<compile_context>
chip_gen: v5e
topology: v5e:2x2
jax: 0.10.0
libtpu: 0.0.40
codegen_flags: <defaults>
</compile_context>

<pallas_src>
import jax
import jax.numpy as jnp
from jax.experimental import pallas as pl
from jax.experimental.pallas import tpu as pltpu

LANE = 128       # lane width / channel count of the big layers
POSE_PAD = 16    # pose channels padded 7 -> 16 (bf16 sublane tile alignment)
SLAB_COLS = 16   # packed per-channel parameter slab: [128, 16] f32
MAX_TN = 1024    # lane-tile cap (safe within v5e's 16 MiB scoped-VMEM default)

# Column assignment inside the packed parameter slab.
_COL = dict(pe_g1=0, pe_b1=1, pe_bias2=2,
            po_g1=3, po_b1=4, po_g2=5, po_b2=6, po_bias3=7,
            d_g1=8, d_b1=9, d_g2=10, d_b2=11, d_w3=12, d_bias3=13)


# ---------------------------------------------------------------------------
# Kernel
# ---------------------------------------------------------------------------
def _disc_kernel(rep_ref, pose_ref,
                 pe_w1t_ref, pe_w2t_ref,
                 po_w1t_ref, po_w2t_ref, po_w3t_ref,
                 d_w1t_ref, d_w2t_ref,
                 vec_ref, out_ref):
    f32 = jnp.float32
    bf16 = jnp.bfloat16

    rep = rep_ref[...]     # [128, TN] bf16 (pre-cast in wrapper; channels x points)
    pose = pose_ref[...]   # [16,  TN] bf16 (zero-padded 7 -> 16)
    vec = vec_ref[...]     # [128, 16] f32 packed per-channel vectors

    def col(name, length):
        c = _COL[name]
        return vec[0:length, c:c + 1]          # [length, 1] f32

    def ln_relu(x, g, b, eps=1e-5):
        # PyTorch LayerNorm over the channel axis (axis 0 here): biased
        # variance, eps inside rsqrt, elementwise affine.  One-pass stats
        # (E[x^2] - mu^2) in f32, ReLU fused, result stored bf16 (the next
        # consumer is an MXU matmul).
        mu = jnp.mean(x, axis=0, keepdims=True)
        var = jnp.mean(x * x, axis=0, keepdims=True) - mu * mu
        y = (x - mu) * jax.lax.rsqrt(var + eps) * g + b
        return jnp.maximum(y, 0.0).astype(bf16)

    def mm(w_ref, x):
        # [out, in] bf16 @ [in, TN] bf16 -> [out, TN] f32 on the MXU.
        return jnp.dot(w_ref[...], x, preferred_element_type=f32)

    # ---- point_encoder: Linear(128,128,nb) -> LN -> ReLU -> Dropout(0) -> Linear(128,128)
    h = ln_relu(mm(pe_w1t_ref, rep), col("pe_g1", 128), col("pe_b1", 128))
    encoded_point = (mm(pe_w2t_ref, h) + col("pe_bias2", 128)).astype(bf16)

    # ---- pose_encoder: Linear(7,64,nb)->LN->ReLU->Linear(64,128,nb)->LN->ReLU->Linear(128,128)
    p = ln_relu(mm(po_w1t_ref, pose), col("po_g1", 64), col("po_b1", 64))
    p = ln_relu(mm(po_w2t_ref, p), col("po_g2", 128), col("po_b2", 128))
    p = mm(po_w3t_ref, p) + col("po_bias3", 128)           # [128, TN] f32

    # softmax over the feature (channel) axis; divide -> EUP reciprocal.
    pmax = jnp.max(p, axis=0, keepdims=True)
    pexp = jnp.exp(p - pmax)
    inv = pl.reciprocal(jnp.sum(pexp, axis=0, keepdims=True), approx=True)
    encoded_pose = (pexp * inv).astype(bf16)

    attn = encoded_point * encoded_pose                    # [128, TN] bf16

    # ---- decoderB: Linear(128,64,nb)->LN->ReLU->Drop(0)->Linear(64,32,nb)->LN->ReLU->Linear(32,1)
    d = ln_relu(mm(d_w1t_ref, attn), col("d_g1", 64), col("d_b1", 64))
    d = ln_relu(mm(d_w2t_ref, d), col("d_g2", 32), col("d_b2", 32))
    # Final Linear(32, 1): VPU multiply + sublane reduce (skip a 1-column MXU pass)
    out = jnp.sum(d.astype(f32) * col("d_w3", 32), axis=0, keepdims=True) \
        + col("d_bias3", 1)

    out_ref[...] = out.astype(out_ref.dtype)               # lane-dense [1, TN]


# ---------------------------------------------------------------------------
# Parameter packing (natural PyTorch-style params -> kernel layout)
# ---------------------------------------------------------------------------
def _pack_kernel_params(p):
    bf16 = jnp.bfloat16
    f32 = jnp.float32

    def t(w):
        return jnp.asarray(w, f32).T.astype(bf16)             # [out, in] bf16

    po_w1 = jnp.pad(jnp.asarray(p["po_w1"], f32), ((0, POSE_PAD - 7), (0, 0)))  # [16, 64]

    weights = (
        t(p["pe_w1"]),    # [128, 128]
        t(p["pe_w2"]),    # [128, 128]
        t(po_w1),         # [64, 16]
        t(p["po_w2"]),    # [128, 64]
        t(p["po_w3"]),    # [128, 128]
        t(p["d_w1"]),     # [64, 128]
        t(p["d_w2"]),     # [32, 64]
    )

    slab = jnp.zeros((LANE, SLAB_COLS), f32)
    for name in ("pe_g1", "pe_b1", "pe_bias2", "po_g1", "po_b1", "po_g2",
                 "po_b2", "po_bias3", "d_g1", "d_b1", "d_g2", "d_b2",
                 "d_w3", "d_bias3"):
        v = jnp.reshape(jnp.asarray(p[name], f32), (-1,))
        slab = slab.at[0:v.shape[0], _COL[name]].set(v)
    return weights, slab


def _choose_tn(n, batch):
    """Largest 128-aligned lane-tile width <= min(n, MAX_TN); keep >=2 grid
    steps along a 'parallel' axis when possible (v7x has 2 TensorCores)."""
    tn = min(MAX_TN, max(LANE, (n // LANE) * LANE))
    if batch * pl.cdiv(n, tn) < 2 and n > LANE:
        tn = max(LANE, ((pl.cdiv(n, 2) + LANE - 1) // LANE) * LANE)
    return tn


# ---------------------------------------------------------------------------
# Forward wrapper (channel-first in, channel-first out — no HBM transposes)
# ---------------------------------------------------------------------------
@jax.jit
def discriminator_forward(representation, dense_pose, params):
    B, C, N = representation.shape
    assert C == 128, representation.shape
    assert dense_pose.shape == (B, 7, N), dense_pose.shape

    bf16 = jnp.bfloat16
    # Pre-cast to bf16 in the wrapper: halves input HBM traffic into the kernel.
    rep = representation.astype(bf16)
    pose = jnp.pad(dense_pose.astype(bf16), ((0, 0), (0, POSE_PAD - 7), (0, 0)))

    n_eff = N
    if N < LANE:  # tiny-N corner case only; otherwise no points-axis padding
        rep = jnp.pad(rep, ((0, 0), (0, 0), (0, LANE - N)))
        pose = jnp.pad(pose, ((0, 0), (0, 0), (0, LANE - N)))
        n_eff = LANE

    tn = _choose_tn(n_eff, B)
    grid = (B, pl.cdiv(n_eff, tn))   # boundary block may be partial (OOB cols unused)

    weights, slab = _pack_kernel_params(params)

    w_specs = [pl.BlockSpec(w.shape, lambda b, j: (0, 0)) for w in weights]
    vec_spec = pl.BlockSpec(slab.shape, lambda b, j: (0, 0))

    flops_per_pt = 2 * (128 * 128 + 128 * 128 + POSE_PAD * 64 + 64 * 128
                        + 128 * 128 + 128 * 64 + 64 * 32 + 32)
    bytes_accessed = (B * n_eff * (128 + POSE_PAD) * 2      # bf16 inputs
                      + B * n_eff * 4                        # f32 output
                      + sum(int(w.size) * 2 for w in weights) + int(slab.size) * 4)
    cost = pl.CostEstimate(flops=flops_per_pt * B * n_eff,
                           transcendentals=(128 + 6) * B * n_eff,
                           bytes_accessed=bytes_accessed)

    out = pl.pallas_call(
        _disc_kernel,
        out_shape=jax.ShapeDtypeStruct((B, 1, n_eff), jnp.float32),
        grid=grid,
        in_specs=[
            pl.BlockSpec((None, 128, tn), lambda b, j: (b, 0, j)),        # representation
            pl.BlockSpec((None, POSE_PAD, tn), lambda b, j: (b, 0, j)),   # padded pose
            *w_specs,
            vec_spec,
        ],
        out_specs=pl.BlockSpec((None, 1, tn), lambda b, j: (b, 0, j)),
        compiler_params=pltpu.CompilerParams(
            dimension_semantics=("parallel", "parallel"),
            vmem_limit_bytes=32 * 1024 * 1024),
        cost_estimate=cost,
    )(rep, pose, *weights, slab)

    if n_eff != N:
        out = out[:, :, :N]
    return out                                                          # [B, 1, N]


# ---------------------------------------------------------------------------
# Deterministic synthetic parameter init (shapes follow the module __init__).
# Linear weights stored as (in_features, out_features); LN gamma=1, beta=0.
# ---------------------------------------------------------------------------
def init_params(key):
    def lin(k, fan_in, fan_out):
        bound = 1.0 / (fan_in ** 0.5)
        return jax.random.uniform(k, (fan_in, fan_out), jnp.float32, -bound, bound)

    ks = jax.random.split(key, 16)
    p = {}
    # point_encoder
    p["pe_w1"] = lin(ks[0], 128, 128)
    p["pe_g1"] = jnp.ones((1, 128), jnp.float32)
    p["pe_b1"] = jnp.zeros((1, 128), jnp.float32)
    p["pe_w2"] = lin(ks[1], 128, 128)
    p["pe_bias2"] = jax.random.uniform(ks[2], (1, 128), jnp.float32, -1 / 128 ** 0.5, 1 / 128 ** 0.5)
    # pose_encoder
    p["po_w1"] = lin(ks[3], 7, 64)
    p["po_g1"] = jnp.ones((1, 64), jnp.float32)
    p["po_b1"] = jnp.zeros((1, 64), jnp.float32)
    p["po_w2"] = lin(ks[4], 64, 128)
    p["po_g2"] = jnp.ones((1, 128), jnp.float32)
    p["po_b2"] = jnp.zeros((1, 128), jnp.float32)
    p["po_w3"] = lin(ks[5], 128, 128)
    p["po_bias3"] = jax.random.uniform(ks[6], (1, 128), jnp.float32, -1 / 128 ** 0.5, 1 / 128 ** 0.5)
    # decoderB
    p["d_w1"] = lin(ks[7], 128, 64)
    p["d_g1"] = jnp.ones((1, 64), jnp.float32)
    p["d_b1"] = jnp.zeros((1, 64), jnp.float32)
    p["d_w2"] = lin(ks[8], 64, 32)
    p["d_g2"] = jnp.ones((1, 32), jnp.float32)
    p["d_b2"] = jnp.zeros((1, 32), jnp.float32)
    p["d_w3"] = lin(ks[9], 32, 1)
    p["d_bias3"] = jax.random.uniform(ks[10], (1, 1), jnp.float32, -1 / 32 ** 0.5, 1 / 32 ** 0.5)
    return p


# ---------------------------------------------------------------------------
# References
# ---------------------------------------------------------------------------
def reference_forward(representation, dense_pose, p):
    """Pure f32 reference mirroring the PyTorch forward."""
    B, C, N = representation.shape
    rep = jnp.transpose(representation, (0, 2, 1)).reshape(B * N, C)
    pose = jnp.transpose(dense_pose, (0, 2, 1)).reshape(B * N, 7)

    def ln(x, g, b):
        mu = jnp.mean(x, -1, keepdims=True)
        var = jnp.mean((x - mu) ** 2, -1, keepdims=True)
        return (x - mu) / jnp.sqrt(var + 1e-5) * g + b

    h = jnp.maximum(ln(rep @ p["pe_w1"], p["pe_g1"], p["pe_b1"]), 0.0)
    enc_point = h @ p["pe_w2"] + p["pe_bias2"]

    q = jnp.maximum(ln(pose @ p["po_w1"], p["po_g1"], p["po_b1"]), 0.0)
    q = jnp.maximum(ln(q @ p["po_w2"], p["po_g2"], p["po_b2"]), 0.0)
    q = q @ p["po_w3"] + p["po_bias3"]
    q = jax.nn.softmax(q, axis=-1)

    a = enc_point * q
    d = jnp.maximum(ln(a @ p["d_w1"], p["d_g1"], p["d_b1"]), 0.0)
    d = jnp.maximum(ln(d @ p["d_w2"], p["d_g2"], p["d_b2"]), 0.0)
    out = d @ p["d_w3"] + p["d_bias3"]
    return jnp.transpose(out.reshape(B, N, 1), (0, 2, 1))


def reference_forward_matched(representation, dense_pose, p):
    """Reference with the SAME precision policy as the kernel (bf16 inputs and
    intermediates, bf16 MXU matmuls with f32 accumulation, f32 LN/softmax
    statistics, VPU final layer)."""
    bf, f32 = jnp.bfloat16, jnp.float32
    B, C, N = representation.shape
    rep = jnp.transpose(representation.astype(bf), (0, 2, 1)).reshape(B * N, C)
    pose = jnp.transpose(dense_pose.astype(bf), (0, 2, 1)).reshape(B * N, 7)

    def ln_relu(x, g, b, eps=1e-5):
        mu = jnp.mean(x, -1, keepdims=True)
        var = jnp.mean(x * x, -1, keepdims=True) - mu * mu
        y = (x - mu) * jax.lax.rsqrt(var + eps) * g + b
        return jnp.maximum(y, 0.0).astype(bf)

    def mm(x, w):
        return jnp.dot(x, jnp.asarray(w, f32).astype(bf),
                       preferred_element_type=f32)

    h = ln_relu(mm(rep, p["pe_w1"]), p["pe_g1"], p["pe_b1"])
    enc_point = (mm(h, p["pe_w2"]) + p["pe_bias2"]).astype(bf)

    q = ln_relu(mm(pose, p["po_w1"]), p["po_g1"], p["po_b1"])
    q = ln_relu(mm(q, p["po_w2"]), p["po_g2"], p["po_b2"])
    q = mm(q, p["po_w3"]) + p["po_bias3"]
    qmax = jnp.max(q, -1, keepdims=True)
    qexp = jnp.exp(q - qmax)
    q = (qexp / jnp.sum(qexp, -1, keepdims=True)).astype(bf)

    a = enc_point * q
    d = ln_relu(mm(a, p["d_w1"]), p["d_g1"], p["d_b1"])
    d = ln_relu(mm(d, p["d_w2"]), p["d_g2"], p["d_b2"])
    out = jnp.sum(d.astype(f32) * p["d_w3"].reshape(1, -1), -1, keepdims=True) + p["d_bias3"]
    return jnp.transpose(out.reshape(B, N, 1), (0, 2, 1))


if __name__ == "__main__":
    key = jax.random.PRNGKey(0)
    k_rep, k_pose, k_par = jax.random.split(key, 3)

    # grid = (2, 2); second lane-tile is partial (1152 = 1024 + 128) — exercises
    # the cdiv/no-pad boundary path and gives >=2 parallel steps (v7x megacore).
    B, N = 2, 1152
    representation = jax.random.normal(k_rep, (B, 128, N), jnp.float32)
    dense_pose = jax.random.normal(k_pose, (B, 7, N), jnp.float32)
    params = init_params(k_par)

    out = discriminator_forward(representation, dense_pose, params)
    out = jax.block_until_ready(out)
    assert out.shape == (B, 1, N), out.shape
    assert bool(jnp.all(jnp.isfinite(out))), "non-finite output"

    ref_matched = reference_forward_matched(representation, dense_pose, params)
    ref_f32 = reference_forward(representation, dense_pose, params)

    err_matched = float(jnp.max(jnp.abs(out - ref_matched)))
    err_f32 = float(jnp.max(jnp.abs(out - ref_f32)))

    # Tight check vs a reference with the kernel's bf16/f32 precision policy.
    assert jnp.allclose(out, ref_matched, atol=2e-2, rtol=2e-2), (err_matched, err_f32)
    # Loose sanity check vs the pure-f32 reference (bf16 quantization tolerance).
    assert err_f32 < 0.5, (err_matched, err_f32)

    print("KERNEL_OK")
</pallas_src>

<mosaic_0001>
module attributes {stable_mosaic.version = 11 : i64} {
  func.func @_disc_kernel(%arg0: i32, %arg1: i32, %arg2: memref<1x128x1024xbf16, #tpu.memory_space<vmem>>, %arg3: memref<1x16x1024xbf16, #tpu.memory_space<vmem>>, %arg4: memref<128x128xbf16, #tpu.memory_space<vmem>>, %arg5: memref<128x128xbf16, #tpu.memory_space<vmem>>, %arg6: memref<64x16xbf16, #tpu.memory_space<vmem>>, %arg7: memref<128x64xbf16, #tpu.memory_space<vmem>>, %arg8: memref<128x128xbf16, #tpu.memory_space<vmem>>, %arg9: memref<64x128xbf16, #tpu.memory_space<vmem>>, %arg10: memref<32x64xbf16, #tpu.memory_space<vmem>>, %arg11: memref<128x16xf32, #tpu.memory_space<vmem>>, %arg12: memref<1x1x1024xf32, #tpu.memory_space<vmem>>) attributes {dimension_semantics = [#tpu.dimension_semantics<parallel>, #tpu.dimension_semantics<parallel>], iteration_bounds = array<i64: 2, 2>, scalar_prefetch = 0 : i64, scratch_operands = 0 : i64, tpu.core_type = #tpu.core_type<tc>, window_params = [{transform_indices = @transform_0, window_bounds = array<i64: 1, 128, 1024>}, {transform_indices = @transform_1, window_bounds = array<i64: 1, 16, 1024>}, {pipeline_mode = #tpu.pipeline_mode<synchronous>, transform_indices = @transform_2, window_bounds = array<i64: 128, 128>}, {pipeline_mode = #tpu.pipeline_mode<synchronous>, transform_indices = @transform_3, window_bounds = array<i64: 128, 128>}, {pipeline_mode = #tpu.pipeline_mode<synchronous>, transform_indices = @transform_4, window_bounds = array<i64: 64, 16>}, {pipeline_mode = #tpu.pipeline_mode<synchronous>, transform_indices = @transform_5, window_bounds = array<i64: 128, 64>}, {pipeline_mode = #tpu.pipeline_mode<synchronous>, transform_indices = @transform_6, window_bounds = array<i64: 128, 128>}, {pipeline_mode = #tpu.pipeline_mode<synchronous>, transform_indices = @transform_7, window_bounds = array<i64: 64, 128>}, {pipeline_mode = #tpu.pipeline_mode<synchronous>, transform_indices = @transform_8, window_bounds = array<i64: 32, 64>}, {pipeline_mode = #tpu.pipeline_mode<synchronous>, transform_indices = @transform_9, window_bounds = array<i64: 128, 16>}, {transform_indices = @transform_10, window_bounds = array<i64: 1, 1, 1024>}]} {
    %c0 = arith.constant 0 : index
    %c0_0 = arith.constant 0 : index
    %c0_1 = arith.constant 0 : index
    %0 = vector.load %arg2[%c0, %c0_0, %c0_1] : memref<1x128x1024xbf16, #tpu.memory_space<vmem>>, vector<1x128x1024xbf16>
    %1 = vector.shape_cast %0 : vector<1x128x1024xbf16> to vector<128x1024xbf16>
    %c0_2 = arith.constant 0 : index
    %c0_3 = arith.constant 0 : index
    %c0_4 = arith.constant 0 : index
    %2 = vector.load %arg3[%c0_2, %c0_3, %c0_4] : memref<1x16x1024xbf16, #tpu.memory_space<vmem>>, vector<1x16x1024xbf16>
    %3 = vector.shape_cast %2 : vector<1x16x1024xbf16> to vector<16x1024xbf16>
    %c0_5 = arith.constant 0 : index
    %c0_6 = arith.constant 0 : index
    %4 = vector.load %arg11[%c0_5, %c0_6] : memref<128x16xf32, #tpu.memory_space<vmem>>, vector<128x16xf32>
    %c0_7 = arith.constant 0 : index
    %c0_8 = arith.constant 0 : index
    %5 = vector.load %arg4[%c0_7, %c0_8] : memref<128x128xbf16, #tpu.memory_space<vmem>>, vector<128x128xbf16>
    %cst = arith.constant dense<0.000000e+00> : vector<128x1024xf32>
    %6 = tpu.matmul %5, %1, %cst {dimension_numbers = #tpu.dot_dimension_numbers<[1], [0], [0], [1], [0, 0, 1, 1], [], []>} : vector<128x128xbf16>, vector<128x1024xbf16>, vector<128x1024xf32> -> vector<128x1024xf32>
    %7 = vector.extract_strided_slice %4 {offsets = [0, 0], sizes = [128, 1], strides = [1, 1]} : vector<128x16xf32> to vector<128x1xf32>
    %8 = vector.extract_strided_slice %4 {offsets = [0, 1], sizes = [128, 1], strides = [1, 1]} : vector<128x16xf32> to vector<128x1xf32>
    %cst_9 = arith.constant dense<0.000000e+00> : vector<1024xf32>
    %9 = vector.multi_reduction <add>, %6, %cst_9 [0] : vector<128x1024xf32> to vector<1024xf32>
    %10 = vector.shape_cast %9 : vector<1024xf32> to vector<1x1024xf32>
    %cst_10 = arith.constant 1.280000e+02 : f32
    %11 = vector.broadcast %cst_10 : f32 to vector<1x1024xf32>
    %12 = arith.divf %10, %11 : vector<1x1024xf32>
    %13 = arith.mulf %6, %6 : vector<128x1024xf32>
    %cst_11 = arith.constant dense<0.000000e+00> : vector<1024xf32>
    %14 = vector.multi_reduction <add>, %13, %cst_11 [0] : vector<128x1024xf32> to vector<1024xf32>
    %15 = vector.shape_cast %14 : vector<1024xf32> to vector<1x1024xf32>
    %cst_12 = arith.constant 1.280000e+02 : f32
    %16 = vector.broadcast %cst_12 : f32 to vector<1x1024xf32>
    %17 = arith.divf %15, %16 : vector<1x1024xf32>
    %18 = arith.mulf %12, %12 : vector<1x1024xf32>
    %19 = arith.subf %17, %18 : vector<1x1024xf32>
    %20 = vector.broadcast %12 : vector<1x1024xf32> to vector<128x1024xf32>
    %21 = arith.subf %6, %20 : vector<128x1024xf32>
    %cst_13 = arith.constant 9.99999974E-6 : f32
    %22 = vector.broadcast %cst_13 : f32 to vector<1x1024xf32>
    %23 = arith.addf %19, %22 : vector<1x1024xf32>
    %24 = math.rsqrt %23 : vector<1x1024xf32>
    %25 = vector.broadcast %24 : vector<1x1024xf32> to vector<128x1024xf32>
    %26 = arith.mulf %21, %25 : vector<128x1024xf32>
    %27 = vector.broadcast %7 : vector<128x1xf32> to vector<128x1024xf32>
    %28 = arith.mulf %26, %27 : vector<128x1024xf32>
    %29 = vector.broadcast %8 : vector<128x1xf32> to vector<128x1024xf32>
    %30 = arith.addf %28, %29 : vector<128x1024xf32>
    %cst_14 = arith.constant 0.000000e+00 : f32
    %31 = vector.broadcast %cst_14 : f32 to vector<128x1024xf32>
    %32 = arith.maximumf %30, %31 : vector<128x1024xf32>
    %33 = arith.truncf %32 : vector<128x1024xf32> to vector<128x1024xbf16>
    %c0_15 = arith.constant 0 : index
    %c0_16 = arith.constant 0 : index
    %34 = vector.load %arg5[%c0_15, %c0_16] : memref<128x128xbf16, #tpu.memory_space<vmem>>, vector<128x128xbf16>
    %cst_17 = arith.constant dense<0.000000e+00> : vector<128x1024xf32>
    %35 = tpu.matmul %34, %33, %cst_17 {dimension_numbers = #tpu.dot_dimension_numbers<[1], [0], [0], [1], [0, 0, 1, 1], [], []>} : vector<128x128xbf16>, vector<128x1024xbf16>, vector<128x1024xf32> -> vector<128x1024xf32>
    %36 = vector.extract_strided_slice %4 {offsets = [0, 2], sizes = [128, 1], strides = [1, 1]} : vector<128x16xf32> to vector<128x1xf32>
    %37 = vector.broadcast %36 : vector<128x1xf32> to vector<128x1024xf32>
    %38 = arith.addf %35, %37 : vector<128x1024xf32>
    %39 = arith.truncf %38 : vector<128x1024xf32> to vector<128x1024xbf16>
    %c0_18 = arith.constant 0 : index
    %c0_19 = arith.constant 0 : index
    %40 = vector.load %arg6[%c0_18, %c0_19] : memref<64x16xbf16, #tpu.memory_space<vmem>>, vector<64x16xbf16>
    %cst_20 = arith.constant dense<0.000000e+00> : vector<64x1024xf32>
    %41 = tpu.matmul %40, %3, %cst_20 {dimension_numbers = #tpu.dot_dimension_numbers<[1], [0], [0], [1], [0, 0, 1, 1], [], []>} : vector<64x16xbf16>, vector<16x1024xbf16>, vector<64x1024xf32> -> vector<64x1024xf32>
    %42 = vector.extract_strided_slice %4 {offsets = [0, 3], sizes = [64, 1], strides = [1, 1]} : vector<128x16xf32> to vector<64x1xf32>
    %43 = vector.extract_strided_slice %4 {offsets = [0, 4], sizes = [64, 1], strides = [1, 1]} : vector<128x16xf32> to vector<64x1xf32>
    %cst_21 = arith.constant dense<0.000000e+00> : vector<1024xf32>
    %44 = vector.multi_reduction <add>, %41, %cst_21 [0] : vector<64x1024xf32> to vector<1024xf32>
    %45 = vector.shape_cast %44 : vector<1024xf32> to vector<1x1024xf32>
    %cst_22 = arith.constant 6.400000e+01 : f32
    %46 = vector.broadcast %cst_22 : f32 to vector<1x1024xf32>
    %47 = arith.divf %45, %46 : vector<1x1024xf32>
    %48 = arith.mulf %41, %41 : vector<64x1024xf32>
    %cst_23 = arith.constant dense<0.000000e+00> : vector<1024xf32>
    %49 = vector.multi_reduction <add>, %48, %cst_23 [0] : vector<64x1024xf32> to vector<1024xf32>
    %50 = vector.shape_cast %49 : vector<1024xf32> to vector<1x1024xf32>
    %cst_24 = arith.constant 6.400000e+01 : f32
    %51 = vector.broadcast %cst_24 : f32 to vector<1x1024xf32>
    %52 = arith.divf %50, %51 : vector<1x1024xf32>
    %53 = arith.mulf %47, %47 : vector<1x1024xf32>
    %54 = arith.subf %52, %53 : vector<1x1024xf32>
    %55 = vector.broadcast %47 : vector<1x1024xf32> to vector<64x1024xf32>
    %56 = arith.subf %41, %55 : vector<64x1024xf32>
    %cst_25 = arith.constant 9.99999974E-6 : f32
    %57 = vector.broadcast %cst_25 : f32 to vector<1x1024xf32>
    %58 = arith.addf %54, %57 : vector<1x1024xf32>
    %59 = math.rsqrt %58 : vector<1x1024xf32>
    %60 = vector.broadcast %59 : vector<1x1024xf32> to vector<64x1024xf32>
    %61 = arith.mulf %56, %60 : vector<64x1024xf32>
    %62 = vector.broadcast %42 : vector<64x1xf32> to vector<64x1024xf32>
    %63 = arith.mulf %61, %62 : vector<64x1024xf32>
    %64 = vector.broadcast %43 : vector<64x1xf32> to vector<64x1024xf32>
    %65 = arith.addf %63, %64 : vector<64x1024xf32>
    %cst_26 = arith.constant 0.000000e+00 : f32
    %66 = vector.broadcast %cst_26 : f32 to vector<64x1024xf32>
    %67 = arith.maximumf %65, %66 : vector<64x1024xf32>
    %68 = arith.truncf %67 : vector<64x1024xf32> to vector<64x1024xbf16>
    %c0_27 = arith.constant 0 : index
    %c0_28 = arith.constant 0 : index
    %69 = vector.load %arg7[%c0_27, %c0_28] : memref<128x64xbf16, #tpu.memory_space<vmem>>, vector<128x64xbf16>
    %cst_29 = arith.constant dense<0.000000e+00> : vector<128x1024xf32>
    %70 = tpu.matmul %69, %68, %cst_29 {dimension_numbers = #tpu.dot_dimension_numbers<[1], [0], [0], [1], [0, 0, 1, 1], [], []>} : vector<128x64xbf16>, vector<64x1024xbf16>, vector<128x1024xf32> -> vector<128x1024xf32>
    %71 = vector.extract_strided_slice %4 {offsets = [0, 5], sizes = [128, 1], strides = [1, 1]} : vector<128x16xf32> to vector<128x1xf32>
    %72 = vector.extract_strided_slice %4 {offsets = [0, 6], sizes = [128, 1], strides = [1, 1]} : vector<128x16xf32> to vector<128x1xf32>
    %cst_30 = arith.constant dense<0.000000e+00> : vector<1024xf32>
    %73 = vector.multi_reduction <add>, %70, %cst_30 [0] : vector<128x1024xf32> to vector<1024xf32>
    %74 = vector.shape_cast %73 : vector<1024xf32> to vector<1x1024xf32>
    %cst_31 = arith.constant 1.280000e+02 : f32
    %75 = vector.broadcast %cst_31 : f32 to vector<1x1024xf32>
    %76 = arith.divf %74, %75 : vector<1x1024xf32>
    %77 = arith.mulf %70, %70 : vector<128x1024xf32>
    %cst_32 = arith.constant dense<0.000000e+00> : vector<1024xf32>
    %78 = vector.multi_reduction <add>, %77, %cst_32 [0] : vector<128x1024xf32> to vector<1024xf32>
    %79 = vector.shape_cast %78 : vector<1024xf32> to vector<1x1024xf32>
    %cst_33 = arith.constant 1.280000e+02 : f32
    %80 = vector.broadcast %cst_33 : f32 to vector<1x1024xf32>
    %81 = arith.divf %79, %80 : vector<1x1024xf32>
    %82 = arith.mulf %76, %76 : vector<1x1024xf32>
    %83 = arith.subf %81, %82 : vector<1x1024xf32>
    %84 = vector.broadcast %76 : vector<1x1024xf32> to vector<128x1024xf32>
    %85 = arith.subf %70, %84 : vector<128x1024xf32>
    %cst_34 = arith.constant 9.99999974E-6 : f32
    %86 = vector.broadcast %cst_34 : f32 to vector<1x1024xf32>
    %87 = arith.addf %83, %86 : vector<1x1024xf32>
    %88 = math.rsqrt %87 : vector<1x1024xf32>
    %89 = vector.broadcast %88 : vector<1x1024xf32> to vector<128x1024xf32>
    %90 = arith.mulf %85, %89 : vector<128x1024xf32>
    %91 = vector.broadcast %71 : vector<128x1xf32> to vector<128x1024xf32>
    %92 = arith.mulf %90, %91 : vector<128x1024xf32>
    %93 = vector.broadcast %72 : vector<128x1xf32> to vector<128x1024xf32>
    %94 = arith.addf %92, %93 : vector<128x1024xf32>
    %cst_35 = arith.constant 0.000000e+00 : f32
    %95 = vector.broadcast %cst_35 : f32 to vector<128x1024xf32>
    %96 = arith.maximumf %94, %95 : vector<128x1024xf32>
    %97 = arith.truncf %96 : vector<128x1024xf32> to vector<128x1024xbf16>
    %c0_36 = arith.constant 0 : index
    %c0_37 = arith.constant 0 : index
    %98 = vector.load %arg8[%c0_36, %c0_37] : memref<128x128xbf16, #tpu.memory_space<vmem>>, vector<128x128xbf16>
    %cst_38 = arith.constant dense<0.000000e+00> : vector<128x1024xf32>
    %99 = tpu.matmul %98, %97, %cst_38 {dimension_numbers = #tpu.dot_dimension_numbers<[1], [0], [0], [1], [0, 0, 1, 1], [], []>} : vector<128x128xbf16>, vector<128x1024xbf16>, vector<128x1024xf32> -> vector<128x1024xf32>
    %100 = vector.extract_strided_slice %4 {offsets = [0, 7], sizes = [128, 1], strides = [1, 1]} : vector<128x16xf32> to vector<128x1xf32>
    %101 = vector.broadcast %100 : vector<128x1xf32> to vector<128x1024xf32>
    %102 = arith.addf %99, %101 : vector<128x1024xf32>
    %cst_39 = arith.constant dense<0xFF800000> : vector<1024xf32>
    %103 = vector.multi_reduction <maximumf>, %102, %cst_39 [0] : vector<128x1024xf32> to vector<1024xf32>
    %104 = vector.shape_cast %103 : vector<1024xf32> to vector<1x1024xf32>
    %105 = vector.broadcast %104 : vector<1x1024xf32> to vector<128x1024xf32>
    %106 = arith.subf %102, %105 : vector<128x1024xf32>
    %107 = math.exp %106 : vector<128x1024xf32>
    %cst_40 = arith.constant dense<0.000000e+00> : vector<1024xf32>
    %108 = vector.multi_reduction <add>, %107, %cst_40 [0] : vector<128x1024xf32> to vector<1024xf32>
    %109 = vector.shape_cast %108 : vector<1024xf32> to vector<1x1024xf32>
    %110 = tpu.reciprocal %109 {approx = true} : vector<1x1024xf32> -> vector<1x1024xf32>
    %111 = vector.broadcast %110 : vector<1x1024xf32> to vector<128x1024xf32>
    %112 = arith.mulf %107, %111 : vector<128x1024xf32>
    %113 = arith.truncf %112 : vector<128x1024xf32> to vector<128x1024xbf16>
    %114 = arith.mulf %39, %113 : vector<128x1024xbf16>
    %c0_41 = arith.constant 0 : index
    %c0_42 = arith.constant 0 : index
    %115 = vector.load %arg9[%c0_41, %c0_42] : memref<64x128xbf16, #tpu.memory_space<vmem>>, vector<64x128xbf16>
    %cst_43 = arith.constant dense<0.000000e+00> : vector<64x1024xf32>
    %116 = tpu.matmul %115, %114, %cst_43 {dimension_numbers = #tpu.dot_dimension_numbers<[1], [0], [0], [1], [0, 0, 1, 1], [], []>} : vector<64x128xbf16>, vector<128x1024xbf16>, vector<64x1024xf32> -> vector<64x1024xf32>
    %117 = vector.extract_strided_slice %4 {offsets = [0, 8], sizes = [64, 1], strides = [1, 1]} : vector<128x16xf32> to vector<64x1xf32>
    %118 = vector.extract_strided_slice %4 {offsets = [0, 9], sizes = [64, 1], strides = [1, 1]} : vector<128x16xf32> to vector<64x1xf32>
    %cst_44 = arith.constant dense<0.000000e+00> : vector<1024xf32>
    %119 = vector.multi_reduction <add>, %116, %cst_44 [0] : vector<64x1024xf32> to vector<1024xf32>
    %120 = vector.shape_cast %119 : vector<1024xf32> to vector<1x1024xf32>
    %cst_45 = arith.constant 6.400000e+01 : f32
    %121 = vector.broadcast %cst_45 : f32 to vector<1x1024xf32>
    %122 = arith.divf %120, %121 : vector<1x1024xf32>
    %123 = arith.mulf %116, %116 : vector<64x1024xf32>
    %cst_46 = arith.constant dense<0.000000e+00> : vector<1024xf32>
    %124 = vector.multi_reduction <add>, %123, %cst_46 [0] : vector<64x1024xf32> to vector<1024xf32>
    %125 = vector.shape_cast %124 : vector<1024xf32> to vector<1x1024xf32>
    %cst_47 = arith.constant 6.400000e+01 : f32
    %126 = vector.broadcast %cst_47 : f32 to vector<1x1024xf32>
    %127 = arith.divf %125, %126 : vector<1x1024xf32>
    %128 = arith.mulf %122, %122 : vector<1x1024xf32>
    %129 = arith.subf %127, %128 : vector<1x1024xf32>
    %130 = vector.broadcast %122 : vector<1x1024xf32> to vector<64x1024xf32>
    %131 = arith.subf %116, %130 : vector<64x1024xf32>
    %cst_48 = arith.constant 9.99999974E-6 : f32
    %132 = vector.broadcast %cst_48 : f32 to vector<1x1024xf32>
    %133 = arith.addf %129, %132 : vector<1x1024xf32>
    %134 = math.rsqrt %133 : vector<1x1024xf32>
    %135 = vector.broadcast %134 : vector<1x1024xf32> to vector<64x1024xf32>
    %136 = arith.mulf %131, %135 : vector<64x1024xf32>
    %137 = vector.broadcast %117 : vector<64x1xf32> to vector<64x1024xf32>
    %138 = arith.mulf %136, %137 : vector<64x1024xf32>
    %139 = vector.broadcast %118 : vector<64x1xf32> to vector<64x1024xf32>
    %140 = arith.addf %138, %139 : vector<64x1024xf32>
    %cst_49 = arith.constant 0.000000e+00 : f32
    %141 = vector.broadcast %cst_49 : f32 to vector<64x1024xf32>
    %142 = arith.maximumf %140, %141 : vector<64x1024xf32>
    %143 = arith.truncf %142 : vector<64x1024xf32> to vector<64x1024xbf16>
    %c0_50 = arith.constant 0 : index
    %c0_51 = arith.constant 0 : index
    %144 = vector.load %arg10[%c0_50, %c0_51] : memref<32x64xbf16, #tpu.memory_space<vmem>>, vector<32x64xbf16>
    %cst_52 = arith.constant dense<0.000000e+00> : vector<32x1024xf32>
    %145 = tpu.matmul %144, %143, %cst_52 {dimension_numbers = #tpu.dot_dimension_numbers<[1], [0], [0], [1], [0, 0, 1, 1], [], []>} : vector<32x64xbf16>, vector<64x1024xbf16>, vector<32x1024xf32> -> vector<32x1024xf32>
    %146 = vector.extract_strided_slice %4 {offsets = [0, 10], sizes = [32, 1], strides = [1, 1]} : vector<128x16xf32> to vector<32x1xf32>
    %147 = vector.extract_strided_slice %4 {offsets = [0, 11], sizes = [32, 1], strides = [1, 1]} : vector<128x16xf32> to vector<32x1xf32>
    %cst_53 = arith.constant dense<0.000000e+00> : vector<1024xf32>
    %148 = vector.multi_reduction <add>, %145, %cst_53 [0] : vector<32x1024xf32> to vector<1024xf32>
    %149 = vector.shape_cast %148 : vector<1024xf32> to vector<1x1024xf32>
    %cst_54 = arith.constant 3.200000e+01 : f32
    %150 = vector.broadcast %cst_54 : f32 to vector<1x1024xf32>
    %151 = arith.divf %149, %150 : vector<1x1024xf32>
    %152 = arith.mulf %145, %145 : vector<32x1024xf32>
    %cst_55 = arith.constant dense<0.000000e+00> : vector<1024xf32>
    %153 = vector.multi_reduction <add>, %152, %cst_55 [0] : vector<32x1024xf32> to vector<1024xf32>
    %154 = vector.shape_cast %153 : vector<1024xf32> to vector<1x1024xf32>
    %cst_56 = arith.constant 3.200000e+01 : f32
    %155 = vector.broadcast %cst_56 : f32 to vector<1x1024xf32>
    %156 = arith.divf %154, %155 : vector<1x1024xf32>
    %157 = arith.mulf %151, %151 : vector<1x1024xf32>
    %158 = arith.subf %156, %157 : vector<1x1024xf32>
    %159 = vector.broadcast %151 : vector<1x1024xf32> to vector<32x1024xf32>
    %160 = arith.subf %145, %159 : vector<32x1024xf32>
    %cst_57 = arith.constant 9.99999974E-6 : f32
    %161 = vector.broadcast %cst_57 : f32 to vector<1x1024xf32>
    %162 = arith.addf %158, %161 : vector<1x1024xf32>
    %163 = math.rsqrt %162 : vector<1x1024xf32>
    %164 = vector.broadcast %163 : vector<1x1024xf32> to vector<32x1024xf32>
    %165 = arith.mulf %160, %164 : vector<32x1024xf32>
    %166 = vector.broadcast %146 : vector<32x1xf32> to vector<32x1024xf32>
    %167 = arith.mulf %165, %166 : vector<32x1024xf32>
    %168 = vector.broadcast %147 : vector<32x1xf32> to vector<32x1024xf32>
    %169 = arith.addf %167, %168 : vector<32x1024xf32>
    %cst_58 = arith.constant 0.000000e+00 : f32
    %170 = vector.broadcast %cst_58 : f32 to vector<32x1024xf32>
    %171 = arith.maximumf %169, %170 : vector<32x1024xf32>
    %172 = arith.truncf %171 : vector<32x1024xf32> to vector<32x1024xbf16>
    %173 = arith.extf %172 : vector<32x1024xbf16> to vector<32x1024xf32>
    %174 = vector.extract_strided_slice %4 {offsets = [0, 12], sizes = [32, 1], strides = [1, 1]} : vector<128x16xf32> to vector<32x1xf32>
    %175 = vector.broadcast %174 : vector<32x1xf32> to vector<32x1024xf32>
    %176 = arith.mulf %173, %175 : vector<32x1024xf32>
    %cst_59 = arith.constant dense<0.000000e+00> : vector<1024xf32>
    %177 = vector.multi_reduction <add>, %176, %cst_59 [0] : vector<32x1024xf32> to vector<1024xf32>
    %178 = vector.shape_cast %177 : vector<1024xf32> to vector<1x1024xf32>
    %179 = vector.extract_strided_slice %4 {offsets = [0, 13], sizes = [1, 1], strides = [1, 1]} : vector<128x16xf32> to vector<1x1xf32>
    %180 = vector.broadcast %179 : vector<1x1xf32> to vector<1x1024xf32>
    %181 = arith.addf %178, %180 : vector<1x1024xf32>
    %c0_60 = arith.constant 0 : index
    %c0_61 = arith.constant 0 : index
    %c0_62 = arith.constant 0 : index
    %182 = vector.load %arg12[%c0_60, %c0_61, %c0_62] : memref<1x1x1024xf32, #tpu.memory_space<vmem>>, vector<1x1x1024xf32>
    %183 = vector.shape_cast %182 : vector<1x1x1024xf32> to vector<1x1024xf32>
    %184 = vector.shape_cast %181 : vector<1x1024xf32> to vector<1x1x1024xf32>
    tpu.vector_store %arg12[%c0_60, %c0_61, %c0_62], %184 {strides = array<i32>} : memref<1x1x1024xf32, #tpu.memory_space<vmem>>, vector<1x1x1024xf32>,
    return
  }
  func.func @transform_0(%arg0: i32, %arg1: i32) -> (i32, i32, i32) {
    %c0_i32 = arith.constant 0 : i32
    %c0_i32_0 = arith.constant 0 : i32
    return %arg0, %c0_i32, %arg1 : i32, i32, i32
  }
  func.func @transform_1(%arg0: i32, %arg1: i32) -> (i32, i32, i32) {
    %c0_i32 = arith.constant 0 : i32
    %c0_i32_0 = arith.constant 0 : i32
    return %arg0, %c0_i32, %arg1 : i32, i32, i32
  }
  func.func @transform_2(%arg0: i32, %arg1: i32) -> (i32, i32) {
    %c0_i32 = arith.constant 0 : i32
    %c0_i32_0 = arith.constant 0 : i32
    %c0_i32_1 = arith.constant 0 : i32
    return %c0_i32, %c0_i32_0 : i32, i32
  }
  func.func @transform_3(%arg0: i32, %arg1: i32) -> (i32, i32) {
    %c0_i32 = arith.constant 0 : i32
    %c0_i32_0 = arith.constant 0 : i32
    %c0_i32_1 = arith.constant 0 : i32
    return %c0_i32, %c0_i32_0 : i32, i32
  }
  func.func @transform_4(%arg0: i32, %arg1: i32) -> (i32, i32) {
    %c0_i32 = arith.constant 0 : i32
    %c0_i32_0 = arith.constant 0 : i32
    %c0_i32_1 = arith.constant 0 : i32
    return %c0_i32, %c0_i32_0 : i32, i32
  }
  func.func @transform_5(%arg0: i32, %arg1: i32) -> (i32, i32) {
    %c0_i32 = arith.constant 0 : i32
    %c0_i32_0 = arith.constant 0 : i32
    %c0_i32_1 = arith.constant 0 : i32
    return %c0_i32, %c0_i32_0 : i32, i32
  }
  func.func @transform_6(%arg0: i32, %arg1: i32) -> (i32, i32) {
    %c0_i32 = arith.constant 0 : i32
    %c0_i32_0 = arith.constant 0 : i32
    %c0_i32_1 = arith.constant 0 : i32
    return %c0_i32, %c0_i32_0 : i32, i32
  }
  func.func @transform_7(%arg0: i32, %arg1: i32) -> (i32, i32) {
    %c0_i32 = arith.constant 0 : i32
    %c0_i32_0 = arith.constant 0 : i32
    %c0_i32_1 = arith.constant 0 : i32
    return %c0_i32, %c0_i32_0 : i32, i32
  }
  func.func @transform_8(%arg0: i32, %arg1: i32) -> (i32, i32) {
    %c0_i32 = arith.constant 0 : i32
    %c0_i32_0 = arith.constant 0 : i32
    %c0_i32_1 = arith.constant 0 : i32
    return %c0_i32, %c0_i32_0 : i32, i32
  }
  func.func @transform_9(%arg0: i32, %arg1: i32) -> (i32, i32) {
    %c0_i32 = arith.constant 0 : i32
    %c0_i32_0 = arith.constant 0 : i32
    %c0_i32_1 = arith.constant 0 : i32
    return %c0_i32, %c0_i32_0 : i32, i32
  }
  func.func @transform_10(%arg0: i32, %arg1: i32) -> (i32, i32, i32) {
    %c0_i32 = arith.constant 0 : i32
    %c0_i32_0 = arith.constant 0 : i32
    return %arg0, %c0_i32, %arg1 : i32, i32, i32
  }
}

</mosaic_0001>

<llo_original>
// kernel: discriminator_forward.1
$region0: #{discriminator_forward.1}
  #allocation0 [shape = 'u32[]', space=smem, size = 0x4, offset = 0x4, fixed_abs, tag = 'smem constant byte address 0x4 - core index']
  #allocation1 [shape = 'u32[72,128]{1,0:T(1,128)}', space=vmem, size = 0x9000, scoped, tag = 'internal scratch']
  %s0 = inlined_call_operand.vmem [shape: bf16[2,128,1152], index: 0, kind: input, shape index: {}]
  %s1 = inlined_call_operand.vmem [shape: bf16[2,16,1152], index: 1, kind: input, shape index: {}]
  %s2 = inlined_call_operand.vmem [shape: bf16[128,128], index: 2, kind: input, shape index: {}]
  %s3 = inlined_call_operand.vmem [shape: bf16[128,128], index: 3, kind: input, shape index: {}]
  %s4 = inlined_call_operand.vmem [shape: bf16[64,16], index: 4, kind: input, shape index: {}]
  %s5 = inlined_call_operand.vmem [shape: bf16[128,64], index: 5, kind: input, shape index: {}]
  %s6 = inlined_call_operand.vmem [shape: bf16[128,128], index: 6, kind: input, shape index: {}]
  %s7 = inlined_call_operand.vmem [shape: bf16[64,128], index: 7, kind: input, shape index: {}]
  %s8 = inlined_call_operand.vmem [shape: bf16[32,64], index: 8, kind: input, shape index: {}]
  %s9 = inlined_call_operand.vmem [shape: f32[128,16], index: 9, kind: input, shape index: {}]
  %s10 = inlined_call_operand.hbm [shape: f32[2,1,1152], index: 10, kind: output, shape index: {}]
  %s11 = sld [smem:[#allocation0]]
  $region205: #{discriminator_forward.1} parent=0
    _
  %s13 = ssub.s32 1, %s11
  %s14 = scalar_select 0, %s13, %s11
  $region1: #{discriminator_forward.1} parent=0
    #allocation2 [shape = 'u8[524288]{0}', space=vmem, size = 0x80000, scoped, tag = 'input window, operand 0']
    #allocation3 [shape = 'u8[65536]{0}', space=vmem, size = 0x10000, scoped, tag = 'input window, operand 1']
    #allocation4 [shape = 'u8[8192]{0}', space=vmem, size = 0x2000, scoped, tag = 'output window, operand 0']
    #allocation5 [shape = 's32[2]{0}', space=sflag, size = 0x8, scoped, tag = 'scoped memory for discriminator_forward.1']
    %15 = vsyncpa [#allocation5], 0
    %s16 = scalar_lea.sflag [#allocation5], 1
    %17 = vsyncpa %s16, 0
    loop: start=0, step=1, limit=6
    $region2: #{discriminator_forward.1} parent=1 // loop_pre_header
      _
    $region3: #{discriminator_forward.1} parent=1 // loop_header
      %s19 = sphi 0, %s23
      %p20 = scmp.ge.s32.totalorder %s19, 6
      %s26 = sphi 0, %s38
      %s27 = sphi 0, %s34
      %s28 = sphi 0, %s26
      %s29 = sphi 0, %s27
      %s30 = sphi 0, %s28
      %s31 = sphi 0, %s29
      %s43 = sphi 0, %s45
      %s46 = sphi 0, %s43
      %s47 = sphi 0, %s46
      %s63 = sphi 0, %s47
      %s71 = sphi 0, %s73
      %s74 = sphi 0, %s71
      %s75 = sphi 0, %s74
      %s91 = sphi 0, %s75
      %s95 = sphi 0, %s95
      %s97 = sphi 0, %s95
      %s98 = sphi 0, %s97
      %s112 = sphi 0, %s98
      %s116 = sphi 0, %s116
      %s118 = sphi 0, %s116
      %s119 = sphi 0, %s118
      %s133 = sphi 0, %s119
      %s137 = sphi 0, %s137
      %s139 = sphi 0, %s137
      %s140 = sphi 0, %s139
      %s154 = sphi 0, %s140
      %s158 = sphi 0, %s158
      %s160 = sphi 0, %s158
      %s161 = sphi 0, %s160
      %s175 = sphi 0, %s161
      %s179 = sphi 0, %s179
      %s181 = sphi 0, %s179
      %s182 = sphi 0, %s181
      %s196 = sphi 0, %s182
      %s200 = sphi 0, %s200
      %s202 = sphi 0, %s200
      %s203 = sphi 0, %s202
      %s217 = sphi 0, %s203
      %s221 = sphi 0, %s221
      %s223 = sphi 0, %s221
      %s224 = sphi 0, %s223
      %s238 = sphi 0, %s224
      %s242 = sphi 0, %s242
      %s244 = sphi 0, %s242
      %s245 = sphi 0, %s244
      %s259 = sphi 0, %s245
      %s267 = sphi 0, %s269
      %s270 = sphi 0, %s267
      %s271 = sphi 0, %s270
      %s287 = sphi 0, %s271
    $region4: #{discriminator_forward.1} parent=1 // loop_header_branch
      %22 = sbr.rel (%p20) target = $region8
    $region5: #{discriminator_forward.1} parent=1 // loop_body
      %s24 = ssub.s32 %s19, 1
      %s25 = ssub.s32 %s19, 2
      %s32 = sadd.s32 1, %s27
      %p33 = scmp.ge.s32.totalorder %s32, 2
      %s34 = scalar_select %p33, 0, %s32
      %s35 = sadd.s32 1, %s26
      %s36 = scalar_select %p33, %s35, %s26
      %p37 = scmp.ge.s32.totalorder %s36, 2
      %s38 = scalar_select %p37, 0, %s36
      %s39 = ssub.s32 %s26, %s38
      %s40 = ssub.s32 %s27, %s34
      %s41 = sor.u32 %s39, %s40
      %p42 = scmp.eq.s32.totalorder %s41, 0
      %s44 = sadd.s32 %s43, 1
      %s45 = scalar_select %p42, %s43, %s44
      %p48 = pneg %p42
      %p49 = scmp.eq.s32.totalorder %s19, 3
      %p50 = por %p48, %p49
      %p51 = scmp.ne.s32.totalorder %s43, %s46
      %p52 = scmp.eq.s32.totalorder %s19, 0
      %p53 = por %p51, %p52
      %p54 = scmp.ne.s32.totalorder %s43, %s46
      %p55 = scmp.eq.s32.totalorder %s24, 3
      %p56 = por %p54, %p55
      %p57 = scmp.ne.s32.totalorder %s46, %s47
      %p58 = scmp.eq.s32.totalorder %s24, 0
      %p59 = por %p57, %p58
      %p60 = scmp.ne.s32.totalorder %s46, %s47
      %p61 = scmp.eq.s32.totalorder %s25, 3
      %p62 = por %p60, %p61
      %p64 = scmp.ne.s32.totalorder %s47, %s63
      %p65 = scmp.eq.s32.totalorder %s25, 0
      %p66 = por %p64, %p65
      %s67 = ssub.s32 %s26, %s38
      %s68 = ssub.s32 %s27, %s34
      %s69 = sor.u32 %s67, %s68
      %p70 = scmp.eq.s32.totalorder %s69, 0
      %s72 = sadd.s32 %s71, 1
      %s73 = scalar_select %p70, %s71, %s72
      %p76 = pneg %p70
      %p77 = scmp.eq.s32.totalorder %s19, 3
      %p78 = por %p76, %p77
      %p79 = scmp.ne.s32.totalorder %s71, %s74
      %p80 = scmp.eq.s32.totalorder %s19, 0
      %p81 = por %p79, %p80
      %p82 = scmp.ne.s32.totalorder %s71, %s74
      %p83 = scmp.eq.s32.totalorder %s24, 3
      %p84 = por %p82, %p83
      %p85 = scmp.ne.s32.totalorder %s74, %s75
      %p86 = scmp.eq.s32.totalorder %s24, 0
      %p87 = por %p85, %p86
      %p88 = scmp.ne.s32.totalorder %s74, %s75
      %p89 = scmp.eq.s32.totalorder %s25, 3
      %p90 = por %p88, %p89
      %p92 = scmp.ne.s32.totalorder %s75, %s91
      %p93 = scmp.eq.s32.totalorder %s25, 0
      %p94 = por %p92, %p93
      %s96 = sadd.s32 %s95, 1
      %p99 = scmp.eq.s32.totalorder %s19, 3
      %p100 = scmp.ne.s32.totalorder %s95, %s97
      %p101 = scmp.eq.s32.totalorder %s19, 0
      %p102 = por %p100, %p101
      %p103 = scmp.ne.s32.totalorder %s95, %s97
      %p104 = scmp.eq.s32.totalorder %s24, 3
      %p105 = por %p103, %p104
      %p106 = scmp.ne.s32.totalorder %s97, %s98
      %p107 = scmp.eq.s32.totalorder %s24, 0
      %p108 = por %p106, %p107
      %p109 = scmp.ne.s32.totalorder %s97, %s98
      %p110 = scmp.eq.s32.totalorder %s25, 3
      %p111 = por %p109, %p110
      %p113 = scmp.ne.s32.totalorder %s98, %s112
      %p114 = scmp.eq.s32.totalorder %s25, 0
      %p115 = por %p113, %p114
      %s117 = sadd.s32 %s116, 1
      %p120 = scmp.eq.s32.totalorder %s19, 3
      %p121 = scmp.ne.s32.totalorder %s116, %s118
      %p122 = scmp.eq.s32.totalorder %s19, 0
      %p123 = por %p121, %p122
      %p124 = scmp.ne.s32.totalorder %s116, %s118
      %p125 = scmp.eq.s32.totalorder %s24, 3
      %p126 = por %p124, %p125
      %p127 = scmp.ne.s32.totalorder %s118, %s119
      %p128 = scmp.eq.s32.totalorder %s24, 0
      %p129 = por %p127, %p128
      %p130 = scmp.ne.s32.totalorder %s118, %s119
      %p131 = scmp.eq.s32.totalorder %s25, 3
      %p132 = por %p130, %p131
      %p134 = scmp.ne.s32.totalorder %s119, %s133
      %p135 = scmp.eq.s32.totalorder %s25, 0
      %p136 = por %p134, %p135
      %s138 = sadd.s32 %s137, 1
      %p141 = scmp.eq.s32.totalorder %s19, 3
      %p142 = scmp.ne.s32.totalorder %s137, %s139
      %p143 = scmp.eq.s32.totalorder %s19, 0
      %p144 = por %p142, %p143
      %p145 = scmp.ne.s32.totalorder %s137, %s139
      %p146 = scmp.eq.s32.totalorder %s24, 3
      %p147 = por %p145, %p146
      %p148 = scmp.ne.s32.totalorder %s139, %s140
      %p149 = scmp.eq.s32.totalorder %s24, 0
      %p150 = por %p148, %p149
      %p151 = scmp.ne.s32.totalorder %s139, %s140
      %p152 = scmp.eq.s32.totalorder %s25, 3
      %p153 = por %p151, %p152
      %p155 = scmp.ne.s32.totalorder %s140, %s154
      %p156 = scmp.eq.s32.totalorder %s25, 0
      %p157 = por %p155, %p156
      %s159 = sadd.s32 %s158, 1
      %p162 = scmp.eq.s32.totalorder %s19, 3
      %p163 = scmp.ne.s32.totalorder %s158, %s160
      %p164 = scmp.eq.s32.totalorder %s19, 0
      %p165 = por %p163, %p164
      %p166 = scmp.ne.s32.totalorder %s158, %s160
      %p167 = scmp.eq.s32.totalorder %s24, 3
      %p168 = por %p166, %p167
      %p169 = scmp.ne.s32.totalorder %s160, %s161
      %p170 = scmp.eq.s32.totalorder %s24, 0
      %p171 = por %p169, %p170
      %p172 = scmp.ne.s32.totalorder %s160, %s161
      %p173 = scmp.eq.s32.totalorder %s25, 3
      %p174 = por %p172, %p173
      %p176 = scmp.ne.s32.totalorder %s161, %s175
      %p177 = scmp.eq.s32.totalorder %s25, 0
      %p178 = por %p176, %p177
      %s180 = sadd.s32 %s179, 1
      %p183 = scmp.eq.s32.totalorder %s19, 3
      %p184 = scmp.ne.s32.totalorder %s179, %s181
      %p185 = scmp.eq.s32.totalorder %s19, 0
      %p186 = por %p184, %p185
      %p187 = scmp.ne.s32.totalorder %s179, %s181
      %p188 = scmp.eq.s32.totalorder %s24, 3
      %p189 = por %p187, %p188
      %p190 = scmp.ne.s32.totalorder %s181, %s182
      %p191 = scmp.eq.s32.totalorder %s24, 0
      %p192 = por %p190, %p191
      %p193 = scmp.ne.s32.totalorder %s181, %s182
      %p194 = scmp.eq.s32.totalorder %s25, 3
      %p195 = por %p193, %p194
      %p197 = scmp.ne.s32.totalorder %s182, %s196
      %p198 = scmp.eq.s32.totalorder %s25, 0
      %p199 = por %p197, %p198
      %s201 = sadd.s32 %s200, 1
      %p204 = scmp.eq.s32.totalorder %s19, 3
      %p205 = scmp.ne.s32.totalorder %s200, %s202
      %p206 = scmp.eq.s32.totalorder %s19, 0
      %p207 = por %p205, %p206
      %p208 = scmp.ne.s32.totalorder %s200, %s202
      %p209 = scmp.eq.s32.totalorder %s24, 3
      %p210 = por %p208, %p209
      %p211 = scmp.ne.s32.totalorder %s202, %s203
      %p212 = scmp.eq.s32.totalorder %s24, 0
      %p213 = por %p211, %p212
      %p214 = scmp.ne.s32.totalorder %s202, %s203
      %p215 = scmp.eq.s32.totalorder %s25, 3
      %p216 = por %p214, %p215
      %p218 = scmp.ne.s32.totalorder %s203, %s217
      %p219 = scmp.eq.s32.totalorder %s25, 0
      %p220 = por %p218, %p219
      %s222 = sadd.s32 %s221, 1
      %p225 = scmp.eq.s32.totalorder %s19, 3
      %p226 = scmp.ne.s32.totalorder %s221, %s223
      %p227 = scmp.eq.s32.totalorder %s19, 0
      %p228 = por %p226, %p227
      %p229 = scmp.ne.s32.totalorder %s221, %s223
      %p230 = scmp.eq.s32.totalorder %s24, 3
      %p231 = por %p229, %p230
      %p232 = scmp.ne.s32.totalorder %s223, %s224
      %p233 = scmp.eq.s32.totalorder %s24, 0
      %p234 = por %p232, %p233
      %p235 = scmp.ne.s32.totalorder %s223, %s224
      %p236 = scmp.eq.s32.totalorder %s25, 3
      %p237 = por %p235, %p236
      %p239 = scmp.ne.s32.totalorder %s224, %s238
      %p240 = scmp.eq.s32.totalorder %s25, 0
      %p241 = por %p239, %p240
      %s243 = sadd.s32 %s242, 1
      %p246 = scmp.eq.s32.totalorder %s19, 3
      %p247 = scmp.ne.s32.totalorder %s242, %s244
      %p248 = scmp.eq.s32.totalorder %s19, 0
      %p249 = por %p247, %p248
      %p250 = scmp.ne.s32.totalorder %s242, %s244
      %p251 = scmp.eq.s32.totalorder %s24, 3
      %p252 = por %p250, %p251
      %p253 = scmp.ne.s32.totalorder %s244, %s245
      %p254 = scmp.eq.s32.totalorder %s24, 0
      %p255 = por %p253, %p254
      %p256 = scmp.ne.s32.totalorder %s244, %s245
      %p257 = scmp.eq.s32.totalorder %s25, 3
      %p258 = por %p256, %p257
      %p260 = scmp.ne.s32.totalorder %s245, %s259
      %p261 = scmp.eq.s32.totalorder %s25, 0
      %p262 = por %p260, %p261
      %s263 = ssub.s32 %s26, %s38
      %s264 = ssub.s32 %s27, %s34
      %s265 = sor.u32 %s263, %s264
      %p266 = scmp.eq.s32.totalorder %s265, 0
      %s268 = sadd.s32 %s267, 1
      %s269 = scalar_select %p266, %s267, %s268
      %p272 = pneg %p266
      %p273 = scmp.eq.s32.totalorder %s19, 3
      %p274 = por %p272, %p273
      %p275 = scmp.ne.s32.totalorder %s267, %s270
      %p276 = scmp.eq.s32.totalorder %s19, 0
      %p277 = por %p275, %p276
      %p278 = scmp.ne.s32.totalorder %s267, %s270
      %p279 = scmp.eq.s32.totalorder %s24, 3
      %p280 = por %p278, %p279
      %p281 = scmp.ne.s32.totalorder %s270, %s271
      %p282 = scmp.eq.s32.totalorder %s24, 0
      %p283 = por %p281, %p282
      %p284 = scmp.ne.s32.totalorder %s270, %s271
      %p285 = scmp.eq.s32.totalorder %s25, 3
      %p286 = por %p284, %p285
      %p288 = scmp.ne.s32.totalorder %s271, %s287
      %p289 = scmp.eq.s32.totalorder %s25, 0
      %p290 = por %p288, %p289
      %p291 = scmp.le.s32.totalorder 1, %s19
      %p292 = scmp.lt.s32.totalorder %s19, 5
      %p293 = pnand %p291, %p292
      %p294 = pneg %p293
      // Predicated region
      $region9: #{discriminator_forward.1} parent=5 // pred_check
        _
      $region10: #{discriminator_forward.1} parent=5 // pred_check_branch
        %296 = sbr.rel (%p293) target = $region12
      $region11: #{discriminator_forward.1} parent=5 // pred_region
        %s297 = ssub.s32 %s19, 1
        // Predicated region
        $region13: #{discriminator_forward.1} parent=11 // pred_check
          %p298 = pneg %p108
        $region14: #{discriminator_forward.1} parent=11 // pred_check_branch
          %300 = sbr.rel (%p298) target = $region16
        $region15: #{discriminator_forward.1} parent=11 // pred_region
          _
        $region16: #{discriminator_forward.1} parent=11 // pred_fallthru
          _
        // Predicated region
        $region17: #{discriminator_forward.1} parent=11 // pred_check
          %p301 = pneg %p129
        $region18: #{discriminator_forward.1} parent=11 // pred_check_branch
          %303 = sbr.rel (%p301) target = $region20
        $region19: #{discriminator_forward.1} parent=11 // pred_region
          _
        $region20: #{discriminator_forward.1} parent=11 // pred_fallthru
          _
        // Predicated region
        $region21: #{discriminator_forward.1} parent=11 // pred_check
          %p304 = pneg %p150
        $region22: #{discriminator_forward.1} parent=11 // pred_check_branch
          %306 = sbr.rel (%p304) target = $region24
        $region23: #{discriminator_forward.1} parent=11 // pred_region
          _
        $region24: #{discriminator_forward.1} parent=11 // pred_fallthru
          _
        // Predicated region
        $region25: #{discriminator_forward.1} parent=11 // pred_check
          %p307 = pneg %p171
        $region26: #{discriminator_forward.1} parent=11 // pred_check_branch
          %309 = sbr.rel (%p307) target = $region28
        $region27: #{discriminator_forward.1} parent=11 // pred_region
          _
        $region28: #{discriminator_forward.1} parent=11 // pred_fallthru
          _
        // Predicated region
        $region29: #{discriminator_forward.1} parent=11 // pred_check
          %p310 = pneg %p192
        $region30: #{discriminator_forward.1} parent=11 // pred_check_branch
          %312 = sbr.rel (%p310) target = $region32
        $region31: #{discriminator_forward.1} parent=11 // pred_region
          _
        $region32: #{discriminator_forward.1} parent=11 // pred_fallthru
          _
        // Predicated region
        $region33: #{discriminator_forward.1} parent=11 // pred_check
          %p313 = pneg %p213
        $region34: #{discriminator_forward.1} parent=11 // pred_check_branch
          %315 = sbr.rel (%p313) target = $region36
        $region35: #{discriminator_forward.1} parent=11 // pred_region
          _
        $region36: #{discriminator_forward.1} parent=11 // pred_fallthru
          _
        // Predicated region
        $region37: #{discriminator_forward.1} parent=11 // pred_check
          %p316 = pneg %p234
        $region38: #{discriminator_forward.1} parent=11 // pred_check_branch
          %318 = sbr.rel (%p316) target = $region40
        $region39: #{discriminator_forward.1} parent=11 // pred_region
          _
        $region40: #{discriminator_forward.1} parent=11 // pred_fallthru
          _
        // Predicated region
        $region41: #{discriminator_forward.1} parent=11 // pred_check
          %p319 = pneg %p255
        $region42: #{discriminator_forward.1} parent=11 // pred_check_branch
          %321 = sbr.rel (%p319) target = $region44
        $region43: #{discriminator_forward.1} parent=11 // pred_region
          _
        $region44: #{discriminator_forward.1} parent=11 // pred_fallthru
          _
      $region12: #{discriminator_forward.1} parent=5 // pred_fallthru
        _
      %p322 = scmp.lt.s32.totalorder %s19, 4
      // Predicated region
      $region45: #{discriminator_forward.1} parent=5 // pred_check
        %p323 = pneg %p322
      $region46: #{discriminator_forward.1} parent=5 // pred_check_branch
        %325 = sbr.rel (%p323) target = $region48
      $region47: #{discriminator_forward.1} parent=5 // pred_region
        // Predicated region
        $region49: #{discriminator_forward.1} parent=47 // pred_check
          %p326 = pneg %p53
        $region50: #{discriminator_forward.1} parent=47 // pred_check_branch
          %328 = sbr.rel (%p326) target = $region52
        $region51: #{discriminator_forward.1} parent=47 // pred_region
          %s329 = sand.u32 %s43, 1
          %s330 = sand.u32 %s43, 1
          %s331 = smul.addr %s330, 512
          %s332 = scalar_lea.vmem [#allocation2], %s331
          %s333 = smul.u32 8, %s27
          %s334 = ssub.s32 9, %s333
          %p335 = scmp.lt.s32.totalorder %s334, 8
          %s336 = scalar_select %p335, %s334, 8
          %s337 = smul.u32 64, %s336
          %p338 = scmp.ne.s32.totalorder 0, %s337
          %s339 = smul.addr %s26, 144
          %s340 = sadd.s32 %s333, %s339
          %s341 = smul.addr %s340, 4
          %s342 = scalar_lea.vmem %s0, %s341
          %s343 = smul.u32 %s336, 4
          // Predicated region
          $region53: #{discriminator_forward.1} parent=51 // pred_check
            %p344 = pneg %p338
          $region54: #{discriminator_forward.1} parent=51 // pred_check_branch
            %346 = sbr.rel (%p344) target = $region56
          $region55: #{discriminator_forward.1} parent=51 // pred_region
            %p347 = scmp.lt.u32.totalorder %s343, 8
            %p348 = pneg %p347
            // Predicated region
            $region57: #{discriminator_forward.1} parent=55 // pred_check
              _
            $region58: #{discriminator_forward.1} parent=55 // pred_check_branch
              %350 = sbr.rel (%p347) target = $region60
            $region59: #{discriminator_forward.1} parent=55 // pred_region
              %s396 = sand.u32 %s343, 7
              %p397 = scmp.eq.s32.totalorder %s396, 0
              // Predicated region
              $region72: #{discriminator_forward.1} parent=59 // pred_check
                %p398 = pneg %p397
              $region73: #{discriminator_forward.1} parent=59 // pred_check_branch
                %400 = sbr.rel (%p398) target = $region75
              $region74: #{discriminator_forward.1} parent=59 // pred_region
                %s401 = sshrl.u32 %s343, 3
                %s402 = sshrl.u32 %s401, 1
                // While loop
                $region76: #{discriminator_forward.1} parent=74 // loop_pre_header
                  _
                $region77: #{discriminator_forward.1} parent=74 // loop_header
                  %s404 = sphi 0, %s406
                  %p405 = scmp.ge.s32.totalorder %s404, %s402
                  %s409 = sphi 0, %s478
                  %s410 = sphi %s342, %s481
                  %s411 = sphi %s332, %s482
                $region78: #{discriminator_forward.1} parent=74 // loop_header_branch
                  %408 = sbr.rel (%p405) target = $region82
                $region79: #{discriminator_forward.1} parent=74 // loop_body
                  %v412 = vld [vmem:[%s410] sm:$0xff]
                  %413 = vst [vmem:[%s411] sm:$0xff] %v412
                  %v414 = vld [vmem:[%s410 + $0x8] sm:$0xff]
                  %415 = vst [vmem:[%s411 + $0x8] sm:$0xff] %v414
                  %v416 = vld [vmem:[%s410 + $0x24] sm:$0xff]
                  %417 = vst [vmem:[%s411 + $0x20] sm:$0xff] %v416
                  %v418 = vld [vmem:[%s410 + $0x2c] sm:$0xff]
                  %419 = vst [vmem:[%s411 + $0x28] sm:$0xff] %v418
                  %v420 = vld [vmem:[%s410 + $0x48] sm:$0xff]
                  %421 = vst [vmem:[%s411 + $0x40] sm:$0xff] %v420
                  %v422 = vld [vmem:[%s410 + $0x50] sm:$0xff]
                  %423 = vst [vmem:[%s411 + $0x48] sm:$0xff] %v422
                  %v424 = vld [vmem:[%s410 + $0x6c] sm:$0xff]
                  %425 = vst [vmem:[%s411 + $0x60] sm:$0xff] %v424
                  %v426 = vld [vmem:[%s410 + $0x74] sm:$0xff]
                  %427 = vst [vmem:[%s411 + $0x68] sm:$0xff] %v426
                  %v428 = vld [vmem:[%s410 + $0x90] sm:$0xff]
                  %429 = vst [vmem:[%s411 + $0x80] sm:$0xff] %v428
                  %v430 = vld [vmem:[%s410 + $0x98] sm:$0xff]
                  %431 = vst [vmem:[%s411 + $0x88] sm:$0xff] %v430
                  %v432 = vld [vmem:[%s410 + $0xb4] sm:$0xff]
                  %433 = vst [vmem:[%s411 + $0xa0] sm:$0xff] %v432
                  %v434 = vld [vmem:[%s410 + $0xbc] sm:$0xff]
                  %435 = vst [vmem:[%s411 + $0xa8] sm:$0xff] %v434
                  %v436 = vld [vmem:[%s410 + $0xd8] sm:$0xff]
                  %437 = vst [vmem:[%s411 + $0xc0] sm:$0xff] %v436
                  %v438 = vld [vmem:[%s410 + $0xe0] sm:$0xff]
                  %439 = vst [vmem:[%s411 + $0xc8] sm:$0xff] %v438
                  %v440 = vld [vmem:[%s410 + $0xfc] sm:$0xff]
                  %441 = vst [vmem:[%s411 + $0xe0] sm:$0xff] %v440
                  %v442 = vld [vmem:[%s410 + $0x104] sm:$0xff]
                  %443 = vst [vmem:[%s411 + $0xe8] sm:$0xff] %v442
                  %v444 = vld [vmem:[%s410 + $0x120] sm:$0xff]
                  %445 = vst [vmem:[%s411 + $0x100] sm:$0xff] %v444
                  %v446 = vld [vmem:[%s410 + $0x128] sm:$0xff]
                  %447 = vst [vmem:[%s411 + $0x108] sm:$0xff] %v446
                  %v448 = vld [vmem:[%s410 + $0x144] sm:$0xff]
                  %449 = vst [vmem:[%s411 + $0x120] sm:$0xff] %v448
                  %v450 = vld [vmem:[%s410 + $0x14c] sm:$0xff]
                  %451 = vst [vmem:[%s411 + $0x128] sm:$0xff] %v450
                  %v452 = vld [vmem:[%s410 + $0x168] sm:$0xff]
                  %453 = vst [vmem:[%s411 + $0x140] sm:$0xff] %v452
                  %v454 = vld [vmem:[%s410 + $0x170] sm:$0xff]
                  %455 = vst [vmem:[%s411 + $0x148] sm:$0xff] %v454
                  %v456 = vld [vmem:[%s410 + $0x18c] sm:$0xff]
                  %457 = vst [vmem:[%s411 + $0x160] sm:$0xff] %v456
                  %v458 = vld [vmem:[%s410 + $0x194] sm:$0xff]
                  %459 = vst [vmem:[%s411 + $0x168] sm:$0xff] %v458
                  %v460 = vld [vmem:[%s410 + $0x1b0] sm:$0xff]
                  %461 = vst [vmem:[%s411 + $0x180] sm:$0xff] %v460
                  %v462 = vld [vmem:[%s410 + $0x1b8] sm:$0xff]
                  %463 = vst [vmem:[%s411 + $0x188] sm:$0xff] %v462
                  %v464 = vld [vmem:[%s410 + $0x1d4] sm:$0xff]
                  %465 = vst [vmem:[%s411 + $0x1a0] sm:$0xff] %v464
                  %v466 = vld [vmem:[%s410 + $0x1dc] sm:$0xff]
                  %467 = vst [vmem:[%s411 + $0x1a8] sm:$0xff] %v466
                  %v468 = vld [vmem:[%s410 + $0x1f8] sm:$0xff]
                  %469 = vst [vmem:[%s411 + $0x1c0] sm:$0xff] %v468
                  %v470 = vld [vmem:[%s410 + $0x200] sm:$0xff]
                  %471 = vst [vmem:[%s411 + $0x1c8] sm:$0xff] %v470
                  %v472 = vld [vmem:[%s410 + $0x21c] sm:$0xff]
                  %473 = vst [vmem:[%s411 + $0x1e0] sm:$0xff] %v472
                  %v474 = vld [vmem:[%s410 + $0x224] sm:$0xff]
                  %475 = vst [vmem:[%s411 + $0x1e8] sm:$0xff] %v474
                  %s476 = sadd.s32 1, %s409
                  %p477 = scmp.ge.s32.totalorder %s476, %s402
                  %s478 = scalar_select %p477, 0, %s476
                  %s479 = smul.u32 %s478, 16
                  %s480 = smul.u32 %s478, 16
                  %s481 = scalar_lea.vmem %s342, %s479
                  %s482 = scalar_lea.vmem %s332, %s480 [#allocation2]
                $region80: #{discriminator_forward.1} parent=74 // loop_footer
                  %s406 = sadd.s32 %s404, 1
                $region81: #{discriminator_forward.1} parent=74 // loop_footer_branch
                  %403 = sbr.rel target = $region77
                $region82: #{discriminator_forward.1} parent=74 // loop_exit
                  _
                %s483 = sshrl.u32 %s401, 1
                %s484 = sand.u32 %s401, 1
                %s485 = smul.u32 %s483, 2
                %s486 = smul.u32 8, %s485
                %s487 = scalar_lea.vmem %s342, %s486
                %s488 = smul.u32 8, %s485
                %s489 = scalar_lea.vmem %s332, %s488 [#allocation2]
                // While loop
                $region83: #{discriminator_forward.1} parent=74 // loop_pre_header
                  _
                $region84: #{discriminator_forward.1} parent=74 // loop_header
                  %s491 = sphi 0, %s493
                  %p492 = scmp.ge.s32.totalorder %s491, %s484
                  %s496 = sphi 0, %s533
                  %s497 = sphi %s487, %s536
                  %s498 = sphi %s489, %s537
                $region85: #{discriminator_forward.1} parent=74 // loop_header_branch
                  %495 = sbr.rel (%p492) target = $region89
                $region86: #{discriminator_forward.1} parent=74 // loop_body
                  %v499 = vld [vmem:[%s497] sm:$0xff]
                  %500 = vst [vmem:[%s498] sm:$0xff] %v499
                  %v501 = vld [vmem:[%s497 + $0x24] sm:$0xff]
                  %502 = vst [vmem:[%s498 + $0x20] sm:$0xff] %v501
                  %v503 = vld [vmem:[%s497 + $0x48] sm:$0xff]
                  %504 = vst [vmem:[%s498 + $0x40] sm:$0xff] %v503
                  %v505 = vld [vmem:[%s497 + $0x6c] sm:$0xff]
                  %506 = vst [vmem:[%s498 + $0x60] sm:$0xff] %v505
                  %v507 = vld [vmem:[%s497 + $0x90] sm:$0xff]
                  %508 = vst [vmem:[%s498 + $0x80] sm:$0xff] %v507
                  %v509 = vld [vmem:[%s497 + $0xb4] sm:$0xff]
                  %510 = vst [vmem:[%s498 + $0xa0] sm:$0xff] %v509
                  %v511 = vld [vmem:[%s497 + $0xd8] sm:$0xff]
                  %512 = vst [vmem:[%s498 + $0xc0] sm:$0xff] %v511
                  %v513 = vld [vmem:[%s497 + $0xfc] sm:$0xff]
                  %514 = vst [vmem:[%s498 + $0xe0] sm:$0xff] %v513
                  %v515 = vld [vmem:[%s497 + $0x120] sm:$0xff]
                  %516 = vst [vmem:[%s498 + $0x100] sm:$0xff] %v515
                  %v517 = vld [vmem:[%s497 + $0x144] sm:$0xff]
                  %518 = vst [vmem:[%s498 + $0x120] sm:$0xff] %v517
                  %v519 = vld [vmem:[%s497 + $0x168] sm:$0xff]
                  %520 = vst [vmem:[%s498 + $0x140] sm:$0xff] %v519
                  %v521 = vld [vmem:[%s497 + $0x18c] sm:$0xff]
                  %522 = vst [vmem:[%s498 + $0x160] sm:$0xff] %v521
                  %v523 = vld [vmem:[%s497 + $0x1b0] sm:$0xff]
                  %524 = vst [vmem:[%s498 + $0x180] sm:$0xff] %v523
                  %v525 = vld [vmem:[%s497 + $0x1d4] sm:$0xff]
                  %526 = vst [vmem:[%s498 + $0x1a0] sm:$0xff] %v525
                  %v527 = vld [vmem:[%s497 + $0x1f8] sm:$0xff]
                  %528 = vst [vmem:[%s498 + $0x1c0] sm:$0xff] %v527
                  %v529 = vld [vmem:[%s497 + $0x21c] sm:$0xff]
                  %530 = vst [vmem:[%s498 + $0x1e0] sm:$0xff] %v529
                  %s531 = sadd.s32 1, %s496
                  %p532 = scmp.ge.s32.totalorder %s531, %s484
                  %s533 = scalar_select %p532, 0, %s531
                  %s534 = smul.u32 %s533, 8
                  %s535 = smul.u32 %s533, 8
                  %s536 = scalar_lea.vmem %s487, %s534
                  %s537 = scalar_lea.vmem %s489, %s535 [#allocation2]
                $region87: #{discriminator_forward.1} parent=74 // loop_footer
                  %s493 = sadd.s32 %s491, 1
                $region88: #{discriminator_forward.1} parent=74 // loop_footer_branch
                  %490 = sbr.rel target = $region84
                $region89: #{discriminator_forward.1} parent=74 // loop_exit
                  _
              $region75: #{discriminator_forward.1} parent=59 // pred_fallthru
                _
              %p538 = pneg %p397
              // Predicated region
              $region90: #{discriminator_forward.1} parent=59 // pred_check
                _
              $region91: #{discriminator_forward.1} parent=59 // pred_check_branch
                %540 = sbr.rel (%p397) target = $region93
              $region92: #{discriminator_forward.1} parent=59 // pred_region
                %s541 = sand.u32 %s343, 7
                %s542 = ssub.s32 %s343, %s541
                %s543 = scalar_lea.vmem %s342, %s542
                %s544 = ssub.s32 %s343, %s541
                %s545 = scalar_lea.vmem %s332, %s544 [#allocation2]
                %s546 = sshrl.u32 %s343, 3
                %s547 = sshrl.u32 %s546, 1
                // While loop
                $region94: #{discriminator_forward.1} parent=92 // loop_pre_header
                  _
                $region95: #{discriminator_forward.1} parent=92 // loop_header
                  %s549 = sphi 0, %s551
                  %p550 = scmp.ge.s32.totalorder %s549, %s547
                  %s554 = sphi 0, %s623
                  %s555 = sphi %s342, %s626
                  %s556 = sphi %s332, %s627
                $region96: #{discriminator_forward.1} parent=92 // loop_header_branch
                  %553 = sbr.rel (%p550) target = $region100
                $region97: #{discriminator_forward.1} parent=92 // loop_body
                  %v557 = vld [vmem:[%s555] sm:$0xff]
                  %558 = vst [vmem:[%s556] sm:$0xff] %v557
                  %v559 = vld [vmem:[%s555 + $0x8] sm:$0xff]
                  %560 = vst [vmem:[%s556 + $0x8] sm:$0xff] %v559
                  %v561 = vld [vmem:[%s555 + $0x24] sm:$0xff]
                  %562 = vst [vmem:[%s556 + $0x20] sm:$0xff] %v561
                  %v563 = vld [vmem:[%s555 + $0x2c] sm:$0xff]
                  %564 = vst [vmem:[%s556 + $0x28] sm:$0xff] %v563
                  %v565 = vld [vmem:[%s555 + $0x48] sm:$0xff]
                  %566 = vst [vmem:[%s556 + $0x40] sm:$0xff] %v565
                  %v567 = vld [vmem:[%s555 + $0x50] sm:$0xff]
                  %568 = vst [vmem:[%s556 + $0x48] sm:$0xff] %v567
                  %v569 = vld [vmem:[%s555 + $0x6c] sm:$0xff]
                  %570 = vst [vmem:[%s556 + $0x60] sm:$0xff] %v569
                  %v571 = vld [vmem:[%s555 + $0x74] sm:$0xff]
                  %572 = vst [vmem:[%s556 + $0x68] sm:$0xff] %v571
                  %v573 = vld [vmem:[%s555 + $0x90] sm:$0xff]
                  %574 = vst [vmem:[%s556 + $0x80] sm:$0xff] %v573
                  %v575 = vld [vmem:[%s555 + $0x98] sm:$0xff]
                  %576 = vst [vmem:[%s556 + $0x88] sm:$0xff] %v575
                  %v577 = vld [vmem:[%s555 + $0xb4] sm:$0xff]
                  %578 = vst [vmem:[%s556 + $0xa0] sm:$0xff] %v577
                  %v579 = vld [vmem:[%s555 + $0xbc] sm:$0xff]
                  %580 = vst [vmem:[%s556 + $0xa8] sm:$0xff] %v579
                  %v581 = vld [vmem:[%s555 + $0xd8] sm:$0xff]
                  %582 = vst [vmem:[%s556 + $0xc0] sm:$0xff] %v581
                  %v583 = vld [vmem:[%s555 + $0xe0] sm:$0xff]
                  %584 = vst [vmem:[%s556 + $0xc8] sm:$0xff] %v583
                  %v585 = vld [vmem:[%s555 + $0xfc] sm:$0xff]
                  %586 = vst [vmem:[%s556 + $0xe0] sm:$0xff] %v585
                  %v587 = vld [vmem:[%s555 + $0x104] sm:$0xff]
                  %588 = vst [vmem:[%s556 + $0xe8] sm:$0xff] %v587
                  %v589 = vld [vmem:[%s555 + $0x120] sm:$0xff]
                  %590 = vst [vmem:[%s556 + $0x100] sm:$0xff] %v589
                  %v591 = vld [vmem:[%s555 + $0x128] sm:$0xff]
                  %592 = vst [vmem:[%s556 + $0x108] sm:$0xff] %v591
                  %v593 = vld [vmem:[%s555 + $0x144] sm:$0xff]
                  %594 = vst [vmem:[%s556 + $0x120] sm:$0xff] %v593
                  %v595 = vld [vmem:[%s555 + $0x14c] sm:$0xff]
                  %596 = vst [vmem:[%s556 + $0x128] sm:$0xff] %v595
                  %v597 = vld [vmem:[%s555 + $0x168] sm:$0xff]
                  %598 = vst [vmem:[%s556 + $0x140] sm:$0xff] %v597
                  %v599 = vld [vmem:[%s555 + $0x170] sm:$0xff]
                  %600 = vst [vmem:[%s556 + $0x148] sm:$0xff] %v599
                  %v601 = vld [vmem:[%s555 + $0x18c] sm:$0xff]
                  %602 = vst [vmem:[%s556 + $0x160] sm:$0xff] %v601
                  %v603 = vld [vmem:[%s555 + $0x194] sm:$0xff]
                  %604 = vst [vmem:[%s556 + $0x168] sm:$0xff] %v603
                  %v605 = vld [vmem:[%s555 + $0x1b0] sm:$0xff]
                  %606 = vst [vmem:[%s556 + $0x180] sm:$0xff] %v605
                  %v607 = vld [vmem:[%s555 + $0x1b8] sm:$0xff]
                  %608 = vst [vmem:[%s556 + $0x188] sm:$0xff] %v607
                  %v609 = vld [vmem:[%s555 + $0x1d4] sm:$0xff]
                  %610 = vst [vmem:[%s556 + $0x1a0] sm:$0xff] %v609
                  %v611 = vld [vmem:[%s555 + $0x1dc] sm:$0xff]
                  %612 = vst [vmem:[%s556 + $0x1a8] sm:$0xff] %v611
                  %v613 = vld [vmem:[%s555 + $0x1f8] sm:$0xff]
                  %614 = vst [vmem:[%s556 + $0x1c0] sm:$0xff] %v613
                  %v615 = vld [vmem:[%s555 + $0x200] sm:$0xff]
                  %616 = vst [vmem:[%s556 + $0x1c8] sm:$0xff] %v615
                  %v617 = vld [vmem:[%s555 + $0x21c] sm:$0xff]
                  %618 = vst [vmem:[%s556 + $0x1e0] sm:$0xff] %v617
                  %v619 = vld [vmem:[%s555 + $0x224] sm:$0xff]
                  %620 = vst [vmem:[%s556 + $0x1e8] sm:$0xff] %v619
                  %s621 = sadd.s32 1, %s554
                  %p622 = scmp.ge.s32.totalorder %s621, %s547
                  %s623 = scalar_select %p622, 0, %s621
                  %s624 = smul.u32 %s623, 16
                  %s625 = smul.u32 %s623, 16
                  %s626 = scalar_lea.vmem %s342, %s624
                  %s627 = scalar_lea.vmem %s332, %s625 [#allocation2]
                $region98: #{discriminator_forward.1} parent=92 // loop_footer
                  %s551 = sadd.s32 %s549, 1
                $region99: #{discriminator_forward.1} parent=92 // loop_footer_branch
                  %548 = sbr.rel target = $region95
                $region100: #{discriminator_forward.1} parent=92 // loop_exit
                  _
                %s628 = sshrl.u32 %s546, 1
                %s629 = sand.u32 %s546, 1
                %s630 = smul.u32 %s628, 2
                %s631 = smul.u32 8, %s630
                %s632 = scalar_lea.vmem %s342, %s631
                %s633 = smul.u32 8, %s630
                %s634 = scalar_lea.vmem %s332, %s633 [#allocation2]
                // While loop
                $region101: #{discriminator_forward.1} parent=92 // loop_pre_header
                  _
                $region102: #{discriminator_forward.1} parent=92 // loop_header
                  %s636 = sphi 0, %s638
                  %p637 = scmp.ge.s32.totalorder %s636, %s629
                  %s641 = sphi 0, %s678
                  %s642 = sphi %s632, %s681
                  %s643 = sphi %s634, %s682
                $region103: #{discriminator_forward.1} parent=92 // loop_header_branch
                  %640 = sbr.rel (%p637) target = $region107
                $region104: #{discriminator_forward.1} parent=92 // loop_body
                  %v644 = vld [vmem:[%s642] sm:$0xff]
                  %645 = vst [vmem:[%s643] sm:$0xff] %v644
                  %v646 = vld [vmem:[%s642 + $0x24] sm:$0xff]
                  %647 = vst [vmem:[%s643 + $0x20] sm:$0xff] %v646
                  %v648 = vld [vmem:[%s642 + $0x48] sm:$0xff]
                  %649 = vst [vmem:[%s643 + $0x40] sm:$0xff] %v648
                  %v650 = vld [vmem:[%s642 + $0x6c] sm:$0xff]
                  %651 = vst [vmem:[%s643 + $0x60] sm:$0xff] %v650
                  %v652 = vld [vmem:[%s642 + $0x90] sm:$0xff]
                  %653 = vst [vmem:[%s643 + $0x80] sm:$0xff] %v652
                  %v654 = vld [vmem:[%s642 + $0xb4] sm:$0xff]
                  %655 = vst [vmem:[%s643 + $0xa0] sm:$0xff] %v654
                  %v656 = vld [vmem:[%s642 + $0xd8] sm:$0xff]
                  %657 = vst [vmem:[%s643 + $0xc0] sm:$0xff] %v656
                  %v658 = vld [vmem:[%s642 + $0xfc] sm:$0xff]
                  %659 = vst [vmem:[%s643 + $0xe0] sm:$0xff] %v658
                  %v660 = vld [vmem:[%s642 + $0x120] sm:$0xff]
                  %661 = vst [vmem:[%s643 + $0x100] sm:$0xff] %v660
                  %v662 = vld [vmem:[%s642 + $0x144] sm:$0xff]
                  %663 = vst [vmem:[%s643 + $0x120] sm:$0xff] %v662
                  %v664 = vld [vmem:[%s642 + $0x168] sm:$0xff]
                  %665 = vst [vmem:[%s643 + $0x140] sm:$0xff] %v664
                  %v666 = vld [vmem:[%s642 + $0x18c] sm:$0xff]
                  %667 = vst [vmem:[%s643 + $0x160] sm:$0xff] %v666
                  %v668 = vld [vmem:[%s642 + $0x1b0] sm:$0xff]
                  %669 = vst [vmem:[%s643 + $0x180] sm:$0xff] %v668
                  %v670 = vld [vmem:[%s642 + $0x1d4] sm:$0xff]
                  %671 = vst [vmem:[%s643 + $0x1a0] sm:$0xff] %v670
                  %v672 = vld [vmem:[%s642 + $0x1f8] sm:$0xff]
                  %673 = vst [vmem:[%s643 + $0x1c0] sm:$0xff] %v672
                  %v674 = vld [vmem:[%s642 + $0x21c] sm:$0xff]
                  %675 = vst [vmem:[%s643 + $0x1e0] sm:$0xff] %v674
                  %s676 = sadd.s32 1, %s641
                  %p677 = scmp.ge.s32.totalorder %s676, %s629
                  %s678 = scalar_select %p677, 0, %s676
                  %s679 = smul.u32 %s678, 8
                  %s680 = smul.u32 %s678, 8
                  %s681 = scalar_lea.vmem %s632, %s679
                  %s682 = scalar_lea.vmem %s634, %s680 [#allocation2]
                $region105: #{discriminator_forward.1} parent=92 // loop_footer
                  %s638 = sadd.s32 %s636, 1
                $region106: #{discriminator_forward.1} parent=92 // loop_footer_branch
                  %635 = sbr.rel target = $region102
                $region107: #{discriminator_forward.1} parent=92 // loop_exit
                  _
                %s683 = sshll.u32 1, %s541
                %s684 = ssub.s32 %s683, 1
                loop: start=0, step=1, limit=1
                $region108: #{discriminator_forward.1} parent=92 // loop_pre_header
                  _
                $region109: #{discriminator_forward.1} parent=92 // loop_header
                  %s686 = sphi 0, %s690
                  %p687 = scmp.ge.s32.totalorder %s686, 1
                  %s691 = sphi %s543, %s543
                  %s692 = sphi %s545, %s545
                $region110: #{discriminator_forward.1} parent=92 // loop_header_branch
                  %689 = sbr.rel (%p687) target = $region114
                $region111: #{discriminator_forward.1} parent=92 // loop_body
                  %v693 = vld [vmem:[%s691] sm:%s684]
                  %694 = vst [vmem:[%s692] sm:%s684] %v693
                  %v695 = vld [vmem:[%s691 + $0x24] sm:%s684]
                  %696 = vst [vmem:[%s692 + $0x20] sm:%s684] %v695
                  %v697 = vld [vmem:[%s691 + $0x48] sm:%s684]
                  %698 = vst [vmem:[%s692 + $0x40] sm:%s684] %v697
                  %v699 = vld [vmem:[%s691 + $0x6c] sm:%s684]
                  %700 = vst [vmem:[%s692 + $0x60] sm:%s684] %v699
                  %v701 = vld [vmem:[%s691 + $0x90] sm:%s684]
                  %702 = vst [vmem:[%s692 + $0x80] sm:%s684] %v701
                  %v703 = vld [vmem:[%s691 + $0xb4] sm:%s684]
                  %704 = vst [vmem:[%s692 + $0xa0] sm:%s684] %v703
                  %v705 = vld [vmem:[%s691 + $0xd8] sm:%s684]
                  %706 = vst [vmem:[%s692 + $0xc0] sm:%s684] %v705
                  %v707 = vld [vmem:[%s691 + $0xfc] sm:%s684]
                  %708 = vst [vmem:[%s692 + $0xe0] sm:%s684] %v707
                  %v709 = vld [vmem:[%s691 + $0x120] sm:%s684]
                  %710 = vst [vmem:[%s692 + $0x100] sm:%s684] %v709
                  %v711 = vld [vmem:[%s691 + $0x144] sm:%s684]
                  %712 = vst [vmem:[%s692 + $0x120] sm:%s684] %v711
                  %v713 = vld [vmem:[%s691 + $0x168] sm:%s684]
                  %714 = vst [vmem:[%s692 + $0x140] sm:%s684] %v713
                  %v715 = vld [vmem:[%s691 + $0x18c] sm:%s684]
                  %716 = vst [vmem:[%s692 + $0x160] sm:%s684] %v715
                  %v717 = vld [vmem:[%s691 + $0x1b0] sm:%s684]
                  %718 = vst [vmem:[%s692 + $0x180] sm:%s684] %v717
                  %v719 = vld [vmem:[%s691 + $0x1d4] sm:%s684]
                  %720 = vst [vmem:[%s692 + $0x1a0] sm:%s684] %v719
                  %v721 = vld [vmem:[%s691 + $0x1f8] sm:%s684]
                  %722 = vst [vmem:[%s692 + $0x1c0] sm:%s684] %v721
                  %v723 = vld [vmem:[%s691 + $0x21c] sm:%s684]
                  %724 = vst [vmem:[%s692 + $0x1e0] sm:%s684] %v723
                $region112: #{discriminator_forward.1} parent=92 // loop_footer
                  %s690 = sadd.s32 1, %s686
                $region113: #{discriminator_forward.1} parent=92 // loop_footer_branch
                  %685 = sbr.rel target = $region109
                $region114: #{discriminator_forward.1} parent=92 // loop_exit
                  _
              $region93: #{discriminator_forward.1} parent=59 // pred_fallthru
                _
            $region60: #{discriminator_forward.1} parent=55 // pred_fallthru
              _
            // Predicated region
            $region61: #{discriminator_forward.1} parent=55 // pred_check
              %p351 = pneg %p347
            $region62: #{discriminator_forward.1} parent=55 // pred_check_branch
              %353 = sbr.rel (%p351) target = $region64
            $region63: #{discriminator_forward.1} parent=55 // pred_region
              %s354 = sshll.u32 1, %s343
              %s355 = ssub.s32 %s354, 1
              loop: start=0, step=1, limit=1
              $region65: #{discriminator_forward.1} parent=63 // loop_pre_header
                _
              $region66: #{discriminator_forward.1} parent=63 // loop_header
                %s357 = sphi 0, %s361
                %p358 = scmp.ge.s32.totalorder %s357, 1
                %s362 = sphi %s342, %s342
                %s363 = sphi %s332, %s332
              $region67: #{discriminator_forward.1} parent=63 // loop_header_branch
                %360 = sbr.rel (%p358) target = $region71
              $region68: #{discriminator_forward.1} parent=63 // loop_body
                %v364 = vld [vmem:[%s362] sm:%s355]
                %365 = vst [vmem:[%s363] sm:%s355] %v364
                %v366 = vld [vmem:[%s362 + $0x24] sm:%s355]
                %367 = vst [vmem:[%s363 + $0x20] sm:%s355] %v366
                %v368 = vld [vmem:[%s362 + $0x48] sm:%s355]
                %369 = vst [vmem:[%s363 + $0x40] sm:%s355] %v368
                %v370 = vld [vmem:[%s362 + $0x6c] sm:%s355]
                %371 = vst [vmem:[%s363 + $0x60] sm:%s355] %v370
                %v372 = vld [vmem:[%s362 + $0x90] sm:%s355]
                %373 = vst [vmem:[%s363 + $0x80] sm:%s355] %v372
                %v374 = vld [vmem:[%s362 + $0xb4] sm:%s355]
                %375 = vst [vmem:[%s363 + $0xa0] sm:%s355] %v374
                %v376 = vld [vmem:[%s362 + $0xd8] sm:%s355]
                %377 = vst [vmem:[%s363 + $0xc0] sm:%s355] %v376
                %v378 = vld [vmem:[%s362 + $0xfc] sm:%s355]
                %379 = vst [vmem:[%s363 + $0xe0] sm:%s355] %v378
                %v380 = vld [vmem:[%s362 + $0x120] sm:%s355]
                %381 = vst [vmem:[%s363 + $0x100] sm:%s355] %v380
                %v382 = vld [vmem:[%s362 + $0x144] sm:%s355]
                %383 = vst [vmem:[%s363 + $0x120] sm:%s355] %v382
                %v384 = vld [vmem:[%s362 + $0x168] sm:%s355]
                %385 = vst [vmem:[%s363 + $0x140] sm:%s355] %v384
                %v386 = vld [vmem:[%s362 + $0x18c] sm:%s355]
                %387 = vst [vmem:[%s363 + $0x160] sm:%s355] %v386
                %v388 = vld [vmem:[%s362 + $0x1b0] sm:%s355]
                %389 = vst [vmem:[%s363 + $0x180] sm:%s355] %v388
                %v390 = vld [vmem:[%s362 + $0x1d4] sm:%s355]
                %391 = vst [vmem:[%s363 + $0x1a0] sm:%s355] %v390
                %v392 = vld [vmem:[%s362 + $0x1f8] sm:%s355]
                %393 = vst [vmem:[%s363 + $0x1c0] sm:%s355] %v392
                %v394 = vld [vmem:[%s362 + $0x21c] sm:%s355]
                %395 = vst [vmem:[%s363 + $0x1e0] sm:%s355] %v394
              $region69: #{discriminator_forward.1} parent=63 // loop_footer
                %s361 = sadd.s32 1, %s357
              $region70: #{discriminator_forward.1} parent=63 // loop_footer_branch
                %356 = sbr.rel target = $region66
              $region71: #{discriminator_forward.1} parent=63 // loop_exit
                _
            $region64: #{discriminator_forward.1} parent=55 // pred_fallthru
              _
          $region56: #{discriminator_forward.1} parent=51 // pred_fallthru
            _
          %725 = vnop
        $region52: #{discriminator_forward.1} parent=47 // pred_fallthru
          _
        // Predicated region
        $region115: #{discriminator_forward.1} parent=47 // pred_check
          %p726 = pneg %p81
        $region116: #{discriminator_forward.1} parent=47 // pred_check_branch
          %728 = sbr.rel (%p726) target = $region118
        $region117: #{discriminator_forward.1} parent=47 // pred_region
          %s729 = sand.u32 %s71, 1
          %s730 = sand.u32 %s71, 1
          %s731 = smul.addr %s730, 64
          %s732 = scalar_lea.vmem [#allocation3], %s731
          %s733 = smul.u32 8, %s27
          %s734 = ssub.s32 9, %s733
          %p735 = scmp.lt.s32.totalorder %s734, 8
          %s736 = scalar_select %p735, %s734, 8
          %s737 = smul.u32 8, %s736
          %p738 = scmp.ne.s32.totalorder 0, %s737
          %s739 = smul.addr %s26, 18
          %s740 = sadd.s32 %s733, %s739
          %s741 = smul.addr %s740, 4
          %s742 = scalar_lea.vmem %s1, %s741
          %s743 = smul.u32 %s736, 4
          // Predicated region
          $region119: #{discriminator_forward.1} parent=117 // pred_check
            %p744 = pneg %p738
          $region120: #{discriminator_forward.1} parent=117 // pred_check_branch
            %746 = sbr.rel (%p744) target = $region122
          $region121: #{discriminator_forward.1} parent=117 // pred_region
            %p747 = scmp.lt.u32.totalorder %s743, 8
            %p748 = pneg %p747
            // Predicated region
            $region123: #{discriminator_forward.1} parent=121 // pred_check
              _
            $region124: #{discriminator_forward.1} parent=121 // pred_check_branch
              %750 = sbr.rel (%p747) target = $region126
            $region125: #{discriminator_forward.1} parent=121 // pred_region
              %s768 = sand.u32 %s743, 7
              %p769 = scmp.eq.s32.totalorder %s768, 0
              // Predicated region
              $region138: #{discriminator_forward.1} parent=125 // pred_check
                %p770 = pneg %p769
              $region139: #{discriminator_forward.1} parent=125 // pred_check_branch
                %772 = sbr.rel (%p770) target = $region141
              $region140: #{discriminator_forward.1} parent=125 // pred_region
                %s773 = sshrl.u32 %s743, 3
                %s774 = sshrl.u32 %s773, 4
                // While loop
                $region142: #{discriminator_forward.1} parent=140 // loop_pre_header
                  _
                $region143: #{discriminator_forward.1} parent=140 // loop_header
                  %s776 = sphi 0, %s778
                  %p777 = scmp.ge.s32.totalorder %s776, %s774
                  %s781 = sphi 0, %s850
                  %s782 = sphi %s742, %s853
                  %s783 = sphi %s732, %s854
                $region144: #{discriminator_forward.1} parent=140 // loop_header_branch
                  %780 = sbr.rel (%p777) target = $region148
                $region145: #{discriminator_forward.1} parent=140 // loop_body
                  %v784 = vld [vmem:[%s782] sm:$0xff]
                  %785 = vst [vmem:[%s783] sm:$0xff] %v784
                  %v786 = vld [vmem:[%s782 + $0x8] sm:$0xff]
                  %787 = vst [vmem:[%s783 + $0x8] sm:$0xff] %v786
                  %v788 = vld [vmem:[%s782 + $0x10] sm:$0xff]
                  %789 = vst [vmem:[%s783 + $0x10] sm:$0xff] %v788
                  %v790 = vld [vmem:[%s782 + $0x18] sm:$0xff]
                  %791 = vst [vmem:[%s783 + $0x18] sm:$0xff] %v790
                  %v792 = vld [vmem:[%s782 + $0x20] sm:$0xff]
                  %793 = vst [vmem:[%s783 + $0x20] sm:$0xff] %v792
                  %v794 = vld [vmem:[%s782 + $0x28] sm:$0xff]
                  %795 = vst [vmem:[%s783 + $0x28] sm:$0xff] %v794
                  %v796 = vld [vmem:[%s782 + $0x30] sm:$0xff]
                  %797 = vst [vmem:[%s783 + $0x30] sm:$0xff] %v796
                  %v798 = vld [vmem:[%s782 + $0x38] sm:$0xff]
                  %799 = vst [vmem:[%s783 + $0x38] sm:$0xff] %v798
                  %v800 = vld [vmem:[%s782 + $0x40] sm:$0xff]
                  %801 = vst [vmem:[%s783 + $0x40] sm:$0xff] %v800
                  %v802 = vld [vmem:[%s782 + $0x48] sm:$0xff]
                  %803 = vst [vmem:[%s783 + $0x48] sm:$0xff] %v802
                  %v804 = vld [vmem:[%s782 + $0x50] sm:$0xff]
                  %805 = vst [vmem:[%s783 + $0x50] sm:$0xff] %v804
                  %v806 = vld [vmem:[%s782 + $0x58] sm:$0xff]
                  %807 = vst [vmem:[%s783 + $0x58] sm:$0xff] %v806
                  %v808 = vld [vmem:[%s782 + $0x60] sm:$0xff]
                  %809 = vst [vmem:[%s783 + $0x60] sm:$0xff] %v808
                  %v810 = vld [vmem:[%s782 + $0x68] sm:$0xff]
                  %811 = vst [vmem:[%s783 + $0x68] sm:$0xff] %v810
                  %v812 = vld [vmem:[%s782 + $0x70] sm:$0xff]
                  %813 = vst [vmem:[%s783 + $0x70] sm:$0xff] %v812
                  %v814 = vld [vmem:[%s782 + $0x78] sm:$0xff]
                  %815 = vst [vmem:[%s783 + $0x78] sm:$0xff] %v814
                  %v816 = vld [vmem:[%s782 + $0x24] sm:$0xff]
                  %817 = vst [vmem:[%s783 + $0x20] sm:$0xff] %v816
                  %v818 = vld [vmem:[%s782 + $0x2c] sm:$0xff]
                  %819 = vst [vmem:[%s783 + $0x28] sm:$0xff] %v818
                  %v820 = vld [vmem:[%s782 + $0x34] sm:$0xff]
                  %821 = vst [vmem:[%s783 + $0x30] sm:$0xff] %v820
                  %v822 = vld [vmem:[%s782 + $0x3c] sm:$0xff]
                  %823 = vst [vmem:[%s783 + $0x38] sm:$0xff] %v822
                  %v824 = vld [vmem:[%s782 + $0x44] sm:$0xff]
                  %825 = vst [vmem:[%s783 + $0x40] sm:$0xff] %v824
                  %v826 = vld [vmem:[%s782 + $0x4c] sm:$0xff]
                  %827 = vst [vmem:[%s783 + $0x48] sm:$0xff] %v826
                  %v828 = vld [vmem:[%s782 + $0x54] sm:$0xff]
                  %829 = vst [vmem:[%s783 + $0x50] sm:$0xff] %v828
                  %v830 = vld [vmem:[%s782 + $0x5c] sm:$0xff]
                  %831 = vst [vmem:[%s783 + $0x58] sm:$0xff] %v830
                  %v832 = vld [vmem:[%s782 + $0x64] sm:$0xff]
                  %833 = vst [vmem:[%s783 + $0x60] sm:$0xff] %v832
                  %v834 = vld [vmem:[%s782 + $0x6c] sm:$0xff]
                  %835 = vst [vmem:[%s783 + $0x68] sm:$0xff] %v834
                  %v836 = vld [vmem:[%s782 + $0x74] sm:$0xff]
                  %837 = vst [vmem:[%s783 + $0x70] sm:$0xff] %v836
                  %v838 = vld [vmem:[%s782 + $0x7c] sm:$0xff]
                  %839 = vst [vmem:[%s783 + $0x78] sm:$0xff] %v838
                  %v840 = vld [vmem:[%s782 + $0x84] sm:$0xff]
                  %841 = vst [vmem:[%s783 + $0x80] sm:$0xff] %v840
                  %v842 = vld [vmem:[%s782 + $0x8c] sm:$0xff]
                  %843 = vst [vmem:[%s783 + $0x88] sm:$0xff] %v842
                  %v844 = vld [vmem:[%s782 + $0x94] sm:$0xff]
                  %845 = vst [vmem:[%s783 + $0x90] sm:$0xff] %v844
                  %v846 = vld [vmem:[%s782 + $0x9c] sm:$0xff]
                  %847 = vst [vmem:[%s783 + $0x98] sm:$0xff] %v846
                  %s848 = sadd.s32 1, %s781
                  %p849 = scmp.ge.s32.totalorder %s848, %s774
                  %s850 = scalar_select %p849, 0, %s848
                  %s851 = smul.u32 %s850, 128
                  %s852 = smul.u32 %s850, 128
                  %s853 = scalar_lea.vmem %s742, %s851
                  %s854 = scalar_lea.vmem %s732, %s852 [#allocation3]
                $region146: #{discriminator_forward.1} parent=140 // loop_footer
                  %s778 = sadd.s32 %s776, 1
                $region147: #{discriminator_forward.1} parent=140 // loop_footer_branch
                  %775 = sbr.rel target = $region143
                $region148: #{discriminator_forward.1} parent=140 // loop_exit
                  _
                %s855 = sshrl.u32 %s773, 4
                %s856 = sand.u32 %s773, 15
                %s857 = smul.u32 %s855, 16
                %s858 = smul.u32 8, %s857
                %s859 = scalar_lea.vmem %s742, %s858
                %s860 = smul.u32 8, %s857
                %s861 = scalar_lea.vmem %s732, %s860 [#allocation3]
                // While loop
                $region149: #{discriminator_forward.1} parent=140 // loop_pre_header
                  _
                $region150: #{discriminator_forward.1} parent=140 // loop_header
                  %s863 = sphi 0, %s865
                  %p864 = scmp.ge.s32.totalorder %s863, %s856
                  %s868 = sphi 0, %s877
                  %s869 = sphi %s859, %s880
                  %s870 = sphi %s861, %s881
                $region151: #{discriminator_forward.1} parent=140 // loop_header_branch
                  %867 = sbr.rel (%p864) target = $region155
                $region152: #{discriminator_forward.1} parent=140 // loop_body
                  %v871 = vld [vmem:[%s869] sm:$0xff]
                  %872 = vst [vmem:[%s870] sm:$0xff] %v871
                  %v873 = vld [vmem:[%s869 + $0x24] sm:$0xff]
                  %874 = vst [vmem:[%s870 + $0x20] sm:$0xff] %v873
                  %s875 = sadd.s32 1, %s868
                  %p876 = scmp.ge.s32.totalorder %s875, %s856
                  %s877 = scalar_select %p876, 0, %s875
                  %s878 = smul.u32 %s877, 8
                  %s879 = smul.u32 %s877, 8
                  %s880 = scalar_lea.vmem %s859, %s878
                  %s881 = scalar_lea.vmem %s861, %s879 [#allocation3]
                $region153: #{discriminator_forward.1} parent=140 // loop_footer
                  %s865 = sadd.s32 %s863, 1
                $region154: #{discriminator_forward.1} parent=140 // loop_footer_branch
                  %862 = sbr.rel target = $region150
                $region155: #{discriminator_forward.1} parent=140 // loop_exit
                  _
              $region141: #{discriminator_forward.1} parent=125 // pred_fallthru
                _
              %p882 = pneg %p769
              // Predicated region
              $region156: #{discriminator_forward.1} parent=125 // pred_check
                _
              $region157: #{discriminator_forward.1} parent=125 // pred_check_branch
                %884 = sbr.rel (%p769) target = $region159
              $region158: #{discriminator_forward.1} parent=125 // pred_region
                %s885 = sand.u32 %s743, 7
                %s886 = ssub.s32 %s743, %s885
                %s887 = scalar_lea.vmem %s742, %s886
                %s888 = ssub.s32 %s743, %s885
                %s889 = scalar_lea.vmem %s732, %s888 [#allocation3]
                %s890 = sshrl.u32 %s743, 3
                %s891 = sshrl.u32 %s890, 4
                // While loop
                $region160: #{discriminator_forward.1} parent=158 // loop_pre_header
                  _
                $region161: #{discriminator_forward.1} parent=158 // loop_header
                  %s893 = sphi 0, %s895
                  %p894 = scmp.ge.s32.totalorder %s893, %s891
                  %s898 = sphi 0, %s967
                  %s899 = sphi %s742, %s970
                  %s900 = sphi %s732, %s971
                $region162: #{discriminator_forward.1} parent=158 // loop_header_branch
                  %897 = sbr.rel (%p894) target = $region166
                $region163: #{discriminator_forward.1} parent=158 // loop_body
                  %v901 = vld [vmem:[%s899] sm:$0xff]
                  %902 = vst [vmem:[%s900] sm:$0xff] %v901
                  %v903 = vld [vmem:[%s899 + $0x8] sm:$0xff]
                  %904 = vst [vmem:[%s900 + $0x8] sm:$0xff] %v903
                  %v905 = vld [vmem:[%s899 + $0x10] sm:$0xff]
                  %906 = vst [vmem:[%s900 + $0x10] sm:$0xff] %v905
                  %v907 = vld [vmem:[%s899 + $0x18] sm:$0xff]
                  %908 = vst [vmem:[%s900 + $0x18] sm:$0xff] %v907
                  %v909 = vld [vmem:[%s899 + $0x20] sm:$0xff]
                  %910 = vst [vmem:[%s900 + $0x20] sm:$0xff] %v909
                  %v911 = vld [vmem:[%s899 + $0x28] sm:$0xff]
                  %912 = vst [vmem:[%s900 + $0x28] sm:$0xff] %v911
                  %v913 = vld [vmem:[%s899 + $0x30] sm:$0xff]
                  %914 = vst [vmem:[%s900 + $0x30] sm:$0xff] %v913
                  %v915 = vld [vmem:[%s899 + $0x38] sm:$0xff]
                  %916 = vst [vmem:[%s900 + $0x38] sm:$0xff] %v915
                  %v917 = vld [vmem:[%s899 + $0x40] sm:$0xff]
                  %918 = vst [vmem:[%s900 + $0x40] sm:$0xff] %v917
                  %v919 = vld [vmem:[%s899 + $0x48] sm:$0xff]
                  %920 = vst [vmem:[%s900 + $0x48] sm:$0xff] %v919
                  %v921 = vld [vmem:[%s899 + $0x50] sm:$0xff]
                  %922 = vst [vmem:[%s900 + $0x50] sm:$0xff] %v921
                  %v923 = vld [vmem:[%s899 + $0x58] sm:$0xff]
                  %924 = vst [vmem:[%s900 + $0x58] sm:$0xff] %v923
                  %v925 = vld [vmem:[%s899 + $0x60] sm:$0xff]
                  %926 = vst [vmem:[%s900 + $0x60] sm:$0xff] %v925
                  %v927 = vld [vmem:[%s899 + $0x68] sm:$0xff]
                  %928 = vst [vmem:[%s900 + $0x68] sm:$0xff] %v927
                  %v929 = vld [vmem:[%s899 + $0x70] sm:$0xff]
                  %930 = vst [vmem:[%s900 + $0x70] sm:$0xff] %v929
                  %v931 = vld [vmem:[%s899 + $0x78] sm:$0xff]
                  %932 = vst [vmem:[%s900 + $0x78] sm:$0xff] %v931
                  %v933 = vld [vmem:[%s899 + $0x24] sm:$0xff]
                  %934 = vst [vmem:[%s900 + $0x20] sm:$0xff] %v933
                  %v935 = vld [vmem:[%s899 + $0x2c] sm:$0xff]
                  %936 = vst [vmem:[%s900 + $0x28] sm:$0xff] %v935
                  %v937 = vld [vmem:[%s899 + $0x34] sm:$0xff]
                  %938 = vst [vmem:[%s900 + $0x30] sm:$0xff] %v937
                  %v939 = vld [vmem:[%s899 + $0x3c] sm:$0xff]
                  %940 = vst [vmem:[%s900 + $0x38] sm:$0xff] %v939
                  %v941 = vld [vmem:[%s899 + $0x44] sm:$0xff]
                  %942 = vst [vmem:[%s900 + $0x40] sm:$0xff] %v941
                  %v943 = vld [vmem:[%s899 + $0x4c] sm:$0xff]
                  %944 = vst [vmem:[%s900 + $0x48] sm:$0xff] %v943
                  %v945 = vld [vmem:[%s899 + $0x54] sm:$0xff]
                  %946 = vst [vmem:[%s900 + $0x50] sm:$0xff] %v945
                  %v947 = vld [vmem:[%s899 + $0x5c] sm:$0xff]
                  %948 = vst [vmem:[%s900 + $0x58] sm:$0xff] %v947
                  %v949 = vld [vmem:[%s899 + $0x64] sm:$0xff]
                  %950 = vst [vmem:[%s900 + $0x60] sm:$0xff] %v949
                  %v951 = vld [vmem:[%s899 + $0x6c] sm:$0xff]
                  %952 = vst [vmem:[%s900 + $0x68] sm:$0xff] %v951
                  %v953 = vld [vmem:[%s899 + $0x74] sm:$0xff]
                  %954 = vst [vmem:[%s900 + $0x70] sm:$0xff] %v953
                  %v955 = vld [vmem:[%s899 + $0x7c] sm:$0xff]
                  %956 = vst [vmem:[%s900 + $0x78] sm:$0xff] %v955
                  %v957 = vld [vmem:[%s899 + $0x84] sm:$0xff]
                  %958 = vst [vmem:[%s900 + $0x80] sm:$0xff] %v957
                  %v959 = vld [vmem:[%s899 + $0x8c] sm:$0xff]
                  %960 = vst [vmem:[%s900 + $0x88] sm:$0xff] %v959
                  %v961 = vld [vmem:[%s899 + $0x94] sm:$0xff]
                  %962 = vst [vmem:[%s900 + $0x90] sm:$0xff] %v961
                  %v963 = vld [vmem:[%s899 + $0x9c] sm:$0xff]
                  %964 = vst [vmem:[%s900 + $0x98] sm:$0xff] %v963
                  %s965 = sadd.s32 1, %s898
                  %p966 = scmp.ge.s32.totalorder %s965, %s891
                  %s967 = scalar_select %p966, 0, %s965
                  %s968 = smul.u32 %s967, 128
                  %s969 = smul.u32 %s967, 128
                  %s970 = scalar_lea.vmem %s742, %s968
                  %s971 = scalar_lea.vmem %s732, %s969 [#allocation3]
                $region164: #{discriminator_forward.1} parent=158 // loop_footer
                  %s895 = sadd.s32 %s893, 1
                $region165: #{discriminator_forward.1} parent=158 // loop_footer_branch
                  %892 = sbr.rel target = $region161
                $region166: #{discriminator_forward.1} parent=158 // loop_exit
                  _
                %s972 = sshrl.u32 %s890, 4
                %s973 = sand.u32 %s890, 15
                %s974 = smul.u32 %s972, 16
                %s975 = smul.u32 8, %s974
                %s976 = scalar_lea.vmem %s742, %s975
                %s977 = smul.u32 8, %s974
                %s978 = scalar_lea.vmem %s732, %s977 [#allocation3]
                // While loop
                $region167: #{discriminator_forward.1} parent=158 // loop_pre_header
                  _
                $region168: #{discriminator_forward.1} parent=158 // loop_header
                  %s980 = sphi 0, %s982
                  %p981 = scmp.ge.s32.totalorder %s980, %s973
                  %s985 = sphi 0, %s994
                  %s986 = sphi %s976, %s997
                  %s987 = sphi %s978, %s998
                $region169: #{discriminator_forward.1} parent=158 // loop_header_branch
                  %984 = sbr.rel (%p981) target = $region173
                $region170: #{discriminator_forward.1} parent=158 // loop_body
                  %v988 = vld [vmem:[%s986] sm:$0xff]
                  %989 = vst [vmem:[%s987] sm:$0xff] %v988
                  %v990 = vld [vmem:[%s986 + $0x24] sm:$0xff]
                  %991 = vst [vmem:[%s987 + $0x20] sm:$0xff] %v990
                  %s992 = sadd.s32 1, %s985
                  %p993 = scmp.ge.s32.totalorder %s992, %s973
                  %s994 = scalar_select %p993, 0, %s992
                  %s995 = smul.u32 %s994, 8
                  %s996 = smul.u32 %s994, 8
                  %s997 = scalar_lea.vmem %s976, %s995
                  %s998 = scalar_lea.vmem %s978, %s996 [#allocation3]
                $region171: #{discriminator_forward.1} parent=158 // loop_footer
                  %s982 = sadd.s32 %s980, 1
                $region172: #{discriminator_forward.1} parent=158 // loop_footer_branch
                  %979 = sbr.rel target = $region168
                $region173: #{discriminator_forward.1} parent=158 // loop_exit
                  _
                %s999 = sshll.u32 1, %s885
                %s1000 = ssub.s32 %s999, 1
                loop: start=0, step=1, limit=1
                $region174: #{discriminator_forward.1} parent=158 // loop_pre_header
                  _
                $region175: #{discriminator_forward.1} parent=158 // loop_header
                  %s1002 = sphi 0, %s1006
                  %p1003 = scmp.ge.s32.totalorder %s1002, 1
                  %s1007 = sphi %s887, %s887
                  %s1008 = sphi %s889, %s889
                $region176: #{discriminator_forward.1} parent=158 // loop_header_branch
                  %1005 = sbr.rel (%p1003) target = $region180
                $region177: #{discriminator_forward.1} parent=158 // loop_body
                  %v1009 = vld [vmem:[%s1007] sm:%s1000]
                  %1010 = vst [vmem:[%s1008] sm:%s1000] %v1009
                  %v1011 = vld [vmem:[%s1007 + $0x24] sm:%s1000]
                  %1012 = vst [vmem:[%s1008 + $0x20] sm:%s1000] %v1011
                $region178: #{discriminator_forward.1} parent=158 // loop_footer
                  %s1006 = sadd.s32 1, %s1002
                $region179: #{discriminator_forward.1} parent=158 // loop_footer_branch
                  %1001 = sbr.rel target = $region175
                $region180: #{discriminator_forward.1} parent=158 // loop_exit
                  _
              $region159: #{discriminator_forward.1} parent=125 // pred_fallthru
                _
            $region126: #{discriminator_forward.1} parent=121 // pred_fallthru
              _
            // Predicated region
            $region127: #{discriminator_forward.1} parent=121 // pred_check
              %p751 = pneg %p747
            $region128: #{discriminator_forward.1} parent=121 // pred_check_branch
              %753 = sbr.rel (%p751) target = $region130
            $region129: #{discriminator_forward.1} parent=121 // pred_region
              %s754 = sshll.u32 1, %s743
              %s755 = ssub.s32 %s754, 1
              loop: start=0, step=1, limit=1
              $region131: #{discriminator_forward.1} parent=129 // loop_pre_header
                _
              $region132: #{discriminator_forward.1} parent=129 // loop_header
                %s757 = sphi 0, %s761
                %p758 = scmp.ge.s32.totalorder %s757, 1
                %s762 = sphi %s742, %s742
                %s763 = sphi %s732, %s732
              $region133: #{discriminator_forward.1} parent=129 // loop_header_branch
                %760 = sbr.rel (%p758) target = $region137
              $region134: #{discriminator_forward.1} parent=129 // loop_body
                %v764 = vld [vmem:[%s762] sm:%s755]
                %765 = vst [vmem:[%s763] sm:%s755] %v764
                %v766 = vld [vmem:[%s762 + $0x24] sm:%s755]
                %767 = vst [vmem:[%s763 + $0x20] sm:%s755] %v766
              $region135: #{discriminator_forward.1} parent=129 // loop_footer
                %s761 = sadd.s32 1, %s757
              $region136: #{discriminator_forward.1} parent=129 // loop_footer_branch
                %756 = sbr.rel target = $region132
              $region137: #{discriminator_forward.1} parent=129 // loop_exit
                _
            $region130: #{discriminator_forward.1} parent=121 // pred_fallthru
              _
          $region122: #{discriminator_forward.1} parent=117 // pred_fallthru
            _
          %1013 = vnop
        $region118: #{discriminator_forward.1} parent=47 // pred_fallthru
          _
      $region48: #{discriminator_forward.1} parent=5 // pred_fallthru
        _
      %p1014 = scmp.le.s32.totalorder 1, %s19
      %p1015 = scmp.lt.s32.totalorder %s19, 5
      %p1016 = pnand %p1014, %p1015
      %p1017 = pneg %p1016
      // Predicated region
      $region181: #{discriminator_forward.1} parent=5 // pred_check
        _
      $region182: #{discriminator_forward.1} parent=5 // pred_check_branch
        %1019 = sbr.rel (%p1016) target = $region184
      $region183: #{discriminator_forward.1} parent=5 // pred_region
        %s1020 = ssub.s32 %s19, 1
        %s1021 = sand.u32 %s46, 1
        %s1022 = sand.u32 %s46, 1
        %s1023 = smul.addr %s1022, 512
        %s1024 = scalar_lea.vmem [#allocation2], %s1023
        // Predicated region
        $region185: #{discriminator_forward.1} parent=183 // pred_check
          %p1025 = pneg %p59
        $region186: #{discriminator_forward.1} parent=183 // pred_check_branch
          %1027 = sbr.rel (%p1025) target = $region188
        $region187: #{discriminator_forward.1} parent=183 // pred_region
          _
        $region188: #{discriminator_forward.1} parent=183 // pred_fallthru
          _
        %s1028 = sand.u32 %s74, 1
        %s1029 = sand.u32 %s74, 1
        %s1030 = smul.addr %s1029, 64
        %s1031 = scalar_lea.vmem [#allocation3], %s1030
        // Predicated region
        $region189: #{discriminator_forward.1} parent=183 // pred_check
          %p1032 = pneg %p87
        $region190: #{discriminator_forward.1} parent=183 // pred_check_branch
          %1034 = sbr.rel (%p1032) target = $region192
        $region191: #{discriminator_forward.1} parent=183 // pred_region
          _
        $region192: #{discriminator_forward.1} parent=183 // pred_fallthru
          _
        %s1035 = sand.u32 %s46, 1
        %s1036 = sand.u32 %s46, 1
        %s1037 = smul.addr %s1036, 512
        %s1038 = scalar_lea.vmem [#allocation2], %s1037
        %p1039 = pneg %p59
        %p1040 = pneg %p56
        %s1041 = sand.u32 %s74, 1
        %s1042 = sand.u32 %s74, 1
        %s1043 = smul.addr %s1042, 64
        %s1044 = scalar_lea.vmem [#allocation3], %s1043
        %p1045 = pneg %p87
        %p1046 = pneg %p84
        %p1047 = pneg %p108
        %p1048 = pneg %p105
        %p1049 = pneg %p129
        %p1050 = pneg %p126
        %p1051 = pneg %p150
        %p1052 = pneg %p147
        %p1053 = pneg %p171
        %p1054 = pneg %p168
        %p1055 = pneg %p192
        %p1056 = pneg %p189
        %p1057 = pneg %p213
        %p1058 = pneg %p210
        %p1059 = pneg %p234
        %p1060 = pneg %p231
        %p1061 = pneg %p255
        %p1062 = pneg %p252
        %p1063 = pneg %p283
        %p1064 = pneg %p280
        %s1065 = sand.u32 %s270, 1
        %s1066 = scalar_lea.sflag [#allocation5], %s1065
        %s1067 = sand.u32 %s270, 1
        %s1068 = smul.addr %s1067, 8
        %s1069 = scalar_lea.vmem [#allocation4], %s1068
        %s1070 = smul.u32 8, %s29
        %s1071 = ssub.s32 9, %s1070
        %p1072 = scmp.lt.s32.totalorder %s1071, 8
        %s1073 = scalar_select %p1072, %s1071, 8
        %s1074 = smul.u32 64, %s1073
        %s1075 = smul.u32 8, %s29
        %s1076 = ssub.s32 9, %s1075
        %p1077 = scmp.lt.s32.totalorder %s1076, 8
        %s1078 = scalar_select %p1077, %s1076, 8
        %s1079 = smul.u32 8, %s1078
        %s1080 = smul.u32 8, %s29
        %s1081 = ssub.s32 9, %s1080
        %p1082 = scmp.lt.s32.totalorder %s1081, 8
        %s1083 = scalar_select %p1082, %s1081, 8
        %v1085 = vld [vmem:[%s1024] sm:$0xff]
        %v1086 = vld [vmem:[%s1024 + $0x8] sm:$0xff]
        %v1087 = vld [vmem:[%s1024 + $0x10] sm:$0xff]
        %v1088 = vld [vmem:[%s1024 + $0x18] sm:$0xff]
        %v1089 = vld [vmem:[%s1024 + $0x20] sm:$0xff]
        %v1090 = vld [vmem:[%s1024 + $0x28] sm:$0xff]
        %v1091 = vld [vmem:[%s1024 + $0x30] sm:$0xff]
        %v1092 = vld [vmem:[%s1024 + $0x38] sm:$0xff]
        %v1093 = vld [vmem:[%s1024 + $0x40] sm:$0xff]
        %v1094 = vld [vmem:[%s1024 + $0x48] sm:$0xff]
        %v1095 = vld [vmem:[%s1024 + $0x50] sm:$0xff]
        %v1096 = vld [vmem:[%s1024 + $0x58] sm:$0xff]
        %v1097 = vld [vmem:[%s1024 + $0x60] sm:$0xff]
        %v1098 = vld [vmem:[%s1024 + $0x68] sm:$0xff]
        %v1099 = vld [vmem:[%s1024 + $0x70] sm:$0xff]
        %v1100 = vld [vmem:[%s1024 + $0x78] sm:$0xff]
        %v1101 = vld [vmem:[%s1024 + $0x80] sm:$0xff]
        %v1102 = vld [vmem:[%s1024 + $0x88] sm:$0xff]
        %v1103 = vld [vmem:[%s1024 + $0x90] sm:$0xff]
        %v1104 = vld [vmem:[%s1024 + $0x98] sm:$0xff]
        %v1105 = vld [vmem:[%s1024 + $0xa0] sm:$0xff]
        %v1106 = vld [vmem:[%s1024 + $0xa8] sm:$0xff]
        %v1107 = vld [vmem:[%s1024 + $0xb0] sm:$0xff]
        %v1108 = vld [vmem:[%s1024 + $0xb8] sm:$0xff]
        %v1109 = vld [vmem:[%s1024 + $0xc0] sm:$0xff]
        %v1110 = vld [vmem:[%s1024 + $0xc8] sm:$0xff]
        %v1111 = vld [vmem:[%s1024 + $0xd0] sm:$0xff]
        %v1112 = vld [vmem:[%s1024 + $0xd8] sm:$0xff]
        %v1113 = vld [vmem:[%s1024 + $0xe0] sm:$0xff]
        %v1114 = vld [vmem:[%s1024 + $0xe8] sm:$0xff]
        %v1115 = vld [vmem:[%s1024 + $0xf0] sm:$0xff]
        %v1116 = vld [vmem:[%s1024 + $0xf8] sm:$0xff]
        %v1117 = vld [vmem:[%s1024 + $0x100] sm:$0xff]
        %v1118 = vld [vmem:[%s1024 + $0x108] sm:$0xff]
        %v1119 = vld [vmem:[%s1024 + $0x110] sm:$0xff]
        %v1120 = vld [vmem:[%s1024 + $0x118] sm:$0xff]
        %v1121 = vld [vmem:[%s1024 + $0x120] sm:$0xff]
        %v1122 = vld [vmem:[%s1024 + $0x128] sm:$0xff]
        %v1123 = vld [vmem:[%s1024 + $0x130] sm:$0xff]
        %v1124 = vld [vmem:[%s1024 + $0x138] sm:$0xff]
        %v1125 = vld [vmem:[%s1024 + $0x140] sm:$0xff]
        %v1126 = vld [vmem:[%s1024 + $0x148] sm:$0xff]
        %v1127 = vld [vmem:[%s1024 + $0x150] sm:$0xff]
        %v1128 = vld [vmem:[%s1024 + $0x158] sm:$0xff]
        %v1129 = vld [vmem:[%s1024 + $0x160] sm:$0xff]
        %v1130 = vld [vmem:[%s1024 + $0x168] sm:$0xff]
        %v1131 = vld [vmem:[%s1024 + $0x170] sm:$0xff]
        %v1132 = vld [vmem:[%s1024 + $0x178] sm:$0xff]
        %v1133 = vld [vmem:[%s1024 + $0x180] sm:$0xff]
        %v1134 = vld [vmem:[%s1024 + $0x188] sm:$0xff]
        %v1135 = vld [vmem:[%s1024 + $0x190] sm:$0xff]
        %v1136 = vld [vmem:[%s1024 + $0x198] sm:$0xff]
        %v1137 = vld [vmem:[%s1024 + $0x1a0] sm:$0xff]
        %v1138 = vld [vmem:[%s1024 + $0x1a8] sm:$0xff]
        %v1139 = vld [vmem:[%s1024 + $0x1b0] sm:$0xff]
        %v1140 = vld [vmem:[%s1024 + $0x1b8] sm:$0xff]
        %v1141 = vld [vmem:[%s1024 + $0x1c0] sm:$0xff]
        %v1142 = vld [vmem:[%s1024 + $0x1c8] sm:$0xff]
        %v1143 = vld [vmem:[%s1024 + $0x1d0] sm:$0xff]
        %v1144 = vld [vmem:[%s1024 + $0x1d8] sm:$0xff]
        %v1145 = vld [vmem:[%s1024 + $0x1e0] sm:$0xff]
        %v1146 = vld [vmem:[%s1024 + $0x1e8] sm:$0xff]
        %v1147 = vld [vmem:[%s1024 + $0x1f0] sm:$0xff]
        %v1148 = vld [vmem:[%s1024 + $0x1f8] sm:$0xff]
        %v1149 = vld [vmem:[%s1031] sm:$0xff]
        %v1150 = vld [vmem:[%s1031 + $0x8] sm:$0xff]
        %v1151 = vld [vmem:[%s1031 + $0x10] sm:$0xff]
        %v1152 = vld [vmem:[%s1031 + $0x18] sm:$0xff]
        %v1153 = vld [vmem:[%s1031 + $0x20] sm:$0xff]
        %v1154 = vld [vmem:[%s1031 + $0x28] sm:$0xff]
        %v1155 = vld [vmem:[%s1031 + $0x30] sm:$0xff]
        %v1156 = vld [vmem:[%s1031 + $0x38] sm:$0xff]
        %v1157 = vld [vmem:[%s9] sm:$0xff]
        %v1158 = vld [vmem:[%s9 + $0x8] sm:$0xff]
        %v1159 = vld [vmem:[%s9 + $0x10] sm:$0xff]
        %v1160 = vld [vmem:[%s9 + $0x18] sm:$0xff]
        %v1161 = vld [vmem:[%s9 + $0x20] sm:$0xff]
        %v1162 = vld [vmem:[%s9 + $0x28] sm:$0xff]
        %v1163 = vld [vmem:[%s9 + $0x30] sm:$0xff]
        %v1164 = vld [vmem:[%s9 + $0x38] sm:$0xff]
        %v1165 = vld [vmem:[%s9 + $0x40] sm:$0xff]
        %v1166 = vld [vmem:[%s9 + $0x48] sm:$0xff]
        %v1167 = vld [vmem:[%s9 + $0x50] sm:$0xff]
        %v1168 = vld [vmem:[%s9 + $0x58] sm:$0xff]
        %v1169 = vld [vmem:[%s9 + $0x60] sm:$0xff]
        %v1170 = vld [vmem:[%s9 + $0x68] sm:$0xff]
        %v1171 = vld [vmem:[%s9 + $0x70] sm:$0xff]
        %v1172 = vld [vmem:[%s9 + $0x78] sm:$0xff]
        %v1173 = vld [vmem:[%s2] sm:$0xf]
        %v1174 = vld [vmem:[%s2 + $0x4] sm:$0xf]
        %v1175 = vld [vmem:[%s2 + $0x8] sm:$0xf]
        %v1176 = vld [vmem:[%s2 + $0xc] sm:$0xf]
        %v1177 = vld [vmem:[%s2 + $0x10] sm:$0xf]
        %v1178 = vld [vmem:[%s2 + $0x14] sm:$0xf]
        %v1179 = vld [vmem:[%s2 + $0x18] sm:$0xf]
        %v1180 = vld [vmem:[%s2 + $0x1c] sm:$0xf]
        %v1181 = vld [vmem:[%s2 + $0x20] sm:$0xf]
        %v1182 = vld [vmem:[%s2 + $0x24] sm:$0xf]
        %v1183 = vld [vmem:[%s2 + $0x28] sm:$0xf]
        %v1184 = vld [vmem:[%s2 + $0x2c] sm:$0xf]
        %v1185 = vld [vmem:[%s2 + $0x30] sm:$0xf]
        %v1186 = vld [vmem:[%s2 + $0x34] sm:$0xf]
        %v1187 = vld [vmem:[%s2 + $0x38] sm:$0xf]
        %v1188 = vld [vmem:[%s2 + $0x3c] sm:$0xf]
        %v1205 = vunpack.c.l.b16 %v1173
        %v1206 = vunpack.c.l.b16 %v1174
        %v1207 = vunpack.c.l.b16 %v1175
        %v1208 = vunpack.c.l.b16 %v1176
        %v1209 = vunpack.c.l.b16 %v1177
        %v1210 = vunpack.c.l.b16 %v1178
        %v1211 = vunpack.c.l.b16 %v1179
        %v1212 = vunpack.c.l.b16 %v1180
        %v1213 = vunpack.c.l.b16 %v1181
        %v1214 = vunpack.c.l.b16 %v1182
        %v1215 = vunpack.c.l.b16 %v1183
        %v1216 = vunpack.c.l.b16 %v1184
        %v1217 = vunpack.c.l.b16 %v1185
        %v1218 = vunpack.c.l.b16 %v1186
        %v1219 = vunpack.c.l.b16 %v1187
        %v1220 = vunpack.c.l.b16 %v1188
        %v1221 = vpack.c.b16 %v1206, %v1205
        %v1222 = vpack.c.b16 %v1208, %v1207
        %v1223 = vpack.c.b16 %v1210, %v1209
        %v1224 = vpack.c.b16 %v1212, %v1211
        %v1225 = vpack.c.b16 %v1214, %v1213
        %v1226 = vpack.c.b16 %v1216, %v1215
        %v1227 = vpack.c.b16 %v1218, %v1217
        %v1228 = vpack.c.b16 %v1220, %v1219
        %v1301 = vunpack.c.l.b16 %v1085
        %v1302 = vunpack.c.h.b16 %v1085
        %v1303 = vunpack.c.l.b16 %v1086
        %v1304 = vunpack.c.h.b16 %v1086
        %v1305 = vunpack.c.l.b16 %v1087
        %v1306 = vunpack.c.h.b16 %v1087
        %v1307 = vunpack.c.l.b16 %v1088
        %v1308 = vunpack.c.h.b16 %v1088
        %v1309 = vunpack.c.l.b16 %v1089
        %v1310 = vunpack.c.h.b16 %v1089
        %v1311 = vunpack.c.l.b16 %v1090
        %v1312 = vunpack.c.h.b16 %v1090
        %v1313 = vunpack.c.l.b16 %v1091
        %v1314 = vunpack.c.h.b16 %v1091
        %v1315 = vunpack.c.l.b16 %v1092
        %v1316 = vunpack.c.h.b16 %v1092
        %v1317 = vunpack.c.l.b16 %v1093
        %v1318 = vunpack.c.h.b16 %v1093
        %v1319 = vunpack.c.l.b16 %v1094
        %v1320 = vunpack.c.h.b16 %v1094
        %v1321 = vunpack.c.l.b16 %v1095
        %v1322 = vunpack.c.h.b16 %v1095
        %v1323 = vunpack.c.l.b16 %v1096
        %v1324 = vunpack.c.h.b16 %v1096
        %v1325 = vunpack.c.l.b16 %v1097
        %v1326 = vunpack.c.h.b16 %v1097
        %v1327 = vunpack.c.l.b16 %v1098
        %v1328 = vunpack.c.h.b16 %v1098
        %v1329 = vunpack.c.l.b16 %v1099
        %v1330 = vunpack.c.h.b16 %v1099
        %v1331 = vunpack.c.l.b16 %v1100
        %v1332 = vunpack.c.h.b16 %v1100
        %v1333 = vunpack.c.l.b16 %v1101
        %v1334 = vunpack.c.h.b16 %v1101
        %v1335 = vunpack.c.l.b16 %v1102
        %v1336 = vunpack.c.h.b16 %v1102
        %v1337 = vunpack.c.l.b16 %v1103
        %v1338 = vunpack.c.h.b16 %v1103
        %v1339 = vunpack.c.l.b16 %v1104
        %v1340 = vunpack.c.h.b16 %v1104
        %v1341 = vunpack.c.l.b16 %v1105
        %v1342 = vunpack.c.h.b16 %v1105
        %v1343 = vunpack.c.l.b16 %v1106
        %v1344 = vunpack.c.h.b16 %v1106
        %v1345 = vunpack.c.l.b16 %v1107
        %v1346 = vunpack.c.h.b16 %v1107
        %v1347 = vunpack.c.l.b16 %v1108
        %v1348 = vunpack.c.h.b16 %v1108
        %v1349 = vunpack.c.l.b16 %v1109
        %v1350 = vunpack.c.h.b16 %v1109
        %v1351 = vunpack.c.l.b16 %v1110
        %v1352 = vunpack.c.h.b16 %v1110
        %v1353 = vunpack.c.l.b16 %v1111
        %v1354 = vunpack.c.h.b16 %v1111
        %v1355 = vunpack.c.l.b16 %v1112
        %v1356 = vunpack.c.h.b16 %v1112
        %v1357 = vunpack.c.l.b16 %v1113
        %v1358 = vunpack.c.h.b16 %v1113
        %v1359 = vunpack.c.l.b16 %v1114
        %v1360 = vunpack.c.h.b16 %v1114
        %v1361 = vunpack.c.l.b16 %v1115
        %v1362 = vunpack.c.h.b16 %v1115
        %v1363 = vunpack.c.l.b16 %v1116
        %v1364 = vunpack.c.h.b16 %v1116
        %v1365 = vunpack.c.l.b16 %v1117
        %v1366 = vunpack.c.h.b16 %v1117
        %v1367 = vunpack.c.l.b16 %v1118
        %v1368 = vunpack.c.h.b16 %v1118
        %v1369 = vunpack.c.l.b16 %v1119
        %v1370 = vunpack.c.h.b16 %v1119
        %v1371 = vunpack.c.l.b16 %v1120
        %v1372 = vunpack.c.h.b16 %v1120
        %v1373 = vunpack.c.l.b16 %v1121
        %v1374 = vunpack.c.h.b16 %v1121
        %v1375 = vunpack.c.l.b16 %v1122
        %v1376 = vunpack.c.h.b16 %v1122
        %v1377 = vunpack.c.l.b16 %v1123
        %v1378 = vunpack.c.h.b16 %v1123
        %v1379 = vunpack.c.l.b16 %v1124
        %v1380 = vunpack.c.h.b16 %v1124
        %v1381 = vunpack.c.l.b16 %v1125
        %v1382 = vunpack.c.h.b16 %v1125
        %v1383 = vunpack.c.l.b16 %v1126
        %v1384 = vunpack.c.h.b16 %v1126
        %v1385 = vunpack.c.l.b16 %v1127
        %v1386 = vunpack.c.h.b16 %v1127
        %v1387 = vunpack.c.l.b16 %v1128
        %v1388 = vunpack.c.h.b16 %v1128
        %v1389 = vunpack.c.l.b16 %v1129
        %v1390 = vunpack.c.h.b16 %v1129
        %v1391 = vunpack.c.l.b16 %v1130
        %v1392 = vunpack.c.h.b16 %v1130
        %v1393 = vunpack.c.l.b16 %v1131
        %v1394 = vunpack.c.h.b16 %v1131
        %v1395 = vunpack.c.l.b16 %v1132
        %v1396 = vunpack.c.h.b16 %v1132
        %v1397 = vunpack.c.l.b16 %v1133
        %v1398 = vunpack.c.h.b16 %v1133
        %v1399 = vunpack.c.l.b16 %v1134
        %v1400 = vunpack.c.h.b16 %v1134
        %v1401 = vunpack.c.l.b16 %v1135
        %v1402 = vunpack.c.h.b16 %v1135
        %v1403 = vunpack.c.l.b16 %v1136
        %v1404 = vunpack.c.h.b16 %v1136
        %v1405 = vunpack.c.l.b16 %v1137
        %v1406 = vunpack.c.h.b16 %v1137
        %v1407 = vunpack.c.l.b16 %v1138
        %v1408 = vunpack.c.h.b16 %v1138
        %v1409 = vunpack.c.l.b16 %v1139
        %v1410 = vunpack.c.h.b16 %v1139
        %v1411 = vunpack.c.l.b16 %v1140
        %v1412 = vunpack.c.h.b16 %v1140
        %v1413 = vunpack.c.l.b16 %v1141
        %v1414 = vunpack.c.h.b16 %v1141
        %v1415 = vunpack.c.l.b16 %v1142
        %v1416 = vunpack.c.h.b16 %v1142
        %v1417 = vunpack.c.l.b16 %v1143
        %v1418 = vunpack.c.h.b16 %v1143
        %v1419 = vunpack.c.l.b16 %v1144
        %v1420 = vunpack.c.h.b16 %v1144
        %v1421 = vunpack.c.l.b16 %v1145
        %v1422 = vunpack.c.h.b16 %v1145
        %v1423 = vunpack.c.l.b16 %v1146
        %v1424 = vunpack.c.h.b16 %v1146
        %v1425 = vunpack.c.l.b16 %v1147
        %v1426 = vunpack.c.h.b16 %v1147
        %v1427 = vunpack.c.l.b16 %v1148
        %v1428 = vunpack.c.h.b16 %v1148
        %v1429 = vpack.c.b16 %v1309, %v1301
        %v1430 = vpack.c.b16 %v1310, %v1302
        %v1431 = vpack.c.b16 %v1311, %v1303
        %v1432 = vpack.c.b16 %v1312, %v1304
        %v1433 = vpack.c.b16 %v1313, %v1305
        %v1434 = vpack.c.b16 %v1314, %v1306
        %v1435 = vpack.c.b16 %v1315, %v1307
        %v1436 = vpack.c.b16 %v1316, %v1308
        %v1437 = vpack.c.b16 %v1325, %v1317
        %v1438 = vpack.c.b16 %v1326, %v1318
        %v1439 = vpack.c.b16 %v1327, %v1319
        %v1440 = vpack.c.b16 %v1328, %v1320
        %v1441 = vpack.c.b16 %v1329, %v1321
        %v1442 = vpack.c.b16 %v1330, %v1322
        %v1443 = vpack.c.b16 %v1331, %v1323
        %v1444 = vpack.c.b16 %v1332, %v1324
        %v1445 = vpack.c.b16 %v1341, %v1333
        %v1446 = vpack.c.b16 %v1342, %v1334
        %v1447 = vpack.c.b16 %v1343, %v1335
        %v1448 = vpack.c.b16 %v1344, %v1336
        %v1449 = vpack.c.b16 %v1345, %v1337
        %v1450 = vpack.c.b16 %v1346, %v1338
        %v1451 = vpack.c.b16 %v1347, %v1339
        %v1452 = vpack.c.b16 %v1348, %v1340
        %v1453 = vpack.c.b16 %v1357, %v1349
        %v1454 = vpack.c.b16 %v1358, %v1350
        %v1455 = vpack.c.b16 %v1359, %v1351
        %v1456 = vpack.c.b16 %v1360, %v1352
        %v1457 = vpack.c.b16 %v1361, %v1353
        %v1458 = vpack.c.b16 %v1362, %v1354
        %v1459 = vpack.c.b16 %v1363, %v1355
        %v1460 = vpack.c.b16 %v1364, %v1356
        %v1461 = vpack.c.b16 %v1373, %v1365
        %v1462 = vpack.c.b16 %v1374, %v1366
        %v1463 = vpack.c.b16 %v1375, %v1367
        %v1464 = vpack.c.b16 %v1376, %v1368
        %v1465 = vpack.c.b16 %v1377, %v1369
        %v1466 = vpack.c.b16 %v1378, %v1370
        %v1467 = vpack.c.b16 %v1379, %v1371
        %v1468 = vpack.c.b16 %v1380, %v1372
        %v1469 = vpack.c.b16 %v1389, %v1381
        %v1470 = vpack.c.b16 %v1390, %v1382
        %v1471 = vpack.c.b16 %v1391, %v1383
        %v1472 = vpack.c.b16 %v1392, %v1384
        %v1473 = vpack.c.b16 %v1393, %v1385
        %v1474 = vpack.c.b16 %v1394, %v1386
        %v1475 = vpack.c.b16 %v1395, %v1387
        %v1476 = vpack.c.b16 %v1396, %v1388
        %v1477 = vpack.c.b16 %v1405, %v1397
        %v1478 = vpack.c.b16 %v1406, %v1398
        %v1479 = vpack.c.b16 %v1407, %v1399
        %v1480 = vpack.c.b16 %v1408, %v1400
        %v1481 = vpack.c.b16 %v1409, %v1401
        %v1482 = vpack.c.b16 %v1410, %v1402
        %v1483 = vpack.c.b16 %v1411, %v1403
        %v1484 = vpack.c.b16 %v1412, %v1404
        %v1485 = vpack.c.b16 %v1421, %v1413
        %v1486 = vpack.c.b16 %v1422, %v1414
        %v1487 = vpack.c.b16 %v1423, %v1415
        %v1488 = vpack.c.b16 %v1424, %v1416
        %v1489 = vpack.c.b16 %v1425, %v1417
        %v1490 = vpack.c.b16 %v1426, %v1418
        %v1491 = vpack.c.b16 %v1427, %v1419
        %v1492 = vpack.c.b16 %v1428, %v1420
        %1557 = vmatpush.bf16.msra.mxu0 %v1485
        %1558 = vmatpush.bf16.msra.mxu0 %v1477
        %1559 = vmatpush.bf16.msra.mxu0 %v1469
        %1560 = vmatpush.bf16.msra.mxu0 %v1461
        %1561 = vmatpush.bf16.msra.mxu0 %v1453
        %1562 = vmatpush.bf16.msra.mxu0 %v1445
        %1563 = vmatpush.bf16.msra.mxu0 %v1437
        %1564 = vmatpush.bf16.msra.mxu0 %v1429
        %1565 = vmatmul.bf16.gmra.mxu0 %v1221
        %v1566 = vpop.f32.mrf.mxu0
        %v1567 = vadd.f32 0.0, %v1566
        %v1568 = vpop.f32.mrf.mxu0
        %v1569 = vadd.f32 0.0, %v1568
        %1570 = vmatmul.bf16.gmra.mxu0 %v1222
        %v1571 = vpop.f32.mrf.mxu0
        %v1572 = vadd.f32 0.0, %v1571
        %v1573 = vpop.f32.mrf.mxu0
        %v1574 = vadd.f32 0.0, %v1573
        %1575 = vmatmul.bf16.gmra.mxu0 %v1223
        %v1576 = vpop.f32.mrf.mxu0
        %v1577 = vadd.f32 0.0, %v1576
        %v1578 = vpop.f32.mrf.mxu0
        %v1579 = vadd.f32 0.0, %v1578
        %1580 = vmatmul.bf16.gmra.mxu0 %v1224
        %v1581 = vpop.f32.mrf.mxu0
        %v1582 = vadd.f32 0.0, %v1581
        %v1583 = vpop.f32.mrf.mxu0
        %v1584 = vadd.f32 0.0, %v1583
        %1585 = vmatmul.bf16.gmra.mxu0 %v1225
        %v1586 = vpop.f32.mrf.mxu0
        %v1587 = vadd.f32 0.0, %v1586
        %v1588 = vpop.f32.mrf.mxu0
        %v1589 = vadd.f32 0.0, %v1588
        %1590 = vmatmul.bf16.gmra.mxu0 %v1226
        %v1591 = vpop.f32.mrf.mxu0
        %v1592 = vadd.f32 0.0, %v1591
        %v1593 = vpop.f32.mrf.mxu0
        %v1594 = vadd.f32 0.0, %v1593
        %1595 = vmatmul.bf16.gmra.mxu0 %v1227
        %v1596 = vpop.f32.mrf.mxu0
        %v1597 = vadd.f32 0.0, %v1596
        %v1598 = vpop.f32.mrf.mxu0
        %v1599 = vadd.f32 0.0, %v1598
        %1600 = vmatmul.bf16.gmra.mxu0 %v1228
        %v1601 = vpop.f32.mrf.mxu0
        %v1602 = vadd.f32 0.0, %v1601
        %v1603 = vpop.f32.mrf.mxu0
        %v1604 = vadd.f32 0.0, %v1603
        %1605 = vdwg.mxu0
        %1606 = vmatpush.bf16.msra.mxu0 %v1486
        %1607 = vmatpush.bf16.msra.mxu0 %v1478
        %1608 = vmatpush.bf16.msra.mxu0 %v1470
        %1609 = vmatpush.bf16.msra.mxu0 %v1462
        %1610 = vmatpush.bf16.msra.mxu0 %v1454
        %1611 = vmatpush.bf16.msra.mxu0 %v1446
        %1612 = vmatpush.bf16.msra.mxu0 %v1438
        %1613 = vmatpush.bf16.msra.mxu0 %v1430
        %1614 = vmatmul.bf16.gmra.mxu0 %v1221
        %v1615 = vpop.f32.mrf.mxu0
        %v1616 = vadd.f32 0.0, %v1615
        %v1617 = vpop.f32.mrf.mxu0
        %v1618 = vadd.f32 0.0, %v1617
        %1619 = vmatmul.bf16.gmra.mxu0 %v1222
        %v1620 = vpop.f32.mrf.mxu0
        %v1621 = vadd.f32 0.0, %v1620
        %v1622 = vpop.f32.mrf.mxu0
        %v1623 = vadd.f32 0.0, %v1622
        %1624 = vmatmul.bf16.gmra.mxu0 %v1223
        %v1625 = vpop.f32.mrf.mxu0
        %v1626 = vadd.f32 0.0, %v1625
        %v1627 = vpop.f32.mrf.mxu0
        %v1628 = vadd.f32 0.0, %v1627
        %1629 = vmatmul.bf16.gmra.mxu0 %v1224
        %v1630 = vpop.f32.mrf.mxu0
        %v1631 = vadd.f32 0.0, %v1630
        %v1632 = vpop.f32.mrf.mxu0
        %v1633 = vadd.f32 0.0, %v1632
        %1634 = vmatmul.bf16.gmra.mxu0 %v1225
        %v1635 = vpop.f32.mrf.mxu0
        %v1636 = vadd.f32 0.0, %v1635
        %v1637 = vpop.f32.mrf.mxu0
        %v1638 = vadd.f32 0.0, %v1637
        %1639 = vmatmul.bf16.gmra.mxu0 %v1226
        %v1640 = vpop.f32.mrf.mxu0
        %v1641 = vadd.f32 0.0, %v1640
        %v1642 = vpop.f32.mrf.mxu0
        %v1643 = vadd.f32 0.0, %v1642
        %1644 = vmatmul.bf16.gmra.mxu0 %v1227
        %v1645 = vpop.f32.mrf.mxu0
        %v1646 = vadd.f32 0.0, %v1645
        %v1647 = vpop.f32.mrf.mxu0
        %v1648 = vadd.f32 0.0, %v1647
        %1649 = vmatmul.bf16.gmra.mxu0 %v1228
        %v1650 = vpop.f32.mrf.mxu0
        %v1651 = vadd.f32 0.0, %v1650
        %v1652 = vpop.f32.mrf.mxu0
        %v1653 = vadd.f32 0.0, %v1652
        %1654 = vdwg.mxu0
        %1655 = vmatpush.bf16.msra.mxu0 %v1487
        %1656 = vmatpush.bf16.msra.mxu0 %v1479
        %1657 = vmatpush.bf16.msra.mxu0 %v1471
        %1658 = vmatpush.bf16.msra.mxu0 %v1463
        %1659 = vmatpush.bf16.msra.mxu0 %v1455
        %1660 = vmatpush.bf16.msra.mxu0 %v1447
        %1661 = vmatpush.bf16.msra.mxu0 %v1439
        %1662 = vmatpush.bf16.msra.mxu0 %v1431
        %1663 = vmatmul.bf16.gmra.mxu0 %v1221
        %v1664 = vpop.f32.mrf.mxu0
        %v1665 = vadd.f32 0.0, %v1664
        %v1666 = vpop.f32.mrf.mxu0
        %v1667 = vadd.f32 0.0, %v1666
        %1668 = vmatmul.bf16.gmra.mxu0 %v1222
        %v1669 = vpop.f32.mrf.mxu0
        %v1670 = vadd.f32 0.0, %v1669
        %v1671 = vpop.f32.mrf.mxu0
        %v1672 = vadd.f32 0.0, %v1671
        %1673 = vmatmul.bf16.gmra.mxu0 %v1223
        %v1674 = vpop.f32.mrf.mxu0
        %v1675 = vadd.f32 0.0, %v1674
        %v1676 = vpop.f32.mrf.mxu0
        %v1677 = vadd.f32 0.0, %v1676
        %1678 = vmatmul.bf16.gmra.mxu0 %v1224
        %v1679 = vpop.f32.mrf.mxu0
        %v1680 = vadd.f32 0.0, %v1679
        %v1681 = vpop.f32.mrf.mxu0
        %v1682 = vadd.f32 0.0, %v1681
        %1683 = vmatmul.bf16.gmra.mxu0 %v1225
        %v1684 = vpop.f32.mrf.mxu0
        %v1685 = vadd.f32 0.0, %v1684
        %v1686 = vpop.f32.mrf.mxu0
        %v1687 = vadd.f32 0.0, %v1686
        %1688 = vmatmul.bf16.gmra.mxu0 %v1226
        %v1689 = vpop.f32.mrf.mxu0
        %v1690 = vadd.f32 0.0, %v1689
        %v1691 = vpop.f32.mrf.mxu0
        %v1692 = vadd.f32 0.0, %v1691
        %1693 = vmatmul.bf16.gmra.mxu0 %v1227
        %v1694 = vpop.f32.mrf.mxu0
        %v1695 = vadd.f32 0.0, %v1694
        %v1696 = vpop.f32.mrf.mxu0
        %v1697 = vadd.f32 0.0, %v1696
        %1698 = vmatmul.bf16.gmra.mxu0 %v1228
        %v1699 = vpop.f32.mrf.mxu0
        %v1700 = vadd.f32 0.0, %v1699
        %v1701 = vpop.f32.mrf.mxu0
        %v1702 = vadd.f32 0.0, %v1701
        %1703 = vdwg.mxu0
        %1704 = vmatpush.bf16.msra.mxu0 %v1488
        %1705 = vmatpush.bf16.msra.mxu0 %v1480
        %1706 = vmatpush.bf16.msra.mxu0 %v1472
        %1707 = vmatpush.bf16.msra.mxu0 %v1464
        %1708 = vmatpush.bf16.msra.mxu0 %v1456
        %1709 = vmatpush.bf16.msra.mxu0 %v1448
        %1710 = vmatpush.bf16.msra.mxu0 %v1440
        %1711 = vmatpush.bf16.msra.mxu0 %v1432
        %1712 = vmatmul.bf16.gmra.mxu0 %v1221
        %v1713 = vpop.f32.mrf.mxu0
        %v1714 = vadd.f32 0.0, %v1713
        %v1715 = vpop.f32.mrf.mxu0
        %v1716 = vadd.f32 0.0, %v1715
        %1717 = vmatmul.bf16.gmra.mxu0 %v1222
        %v1718 = vpop.f32.mrf.mxu0
        %v1719 = vadd.f32 0.0, %v1718
        %v1720 = vpop.f32.mrf.mxu0
        %v1721 = vadd.f32 0.0, %v1720
        %1722 = vmatmul.bf16.gmra.mxu0 %v1223
        %v1723 = vpop.f32.mrf.mxu0
        %v1724 = vadd.f32 0.0, %v1723
        %v1725 = vpop.f32.mrf.mxu0
        %v1726 = vadd.f32 0.0, %v1725
        %1727 = vmatmul.bf16.gmra.mxu0 %v1224
        %v1728 = vpop.f32.mrf.mxu0
        %v1729 = vadd.f32 0.0, %v1728
        %v1730 = vpop.f32.mrf.mxu0
        %v1731 = vadd.f32 0.0, %v1730
        %1732 = vmatmul.bf16.gmra.mxu0 %v1225
        %v1733 = vpop.f32.mrf.mxu0
        %v1734 = vadd.f32 0.0, %v1733
        %v1735 = vpop.f32.mrf.mxu0
        %v1736 = vadd.f32 0.0, %v1735
        %1737 = vmatmul.bf16.gmra.mxu0 %v1226
        %v1738 = vpop.f32.mrf.mxu0
        %v1739 = vadd.f32 0.0, %v1738
        %v1740 = vpop.f32.mrf.mxu0
        %v1741 = vadd.f32 0.0, %v1740
        %1742 = vmatmul.bf16.gmra.mxu0 %v1227
        %v1743 = vpop.f32.mrf.mxu0
        %v1744 = vadd.f32 0.0, %v1743
        %v1745 = vpop.f32.mrf.mxu0
        %v1746 = vadd.f32 0.0, %v1745
        %1747 = vmatmul.bf16.gmra.mxu0 %v1228
        %v1748 = vpop.f32.mrf.mxu0
        %v1749 = vadd.f32 0.0, %v1748
        %v1750 = vpop.f32.mrf.mxu0
        %v1751 = vadd.f32 0.0, %v1750
        %1752 = vdwg.mxu0
        %1753 = vmatpush.bf16.msra.mxu0 %v1489
        %1754 = vmatpush.bf16.msra.mxu0 %v1481
        %1755 = vmatpush.bf16.msra.mxu0 %v1473
        %1756 = vmatpush.bf16.msra.mxu0 %v1465
        %1757 = vmatpush.bf16.msra.mxu0 %v1457
        %1758 = vmatpush.bf16.msra.mxu0 %v1449
        %1759 = vmatpush.bf16.msra.mxu0 %v1441
        %1760 = vmatpush.bf16.msra.mxu0 %v1433
        %1761 = vmatmul.bf16.gmra.mxu0 %v1221
        %v1762 = vpop.f32.mrf.mxu0
        %v1763 = vadd.f32 0.0, %v1762
        %v1764 = vpop.f32.mrf.mxu0
        %v1765 = vadd.f32 0.0, %v1764
        %1766 = vmatmul.bf16.gmra.mxu0 %v1222
        %v1767 = vpop.f32.mrf.mxu0
        %v1768 = vadd.f32 0.0, %v1767
        %v1769 = vpop.f32.mrf.mxu0
        %v1770 = vadd.f32 0.0, %v1769
        %1771 = vmatmul.bf16.gmra.mxu0 %v1223
        %v1772 = vpop.f32.mrf.mxu0
        %v1773 = vadd.f32 0.0, %v1772
        %v1774 = vpop.f32.mrf.mxu0
        %v1775 = vadd.f32 0.0, %v1774
        %1776 = vmatmul.bf16.gmra.mxu0 %v1224
        %v1777 = vpop.f32.mrf.mxu0
        %v1778 = vadd.f32 0.0, %v1777
        %v1779 = vpop.f32.mrf.mxu0
        %v1780 = vadd.f32 0.0, %v1779
        %1781 = vmatmul.bf16.gmra.mxu0 %v1225
        %v1782 = vpop.f32.mrf.mxu0
        %v1783 = vadd.f32 0.0, %v1782
        %v1784 = vpop.f32.mrf.mxu0
        %v1785 = vadd.f32 0.0, %v1784
        %1786 = vmatmul.bf16.gmra.mxu0 %v1226
        %v1787 = vpop.f32.mrf.mxu0
        %v1788 = vadd.f32 0.0, %v1787
        %v1789 = vpop.f32.mrf.mxu0
        %v1790 = vadd.f32 0.0, %v1789
        %1791 = vmatmul.bf16.gmra.mxu0 %v1227
        %v1792 = vpop.f32.mrf.mxu0
        %v1793 = vadd.f32 0.0, %v1792
        %v1794 = vpop.f32.mrf.mxu0
        %v1795 = vadd.f32 0.0, %v1794
        %1796 = vmatmul.bf16.gmra.mxu0 %v1228
        %v1797 = vpop.f32.mrf.mxu0
        %v1798 = vadd.f32 0.0, %v1797
        %v1799 = vpop.f32.mrf.mxu0
        %v1800 = vadd.f32 0.0, %v1799
        %1801 = vdwg.mxu0
        %1802 = vmatpush.bf16.msra.mxu0 %v1490
        %1803 = vmatpush.bf16.msra.mxu0 %v1482
        %1804 = vmatpush.bf16.msra.mxu0 %v1474
        %1805 = vmatpush.bf16.msra.mxu0 %v1466
        %1806 = vmatpush.bf16.msra.mxu0 %v1458
        %1807 = vmatpush.bf16.msra.mxu0 %v1450
        %1808 = vmatpush.bf16.msra.mxu0 %v1442
        %1809 = vmatpush.bf16.msra.mxu0 %v1434
        %1810 = vmatmul.bf16.gmra.mxu0 %v1221
        %v1811 = vpop.f32.mrf.mxu0
        %v1812 = vadd.f32 0.0, %v1811
        %v1813 = vpop.f32.mrf.mxu0
        %v1814 = vadd.f32 0.0, %v1813
        %1815 = vmatmul.bf16.gmra.mxu0 %v1222
        %v1816 = vpop.f32.mrf.mxu0
        %v1817 = vadd.f32 0.0, %v1816
        %v1818 = vpop.f32.mrf.mxu0
        %v1819 = vadd.f32 0.0, %v1818
        %1820 = vmatmul.bf16.gmra.mxu0 %v1223
        %v1821 = vpop.f32.mrf.mxu0
        %v1822 = vadd.f32 0.0, %v1821
        %v1823 = vpop.f32.mrf.mxu0
        %v1824 = vadd.f32 0.0, %v1823
        %1825 = vmatmul.bf16.gmra.mxu0 %v1224
        %v1826 = vpop.f32.mrf.mxu0
        %v1827 = vadd.f32 0.0, %v1826
        %v1828 = vpop.f32.mrf.mxu0
        %v1829 = vadd.f32 0.0, %v1828
        %1830 = vmatmul.bf16.gmra.mxu0 %v1225
        %v1831 = vpop.f32.mrf.mxu0
        %v1832 = vadd.f32 0.0, %v1831
        %v1833 = vpop.f32.mrf.mxu0
        %v1834 = vadd.f32 0.0, %v1833
        %1835 = vmatmul.bf16.gmra.mxu0 %v1226
        %v1836 = vpop.f32.mrf.mxu0
        %v1837 = vadd.f32 0.0, %v1836
        %v1838 = vpop.f32.mrf.mxu0
        %v1839 = vadd.f32 0.0, %v1838
        %1840 = vmatmul.bf16.gmra.mxu0 %v1227
        %v1841 = vpop.f32.mrf.mxu0
        %v1842 = vadd.f32 0.0, %v1841
        %v1843 = vpop.f32.mrf.mxu0
        %v1844 = vadd.f32 0.0, %v1843
        %1845 = vmatmul.bf16.gmra.mxu0 %v1228
        %v1846 = vpop.f32.mrf.mxu0
        %v1847 = vadd.f32 0.0, %v1846
        %v1848 = vpop.f32.mrf.mxu0
        %v1849 = vadd.f32 0.0, %v1848
        %1850 = vdwg.mxu0
        %1851 = vmatpush.bf16.msra.mxu0 %v1491
        %1852 = vmatpush.bf16.msra.mxu0 %v1483
        %1853 = vmatpush.bf16.msra.mxu0 %v1475
        %1854 = vmatpush.bf16.msra.mxu0 %v1467
        %1855 = vmatpush.bf16.msra.mxu0 %v1459
        %1856 = vmatpush.bf16.msra.mxu0 %v1451
        %1857 = vmatpush.bf16.msra.mxu0 %v1443
        %1858 = vmatpush.bf16.msra.mxu0 %v1435
        %1859 = vmatmul.bf16.gmra.mxu0 %v1221
        %v1860 = vpop.f32.mrf.mxu0
        %v1861 = vadd.f32 0.0, %v1860
        %v1862 = vpop.f32.mrf.mxu0
        %v1863 = vadd.f32 0.0, %v1862
        %1864 = vmatmul.bf16.gmra.mxu0 %v1222
        %v1865 = vpop.f32.mrf.mxu0
        %v1866 = vadd.f32 0.0, %v1865
        %v1867 = vpop.f32.mrf.mxu0
        %v1868 = vadd.f32 0.0, %v1867
        %1869 = vmatmul.bf16.gmra.mxu0 %v1223
        %v1870 = vpop.f32.mrf.mxu0
        %v1871 = vadd.f32 0.0, %v1870
        %v1872 = vpop.f32.mrf.mxu0
        %v1873 = vadd.f32 0.0, %v1872
        %1874 = vmatmul.bf16.gmra.mxu0 %v1224
        %v1875 = vpop.f32.mrf.mxu0
        %v1876 = vadd.f32 0.0, %v1875
        %v1877 = vpop.f32.mrf.mxu0
        %v1878 = vadd.f32 0.0, %v1877
        %1879 = vmatmul.bf16.gmra.mxu0 %v1225
        %v1880 = vpop.f32.mrf.mxu0
        %v1881 = vadd.f32 0.0, %v1880
        %v1882 = vpop.f32.mrf.mxu0
        %v1883 = vadd.f32 0.0, %v1882
        %1884 = vmatmul.bf16.gmra.mxu0 %v1226
        %v1885 = vpop.f32.mrf.mxu0
        %v1886 = vadd.f32 0.0, %v1885
        %v1887 = vpop.f32.mrf.mxu0
        %v1888 = vadd.f32 0.0, %v1887
        %1889 = vmatmul.bf16.gmra.mxu0 %v1227
        %v1890 = vpop.f32.mrf.mxu0
        %v1891 = vadd.f32 0.0, %v1890
        %v1892 = vpop.f32.mrf.mxu0
        %v1893 = vadd.f32 0.0, %v1892
        %1894 = vmatmul.bf16.gmra.mxu0 %v1228
        %v1895 = vpop.f32.mrf.mxu0
        %v1896 = vadd.f32 0.0, %v1895
        %v1897 = vpop.f32.mrf.mxu0
        %v1898 = vadd.f32 0.0, %v1897
        %1899 = vdwg.mxu0
        %1900 = vmatpush.bf16.msra.mxu0 %v1492
        %1901 = vmatpush.bf16.msra.mxu0 %v1484
        %1902 = vmatpush.bf16.msra.mxu0 %v1476
        %1903 = vmatpush.bf16.msra.mxu0 %v1468
        %1904 = vmatpush.bf16.msra.mxu0 %v1460
        %1905 = vmatpush.bf16.msra.mxu0 %v1452
        %1906 = vmatpush.bf16.msra.mxu0 %v1444
        %1907 = vmatpush.bf16.msra.mxu0 %v1436
        %1908 = vmatmul.bf16.gmra.mxu0 %v1221
        %v1909 = vpop.f32.mrf.mxu0
        %v1910 = vadd.f32 0.0, %v1909
        %v1911 = vpop.f32.mrf.mxu0
        %v1912 = vadd.f32 0.0, %v1911
        %1913 = vmatmul.bf16.gmra.mxu0 %v1222
        %v1914 = vpop.f32.mrf.mxu0
        %v1915 = vadd.f32 0.0, %v1914
        %v1916 = vpop.f32.mrf.mxu0
        %v1917 = vadd.f32 0.0, %v1916
        %1918 = vmatmul.bf16.gmra.mxu0 %v1223
        %v1919 = vpop.f32.mrf.mxu0
        %v1920 = vadd.f32 0.0, %v1919
        %v1921 = vpop.f32.mrf.mxu0
        %v1922 = vadd.f32 0.0, %v1921
        %1923 = vmatmul.bf16.gmra.mxu0 %v1224
        %v1924 = vpop.f32.mrf.mxu0
        %v1925 = vadd.f32 0.0, %v1924
        %v1926 = vpop.f32.mrf.mxu0
        %v1927 = vadd.f32 0.0, %v1926
        %1928 = vmatmul.bf16.gmra.mxu0 %v1225
        %v1929 = vpop.f32.mrf.mxu0
        %v1930 = vadd.f32 0.0, %v1929
        %v1931 = vpop.f32.mrf.mxu0
        %v1932 = vadd.f32 0.0, %v1931
        %1933 = vmatmul.bf16.gmra.mxu0 %v1226
        %v1934 = vpop.f32.mrf.mxu0
        %v1935 = vadd.f32 0.0, %v1934
        %v1936 = vpop.f32.mrf.mxu0
        %v1937 = vadd.f32 0.0, %v1936
        %1938 = vmatmul.bf16.gmra.mxu0 %v1227
        %v1939 = vpop.f32.mrf.mxu0
        %v1940 = vadd.f32 0.0, %v1939
        %v1941 = vpop.f32.mrf.mxu0
        %v1942 = vadd.f32 0.0, %v1941
        %1943 = vmatmul.bf16.gmra.mxu0 %v1228
        %v1944 = vpop.f32.mrf.mxu0
        %v1945 = vadd.f32 0.0, %v1944
        %v1946 = vpop.f32.mrf.mxu0
        %v1947 = vadd.f32 0.0, %v1946
        %1948 = vdwg.mxu0
        %v1949 = vadd.f32 %v1567, %v1569
        %v1950 = vadd.f32 %v1949, %v1572
        %v1951 = vadd.f32 %v1950, %v1574
        %v1952 = vadd.f32 %v1951, %v1577
        %v1953 = vadd.f32 %v1952, %v1579
        %v1954 = vadd.f32 %v1953, %v1582
        %v1955 = vadd.f32 %v1954, %v1584
        %v1956 = vadd.f32 %v1955, %v1587
        %v1957 = vadd.f32 %v1956, %v1589
        %v1958 = vadd.f32 %v1957, %v1592
        %v1959 = vadd.f32 %v1958, %v1594
        %v1960 = vadd.f32 %v1959, %v1597
        %v1961 = vadd.f32 %v1960, %v1599
        %v1962 = vadd.f32 %v1961, %v1602
        %v1963 = vadd.f32 %v1962, %v1604
        %v1964 = vrot.slane %v1963, 4
        %v1965 = vadd.f32 %v1963, %v1964
        %v1966 = vrot.slane %v1965, 2
        %v1967 = vadd.f32 %v1965, %v1966
        %v1968 = vrot.slane %v1967, 1
        %v1969 = vadd.f32 %v1967, %v1968
        %v1970 = vadd.f32 %v1616, %v1618
        %v1971 = vadd.f32 %v1970, %v1621
        %v1972 = vadd.f32 %v1971, %v1623
        %v1973 = vadd.f32 %v1972, %v1626
        %v1974 = vadd.f32 %v1973, %v1628
        %v1975 = vadd.f32 %v1974, %v1631
        %v1976 = vadd.f32 %v1975, %v1633
        %v1977 = vadd.f32 %v1976, %v1636
        %v1978 = vadd.f32 %v1977, %v1638
        %v1979 = vadd.f32 %v1978, %v1641
        %v1980 = vadd.f32 %v1979, %v1643
        %v1981 = vadd.f32 %v1980, %v1646
        %v1982 = vadd.f32 %v1981, %v1648
        %v1983 = vadd.f32 %v1982, %v1651
        %v1984 = vadd.f32 %v1983, %v1653
        %v1985 = vrot.slane %v1984, 4
        %v1986 = vadd.f32 %v1984, %v1985
        %v1987 = vrot.slane %v1986, 2
        %v1988 = vadd.f32 %v1986, %v1987
        %v1989 = vrot.slane %v1988, 1
        %v1990 = vadd.f32 %v1988, %v1989
        %v1991 = vadd.f32 %v1665, %v1667
        %v1992 = vadd.f32 %v1991, %v1670
        %v1993 = vadd.f32 %v1992, %v1672
        %v1994 = vadd.f32 %v1993, %v1675
        %v1995 = vadd.f32 %v1994, %v1677
        %v1996 = vadd.f32 %v1995, %v1680
        %v1997 = vadd.f32 %v1996, %v1682
        %v1998 = vadd.f32 %v1997, %v1685
        %v1999 = vadd.f32 %v1998, %v1687
        %v2000 = vadd.f32 %v1999, %v1690
        %v2001 = vadd.f32 %v2000, %v1692
        %v2002 = vadd.f32 %v2001, %v1695
        %v2003 = vadd.f32 %v2002, %v1697
        %v2004 = vadd.f32 %v2003, %v1700
        %v2005 = vadd.f32 %v2004, %v1702
        %v2006 = vrot.slane %v2005, 4
        %v2007 = vadd.f32 %v2005, %v2006
        %v2008 = vrot.slane %v2007, 2
        %v2009 = vadd.f32 %v2007, %v2008
        %v2010 = vrot.slane %v2009, 1
        %v2011 = vadd.f32 %v2009, %v2010
        %v2012 = vadd.f32 %v1714, %v1716
        %v2013 = vadd.f32 %v2012, %v1719
        %v2014 = vadd.f32 %v2013, %v1721
        %v2015 = vadd.f32 %v2014, %v1724
        %v2016 = vadd.f32 %v2015, %v1726
        %v2017 = vadd.f32 %v2016, %v1729
        %v2018 = vadd.f32 %v2017, %v1731
        %v2019 = vadd.f32 %v2018, %v1734
        %v2020 = vadd.f32 %v2019, %v1736
        %v2021 = vadd.f32 %v2020, %v1739
        %v2022 = vadd.f32 %v2021, %v1741
        %v2023 = vadd.f32 %v2022, %v1744
        %v2024 = vadd.f32 %v2023, %v1746
        %v2025 = vadd.f32 %v2024, %v1749
        %v2026 = vadd.f32 %v2025, %v1751
        %v2027 = vrot.slane %v2026, 4
        %v2028 = vadd.f32 %v2026, %v2027
        %v2029 = vrot.slane %v2028, 2
        %v2030 = vadd.f32 %v2028, %v2029
        %v2031 = vrot.slane %v2030, 1
        %v2032 = vadd.f32 %v2030, %v2031
        %v2033 = vadd.f32 %v1763, %v1765
        %v2034 = vadd.f32 %v2033, %v1768
        %v2035 = vadd.f32 %v2034, %v1770
        %v2036 = vadd.f32 %v2035, %v1773
        %v2037 = vadd.f32 %v2036, %v1775
        %v2038 = vadd.f32 %v2037, %v1778
        %v2039 = vadd.f32 %v2038, %v1780
        %v2040 = vadd.f32 %v2039, %v1783
        %v2041 = vadd.f32 %v2040, %v1785
        %v2042 = vadd.f32 %v2041, %v1788
        %v2043 = vadd.f32 %v2042, %v1790
        %v2044 = vadd.f32 %v2043, %v1793
        %v2045 = vadd.f32 %v2044, %v1795
        %v2046 = vadd.f32 %v2045, %v1798
        %v2047 = vadd.f32 %v2046, %v1800
        %v2048 = vrot.slane %v2047, 4
        %v2049 = vadd.f32 %v2047, %v2048
        %v2050 = vrot.slane %v2049, 2
        %v2051 = vadd.f32 %v2049, %v2050
        %v2052 = vrot.slane %v2051, 1
        %v2053 = vadd.f32 %v2051, %v2052
        %v2054 = vadd.f32 %v1812, %v1814
        %v2055 = vadd.f32 %v2054, %v1817
        %v2056 = vadd.f32 %v2055, %v1819
        %v2057 = vadd.f32 %v2056, %v1822
        %v2058 = vadd.f32 %v2057, %v1824
        %v2059 = vadd.f32 %v2058, %v1827
        %v2060 = vadd.f32 %v2059, %v1829
        %v2061 = vadd.f32 %v2060, %v1832
        %v2062 = vadd.f32 %v2061, %v1834
        %v2063 = vadd.f32 %v2062, %v1837
        %v2064 = vadd.f32 %v2063, %v1839
        %v2065 = vadd.f32 %v2064, %v1842
        %v2066 = vadd.f32 %v2065, %v1844
        %v2067 = vadd.f32 %v2066, %v1847
        %v2068 = vadd.f32 %v2067, %v1849
        %v2069 = vrot.slane %v2068, 4
        %v2070 = vadd.f32 %v2068, %v2069
        %v2071 = vrot.slane %v2070, 2
        %v2072 = vadd.f32 %v2070, %v2071
        %v2073 = vrot.slane %v2072, 1
        %v2074 = vadd.f32 %v2072, %v2073
        %v2075 = vadd.f32 %v1861, %v1863
        %v2076 = vadd.f32 %v2075, %v1866
        %v2077 = vadd.f32 %v2076, %v1868
        %v2078 = vadd.f32 %v2077, %v1871
        %v2079 = vadd.f32 %v2078, %v1873
        %v2080 = vadd.f32 %v2079, %v1876
        %v2081 = vadd.f32 %v2080, %v1878
        %v2082 = vadd.f32 %v2081, %v1881
        %v2083 = vadd.f32 %v2082, %v1883
        %v2084 = vadd.f32 %v2083, %v1886
        %v2085 = vadd.f32 %v2084, %v1888
        %v2086 = vadd.f32 %v2085, %v1891
        %v2087 = vadd.f32 %v2086, %v1893
        %v2088 = vadd.f32 %v2087, %v1896
        %v2089 = vadd.f32 %v2088, %v1898
        %v2090 = vrot.slane %v2089, 4
        %v2091 = vadd.f32 %v2089, %v2090
        %v2092 = vrot.slane %v2091, 2
        %v2093 = vadd.f32 %v2091, %v2092
        %v2094 = vrot.slane %v2093, 1
        %v2095 = vadd.f32 %v2093, %v2094
        %v2096 = vadd.f32 %v1910, %v1912
        %v2097 = vadd.f32 %v2096, %v1915
        %v2098 = vadd.f32 %v2097, %v1917
        %v2099 = vadd.f32 %v2098, %v1920
        %v2100 = vadd.f32 %v2099, %v1922
        %v2101 = vadd.f32 %v2100, %v1925
        %v2102 = vadd.f32 %v2101, %v1927
        %v2103 = vadd.f32 %v2102, %v1930
        %v2104 = vadd.f32 %v2103, %v1932
        %v2105 = vadd.f32 %v2104, %v1935
        %v2106 = vadd.f32 %v2105, %v1937
        %v2107 = vadd.f32 %v2106, %v1940
        %v2108 = vadd.f32 %v2107, %v1942
        %v2109 = vadd.f32 %v2108, %v1945
        %v2110 = vadd.f32 %v2109, %v1947
        %v2111 = vrot.slane %v2110, 4
        %v2112 = vadd.f32 %v2110, %v2111
        %v2113 = vrot.slane %v2112, 2
        %v2114 = vadd.f32 %v2112, %v2113
        %v2115 = vrot.slane %v2114, 1
        %v2116 = vadd.f32 %v2114, %v2115
        %v2117 = vrcp.pop 128.0
        %v2118 = vmul.f32 128.0, %v2117
        %v2119 = vsub.f32 1.0, %v2118
        %v2120 = vmul.f32 %v2117, %v2119
        %v2121 = vadd.f32 %v2117, %v2120
        %vm2122 = vweird.f32 %v2117
        %v2123 = vsel %vm2122, %v2117, %v2121
        %v2124 = vmul.f32 %v1969, %v2123
        %v2125 = vmul.f32 %v1990, %v2123
        %v2126 = vmul.f32 %v2011, %v2123
        %v2127 = vmul.f32 %v2032, %v2123
        %v2128 = vmul.f32 %v2053, %v2123
        %v2129 = vmul.f32 %v2074, %v2123
        %v2130 = vmul.f32 %v2095, %v2123
        %v2131 = vmul.f32 %v2116, %v2123
        %v2132 = vmul.f32 %v1567, %v1567
        %v2133 = vmul.f32 %v1616, %v1616
        %v2134 = vmul.f32 %v1665, %v1665
        %v2135 = vmul.f32 %v1714, %v1714
        %v2136 = vmul.f32 %v1763, %v1763
        %v2137 = vmul.f32 %v1812, %v1812
        %v2138 = vmul.f32 %v1861, %v1861
        %v2139 = vmul.f32 %v1910, %v1910
        %v2140 = vmul.f32 %v1569, %v1569
        %v2141 = vmul.f32 %v1618, %v1618
        %v2142 = vmul.f32 %v1667, %v1667
        %v2143 = vmul.f32 %v1716, %v1716
        %v2144 = vmul.f32 %v1765, %v1765
        %v2145 = vmul.f32 %v1814, %v1814
        %v2146 = vmul.f32 %v1863, %v1863
        %v2147 = vmul.f32 %v1912, %v1912
        %v2148 = vmul.f32 %v1572, %v1572
        %v2149 = vmul.f32 %v1621, %v1621
        %v2150 = vmul.f32 %v1670, %v1670
        %v2151 = vmul.f32 %v1719, %v1719
        %v2152 = vmul.f32 %v1768, %v1768
        %v2153 = vmul.f32 %v1817, %v1817
        %v2154 = vmul.f32 %v1866, %v1866
        %v2155 = vmul.f32 %v1915, %v1915
        %v2156 = vmul.f32 %v1574, %v1574
        %v2157 = vmul.f32 %v1623, %v1623
        %v2158 = vmul.f32 %v1672, %v1672
        %v2159 = vmul.f32 %v1721, %v1721
        %v2160 = vmul.f32 %v1770, %v1770
        %v2161 = vmul.f32 %v1819, %v1819
        %v2162 = vmul.f32 %v1868, %v1868
        %v2163 = vmul.f32 %v1917, %v1917
        %v2164 = vmul.f32 %v1577, %v1577
        %v2165 = vmul.f32 %v1626, %v1626
        %v2166 = vmul.f32 %v1675, %v1675
        %v2167 = vmul.f32 %v1724, %v1724
        %v2168 = vmul.f32 %v1773, %v1773
        %v2169 = vmul.f32 %v1822, %v1822
        %v2170 = vmul.f32 %v1871, %v1871
        %v2171 = vmul.f32 %v1920, %v1920
        %v2172 = vmul.f32 %v1579, %v1579
        %v2173 = vmul.f32 %v1628, %v1628
        %v2174 = vmul.f32 %v1677, %v1677
        %v2175 = vmul.f32 %v1726, %v1726
        %v2176 = vmul.f32 %v1775, %v1775
        %v2177 = vmul.f32 %v1824, %v1824
        %v2178 = vmul.f32 %v1873, %v1873
        %v2179 = vmul.f32 %v1922, %v1922
        %v2180 = vmul.f32 %v1582, %v1582
        %v2181 = vmul.f32 %v1631, %v1631
        %v2182 = vmul.f32 %v1680, %v1680
        %v2183 = vmul.f32 %v1729, %v1729
        %v2184 = vmul.f32 %v1778, %v1778
        %v2185 = vmul.f32 %v1827, %v1827
        %v2186 = vmul.f32 %v1876, %v1876
        %v2187 = vmul.f32 %v1925, %v1925
        %v2188 = vmul.f32 %v1584, %v1584
        %v2189 = vmul.f32 %v1633, %v1633
        %v2190 = vmul.f32 %v1682, %v1682
        %v2191 = vmul.f32 %v1731, %v1731
        %v2192 = vmul.f32 %v1780, %v1780
        %v2193 = vmul.f32 %v1829, %v1829
        %v2194 = vmul.f32 %v1878, %v1878
        %v2195 = vmul.f32 %v1927, %v1927
        %v2196 = vmul.f32 %v1587, %v1587
        %v2197 = vmul.f32 %v1636, %v1636
        %v2198 = vmul.f32 %v1685, %v1685
        %v2199 = vmul.f32 %v1734, %v1734
        %v2200 = vmul.f32 %v1783, %v1783
        %v2201 = vmul.f32 %v1832, %v1832
        %v2202 = vmul.f32 %v1881, %v1881
        %v2203 = vmul.f32 %v1930, %v1930
        %v2204 = vmul.f32 %v1589, %v1589
        %v2205 = vmul.f32 %v1638, %v1638
        %v2206 = vmul.f32 %v1687, %v1687
        %v2207 = vmul.f32 %v1736, %v1736
        %v2208 = vmul.f32 %v1785, %v1785
        %v2209 = vmul.f32 %v1834, %v1834
        %v2210 = vmul.f32 %v1883, %v1883
        %v2211 = vmul.f32 %v1932, %v1932
        %v2212 = vmul.f32 %v1592, %v1592
        %v2213 = vmul.f32 %v1641, %v1641
        %v2214 = vmul.f32 %v1690, %v1690
        %v2215 = vmul.f32 %v1739, %v1739
        %v2216 = vmul.f32 %v1788, %v1788
        %v2217 = vmul.f32 %v1837, %v1837
        %v2218 = vmul.f32 %v1886, %v1886
        %v2219 = vmul.f32 %v1935, %v1935
        %v2220 = vmul.f32 %v1594, %v1594
        %v2221 = vmul.f32 %v1643, %v1643
        %v2222 = vmul.f32 %v1692, %v1692
        %v2223 = vmul.f32 %v1741, %v1741
        %v2224 = vmul.f32 %v1790, %v1790
        %v2225 = vmul.f32 %v1839, %v1839
        %v2226 = vmul.f32 %v1888, %v1888
        %v2227 = vmul.f32 %v1937, %v1937
        %v2228 = vmul.f32 %v1597, %v1597
        %v2229 = vmul.f32 %v1646, %v1646
        %v2230 = vmul.f32 %v1695, %v1695
        %v2231 = vmul.f32 %v1744, %v1744
        %v2232 = vmul.f32 %v1793, %v1793
        %v2233 = vmul.f32 %v1842, %v1842
        %v2234 = vmul.f32 %v1891, %v1891
        %v2235 = vmul.f32 %v1940, %v1940
        %v2236 = vmul.f32 %v1599, %v1599
        %v2237 = vmul.f32 %v1648, %v1648
        %v2238 = vmul.f32 %v1697, %v1697
        %v2239 = vmul.f32 %v1746, %v1746
        %v2240 = vmul.f32 %v1795, %v1795
        %v2241 = vmul.f32 %v1844, %v1844
        %v2242 = vmul.f32 %v1893, %v1893
        %v2243 = vmul.f32 %v1942, %v1942
        %v2244 = vmul.f32 %v1602, %v1602
        %v2245 = vmul.f32 %v1651, %v1651
        %v2246 = vmul.f32 %v1700, %v1700
        %v2247 = vmul.f32 %v1749, %v1749
        %v2248 = vmul.f32 %v1798, %v1798
        %v2249 = vmul.f32 %v1847, %v1847
        %v2250 = vmul.f32 %v1896, %v1896
        %v2251 = vmul.f32 %v1945, %v1945
        %v2252 = vmul.f32 %v1604, %v1604
        %v2253 = vmul.f32 %v1653, %v1653
        %v2254 = vmul.f32 %v1702, %v1702
        %v2255 = vmul.f32 %v1751, %v1751
        %v2256 = vmul.f32 %v1800, %v1800
        %v2257 = vmul.f32 %v1849, %v1849
        %v2258 = vmul.f32 %v1898, %v1898
        %v2259 = vmul.f32 %v1947, %v1947
        %v2260 = vadd.f32 %v2132, %v2140
        %v2261 = vadd.f32 %v2260, %v2148
        %v2262 = vadd.f32 %v2261, %v2156
        %v2263 = vadd.f32 %v2262, %v2164
        %v2264 = vadd.f32 %v2263, %v2172
        %v2265 = vadd.f32 %v2264, %v2180
        %v2266 = vadd.f32 %v2265, %v2188
        %v2267 = vadd.f32 %v2266, %v2196
        %v2268 = vadd.f32 %v2267, %v2204
        %v2269 = vadd.f32 %v2268, %v2212
        %v2270 = vadd.f32 %v2269, %v2220
        %v2271 = vadd.f32 %v2270, %v2228
        %v2272 = vadd.f32 %v2271, %v2236
        %v2273 = vadd.f32 %v2272, %v2244
        %v2274 = vadd.f32 %v2273, %v2252
        %v2275 = vrot.slane %v2274, 4
        %v2276 = vadd.f32 %v2274, %v2275
        %v2277 = vrot.slane %v2276, 2
        %v2278 = vadd.f32 %v2276, %v2277
        %v2279 = vrot.slane %v2278, 1
        %v2280 = vadd.f32 %v2278, %v2279
        %v2281 = vadd.f32 %v2133, %v2141
        %v2282 = vadd.f32 %v2281, %v2149
        %v2283 = vadd.f32 %v2282, %v2157
        %v2284 = vadd.f32 %v2283, %v2165
        %v2285 = vadd.f32 %v2284, %v2173
        %v2286 = vadd.f32 %v2285, %v2181
        %v2287 = vadd.f32 %v2286, %v2189
        %v2288 = vadd.f32 %v2287, %v2197
        %v2289 = vadd.f32 %v2288, %v2205
        %v2290 = vadd.f32 %v2289, %v2213
        %v2291 = vadd.f32 %v2290, %v2221
        %v2292 = vadd.f32 %v2291, %v2229
        %v2293 = vadd.f32 %v2292, %v2237
        %v2294 = vadd.f32 %v2293, %v2245
        %v2295 = vadd.f32 %v2294, %v2253
        %v2296 = vrot.slane %v2295, 4
        %v2297 = vadd.f32 %v2295, %v2296
        %v2298 = vrot.slane %v2297, 2
        %v2299 = vadd.f32 %v2297, %v2298
        %v2300 = vrot.slane %v2299, 1
        %v2301 = vadd.f32 %v2299, %v2300
        %v2302 = vadd.f32 %v2134, %v2142
        %v2303 = vadd.f32 %v2302, %v2150
        %v2304 = vadd.f32 %v2303, %v2158
        %v2305 = vadd.f32 %v2304, %v2166
        %v2306 = vadd.f32 %v2305, %v2174
        %v2307 = vadd.f32 %v2306, %v2182
        %v2308 = vadd.f32 %v2307, %v2190
        %v2309 = vadd.f32 %v2308, %v2198
        %v2310 = vadd.f32 %v2309, %v2206
        %v2311 = vadd.f32 %v2310, %v2214
        %v2312 = vadd.f32 %v2311, %v2222
        %v2313 = vadd.f32 %v2312, %v2230
        %v2314 = vadd.f32 %v2313, %v2238
        %v2315 = vadd.f32 %v2314, %v2246
        %v2316 = vadd.f32 %v2315, %v2254
        %v2317 = vrot.slane %v2316, 4
        %v2318 = vadd.f32 %v2316, %v2317
        %v2319 = vrot.slane %v2318, 2
        %v2320 = vadd.f32 %v2318, %v2319
        %v2321 = vrot.slane %v2320, 1
        %v2322 = vadd.f32 %v2320, %v2321
        %v2323 = vadd.f32 %v2135, %v2143
        %v2324 = vadd.f32 %v2323, %v2151
        %v2325 = vadd.f32 %v2324, %v2159
        %v2326 = vadd.f32 %v2325, %v2167
        %v2327 = vadd.f32 %v2326, %v2175
        %v2328 = vadd.f32 %v2327, %v2183
        %v2329 = vadd.f32 %v2328, %v2191
        %v2330 = vadd.f32 %v2329, %v2199
        %v2331 = vadd.f32 %v2330, %v2207
        %v2332 = vadd.f32 %v2331, %v2215
        %v2333 = vadd.f32 %v2332, %v2223
        %v2334 = vadd.f32 %v2333, %v2231
        %v2335 = vadd.f32 %v2334, %v2239
        %v2336 = vadd.f32 %v2335, %v2247
        %v2337 = vadd.f32 %v2336, %v2255
        %v2338 = vrot.slane %v2337, 4
        %v2339 = vadd.f32 %v2337, %v2338
        %v2340 = vrot.slane %v2339, 2
        %v2341 = vadd.f32 %v2339, %v2340
        %v2342 = vrot.slane %v2341, 1
        %v2343 = vadd.f32 %v2341, %v2342
        %v2344 = vadd.f32 %v2136, %v2144
        %v2345 = vadd.f32 %v2344, %v2152
        %v2346 = vadd.f32 %v2345, %v2160
        %v2347 = vadd.f32 %v2346, %v2168
        %v2348 = vadd.f32 %v2347, %v2176
        %v2349 = vadd.f32 %v2348, %v2184
        %v2350 = vadd.f32 %v2349, %v2192
        %v2351 = vadd.f32 %v2350, %v2200
        %v2352 = vadd.f32 %v2351, %v2208
        %v2353 = vadd.f32 %v2352, %v2216
        %v2354 = vadd.f32 %v2353, %v2224
        %v2355 = vadd.f32 %v2354, %v2232
        %v2356 = vadd.f32 %v2355, %v2240
        %v2357 = vadd.f32 %v2356, %v2248
        %v2358 = vadd.f32 %v2357, %v2256
        %v2359 = vrot.slane %v2358, 4
        %v2360 = vadd.f32 %v2358, %v2359
        %v2361 = vrot.slane %v2360, 2
        %v2362 = vadd.f32 %v2360, %v2361
        %v2363 = vrot.slane %v2362, 1
        %v2364 = vadd.f32 %v2362, %v2363
        %v2365 = vadd.f32 %v2137, %v2145
        %v2366 = vadd.f32 %v2365, %v2153
        %v2367 = vadd.f32 %v2366, %v2161
        %v2368 = vadd.f32 %v2367, %v2169
        %v2369 = vadd.f32 %v2368, %v2177
        %v2370 = vadd.f32 %v2369, %v2185
        %v2371 = vadd.f32 %v2370, %v2193
        %v2372 = vadd.f32 %v2371, %v2201
        %v2373 = vadd.f32 %v2372, %v2209
        %v2374 = vadd.f32 %v2373, %v2217
        %v2375 = vadd.f32 %v2374, %v2225
        %v2376 = vadd.f32 %v2375, %v2233
        %v2377 = vadd.f32 %v2376, %v2241
        %v2378 = vadd.f32 %v2377, %v2249
        %v2379 = vadd.f32 %v2378, %v2257
        %v2380 = vrot.slane %v2379, 4
        %v2381 = vadd.f32 %v2379, %v2380
        %v2382 = vrot.slane %v2381, 2
        %v2383 = vadd.f32 %v2381, %v2382
        %v2384 = vrot.slane %v2383, 1
        %v2385 = vadd.f32 %v2383, %v2384
        %v2386 = vadd.f32 %v2138, %v2146
        %v2387 = vadd.f32 %v2386, %v2154
        %v2388 = vadd.f32 %v2387, %v2162
        %v2389 = vadd.f32 %v2388, %v2170
        %v2390 = vadd.f32 %v2389, %v2178
        %v2391 = vadd.f32 %v2390, %v2186
        %v2392 = vadd.f32 %v2391, %v2194
        %v2393 = vadd.f32 %v2392, %v2202
        %v2394 = vadd.f32 %v2393, %v2210
        %v2395 = vadd.f32 %v2394, %v2218
        %v2396 = vadd.f32 %v2395, %v2226
        %v2397 = vadd.f32 %v2396, %v2234
        %v2398 = vadd.f32 %v2397, %v2242
        %v2399 = vadd.f32 %v2398, %v2250
        %v2400 = vadd.f32 %v2399, %v2258
        %v2401 = vrot.slane %v2400, 4
        %v2402 = vadd.f32 %v2400, %v2401
        %v2403 = vrot.slane %v2402, 2
        %v2404 = vadd.f32 %v2402, %v2403
        %v2405 = vrot.slane %v2404, 1
        %v2406 = vadd.f32 %v2404, %v2405
        %v2407 = vadd.f32 %v2139, %v2147
        %v2408 = vadd.f32 %v2407, %v2155
        %v2409 = vadd.f32 %v2408, %v2163
        %v2410 = vadd.f32 %v2409, %v2171
        %v2411 = vadd.f32 %v2410, %v2179
        %v2412 = vadd.f32 %v2411, %v2187
        %v2413 = vadd.f32 %v2412, %v2195
        %v2414 = vadd.f32 %v2413, %v2203
        %v2415 = vadd.f32 %v2414, %v2211
        %v2416 = vadd.f32 %v2415, %v2219
        %v2417 = vadd.f32 %v2416, %v2227
        %v2418 = vadd.f32 %v2417, %v2235
        %v2419 = vadd.f32 %v2418, %v2243
        %v2420 = vadd.f32 %v2419, %v2251
        %v2421 = vadd.f32 %v2420, %v2259
        %v2422 = vrot.slane %v2421, 4
        %v2423 = vadd.f32 %v2421, %v2422
        %v2424 = vrot.slane %v2423, 2
        %v2425 = vadd.f32 %v2423, %v2424
        %v2426 = vrot.slane %v2425, 1
        %v2427 = vadd.f32 %v2425, %v2426
        %v2428 = vmul.f32 %v2280, %v2123
        %v2429 = vmul.f32 %v2301, %v2123
        %v2430 = vmul.f32 %v2322, %v2123
        %v2431 = vmul.f32 %v2343, %v2123
        %v2432 = vmul.f32 %v2364, %v2123
        %v2433 = vmul.f32 %v2385, %v2123
        %v2434 = vmul.f32 %v2406, %v2123
        %v2435 = vmul.f32 %v2427, %v2123
        %v2436 = vmul.f32 %v2124, %v2124
        %v2437 = vmul.f32 %v2125, %v2125
        %v2438 = vmul.f32 %v2126, %v2126
        %v2439 = vmul.f32 %v2127, %v2127
        %v2440 = vmul.f32 %v2128, %v2128
        %v2441 = vmul.f32 %v2129, %v2129
        %v2442 = vmul.f32 %v2130, %v2130
        %v2443 = vmul.f32 %v2131, %v2131
        %v2444 = vsub.f32 %v2428, %v2436
        %v2445 = vsub.f32 %v2429, %v2437
        %v2446 = vsub.f32 %v2430, %v2438
        %v2447 = vsub.f32 %v2431, %v2439
        %v2448 = vsub.f32 %v2432, %v2440
        %v2449 = vsub.f32 %v2433, %v2441
        %v2450 = vsub.f32 %v2434, %v2442
        %v2451 = vsub.f32 %v2435, %v2443
        %v2452 = vsub.f32 %v1567, %v2124
        %v2453 = vsub.f32 %v1616, %v2125
        %v2454 = vsub.f32 %v1665, %v2126
        %v2455 = vsub.f32 %v1714, %v2127
        %v2456 = vsub.f32 %v1763, %v2128
        %v2457 = vsub.f32 %v1812, %v2129
        %v2458 = vsub.f32 %v1861, %v2130
        %v2459 = vsub.f32 %v1910, %v2131
        %v2460 = vsub.f32 %v1569, %v2124
        %v2461 = vsub.f32 %v1618, %v2125
        %v2462 = vsub.f32 %v1667, %v2126
        %v2463 = vsub.f32 %v1716, %v2127
        %v2464 = vsub.f32 %v1765, %v2128
        %v2465 = vsub.f32 %v1814, %v2129
        %v2466 = vsub.f32 %v1863, %v2130
        %v2467 = vsub.f32 %v1912, %v2131
        %v2468 = vsub.f32 %v1572, %v2124
        %v2469 = vsub.f32 %v1621, %v2125
        %v2470 = vsub.f32 %v1670, %v2126
        %v2471 = vsub.f32 %v1719, %v2127
        %v2472 = vsub.f32 %v1768, %v2128
        %v2473 = vsub.f32 %v1817, %v2129
        %v2474 = vsub.f32 %v1866, %v2130
        %v2475 = vsub.f32 %v1915, %v2131
        %v2476 = vsub.f32 %v1574, %v2124
        %v2477 = vsub.f32 %v1623, %v2125
        %v2478 = vsub.f32 %v1672, %v2126
        %v2479 = vsub.f32 %v1721, %v2127
        %v2480 = vsub.f32 %v1770, %v2128
        %v2481 = vsub.f32 %v1819, %v2129
        %v2482 = vsub.f32 %v1868, %v2130
        %v2483 = vsub.f32 %v1917, %v2131
        %v2484 = vsub.f32 %v1577, %v2124
        %v2485 = vsub.f32 %v1626, %v2125
        %v2486 = vsub.f32 %v1675, %v2126
        %v2487 = vsub.f32 %v1724, %v2127
        %v2488 = vsub.f32 %v1773, %v2128
        %v2489 = vsub.f32 %v1822, %v2129
        %v2490 = vsub.f32 %v1871, %v2130
        %v2491 = vsub.f32 %v1920, %v2131
        %v2492 = vsub.f32 %v1579, %v2124
        %v2493 = vsub.f32 %v1628, %v2125
        %v2494 = vsub.f32 %v1677, %v2126
        %v2495 = vsub.f32 %v1726, %v2127
        %v2496 = vsub.f32 %v1775, %v2128
        %v2497 = vsub.f32 %v1824, %v2129
        %v2498 = vsub.f32 %v1873, %v2130
        %v2499 = vsub.f32 %v1922, %v2131
        %v2500 = vsub.f32 %v1582, %v2124
        %v2501 = vsub.f32 %v1631, %v2125
        %v2502 = vsub.f32 %v1680, %v2126
        %v2503 = vsub.f32 %v1729, %v2127
        %v2504 = vsub.f32 %v1778, %v2128
        %v2505 = vsub.f32 %v1827, %v2129
        %v2506 = vsub.f32 %v1876, %v2130
        %v2507 = vsub.f32 %v1925, %v2131
        %v2508 = vsub.f32 %v1584, %v2124
        %v2509 = vsub.f32 %v1633, %v2125
        %v2510 = vsub.f32 %v1682, %v2126
        %v2511 = vsub.f32 %v1731, %v2127
        %v2512 = vsub.f32 %v1780, %v2128
        %v2513 = vsub.f32 %v1829, %v2129
        %v2514 = vsub.f32 %v1878, %v2130
        %v2515 = vsub.f32 %v1927, %v2131
        %v2516 = vsub.f32 %v1587, %v2124
        %v2517 = vsub.f32 %v1636, %v2125
        %v2518 = vsub.f32 %v1685, %v2126
        %v2519 = vsub.f32 %v1734, %v2127
        %v2520 = vsub.f32 %v1783, %v2128
        %v2521 = vsub.f32 %v1832, %v2129
        %v2522 = vsub.f32 %v1881, %v2130
        %v2523 = vsub.f32 %v1930, %v2131
        %v2524 = vsub.f32 %v1589, %v2124
        %v2525 = vsub.f32 %v1638, %v2125
        %v2526 = vsub.f32 %v1687, %v2126
        %v2527 = vsub.f32 %v1736, %v2127
        %v2528 = vsub.f32 %v1785, %v2128
        %v2529 = vsub.f32 %v1834, %v2129
        %v2530 = vsub.f32 %v1883, %v2130
        %v2531 = vsub.f32 %v1932, %v2131
        %v2532 = vsub.f32 %v1592, %v2124
        %v2533 = vsub.f32 %v1641, %v2125
        %v2534 = vsub.f32 %v1690, %v2126
        %v2535 = vsub.f32 %v1739, %v2127
        %v2536 = vsub.f32 %v1788, %v2128
        %v2537 = vsub.f32 %v1837, %v2129
        %v2538 = vsub.f32 %v1886, %v2130
        %v2539 = vsub.f32 %v1935, %v2131
        %v2540 = vsub.f32 %v1594, %v2124
        %v2541 = vsub.f32 %v1643, %v2125
        %v2542 = vsub.f32 %v1692, %v2126
        %v2543 = vsub.f32 %v1741, %v2127
        %v2544 = vsub.f32 %v1790, %v2128
        %v2545 = vsub.f32 %v1839, %v2129
        %v2546 = vsub.f32 %v1888, %v2130
        %v2547 = vsub.f32 %v1937, %v2131
        %v2548 = vsub.f32 %v1597, %v2124
        %v2549 = vsub.f32 %v1646, %v2125
        %v2550 = vsub.f32 %v1695, %v2126
        %v2551 = vsub.f32 %v1744, %v2127
        %v2552 = vsub.f32 %v1793, %v2128
        %v2553 = vsub.f32 %v1842, %v2129
        %v2554 = vsub.f32 %v1891, %v2130
        %v2555 = vsub.f32 %v1940, %v2131
        %v2556 = vsub.f32 %v1599, %v2124
        %v2557 = vsub.f32 %v1648, %v2125
        %v2558 = vsub.f32 %v1697, %v2126
        %v2559 = vsub.f32 %v1746, %v2127
        %v2560 = vsub.f32 %v1795, %v2128
        %v2561 = vsub.f32 %v1844, %v2129
        %v2562 = vsub.f32 %v1893, %v2130
        %v2563 = vsub.f32 %v1942, %v2131
        %v2564 = vsub.f32 %v1602, %v2124
        %v2565 = vsub.f32 %v1651, %v2125
        %v2566 = vsub.f32 %v1700, %v2126
        %v2567 = vsub.f32 %v1749, %v2127
        %v2568 = vsub.f32 %v1798, %v2128
        %v2569 = vsub.f32 %v1847, %v2129
        %v2570 = vsub.f32 %v1896, %v2130
        %v2571 = vsub.f32 %v1945, %v2131
        %v2572 = vsub.f32 %v1604, %v2124
        %v2573 = vsub.f32 %v1653, %v2125
        %v2574 = vsub.f32 %v1702, %v2126
        %v2575 = vsub.f32 %v1751, %v2127
        %v2576 = vsub.f32 %v1800, %v2128
        %v2577 = vsub.f32 %v1849, %v2129
        %v2578 = vsub.f32 %v1898, %v2130
        %v2579 = vsub.f32 %v1947, %v2131
        %v2580 = vadd.f32 %v2444, 1e-05
        %v2581 = vadd.f32 %v2445, 1e-05
        %v2582 = vadd.f32 %v2446, 1e-05
        %v2583 = vadd.f32 %v2447, 1e-05
        %v2584 = vadd.f32 %v2448, 1e-05
        %v2585 = vadd.f32 %v2449, 1e-05
        %v2586 = vadd.f32 %v2450, 1e-05
        %v2587 = vadd.f32 %v2451, 1e-05
        %v2588 = vrsqrt.pop %v2580
        %v2589 = vmul.f32 %v2588, %v2580
        %v2590 = vmul.f32 %v2589, %v2588
        %v2591 = vmul.f32 0.5, %v2590
        %v2592 = vsub.f32 1.5, %v2591
        %v2593 = vmul.f32 %v2588, %v2592
        %vm2594 = vweird.f32 %v2580
        %vm2595 = vweird.f32 %v2588
        %vm2596 = vmor %vm2594, %vm2595
        %v2597 = vsel %vm2596, %v2588, %v2593
        %v2598 = vrsqrt.pop %v2581
        %v2599 = vmul.f32 %v2598, %v2581
        %v2600 = vmul.f32 %v2599, %v2598
        %v2601 = vmul.f32 0.5, %v2600
        %v2602 = vsub.f32 1.5, %v2601
        %v2603 = vmul.f32 %v2598, %v2602
        %vm2604 = vweird.f32 %v2581
        %vm2605 = vweird.f32 %v2598
        %vm2606 = vmor %vm2604, %vm2605
        %v2607 = vsel %vm2606, %v2598, %v2603
        %v2608 = vrsqrt.pop %v2582
        %v2609 = vmul.f32 %v2608, %v2582
        %v2610 = vmul.f32 %v2609, %v2608
        %v2611 = vmul.f32 0.5, %v2610
        %v2612 = vsub.f32 1.5, %v2611
        %v2613 = vmul.f32 %v2608, %v2612
        %vm2614 = vweird.f32 %v2582
        %vm2615 = vweird.f32 %v2608
        %vm2616 = vmor %vm2614, %vm2615
        %v2617 = vsel %vm2616, %v2608, %v2613
        %v2618 = vrsqrt.pop %v2583
        %v2619 = vmul.f32 %v2618, %v2583
        %v2620 = vmul.f32 %v2619, %v2618
        %v2621 = vmul.f32 0.5, %v2620
        %v2622 = vsub.f32 1.5, %v2621
        %v2623 = vmul.f32 %v2618, %v2622
        %vm2624 = vweird.f32 %v2583
        %vm2625 = vweird.f32 %v2618
        %vm2626 = vmor %vm2624, %vm2625
        %v2627 = vsel %vm2626, %v2618, %v2623
        %v2628 = vrsqrt.pop %v2584
        %v2629 = vmul.f32 %v2628, %v2584
        %v2630 = vmul.f32 %v2629, %v2628
        %v2631 = vmul.f32 0.5, %v2630
        %v2632 = vsub.f32 1.5, %v2631
        %v2633 = vmul.f32 %v2628, %v2632
        %vm2634 = vweird.f32 %v2584
        %vm2635 = vweird.f32 %v2628
        %vm2636 = vmor %vm2634, %vm2635
        %v2637 = vsel %vm2636, %v2628, %v2633
        %v2638 = vrsqrt.pop %v2585
        %v2639 = vmul.f32 %v2638, %v2585
        %v2640 = vmul.f32 %v2639, %v2638
        %v2641 = vmul.f32 0.5, %v2640
        %v2642 = vsub.f32 1.5, %v2641
        %v2643 = vmul.f32 %v2638, %v2642
        %vm2644 = vweird.f32 %v2585
        %vm2645 = vweird.f32 %v2638
        %vm2646 = vmor %vm2644, %vm2645
        %v2647 = vsel %vm2646, %v2638, %v2643
        %v2648 = vrsqrt.pop %v2586
        %v2649 = vmul.f32 %v2648, %v2586
        %v2650 = vmul.f32 %v2649, %v2648
        %v2651 = vmul.f32 0.5, %v2650
        %v2652 = vsub.f32 1.5, %v2651
        %v2653 = vmul.f32 %v2648, %v2652
        %vm2654 = vweird.f32 %v2586
        %vm2655 = vweird.f32 %v2648
        %vm2656 = vmor %vm2654, %vm2655
        %v2657 = vsel %vm2656, %v2648, %v2653
        %v2658 = vrsqrt.pop %v2587
        %v2659 = vmul.f32 %v2658, %v2587
        %v2660 = vmul.f32 %v2659, %v2658
        %v2661 = vmul.f32 0.5, %v2660
        %v2662 = vsub.f32 1.5, %v2661
        %v2663 = vmul.f32 %v2658, %v2662
        %vm2664 = vweird.f32 %v2587
        %vm2665 = vweird.f32 %v2658
        %vm2666 = vmor %vm2664, %vm2665
        %v2667 = vsel %vm2666, %v2658, %v2663
        %v2668 = vmul.f32 %v2452, %v2597
        %v2669 = vmul.f32 %v2453, %v2607
        %v2670 = vmul.f32 %v2454, %v2617
        %v2671 = vmul.f32 %v2455, %v2627
        %v2672 = vmul.f32 %v2456, %v2637
        %v2673 = vmul.f32 %v2457, %v2647
        %v2674 = vmul.f32 %v2458, %v2657
        %v2675 = vmul.f32 %v2459, %v2667
        %v2676 = vmul.f32 %v2460, %v2597
        %v2677 = vmul.f32 %v2461, %v2607
        %v2678 = vmul.f32 %v2462, %v2617
        %v2679 = vmul.f32 %v2463, %v2627
        %v2680 = vmul.f32 %v2464, %v2637
        %v2681 = vmul.f32 %v2465, %v2647
        %v2682 = vmul.f32 %v2466, %v2657
        %v2683 = vmul.f32 %v2467, %v2667
        %v2684 = vmul.f32 %v2468, %v2597
        %v2685 = vmul.f32 %v2469, %v2607
        %v2686 = vmul.f32 %v2470, %v2617
        %v2687 = vmul.f32 %v2471, %v2627
        %v2688 = vmul.f32 %v2472, %v2637
        %v2689 = vmul.f32 %v2473, %v2647
        %v2690 = vmul.f32 %v2474, %v2657
        %v2691 = vmul.f32 %v2475, %v2667
        %v2692 = vmul.f32 %v2476, %v2597
        %v2693 = vmul.f32 %v2477, %v2607
        %v2694 = vmul.f32 %v2478, %v2617
        %v2695 = vmul.f32 %v2479, %v2627
        %v2696 = vmul.f32 %v2480, %v2637
        %v2697 = vmul.f32 %v2481, %v2647
        %v2698 = vmul.f32 %v2482, %v2657
        %v2699 = vmul.f32 %v2483, %v2667
        %v2700 = vmul.f32 %v2484, %v2597
        %v2701 = vmul.f32 %v2485, %v2607
        %v2702 = vmul.f32 %v2486, %v2617
        %v2703 = vmul.f32 %v2487, %v2627
        %v2704 = vmul.f32 %v2488, %v2637
        %v2705 = vmul.f32 %v2489, %v2647
        %v2706 = vmul.f32 %v2490, %v2657
        %v2707 = vmul.f32 %v2491, %v2667
        %v2708 = vmul.f32 %v2492, %v2597
        %v2709 = vmul.f32 %v2493, %v2607
        %v2710 = vmul.f32 %v2494, %v2617
        %v2711 = vmul.f32 %v2495, %v2627
        %v2712 = vmul.f32 %v2496, %v2637
        %v2713 = vmul.f32 %v2497, %v2647
        %v2714 = vmul.f32 %v2498, %v2657
        %v2715 = vmul.f32 %v2499, %v2667
        %v2716 = vmul.f32 %v2500, %v2597
        %v2717 = vmul.f32 %v2501, %v2607
        %v2718 = vmul.f32 %v2502, %v2617
        %v2719 = vmul.f32 %v2503, %v2627
        %v2720 = vmul.f32 %v2504, %v2637
        %v2721 = vmul.f32 %v2505, %v2647
        %v2722 = vmul.f32 %v2506, %v2657
        %v2723 = vmul.f32 %v2507, %v2667
        %v2724 = vmul.f32 %v2508, %v2597
        %v2725 = vmul.f32 %v2509, %v2607
        %v2726 = vmul.f32 %v2510, %v2617
        %v2727 = vmul.f32 %v2511, %v2627
        %v2728 = vmul.f32 %v2512, %v2637
        %v2729 = vmul.f32 %v2513, %v2647
        %v2730 = vmul.f32 %v2514, %v2657
        %v2731 = vmul.f32 %v2515, %v2667
        %v2732 = vmul.f32 %v2516, %v2597
        %v2733 = vmul.f32 %v2517, %v2607
        %v2734 = vmul.f32 %v2518, %v2617
        %v2735 = vmul.f32 %v2519, %v2627
        %v2736 = vmul.f32 %v2520, %v2637
        %v2737 = vmul.f32 %v2521, %v2647
        %v2738 = vmul.f32 %v2522, %v2657
        %v2739 = vmul.f32 %v2523, %v2667
        %v2740 = vmul.f32 %v2524, %v2597
        %v2741 = vmul.f32 %v2525, %v2607
        %v2742 = vmul.f32 %v2526, %v2617
        %v2743 = vmul.f32 %v2527, %v2627
        %v2744 = vmul.f32 %v2528, %v2637
        %v2745 = vmul.f32 %v2529, %v2647
        %v2746 = vmul.f32 %v2530, %v2657
        %v2747 = vmul.f32 %v2531, %v2667
        %v2748 = vmul.f32 %v2532, %v2597
        %v2749 = vmul.f32 %v2533, %v2607
        %v2750 = vmul.f32 %v2534, %v2617
        %v2751 = vmul.f32 %v2535, %v2627
        %v2752 = vmul.f32 %v2536, %v2637
        %v2753 = vmul.f32 %v2537, %v2647
        %v2754 = vmul.f32 %v2538, %v2657
        %v2755 = vmul.f32 %v2539, %v2667
        %v2756 = vmul.f32 %v2540, %v2597
        %v2757 = vmul.f32 %v2541, %v2607
        %v2758 = vmul.f32 %v2542, %v2617
        %v2759 = vmul.f32 %v2543, %v2627
        %v2760 = vmul.f32 %v2544, %v2637
        %v2761 = vmul.f32 %v2545, %v2647
        %v2762 = vmul.f32 %v2546, %v2657
        %v2763 = vmul.f32 %v2547, %v2667
        %v2764 = vmul.f32 %v2548, %v2597
        %v2765 = vmul.f32 %v2549, %v2607
        %v2766 = vmul.f32 %v2550, %v2617
        %v2767 = vmul.f32 %v2551, %v2627
        %v2768 = vmul.f32 %v2552, %v2637
        %v2769 = vmul.f32 %v2553, %v2647
        %v2770 = vmul.f32 %v2554, %v2657
        %v2771 = vmul.f32 %v2555, %v2667
        %v2772 = vmul.f32 %v2556, %v2597
        %v2773 = vmul.f32 %v2557, %v2607
        %v2774 = vmul.f32 %v2558, %v2617
        %v2775 = vmul.f32 %v2559, %v2627
        %v2776 = vmul.f32 %v2560, %v2637
        %v2777 = vmul.f32 %v2561, %v2647
        %v2778 = vmul.f32 %v2562, %v2657
        %v2779 = vmul.f32 %v2563, %v2667
        %v2780 = vmul.f32 %v2564, %v2597
        %v2781 = vmul.f32 %v2565, %v2607
        %v2782 = vmul.f32 %v2566, %v2617
        %v2783 = vmul.f32 %v2567, %v2627
        %v2784 = vmul.f32 %v2568, %v2637
        %v2785 = vmul.f32 %v2569, %v2647
        %v2786 = vmul.f32 %v2570, %v2657
        %v2787 = vmul.f32 %v2571, %v2667
        %v2788 = vmul.f32 %v2572, %v2597
        %v2789 = vmul.f32 %v2573, %v2607
        %v2790 = vmul.f32 %v2574, %v2617
        %v2791 = vmul.f32 %v2575, %v2627
        %v2792 = vmul.f32 %v2576, %v2637
        %v2793 = vmul.f32 %v2577, %v2647
        %v2794 = vmul.f32 %v2578, %v2657
        %v2795 = vmul.f32 %v2579, %v2667
        %2797 = vset.pattern.permute.xlu0 0
        %2798 = vperm.xlu0 %2797, %v1157
        %v2799 = vpop.permute.xlu0 %2798
        %2802 = vset.pattern.permute.xlu0 0
        %2803 = vperm.xlu0 %2802, %v1158
        %v2804 = vpop.permute.xlu0 %2803
        %2807 = vset.pattern.permute.xlu0 0
        %2808 = vperm.xlu0 %2807, %v1159
        %v2809 = vpop.permute.xlu0 %2808
        %2812 = vset.pattern.permute.xlu0 0
        %2813 = vperm.xlu0 %2812, %v1160
        %v2814 = vpop.permute.xlu0 %2813
        %2817 = vset.pattern.permute.xlu0 0
        %2818 = vperm.xlu0 %2817, %v1161
        %v2819 = vpop.permute.xlu0 %2818
        %2822 = vset.pattern.permute.xlu0 0
        %2823 = vperm.xlu0 %2822, %v1162
        %v2824 = vpop.permute.xlu0 %2823
        %2827 = vset.pattern.permute.xlu0 0
        %2828 = vperm.xlu0 %2827, %v1163
        %v2829 = vpop.permute.xlu0 %2828
        %2832 = vset.pattern.permute.xlu0 0
        %2833 = vperm.xlu0 %2832, %v1164
        %v2834 = vpop.permute.xlu0 %2833
        %2837 = vset.pattern.permute.xlu0 0
        %2838 = vperm.xlu0 %2837, %v1165
        %v2839 = vpop.permute.xlu0 %2838
        %2842 = vset.pattern.permute.xlu0 0
        %2843 = vperm.xlu0 %2842, %v1166
        %v2844 = vpop.permute.xlu0 %2843
        %2847 = vset.pattern.permute.xlu0 0
        %2848 = vperm.xlu0 %2847, %v1167
        %v2849 = vpop.permute.xlu0 %2848
        %2852 = vset.pattern.permute.xlu0 0
        %2853 = vperm.xlu0 %2852, %v1168
        %v2854 = vpop.permute.xlu0 %2853
        %2857 = vset.pattern.permute.xlu0 0
        %2858 = vperm.xlu0 %2857, %v1169
        %v2859 = vpop.permute.xlu0 %2858
        %2862 = vset.pattern.permute.xlu0 0
        %2863 = vperm.xlu0 %2862, %v1170
        %v2864 = vpop.permute.xlu0 %2863
        %2867 = vset.pattern.permute.xlu0 0
        %2868 = vperm.xlu0 %2867, %v1171
        %v2869 = vpop.permute.xlu0 %2868
        %2872 = vset.pattern.permute.xlu0 0
        %2873 = vperm.xlu0 %2872, %v1172
        %v2874 = vpop.permute.xlu0 %2873
        %v2876 = vmul.f32 %v2668, %v2799
        %v2877 = vmul.f32 %v2669, %v2799
        %v2878 = vmul.f32 %v2670, %v2799
        %v2879 = vmul.f32 %v2671, %v2799
        %v2880 = vmul.f32 %v2672, %v2799
        %v2881 = vmul.f32 %v2673, %v2799
        %v2882 = vmul.f32 %v2674, %v2799
        %v2883 = vmul.f32 %v2675, %v2799
        %v2884 = vmul.f32 %v2676, %v2804
        %v2885 = vmul.f32 %v2677, %v2804
        %v2886 = vmul.f32 %v2678, %v2804
        %v2887 = vmul.f32 %v2679, %v2804
        %v2888 = vmul.f32 %v2680, %v2804
        %v2889 = vmul.f32 %v2681, %v2804
        %v2890 = vmul.f32 %v2682, %v2804
        %v2891 = vmul.f32 %v2683, %v2804
        %v2892 = vmul.f32 %v2684, %v2809
        %v2893 = vmul.f32 %v2685, %v2809
        %v2894 = vmul.f32 %v2686, %v2809
        %v2895 = vmul.f32 %v2687, %v2809
        %v2896 = vmul.f32 %v2688, %v2809
        %v2897 = vmul.f32 %v2689, %v2809
        %v2898 = vmul.f32 %v2690, %v2809
        %v2899 = vmul.f32 %v2691, %v2809
        %v2900 = vmul.f32 %v2692, %v2814
        %v2901 = vmul.f32 %v2693, %v2814
        %v2902 = vmul.f32 %v2694, %v2814
        %v2903 = vmul.f32 %v2695, %v2814
        %v2904 = vmul.f32 %v2696, %v2814
        %v2905 = vmul.f32 %v2697, %v2814
        %v2906 = vmul.f32 %v2698, %v2814
        %v2907 = vmul.f32 %v2699, %v2814
        %v2908 = vmul.f32 %v2700, %v2819
        %v2909 = vmul.f32 %v2701, %v2819
        %v2910 = vmul.f32 %v2702, %v2819
        %v2911 = vmul.f32 %v2703, %v2819
        %v2912 = vmul.f32 %v2704, %v2819
        %v2913 = vmul.f32 %v2705, %v2819
        %v2914 = vmul.f32 %v2706, %v2819
        %v2915 = vmul.f32 %v2707, %v2819
        %v2916 = vmul.f32 %v2708, %v2824
        %v2917 = vmul.f32 %v2709, %v2824
        %v2918 = vmul.f32 %v2710, %v2824
        %v2919 = vmul.f32 %v2711, %v2824
        %v2920 = vmul.f32 %v2712, %v2824
        %v2921 = vmul.f32 %v2713, %v2824
        %v2922 = vmul.f32 %v2714, %v2824
        %v2923 = vmul.f32 %v2715, %v2824
        %v2924 = vmul.f32 %v2716, %v2829
        %v2925 = vmul.f32 %v2717, %v2829
        %v2926 = vmul.f32 %v2718, %v2829
        %v2927 = vmul.f32 %v2719, %v2829
        %v2928 = vmul.f32 %v2720, %v2829
        %v2929 = vmul.f32 %v2721, %v2829
        %v2930 = vmul.f32 %v2722, %v2829
        %v2931 = vmul.f32 %v2723, %v2829
        %v2932 = vmul.f32 %v2724, %v2834
        %v2933 = vmul.f32 %v2725, %v2834
        %v2934 = vmul.f32 %v2726, %v2834
        %v2935 = vmul.f32 %v2727, %v2834
        %v2936 = vmul.f32 %v2728, %v2834
        %v2937 = vmul.f32 %v2729, %v2834
        %v2938 = vmul.f32 %v2730, %v2834
        %v2939 = vmul.f32 %v2731, %v2834
        %v2940 = vmul.f32 %v2732, %v2839
        %v2941 = vmul.f32 %v2733, %v2839
        %v2942 = vmul.f32 %v2734, %v2839
        %v2943 = vmul.f32 %v2735, %v2839
        %v2944 = vmul.f32 %v2736, %v2839
        %v2945 = vmul.f32 %v2737, %v2839
        %v2946 = vmul.f32 %v2738, %v2839
        %v2947 = vmul.f32 %v2739, %v2839
        %v2948 = vmul.f32 %v2740, %v2844
        %v2949 = vmul.f32 %v2741, %v2844
        %v2950 = vmul.f32 %v2742, %v2844
        %v2951 = vmul.f32 %v2743, %v2844
        %v2952 = vmul.f32 %v2744, %v2844
        %v2953 = vmul.f32 %v2745, %v2844
        %v2954 = vmul.f32 %v2746, %v2844
        %v2955 = vmul.f32 %v2747, %v2844
        %v2956 = vmul.f32 %v2748, %v2849
        %v2957 = vmul.f32 %v2749, %v2849
        %v2958 = vmul.f32 %v2750, %v2849
        %v2959 = vmul.f32 %v2751, %v2849
        %v2960 = vmul.f32 %v2752, %v2849
        %v2961 = vmul.f32 %v2753, %v2849
        %v2962 = vmul.f32 %v2754, %v2849
        %v2963 = vmul.f32 %v2755, %v2849
        %v2964 = vmul.f32 %v2756, %v2854
        %v2965 = vmul.f32 %v2757, %v2854
        %v2966 = vmul.f32 %v2758, %v2854
        %v2967 = vmul.f32 %v2759, %v2854
        %v2968 = vmul.f32 %v2760, %v2854
        %v2969 = vmul.f32 %v2761, %v2854
        %v2970 = vmul.f32 %v2762, %v2854
        %v2971 = vmul.f32 %v2763, %v2854
        %v2972 = vmul.f32 %v2764, %v2859
        %v2973 = vmul.f32 %v2765, %v2859
        %v2974 = vmul.f32 %v2766, %v2859
        %v2975 = vmul.f32 %v2767, %v2859
        %v2976 = vmul.f32 %v2768, %v2859
        %v2977 = vmul.f32 %v2769, %v2859
        %v2978 = vmul.f32 %v2770, %v2859
        %v2979 = vmul.f32 %v2771, %v2859
        %v2980 = vmul.f32 %v2772, %v2864
        %v2981 = vmul.f32 %v2773, %v2864
        %v2982 = vmul.f32 %v2774, %v2864
        %v2983 = vmul.f32 %v2775, %v2864
        %v2984 = vmul.f32 %v2776, %v2864
        %v2985 = vmul.f32 %v2777, %v2864
        %v2986 = vmul.f32 %v2778, %v2864
        %v2987 = vmul.f32 %v2779, %v2864
        %v2988 = vmul.f32 %v2780, %v2869
        %v2989 = vmul.f32 %v2781, %v2869
        %v2990 = vmul.f32 %v2782, %v2869
        %v2991 = vmul.f32 %v2783, %v2869
        %v2992 = vmul.f32 %v2784, %v2869
        %v2993 = vmul.f32 %v2785, %v2869
        %v2994 = vmul.f32 %v2786, %v2869
        %v2995 = vmul.f32 %v2787, %v2869
        %v2996 = vmul.f32 %v2788, %v2874
        %v2997 = vmul.f32 %v2789, %v2874
        %v2998 = vmul.f32 %v2790, %v2874
        %v2999 = vmul.f32 %v2791, %v2874
        %v3000 = vmul.f32 %v2792, %v2874
        %v3001 = vmul.f32 %v2793, %v2874
        %v3002 = vmul.f32 %v2794, %v2874
        %v3003 = vmul.f32 %v2795, %v2874
        %3004 = vset.pattern.permute.xlu0 1
        %3005 = vperm.xlu0 %3004, %v1157
        %v3006 = vpop.permute.xlu0 %3005
        %3008 = vset.pattern.permute.xlu0 1
        %3009 = vperm.xlu0 %3008, %v1158
        %v3010 = vpop.permute.xlu0 %3009
        %3012 = vset.pattern.permute.xlu0 1
        %3013 = vperm.xlu0 %3012, %v1159
        %v3014 = vpop.permute.xlu0 %3013
        %3016 = vset.pattern.permute.xlu0 1
        %3017 = vperm.xlu0 %3016, %v1160
        %v3018 = vpop.permute.xlu0 %3017
        %3020 = vset.pattern.permute.xlu0 1
        %3021 = vperm.xlu0 %3020, %v1161
        %v3022 = vpop.permute.xlu0 %3021
        %3024 = vset.pattern.permute.xlu0 1
        %3025 = vperm.xlu0 %3024, %v1162
        %v3026 = vpop.permute.xlu0 %3025
        %3028 = vset.pattern.permute.xlu0 1
        %3029 = vperm.xlu0 %3028, %v1163
        %v3030 = vpop.permute.xlu0 %3029
        %3032 = vset.pattern.permute.xlu0 1
        %3033 = vperm.xlu0 %3032, %v1164
        %v3034 = vpop.permute.xlu0 %3033
        %3036 = vset.pattern.permute.xlu0 1
        %3037 = vperm.xlu0 %3036, %v1165
        %v3038 = vpop.permute.xlu0 %3037
        %3040 = vset.pattern.permute.xlu0 1
        %3041 = vperm.xlu0 %3040, %v1166
        %v3042 = vpop.permute.xlu0 %3041
        %3044 = vset.pattern.permute.xlu0 1
        %3045 = vperm.xlu0 %3044, %v1167
        %v3046 = vpop.permute.xlu0 %3045
        %3048 = vset.pattern.permute.xlu0 1
        %3049 = vperm.xlu0 %3048, %v1168
        %v3050 = vpop.permute.xlu0 %3049
        %3052 = vset.pattern.permute.xlu0 1
        %3053 = vperm.xlu0 %3052, %v1169
        %v3054 = vpop.permute.xlu0 %3053
        %3056 = vset.pattern.permute.xlu0 1
        %3057 = vperm.xlu0 %3056, %v1170
        %v3058 = vpop.permute.xlu0 %3057
        %3060 = vset.pattern.permute.xlu0 1
        %3061 = vperm.xlu0 %3060, %v1171
        %v3062 = vpop.permute.xlu0 %3061
        %3064 = vset.pattern.permute.xlu0 1
        %3065 = vperm.xlu0 %3064, %v1172
        %v3066 = vpop.permute.xlu0 %3065
        %v3068 = vadd.f32 %v2876, %v3006
        %v3069 = vadd.f32 %v2877, %v3006
        %v3070 = vadd.f32 %v2878, %v3006
        %v3071 = vadd.f32 %v2879, %v3006
        %v3072 = vadd.f32 %v2880, %v3006
        %v3073 = vadd.f32 %v2881, %v3006
        %v3074 = vadd.f32 %v2882, %v3006
        %v3075 = vadd.f32 %v2883, %v3006
        %v3076 = vadd.f32 %v2884, %v3010
        %v3077 = vadd.f32 %v2885, %v3010
        %v3078 = vadd.f32 %v2886, %v3010
        %v3079 = vadd.f32 %v2887, %v3010
        %v3080 = vadd.f32 %v2888, %v3010
        %v3081 = vadd.f32 %v2889, %v3010
        %v3082 = vadd.f32 %v2890, %v3010
        %v3083 = vadd.f32 %v2891, %v3010
        %v3084 = vadd.f32 %v2892, %v3014
        %v3085 = vadd.f32 %v2893, %v3014
        %v3086 = vadd.f32 %v2894, %v3014
        %v3087 = vadd.f32 %v2895, %v3014
        %v3088 = vadd.f32 %v2896, %v3014
        %v3089 = vadd.f32 %v2897, %v3014
        %v3090 = vadd.f32 %v2898, %v3014
        %v3091 = vadd.f32 %v2899, %v3014
        %v3092 = vadd.f32 %v2900, %v3018
        %v3093 = vadd.f32 %v2901, %v3018
        %v3094 = vadd.f32 %v2902, %v3018
        %v3095 = vadd.f32 %v2903, %v3018
        %v3096 = vadd.f32 %v2904, %v3018
        %v3097 = vadd.f32 %v2905, %v3018
        %v3098 = vadd.f32 %v2906, %v3018
        %v3099 = vadd.f32 %v2907, %v3018
        %v3100 = vadd.f32 %v2908, %v3022
        %v3101 = vadd.f32 %v2909, %v3022
        %v3102 = vadd.f32 %v2910, %v3022
        %v3103 = vadd.f32 %v2911, %v3022
        %v3104 = vadd.f32 %v2912, %v3022
        %v3105 = vadd.f32 %v2913, %v3022
        %v3106 = vadd.f32 %v2914, %v3022
        %v3107 = vadd.f32 %v2915, %v3022
        %v3108 = vadd.f32 %v2916, %v3026
        %v3109 = vadd.f32 %v2917, %v3026
        %v3110 = vadd.f32 %v2918, %v3026
        %v3111 = vadd.f32 %v2919, %v3026
        %v3112 = vadd.f32 %v2920, %v3026
        %v3113 = vadd.f32 %v2921, %v3026
        %v3114 = vadd.f32 %v2922, %v3026
        %v3115 = vadd.f32 %v2923, %v3026
        %v3116 = vadd.f32 %v2924, %v3030
        %v3117 = vadd.f32 %v2925, %v3030
        %v3118 = vadd.f32 %v2926, %v3030
        %v3119 = vadd.f32 %v2927, %v3030
        %v3120 = vadd.f32 %v2928, %v3030
        %v3121 = vadd.f32 %v2929, %v3030
        %v3122 = vadd.f32 %v2930, %v3030
        %v3123 = vadd.f32 %v2931, %v3030
        %v3124 = vadd.f32 %v2932, %v3034
        %v3125 = vadd.f32 %v2933, %v3034
        %v3126 = vadd.f32 %v2934, %v3034
        %v3127 = vadd.f32 %v2935, %v3034
        %v3128 = vadd.f32 %v2936, %v3034
        %v3129 = vadd.f32 %v2937, %v3034
        %v3130 = vadd.f32 %v2938, %v3034
        %v3131 = vadd.f32 %v2939, %v3034
        %v3132 = vadd.f32 %v2940, %v3038
        %v3133 = vadd.f32 %v2941, %v3038
        %v3134 = vadd.f32 %v2942, %v3038
        %v3135 = vadd.f32 %v2943, %v3038
        %v3136 = vadd.f32 %v2944, %v3038
        %v3137 = vadd.f32 %v2945, %v3038
        %v3138 = vadd.f32 %v2946, %v3038
        %v3139 = vadd.f32 %v2947, %v3038
        %v3140 = vadd.f32 %v2948, %v3042
        %v3141 = vadd.f32 %v2949, %v3042
        %v3142 = vadd.f32 %v2950, %v3042
        %v3143 = vadd.f32 %v2951, %v3042
        %v3144 = vadd.f32 %v2952, %v3042
        %v3145 = vadd.f32 %v2953, %v3042
        %v3146 = vadd.f32 %v2954, %v3042
        %v3147 = vadd.f32 %v2955, %v3042
        %v3148 = vadd.f32 %v2956, %v3046
        %v3149 = vadd.f32 %v2957, %v3046
        %v3150 = vadd.f32 %v2958, %v3046
        %v3151 = vadd.f32 %v2959, %v3046
        %v3152 = vadd.f32 %v2960, %v3046
        %v3153 = vadd.f32 %v2961, %v3046
        %v3154 = vadd.f32 %v2962, %v3046
        %v3155 = vadd.f32 %v2963, %v3046
        %v3156 = vadd.f32 %v2964, %v3050
        %v3157 = vadd.f32 %v2965, %v3050
        %v3158 = vadd.f32 %v2966, %v3050
        %v3159 = vadd.f32 %v2967, %v3050
        %v3160 = vadd.f32 %v2968, %v3050
        %v3161 = vadd.f32 %v2969, %v3050
        %v3162 = vadd.f32 %v2970, %v3050
        %v3163 = vadd.f32 %v2971, %v3050
        %v3164 = vadd.f32 %v2972, %v3054
        %v3165 = vadd.f32 %v2973, %v3054
        %v3166 = vadd.f32 %v2974, %v3054
        %v3167 = vadd.f32 %v2975, %v3054
        %v3168 = vadd.f32 %v2976, %v3054
        %v3169 = vadd.f32 %v2977, %v3054
        %v3170 = vadd.f32 %v2978, %v3054
        %v3171 = vadd.f32 %v2979, %v3054
        %v3172 = vadd.f32 %v2980, %v3058
        %v3173 = vadd.f32 %v2981, %v3058
        %v3174 = vadd.f32 %v2982, %v3058
        %v3175 = vadd.f32 %v2983, %v3058
        %v3176 = vadd.f32 %v2984, %v3058
        %v3177 = vadd.f32 %v2985, %v3058
        %v3178 = vadd.f32 %v2986, %v3058
        %v3179 = vadd.f32 %v2987, %v3058
        %v3180 = vadd.f32 %v2988, %v3062
        %v3181 = vadd.f32 %v2989, %v3062
        %v3182 = vadd.f32 %v2990, %v3062
        %v3183 = vadd.f32 %v2991, %v3062
        %v3184 = vadd.f32 %v2992, %v3062
        %v3185 = vadd.f32 %v2993, %v3062
        %v3186 = vadd.f32 %v2994, %v3062
        %v3187 = vadd.f32 %v2995, %v3062
        %v3188 = vadd.f32 %v2996, %v3066
        %v3189 = vadd.f32 %v2997, %v3066
        %v3190 = vadd.f32 %v2998, %v3066
        %v3191 = vadd.f32 %v2999, %v3066
        %v3192 = vadd.f32 %v3000, %v3066
        %v3193 = vadd.f32 %v3001, %v3066
        %v3194 = vadd.f32 %v3002, %v3066
        %v3195 = vadd.f32 %v3003, %v3066
        %v3196 = vmax.f32 %v3068, 0.0
        %v3197 = vmax.f32 %v3069, 0.0
        %v3198 = vmax.f32 %v3070, 0.0
        %v3199 = vmax.f32 %v3071, 0.0
        %v3200 = vmax.f32 %v3072, 0.0
        %v3201 = vmax.f32 %v3073, 0.0
        %v3202 = vmax.f32 %v3074, 0.0
        %v3203 = vmax.f32 %v3075, 0.0
        %v3204 = vmax.f32 %v3076, 0.0
        %v3205 = vmax.f32 %v3077, 0.0
        %v3206 = vmax.f32 %v3078, 0.0
        %v3207 = vmax.f32 %v3079, 0.0
        %v3208 = vmax.f32 %v3080, 0.0
        %v3209 = vmax.f32 %v3081, 0.0
        %v3210 = vmax.f32 %v3082, 0.0
        %v3211 = vmax.f32 %v3083, 0.0
        %v3212 = vmax.f32 %v3084, 0.0
        %v3213 = vmax.f32 %v3085, 0.0
        %v3214 = vmax.f32 %v3086, 0.0
        %v3215 = vmax.f32 %v3087, 0.0
        %v3216 = vmax.f32 %v3088, 0.0
        %v3217 = vmax.f32 %v3089, 0.0
        %v3218 = vmax.f32 %v3090, 0.0
        %v3219 = vmax.f32 %v3091, 0.0
        %v3220 = vmax.f32 %v3092, 0.0
        %v3221 = vmax.f32 %v3093, 0.0
        %v3222 = vmax.f32 %v3094, 0.0
        %v3223 = vmax.f32 %v3095, 0.0
        %v3224 = vmax.f32 %v3096, 0.0
        %v3225 = vmax.f32 %v3097, 0.0
        %v3226 = vmax.f32 %v3098, 0.0
        %v3227 = vmax.f32 %v3099, 0.0
        %v3228 = vmax.f32 %v3100, 0.0
        %v3229 = vmax.f32 %v3101, 0.0
        %v3230 = vmax.f32 %v3102, 0.0
        %v3231 = vmax.f32 %v3103, 0.0
        %v3232 = vmax.f32 %v3104, 0.0
        %v3233 = vmax.f32 %v3105, 0.0
        %v3234 = vmax.f32 %v3106, 0.0
        %v3235 = vmax.f32 %v3107, 0.0
        %v3236 = vmax.f32 %v3108, 0.0
        %v3237 = vmax.f32 %v3109, 0.0
        %v3238 = vmax.f32 %v3110, 0.0
        %v3239 = vmax.f32 %v3111, 0.0
        %v3240 = vmax.f32 %v3112, 0.0
        %v3241 = vmax.f32 %v3113, 0.0
        %v3242 = vmax.f32 %v3114, 0.0
        %v3243 = vmax.f32 %v3115, 0.0
        %v3244 = vmax.f32 %v3116, 0.0
        %v3245 = vmax.f32 %v3117, 0.0
        %v3246 = vmax.f32 %v3118, 0.0
        %v3247 = vmax.f32 %v3119, 0.0
        %v3248 = vmax.f32 %v3120, 0.0
        %v3249 = vmax.f32 %v3121, 0.0
        %v3250 = vmax.f32 %v3122, 0.0
        %v3251 = vmax.f32 %v3123, 0.0
        %v3252 = vmax.f32 %v3124, 0.0
        %v3253 = vmax.f32 %v3125, 0.0
        %v3254 = vmax.f32 %v3126, 0.0
        %v3255 = vmax.f32 %v3127, 0.0
        %v3256 = vmax.f32 %v3128, 0.0
        %v3257 = vmax.f32 %v3129, 0.0
        %v3258 = vmax.f32 %v3130, 0.0
        %v3259 = vmax.f32 %v3131, 0.0
        %v3260 = vmax.f32 %v3132, 0.0
        %v3261 = vmax.f32 %v3133, 0.0
        %v3262 = vmax.f32 %v3134, 0.0
        %v3263 = vmax.f32 %v3135, 0.0
        %v3264 = vmax.f32 %v3136, 0.0
        %v3265 = vmax.f32 %v3137, 0.0
        %v3266 = vmax.f32 %v3138, 0.0
        %v3267 = vmax.f32 %v3139, 0.0
        %v3268 = vmax.f32 %v3140, 0.0
        %v3269 = vmax.f32 %v3141, 0.0
        %v3270 = vmax.f32 %v3142, 0.0
        %v3271 = vmax.f32 %v3143, 0.0
        %v3272 = vmax.f32 %v3144, 0.0
        %v3273 = vmax.f32 %v3145, 0.0
        %v3274 = vmax.f32 %v3146, 0.0
        %v3275 = vmax.f32 %v3147, 0.0
        %v3276 = vmax.f32 %v3148, 0.0
        %v3277 = vmax.f32 %v3149, 0.0
        %v3278 = vmax.f32 %v3150, 0.0
        %v3279 = vmax.f32 %v3151, 0.0
        %v3280 = vmax.f32 %v3152, 0.0
        %v3281 = vmax.f32 %v3153, 0.0
        %v3282 = vmax.f32 %v3154, 0.0
        %v3283 = vmax.f32 %v3155, 0.0
        %v3284 = vmax.f32 %v3156, 0.0
        %v3285 = vmax.f32 %v3157, 0.0
        %v3286 = vmax.f32 %v3158, 0.0
        %v3287 = vmax.f32 %v3159, 0.0
        %v3288 = vmax.f32 %v3160, 0.0
        %v3289 = vmax.f32 %v3161, 0.0
        %v3290 = vmax.f32 %v3162, 0.0
        %v3291 = vmax.f32 %v3163, 0.0
        %v3292 = vmax.f32 %v3164, 0.0
        %v3293 = vmax.f32 %v3165, 0.0
        %v3294 = vmax.f32 %v3166, 0.0
        %v3295 = vmax.f32 %v3167, 0.0
        %v3296 = vmax.f32 %v3168, 0.0
        %v3297 = vmax.f32 %v3169, 0.0
        %v3298 = vmax.f32 %v3170, 0.0
        %v3299 = vmax.f32 %v3171, 0.0
        %v3300 = vmax.f32 %v3172, 0.0
        %v3301 = vmax.f32 %v3173, 0.0
        %v3302 = vmax.f32 %v3174, 0.0
        %v3303 = vmax.f32 %v3175, 0.0
        %v3304 = vmax.f32 %v3176, 0.0
        %v3305 = vmax.f32 %v3177, 0.0
        %v3306 = vmax.f32 %v3178, 0.0
        %v3307 = vmax.f32 %v3179, 0.0
        %v3308 = vmax.f32 %v3180, 0.0
        %v3309 = vmax.f32 %v3181, 0.0
        %v3310 = vmax.f32 %v3182, 0.0
        %v3311 = vmax.f32 %v3183, 0.0
        %v3312 = vmax.f32 %v3184, 0.0
        %v3313 = vmax.f32 %v3185, 0.0
        %v3314 = vmax.f32 %v3186, 0.0
        %v3315 = vmax.f32 %v3187, 0.0
        %v3316 = vmax.f32 %v3188, 0.0
        %v3317 = vmax.f32 %v3189, 0.0
        %v3318 = vmax.f32 %v3190, 0.0
        %v3319 = vmax.f32 %v3191, 0.0
        %v3320 = vmax.f32 %v3192, 0.0
        %v3321 = vmax.f32 %v3193, 0.0
        %v3322 = vmax.f32 %v3194, 0.0
        %v3323 = vmax.f32 %v3195, 0.0
        %v3324 = vpack.c.bf16 %v3204, %v3196
        %v3325 = vpack.c.bf16 %v3205, %v3197
        %v3326 = vpack.c.bf16 %v3206, %v3198
        %v3327 = vpack.c.bf16 %v3207, %v3199
        %v3328 = vpack.c.bf16 %v3208, %v3200
        %v3329 = vpack.c.bf16 %v3209, %v3201
        %v3330 = vpack.c.bf16 %v3210, %v3202
        %v3331 = vpack.c.bf16 %v3211, %v3203
        %v3332 = vpack.c.bf16 %v3220, %v3212
        %v3333 = vpack.c.bf16 %v3221, %v3213
        %v3334 = vpack.c.bf16 %v3222, %v3214
        %v3335 = vpack.c.bf16 %v3223, %v3215
        %v3336 = vpack.c.bf16 %v3224, %v3216
        %v3337 = vpack.c.bf16 %v3225, %v3217
        %v3338 = vpack.c.bf16 %v3226, %v3218
        %v3339 = vpack.c.bf16 %v3227, %v3219
        %v3340 = vpack.c.bf16 %v3236, %v3228
        %v3341 = vpack.c.bf16 %v3237, %v3229
        %v3342 = vpack.c.bf16 %v3238, %v3230
        %v3343 = vpack.c.bf16 %v3239, %v3231
        %v3344 = vpack.c.bf16 %v3240, %v3232
        %v3345 = vpack.c.bf16 %v3241, %v3233
        %v3346 = vpack.c.bf16 %v3242, %v3234
        %v3347 = vpack.c.bf16 %v3243, %v3235
        %v3348 = vpack.c.bf16 %v3252, %v3244
        %v3349 = vpack.c.bf16 %v3253, %v3245
        %v3350 = vpack.c.bf16 %v3254, %v3246
        %v3351 = vpack.c.bf16 %v3255, %v3247
        %v3352 = vpack.c.bf16 %v3256, %v3248
        %v3353 = vpack.c.bf16 %v3257, %v3249
        %v3354 = vpack.c.bf16 %v3258, %v3250
        %v3355 = vpack.c.bf16 %v3259, %v3251
        %v3356 = vpack.c.bf16 %v3268, %v3260
        %v3357 = vpack.c.bf16 %v3269, %v3261
        %v3358 = vpack.c.bf16 %v3270, %v3262
        %v3359 = vpack.c.bf16 %v3271, %v3263
        %v3360 = vpack.c.bf16 %v3272, %v3264
        %v3361 = vpack.c.bf16 %v3273, %v3265
        %v3362 = vpack.c.bf16 %v3274, %v3266
        %v3363 = vpack.c.bf16 %v3275, %v3267
        %v3364 = vpack.c.bf16 %v3284, %v3276
        %v3365 = vpack.c.bf16 %v3285, %v3277
        %v3366 = vpack.c.bf16 %v3286, %v3278
        %v3367 = vpack.c.bf16 %v3287, %v3279
        %v3368 = vpack.c.bf16 %v3288, %v3280
        %v3369 = vpack.c.bf16 %v3289, %v3281
        %v3370 = vpack.c.bf16 %v3290, %v3282
        %v3371 = vpack.c.bf16 %v3291, %v3283
        %v3372 = vpack.c.bf16 %v3300, %v3292
        %v3373 = vpack.c.bf16 %v3301, %v3293
        %v3374 = vpack.c.bf16 %v3302, %v3294
        %v3375 = vpack.c.bf16 %v3303, %v3295
        %v3376 = vpack.c.bf16 %v3304, %v3296
        %v3377 = vpack.c.bf16 %v3305, %v3297
        %v3378 = vpack.c.bf16 %v3306, %v3298
        %v3379 = vpack.c.bf16 %v3307, %v3299
        %v3380 = vpack.c.bf16 %v3316, %v3308
        %v3381 = vpack.c.bf16 %v3317, %v3309
        %v3382 = vpack.c.bf16 %v3318, %v3310
        %v3383 = vpack.c.bf16 %v3319, %v3311
        %v3384 = vpack.c.bf16 %v3320, %v3312
        %v3385 = vpack.c.bf16 %v3321, %v3313
        %v3386 = vpack.c.bf16 %v3322, %v3314
        %v3387 = vpack.c.bf16 %v3323, %v3315
        %v3388 = vld [vmem:[%s3] sm:$0xf]
        %v3389 = vld [vmem:[%s3 + $0x4] sm:$0xf]
        %v3390 = vld [vmem:[%s3 + $0x8] sm:$0xf]
        %v3391 = vld [vmem:[%s3 + $0xc] sm:$0xf]
        %v3392 = vld [vmem:[%s3 + $0x10] sm:$0xf]
        %v3393 = vld [vmem:[%s3 + $0x14] sm:$0xf]
        %v3394 = vld [vmem:[%s3 + $0x18] sm:$0xf]
        %v3395 = vld [vmem:[%s3 + $0x1c] sm:$0xf]
        %v3396 = vld [vmem:[%s3 + $0x20] sm:$0xf]
        %v3397 = vld [vmem:[%s3 + $0x24] sm:$0xf]
        %v3398 = vld [vmem:[%s3 + $0x28] sm:$0xf]
        %v3399 = vld [vmem:[%s3 + $0x2c] sm:$0xf]
        %v3400 = vld [vmem:[%s3 + $0x30] sm:$0xf]
        %v3401 = vld [vmem:[%s3 + $0x34] sm:$0xf]
        %v3402 = vld [vmem:[%s3 + $0x38] sm:$0xf]
        %v3403 = vld [vmem:[%s3 + $0x3c] sm:$0xf]
        %3404 = vset.pattern.permute.xlu0 2
        %3405 = vperm.xlu0 %3404, %v1157
        %v3406 = vpop.permute.xlu0 %3405
        %3408 = vset.pattern.permute.xlu0 2
        %3409 = vperm.xlu0 %3408, %v1158
        %v3410 = vpop.permute.xlu0 %3409
        %3412 = vset.pattern.permute.xlu0 2
        %3413 = vperm.xlu0 %3412, %v1159
        %v3414 = vpop.permute.xlu0 %3413
        %3416 = vset.pattern.permute.xlu0 2
        %3417 = vperm.xlu0 %3416, %v1160
        %v3418 = vpop.permute.xlu0 %3417
        %3420 = vset.pattern.permute.xlu0 2
        %3421 = vperm.xlu0 %3420, %v1161
        %v3422 = vpop.permute.xlu0 %3421
        %3424 = vset.pattern.permute.xlu0 2
        %3425 = vperm.xlu0 %3424, %v1162
        %v3426 = vpop.permute.xlu0 %3425
        %3428 = vset.pattern.permute.xlu0 2
        %3429 = vperm.xlu0 %3428, %v1163
        %v3430 = vpop.permute.xlu0 %3429
        %3432 = vset.pattern.permute.xlu0 2
        %3433 = vperm.xlu0 %3432, %v1164
        %v3434 = vpop.permute.xlu0 %3433
        %3436 = vset.pattern.permute.xlu0 2
        %3437 = vperm.xlu0 %3436, %v1165
        %v3438 = vpop.permute.xlu0 %3437
        %3440 = vset.pattern.permute.xlu0 2
        %3441 = vperm.xlu0 %3440, %v1166
        %v3442 = vpop.permute.xlu0 %3441
        %3444 = vset.pattern.permute.xlu0 2
        %3445 = vperm.xlu0 %3444, %v1167
        %v3446 = vpop.permute.xlu0 %3445
        %3448 = vset.pattern.permute.xlu0 2
        %3449 = vperm.xlu0 %3448, %v1168
        %v3450 = vpop.permute.xlu0 %3449
        %3452 = vset.pattern.permute.xlu0 2
        %3453 = vperm.xlu0 %3452, %v1169
        %v3454 = vpop.permute.xlu0 %3453
        %3456 = vset.pattern.permute.xlu0 2
        %3457 = vperm.xlu0 %3456, %v1170
        %v3458 = vpop.permute.xlu0 %3457
        %3460 = vset.pattern.permute.xlu0 2
        %3461 = vperm.xlu0 %3460, %v1171
        %v3462 = vpop.permute.xlu0 %3461
        %3464 = vset.pattern.permute.xlu0 2
        %3465 = vperm.xlu0 %3464, %v1172
        %v3466 = vpop.permute.xlu0 %3465
        %v3484 = vunpack.c.l.b16 %v3388
        %v3485 = vunpack.c.l.b16 %v3389
        %v3486 = vunpack.c.l.b16 %v3390
        %v3487 = vunpack.c.l.b16 %v3391
        %v3488 = vunpack.c.l.b16 %v3392
        %v3489 = vunpack.c.l.b16 %v3393
        %v3490 = vunpack.c.l.b16 %v3394
        %v3491 = vunpack.c.l.b16 %v3395
        %v3492 = vunpack.c.l.b16 %v3396
        %v3493 = vunpack.c.l.b16 %v3397
        %v3494 = vunpack.c.l.b16 %v3398
        %v3495 = vunpack.c.l.b16 %v3399
        %v3496 = vunpack.c.l.b16 %v3400
        %v3497 = vunpack.c.l.b16 %v3401
        %v3498 = vunpack.c.l.b16 %v3402
        %v3499 = vunpack.c.l.b16 %v3403
        %v3500 = vpack.c.b16 %v3485, %v3484
        %v3501 = vpack.c.b16 %v3487, %v3486
        %v3502 = vpack.c.b16 %v3489, %v3488
        %v3503 = vpack.c.b16 %v3491, %v3490
        %v3504 = vpack.c.b16 %v3493, %v3492
        %v3505 = vpack.c.b16 %v3495, %v3494
        %v3506 = vpack.c.b16 %v3497, %v3496
        %v3507 = vpack.c.b16 %v3499, %v3498
        %3516 = vmatpush.bf16.msra.mxu0 %v3380
        %3517 = vmatpush.bf16.msra.mxu0 %v3372
        %3518 = vmatpush.bf16.msra.mxu0 %v3364
        %3519 = vmatpush.bf16.msra.mxu0 %v3356
        %3520 = vmatpush.bf16.msra.mxu0 %v3348
        %3521 = vmatpush.bf16.msra.mxu0 %v3340
        %3522 = vmatpush.bf16.msra.mxu0 %v3332
        %3523 = vmatpush.bf16.msra.mxu0 %v3324
        %3524 = vmatmul.bf16.gmra.mxu0 %v3500
        %v3525 = vpop.f32.mrf.mxu0
        %v3526 = vadd.f32 %v3406, %v3525
        %v3527 = vpop.f32.mrf.mxu0
        %v3528 = vadd.f32 %v3410, %v3527
        %3529 = vmatmul.bf16.gmra.mxu0 %v3501
        %v3530 = vpop.f32.mrf.mxu0
        %v3531 = vadd.f32 %v3414, %v3530
        %v3532 = vpop.f32.mrf.mxu0
        %v3533 = vadd.f32 %v3418, %v3532
        %3534 = vmatmul.bf16.gmra.mxu0 %v3502
        %v3535 = vpop.f32.mrf.mxu0
        %v3536 = vadd.f32 %v3422, %v3535
        %v3537 = vpop.f32.mrf.mxu0
        %v3538 = vadd.f32 %v3426, %v3537
        %3539 = vmatmul.bf16.gmra.mxu0 %v3503
        %v3540 = vpop.f32.mrf.mxu0
        %v3541 = vadd.f32 %v3430, %v3540
        %v3542 = vpop.f32.mrf.mxu0
        %v3543 = vadd.f32 %v3434, %v3542
        %3544 = vmatmul.bf16.gmra.mxu0 %v3504
        %v3545 = vpop.f32.mrf.mxu0
        %v3546 = vadd.f32 %v3438, %v3545
        %v3547 = vpop.f32.mrf.mxu0
        %v3548 = vadd.f32 %v3442, %v3547
        %3549 = vmatmul.bf16.gmra.mxu0 %v3505
        %v3550 = vpop.f32.mrf.mxu0
        %v3551 = vadd.f32 %v3446, %v3550
        %v3552 = vpop.f32.mrf.mxu0
        %v3553 = vadd.f32 %v3450, %v3552
        %3554 = vmatmul.bf16.gmra.mxu0 %v3506
        %v3555 = vpop.f32.mrf.mxu0
        %v3556 = vadd.f32 %v3454, %v3555
        %v3557 = vpop.f32.mrf.mxu0
        %v3558 = vadd.f32 %v3458, %v3557
        %3559 = vmatmul.bf16.gmra.mxu0 %v3507
        %v3560 = vpop.f32.mrf.mxu0
        %v3561 = vadd.f32 %v3462, %v3560
        %v3562 = vpop.f32.mrf.mxu0
        %v3563 = vadd.f32 %v3466, %v3562
        %3564 = vdwg.mxu0
        %3565 = vmatpush.bf16.msra.mxu0 %v3381
        %3566 = vmatpush.bf16.msra.mxu0 %v3373
        %3567 = vmatpush.bf16.msra.mxu0 %v3365
        %3568 = vmatpush.bf16.msra.mxu0 %v3357
        %3569 = vmatpush.bf16.msra.mxu0 %v3349
        %3570 = vmatpush.bf16.msra.mxu0 %v3341
        %3571 = vmatpush.bf16.msra.mxu0 %v3333
        %3572 = vmatpush.bf16.msra.mxu0 %v3325
        %3573 = vmatmul.bf16.gmra.mxu0 %v3500
        %v3574 = vpop.f32.mrf.mxu0
        %v3575 = vadd.f32 %v3406, %v3574
        %v3576 = vpop.f32.mrf.mxu0
        %v3577 = vadd.f32 %v3410, %v3576
        %3578 = vmatmul.bf16.gmra.mxu0 %v3501
        %v3579 = vpop.f32.mrf.mxu0
        %v3580 = vadd.f32 %v3414, %v3579
        %v3581 = vpop.f32.mrf.mxu0
        %v3582 = vadd.f32 %v3418, %v3581
        %3583 = vmatmul.bf16.gmra.mxu0 %v3502
        %v3584 = vpop.f32.mrf.mxu0
        %v3585 = vadd.f32 %v3422, %v3584
        %v3586 = vpop.f32.mrf.mxu0
        %v3587 = vadd.f32 %v3426, %v3586
        %3588 = vmatmul.bf16.gmra.mxu0 %v3503
        %v3589 = vpop.f32.mrf.mxu0
        %v3590 = vadd.f32 %v3430, %v3589
        %v3591 = vpop.f32.mrf.mxu0
        %v3592 = vadd.f32 %v3434, %v3591
        %3593 = vmatmul.bf16.gmra.mxu0 %v3504
        %v3594 = vpop.f32.mrf.mxu0
        %v3595 = vadd.f32 %v3438, %v3594
        %v3596 = vpop.f32.mrf.mxu0
        %v3597 = vadd.f32 %v3442, %v3596
        %3598 = vmatmul.bf16.gmra.mxu0 %v3505
        %v3599 = vpop.f32.mrf.mxu0
        %v3600 = vadd.f32 %v3446, %v3599
        %v3601 = vpop.f32.mrf.mxu0
        %v3602 = vadd.f32 %v3450, %v3601
        %3603 = vmatmul.bf16.gmra.mxu0 %v3506
        %v3604 = vpop.f32.mrf.mxu0
        %v3605 = vadd.f32 %v3454, %v3604
        %v3606 = vpop.f32.mrf.mxu0
        %v3607 = vadd.f32 %v3458, %v3606
        %3608 = vmatmul.bf16.gmra.mxu0 %v3507
        %v3609 = vpop.f32.mrf.mxu0
        %v3610 = vadd.f32 %v3462, %v3609
        %v3611 = vpop.f32.mrf.mxu0
        %v3612 = vadd.f32 %v3466, %v3611
        %3613 = vdwg.mxu0
        %3614 = vmatpush.bf16.msra.mxu0 %v3382
        %3615 = vmatpush.bf16.msra.mxu0 %v3374
        %3616 = vmatpush.bf16.msra.mxu0 %v3366
        %3617 = vmatpush.bf16.msra.mxu0 %v3358
        %3618 = vmatpush.bf16.msra.mxu0 %v3350
        %3619 = vmatpush.bf16.msra.mxu0 %v3342
        %3620 = vmatpush.bf16.msra.mxu0 %v3334
        %3621 = vmatpush.bf16.msra.mxu0 %v3326
        %3622 = vmatmul.bf16.gmra.mxu0 %v3500
        %v3623 = vpop.f32.mrf.mxu0
        %v3624 = vadd.f32 %v3406, %v3623
        %v3625 = vpop.f32.mrf.mxu0
        %v3626 = vadd.f32 %v3410, %v3625
        %3627 = vmatmul.bf16.gmra.mxu0 %v3501
        %v3628 = vpop.f32.mrf.mxu0
        %v3629 = vadd.f32 %v3414, %v3628
        %v3630 = vpop.f32.mrf.mxu0
        %v3631 = vadd.f32 %v3418, %v3630
        %3632 = vmatmul.bf16.gmra.mxu0 %v3502
        %v3633 = vpop.f32.mrf.mxu0
        %v3634 = vadd.f32 %v3422, %v3633
        %v3635 = vpop.f32.mrf.mxu0
        %v3636 = vadd.f32 %v3426, %v3635
        %3637 = vmatmul.bf16.gmra.mxu0 %v3503
        %v3638 = vpop.f32.mrf.mxu0
        %v3639 = vadd.f32 %v3430, %v3638
        %v3640 = vpop.f32.mrf.mxu0
        %v3641 = vadd.f32 %v3434, %v3640
        %3642 = vmatmul.bf16.gmra.mxu0 %v3504
        %v3643 = vpop.f32.mrf.mxu0
        %v3644 = vadd.f32 %v3438, %v3643
        %v3645 = vpop.f32.mrf.mxu0
        %v3646 = vadd.f32 %v3442, %v3645
        %3647 = vmatmul.bf16.gmra.mxu0 %v3505
        %v3648 = vpop.f32.mrf.mxu0
        %v3649 = vadd.f32 %v3446, %v3648
        %v3650 = vpop.f32.mrf.mxu0
        %v3651 = vadd.f32 %v3450, %v3650
        %3652 = vmatmul.bf16.gmra.mxu0 %v3506
        %v3653 = vpop.f32.mrf.mxu0
        %v3654 = vadd.f32 %v3454, %v3653
        %v3655 = vpop.f32.mrf.mxu0
        %v3656 = vadd.f32 %v3458, %v3655
        %3657 = vmatmul.bf16.gmra.mxu0 %v3507
        %v3658 = vpop.f32.mrf.mxu0
        %v3659 = vadd.f32 %v3462, %v3658
        %v3660 = vpop.f32.mrf.mxu0
        %v3661 = vadd.f32 %v3466, %v3660
        %3662 = vdwg.mxu0
        %3663 = vmatpush.bf16.msra.mxu0 %v3383
        %3664 = vmatpush.bf16.msra.mxu0 %v3375
        %3665 = vmatpush.bf16.msra.mxu0 %v3367
        %3666 = vmatpush.bf16.msra.mxu0 %v3359
        %3667 = vmatpush.bf16.msra.mxu0 %v3351
        %3668 = vmatpush.bf16.msra.mxu0 %v3343
        %3669 = vmatpush.bf16.msra.mxu0 %v3335
        %3670 = vmatpush.bf16.msra.mxu0 %v3327
        %3671 = vmatmul.bf16.gmra.mxu0 %v3500
        %v3672 = vpop.f32.mrf.mxu0
        %v3673 = vadd.f32 %v3406, %v3672
        %v3674 = vpop.f32.mrf.mxu0
        %v3675 = vadd.f32 %v3410, %v3674
        %3676 = vmatmul.bf16.gmra.mxu0 %v3501
        %v3677 = vpop.f32.mrf.mxu0
        %v3678 = vadd.f32 %v3414, %v3677
        %v3679 = vpop.f32.mrf.mxu0
        %v3680 = vadd.f32 %v3418, %v3679
        %3681 = vmatmul.bf16.gmra.mxu0 %v3502
        %v3682 = vpop.f32.mrf.mxu0
        %v3683 = vadd.f32 %v3422, %v3682
        %v3684 = vpop.f32.mrf.mxu0
        %v3685 = vadd.f32 %v3426, %v3684
        %3686 = vmatmul.bf16.gmra.mxu0 %v3503
        %v3687 = vpop.f32.mrf.mxu0
        %v3688 = vadd.f32 %v3430, %v3687
        %v3689 = vpop.f32.mrf.mxu0
        %v3690 = vadd.f32 %v3434, %v3689
        %3691 = vmatmul.bf16.gmra.mxu0 %v3504
        %v3692 = vpop.f32.mrf.mxu0
        %v3693 = vadd.f32 %v3438, %v3692
        %v3694 = vpop.f32.mrf.mxu0
        %v3695 = vadd.f32 %v3442, %v3694
        %3696 = vmatmul.bf16.gmra.mxu0 %v3505
        %v3697 = vpop.f32.mrf.mxu0
        %v3698 = vadd.f32 %v3446, %v3697
        %v3699 = vpop.f32.mrf.mxu0
        %v3700 = vadd.f32 %v3450, %v3699
        %3701 = vmatmul.bf16.gmra.mxu0 %v3506
        %v3702 = vpop.f32.mrf.mxu0
        %v3703 = vadd.f32 %v3454, %v3702
        %v3704 = vpop.f32.mrf.mxu0
        %v3705 = vadd.f32 %v3458, %v3704
        %3706 = vmatmul.bf16.gmra.mxu0 %v3507
        %v3707 = vpop.f32.mrf.mxu0
        %v3708 = vadd.f32 %v3462, %v3707
        %v3709 = vpop.f32.mrf.mxu0
        %v3710 = vadd.f32 %v3466, %v3709
        %3711 = vdwg.mxu0
        %3712 = vmatpush.bf16.msra.mxu0 %v3384
        %3713 = vmatpush.bf16.msra.mxu0 %v3376
        %3714 = vmatpush.bf16.msra.mxu0 %v3368
        %3715 = vmatpush.bf16.msra.mxu0 %v3360
        %3716 = vmatpush.bf16.msra.mxu0 %v3352
        %3717 = vmatpush.bf16.msra.mxu0 %v3344
        %3718 = vmatpush.bf16.msra.mxu0 %v3336
        %3719 = vmatpush.bf16.msra.mxu0 %v3328
        %3720 = vmatmul.bf16.gmra.mxu0 %v3500
        %v3721 = vpop.f32.mrf.mxu0
        %v3722 = vadd.f32 %v3406, %v3721
        %v3723 = vpop.f32.mrf.mxu0
        %v3724 = vadd.f32 %v3410, %v3723
        %3725 = vmatmul.bf16.gmra.mxu0 %v3501
        %v3726 = vpop.f32.mrf.mxu0
        %v3727 = vadd.f32 %v3414, %v3726
        %v3728 = vpop.f32.mrf.mxu0
        %v3729 = vadd.f32 %v3418, %v3728
        %3730 = vmatmul.bf16.gmra.mxu0 %v3502
        %v3731 = vpop.f32.mrf.mxu0
        %v3732 = vadd.f32 %v3422, %v3731
        %v3733 = vpop.f32.mrf.mxu0
        %v3734 = vadd.f32 %v3426, %v3733
        %3735 = vmatmul.bf16.gmra.mxu0 %v3503
        %v3736 = vpop.f32.mrf.mxu0
        %v3737 = vadd.f32 %v3430, %v3736
        %v3738 = vpop.f32.mrf.mxu0
        %v3739 = vadd.f32 %v3434, %v3738
        %3740 = vmatmul.bf16.gmra.mxu0 %v3504
        %v3741 = vpop.f32.mrf.mxu0
        %v3742 = vadd.f32 %v3438, %v3741
        %v3743 = vpop.f32.mrf.mxu0
        %v3744 = vadd.f32 %v3442, %v3743
        %3745 = vmatmul.bf16.gmra.mxu0 %v3505
        %v3746 = vpop.f32.mrf.mxu0
        %v3747 = vadd.f32 %v3446, %v3746
        %v3748 = vpop.f32.mrf.mxu0
        %v3749 = vadd.f32 %v3450, %v3748
        %3750 = vmatmul.bf16.gmra.mxu0 %v3506
        %v3751 = vpop.f32.mrf.mxu0
        %v3752 = vadd.f32 %v3454, %v3751
        %v3753 = vpop.f32.mrf.mxu0
        %v3754 = vadd.f32 %v3458, %v3753
        %3755 = vmatmul.bf16.gmra.mxu0 %v3507
        %v3756 = vpop.f32.mrf.mxu0
        %v3757 = vadd.f32 %v3462, %v3756
        %v3758 = vpop.f32.mrf.mxu0
        %v3759 = vadd.f32 %v3466, %v3758
        %3760 = vdwg.mxu0
        %3761 = vmatpush.bf16.msra.mxu0 %v3385
        %3762 = vmatpush.bf16.msra.mxu0 %v3377
        %3763 = vmatpush.bf16.msra.mxu0 %v3369
        %3764 = vmatpush.bf16.msra.mxu0 %v3361
        %3765 = vmatpush.bf16.msra.mxu0 %v3353
        %3766 = vmatpush.bf16.msra.mxu0 %v3345
        %3767 = vmatpush.bf16.msra.mxu0 %v3337
        %3768 = vmatpush.bf16.msra.mxu0 %v3329
        %3769 = vmatmul.bf16.gmra.mxu0 %v3500
        %v3770 = vpop.f32.mrf.mxu0
        %v3771 = vadd.f32 %v3406, %v3770
        %v3772 = vpop.f32.mrf.mxu0
        %v3773 = vadd.f32 %v3410, %v3772
        %3774 = vmatmul.bf16.gmra.mxu0 %v3501
        %v3775 = vpop.f32.mrf.mxu0
        %v3776 = vadd.f32 %v3414, %v3775
        %v3777 = vpop.f32.mrf.mxu0
        %v3778 = vadd.f32 %v3418, %v3777
        %3779 = vmatmul.bf16.gmra.mxu0 %v3502
        %v3780 = vpop.f32.mrf.mxu0
        %v3781 = vadd.f32 %v3422, %v3780
        %v3782 = vpop.f32.mrf.mxu0
        %v3783 = vadd.f32 %v3426, %v3782
        %3784 = vmatmul.bf16.gmra.mxu0 %v3503
        %v3785 = vpop.f32.mrf.mxu0
        %v3786 = vadd.f32 %v3430, %v3785
        %v3787 = vpop.f32.mrf.mxu0
        %v3788 = vadd.f32 %v3434, %v3787
        %3789 = vmatmul.bf16.gmra.mxu0 %v3504
        %v3790 = vpop.f32.mrf.mxu0
        %v3791 = vadd.f32 %v3438, %v3790
        %v3792 = vpop.f32.mrf.mxu0
        %v3793 = vadd.f32 %v3442, %v3792
        %3794 = vmatmul.bf16.gmra.mxu0 %v3505
        %v3795 = vpop.f32.mrf.mxu0
        %v3796 = vadd.f32 %v3446, %v3795
        %v3797 = vpop.f32.mrf.mxu0
        %v3798 = vadd.f32 %v3450, %v3797
        %3799 = vmatmul.bf16.gmra.mxu0 %v3506
        %v3800 = vpop.f32.mrf.mxu0
        %v3801 = vadd.f32 %v3454, %v3800
        %v3802 = vpop.f32.mrf.mxu0
        %v3803 = vadd.f32 %v3458, %v3802
        %3804 = vmatmul.bf16.gmra.mxu0 %v3507
        %v3805 = vpop.f32.mrf.mxu0
        %v3806 = vadd.f32 %v3462, %v3805
        %v3807 = vpop.f32.mrf.mxu0
        %v3808 = vadd.f32 %v3466, %v3807
        %3809 = vdwg.mxu0
        %3810 = vmatpush.bf16.msra.mxu0 %v3386
        %3811 = vmatpush.bf16.msra.mxu0 %v3378
        %3812 = vmatpush.bf16.msra.mxu0 %v3370
        %3813 = vmatpush.bf16.msra.mxu0 %v3362
        %3814 = vmatpush.bf16.msra.mxu0 %v3354
        %3815 = vmatpush.bf16.msra.mxu0 %v3346
        %3816 = vmatpush.bf16.msra.mxu0 %v3338
        %3817 = vmatpush.bf16.msra.mxu0 %v3330
        %3818 = vmatmul.bf16.gmra.mxu0 %v3500
        %v3819 = vpop.f32.mrf.mxu0
        %v3820 = vadd.f32 %v3406, %v3819
        %v3821 = vpop.f32.mrf.mxu0
        %v3822 = vadd.f32 %v3410, %v3821
        %3823 = vmatmul.bf16.gmra.mxu0 %v3501
        %v3824 = vpop.f32.mrf.mxu0
        %v3825 = vadd.f32 %v3414, %v3824
        %v3826 = vpop.f32.mrf.mxu0
        %v3827 = vadd.f32 %v3418, %v3826
        %3828 = vmatmul.bf16.gmra.mxu0 %v3502
        %v3829 = vpop.f32.mrf.mxu0
        %v3830 = vadd.f32 %v3422, %v3829
        %v3831 = vpop.f32.mrf.mxu0
        %v3832 = vadd.f32 %v3426, %v3831
        %3833 = vmatmul.bf16.gmra.mxu0 %v3503
        %v3834 = vpop.f32.mrf.mxu0
        %v3835 = vadd.f32 %v3430, %v3834
        %v3836 = vpop.f32.mrf.mxu0
        %v3837 = vadd.f32 %v3434, %v3836
        %3838 = vmatmul.bf16.gmra.mxu0 %v3504
        %v3839 = vpop.f32.mrf.mxu0
        %v3840 = vadd.f32 %v3438, %v3839
        %v3841 = vpop.f32.mrf.mxu0
        %v3842 = vadd.f32 %v3442, %v3841
        %3843 = vmatmul.bf16.gmra.mxu0 %v3505
        %v3844 = vpop.f32.mrf.mxu0
        %v3845 = vadd.f32 %v3446, %v3844
        %v3846 = vpop.f32.mrf.mxu0
        %v3847 = vadd.f32 %v3450, %v3846
        %3848 = vmatmul.bf16.gmra.mxu0 %v3506
        %v3849 = vpop.f32.mrf.mxu0
        %v3850 = vadd.f32 %v3454, %v3849
        %v3851 = vpop.f32.mrf.mxu0
        %v3852 = vadd.f32 %v3458, %v3851
        %3853 = vmatmul.bf16.gmra.mxu0 %v3507
        %v3854 = vpop.f32.mrf.mxu0
        %v3855 = vadd.f32 %v3462, %v3854
        %v3856 = vpop.f32.mrf.mxu0
        %v3857 = vadd.f32 %v3466, %v3856
        %3858 = vdwg.mxu0
        %3859 = vmatpush.bf16.msra.mxu0 %v3387
        %3860 = vmatpush.bf16.msra.mxu0 %v3379
        %3861 = vmatpush.bf16.msra.mxu0 %v3371
        %3862 = vmatpush.bf16.msra.mxu0 %v3363
        %3863 = vmatpush.bf16.msra.mxu0 %v3355
        %3864 = vmatpush.bf16.msra.mxu0 %v3347
        %3865 = vmatpush.bf16.msra.mxu0 %v3339
        %3866 = vmatpush.bf16.msra.mxu0 %v3331
        %3867 = vmatmul.bf16.gmra.mxu0 %v3500
        %v3868 = vpop.f32.mrf.mxu0
        %v3869 = vadd.f32 %v3406, %v3868
        %v3870 = vpop.f32.mrf.mxu0
        %v3871 = vadd.f32 %v3410, %v3870
        %3872 = vmatmul.bf16.gmra.mxu0 %v3501
        %v3873 = vpop.f32.mrf.mxu0
        %v3874 = vadd.f32 %v3414, %v3873
        %v3875 = vpop.f32.mrf.mxu0
        %v3876 = vadd.f32 %v3418, %v3875
        %3877 = vmatmul.bf16.gmra.mxu0 %v3502
        %v3878 = vpop.f32.mrf.mxu0
        %v3879 = vadd.f32 %v3422, %v3878
        %v3880 = vpop.f32.mrf.mxu0
        %v3881 = vadd.f32 %v3426, %v3880
        %3882 = vmatmul.bf16.gmra.mxu0 %v3503
        %v3883 = vpop.f32.mrf.mxu0
        %v3884 = vadd.f32 %v3430, %v3883
        %v3885 = vpop.f32.mrf.mxu0
        %v3886 = vadd.f32 %v3434, %v3885
        %3887 = vmatmul.bf16.gmra.mxu0 %v3504
        %v3888 = vpop.f32.mrf.mxu0
        %v3889 = vadd.f32 %v3438, %v3888
        %v3890 = vpop.f32.mrf.mxu0
        %v3891 = vadd.f32 %v3442, %v3890
        %3892 = vmatmul.bf16.gmra.mxu0 %v3505
        %v3893 = vpop.f32.mrf.mxu0
        %v3894 = vadd.f32 %v3446, %v3893
        %v3895 = vpop.f32.mrf.mxu0
        %v3896 = vadd.f32 %v3450, %v3895
        %3897 = vmatmul.bf16.gmra.mxu0 %v3506
        %v3898 = vpop.f32.mrf.mxu0
        %v3899 = vadd.f32 %v3454, %v3898
        %v3900 = vpop.f32.mrf.mxu0
        %v3901 = vadd.f32 %v3458, %v3900
        %3902 = vmatmul.bf16.gmra.mxu0 %v3507
        %v3903 = vpop.f32.mrf.mxu0
        %v3904 = vadd.f32 %v3462, %v3903
        %v3905 = vpop.f32.mrf.mxu0
        %v3906 = vadd.f32 %v3466, %v3905
        %3907 = vdwg.mxu0
        %v3908 = vpack.c.bf16 %v3575, %v3526
        %v3909 = vpack.c.bf16 %v3673, %v3624
        %v3910 = vpack.c.bf16 %v3771, %v3722
        %v3911 = vpack.c.bf16 %v3869, %v3820
        %v3912 = vpack.c.bf16 %v3577, %v3528
        %v3913 = vpack.c.bf16 %v3675, %v3626
        %v3914 = vpack.c.bf16 %v3773, %v3724
        %v3915 = vpack.c.bf16 %v3871, %v3822
        %v3916 = vpack.c.bf16 %v3580, %v3531
        %v3917 = vpack.c.bf16 %v3678, %v3629
        %v3918 = vpack.c.bf16 %v3776, %v3727
        %v3919 = vpack.c.bf16 %v3874, %v3825
        %v3920 = vpack.c.bf16 %v3582, %v3533
        %v3921 = vpack.c.bf16 %v3680, %v3631
        %v3922 = vpack.c.bf16 %v3778, %v3729
        %v3923 = vpack.c.bf16 %v3876, %v3827
        %v3924 = vpack.c.bf16 %v3585, %v3536
        %v3925 = vpack.c.bf16 %v3683, %v3634
        %v3926 = vpack.c.bf16 %v3781, %v3732
        %v3927 = vpack.c.bf16 %v3879, %v3830
        %v3928 = vpack.c.bf16 %v3587, %v3538
        %v3929 = vpack.c.bf16 %v3685, %v3636
        %v3930 = vpack.c.bf16 %v3783, %v3734
        %v3931 = vpack.c.bf16 %v3881, %v3832
        %v3932 = vpack.c.bf16 %v3590, %v3541
        %v3933 = vpack.c.bf16 %v3688, %v3639
        %v3934 = vpack.c.bf16 %v3786, %v3737
        %v3935 = vpack.c.bf16 %v3884, %v3835
        %v3936 = vpack.c.bf16 %v3592, %v3543
        %v3937 = vpack.c.bf16 %v3690, %v3641
        %v3938 = vpack.c.bf16 %v3788, %v3739
        %v3939 = vpack.c.bf16 %v3886, %v3837
        %v3940 = vpack.c.bf16 %v3595, %v3546
        %v3941 = vpack.c.bf16 %v3693, %v3644
        %v3942 = vpack.c.bf16 %v3791, %v3742
        %v3943 = vpack.c.bf16 %v3889, %v3840
        %v3944 = vpack.c.bf16 %v3597, %v3548
        %v3945 = vpack.c.bf16 %v3695, %v3646
        %v3946 = vpack.c.bf16 %v3793, %v3744
        %v3947 = vpack.c.bf16 %v3891, %v3842
        %v3948 = vpack.c.bf16 %v3600, %v3551
        %v3949 = vpack.c.bf16 %v3698, %v3649
        %v3950 = vpack.c.bf16 %v3796, %v3747
        %v3951 = vpack.c.bf16 %v3894, %v3845
        %v3952 = vpack.c.bf16 %v3602, %v3553
        %v3953 = vpack.c.bf16 %v3700, %v3651
        %v3954 = vpack.c.bf16 %v3798, %v3749
        %v3955 = vpack.c.bf16 %v3896, %v3847
        %v3956 = vpack.c.bf16 %v3605, %v3556
        %v3957 = vpack.c.bf16 %v3703, %v3654
        %v3958 = vpack.c.bf16 %v3801, %v3752
        %v3959 = vpack.c.bf16 %v3899, %v3850
        %v3960 = vpack.c.bf16 %v3607, %v3558
        %v3961 = vpack.c.bf16 %v3705, %v3656
        %v3962 = vpack.c.bf16 %v3803, %v3754
        %v3963 = vpack.c.bf16 %v3901, %v3852
        %v3964 = vpack.c.bf16 %v3610, %v3561
        %v3965 = vpack.c.bf16 %v3708, %v3659
        %v3966 = vpack.c.bf16 %v3806, %v3757
        %v3967 = vpack.c.bf16 %v3904, %v3855
        %v3968 = vpack.c.bf16 %v3612, %v3563
        %v3969 = vpack.c.bf16 %v3710, %v3661
        %v3970 = vpack.c.bf16 %v3808, %v3759
        %v3971 = vpack.c.bf16 %v3906, %v3857
        %v3972 = vld [vmem:[%s4] sm:$0xf]
        %v3973 = vld [vmem:[%s4 + $0x4] sm:$0xf]
        %v3974 = vld [vmem:[%s4 + $0x8] sm:$0xf]
        %v3975 = vld [vmem:[%s4 + $0xc] sm:$0xf]
        %v3976 = vld [vmem:[%s4 + $0x10] sm:$0xf]
        %v3977 = vld [vmem:[%s4 + $0x14] sm:$0xf]
        %v3978 = vld [vmem:[%s4 + $0x18] sm:$0xf]
        %v3979 = vld [vmem:[%s4 + $0x1c] sm:$0xf]
        %v3988 = vunpack.c.l.b16 %v3972
        %v3989 = vunpack.c.l.b16 %v3973
        %v3990 = vunpack.c.l.b16 %v3974
        %v3991 = vunpack.c.l.b16 %v3975
        %v3992 = vunpack.c.l.b16 %v3976
        %v3993 = vunpack.c.l.b16 %v3977
        %v3994 = vunpack.c.l.b16 %v3978
        %v3995 = vunpack.c.l.b16 %v3979
        %v3996 = vpack.c.b16 %v3989, %v3988
        %v3997 = vpack.c.b16 %v3991, %v3990
        %v3998 = vpack.c.b16 %v3993, %v3992
        %v3999 = vpack.c.b16 %v3995, %v3994
        %v4008 = vunpack.c.l.b16 %v1149
        %v4009 = vunpack.c.h.b16 %v1149
        %v4010 = vunpack.c.l.b16 %v1150
        %v4011 = vunpack.c.h.b16 %v1150
        %v4012 = vunpack.c.l.b16 %v1151
        %v4013 = vunpack.c.h.b16 %v1151
        %v4014 = vunpack.c.l.b16 %v1152
        %v4015 = vunpack.c.h.b16 %v1152
        %v4016 = vunpack.c.l.b16 %v1153
        %v4017 = vunpack.c.h.b16 %v1153
        %v4018 = vunpack.c.l.b16 %v1154
        %v4019 = vunpack.c.h.b16 %v1154
        %v4020 = vunpack.c.l.b16 %v1155
        %v4021 = vunpack.c.h.b16 %v1155
        %v4022 = vunpack.c.l.b16 %v1156
        %v4023 = vunpack.c.h.b16 %v1156
        %v4024 = vpack.c.b16 %v4016, %v4008
        %v4025 = vpack.c.b16 %v4017, %v4009
        %v4026 = vpack.c.b16 %v4018, %v4010
        %v4027 = vpack.c.b16 %v4019, %v4011
        %v4028 = vpack.c.b16 %v4020, %v4012
        %v4029 = vpack.c.b16 %v4021, %v4013
        %v4030 = vpack.c.b16 %v4022, %v4014
        %v4031 = vpack.c.b16 %v4023, %v4015
        %vm4040 = vcmask 130048
        %v4042 = vsel %vm4040, %v3996, 0
        %v4045 = vsel %vm4040, %v3997, 0
        %v4048 = vsel %vm4040, %v3998, 0
        %v4051 = vsel %vm4040, %v3999, 0
        %4053 = vmatpush.bf16.msra.mxu0 0
        %4054 = vmatpush.bf16.msra.mxu0 0
        %4055 = vmatpush.bf16.msra.mxu0 0
        %4056 = vmatpush.bf16.msra.mxu0 0
        %4057 = vmatpush.bf16.msra.mxu0 0
        %4058 = vmatpush.bf16.msra.mxu0 0
        %4059 = vmatpush.bf16.msra.mxu0 0
        %4060 = vmatpush.bf16.msra.mxu0 %v4024
        %4061 = vmatmul.bf16.gmra.mxu0 %v4042
        %v4062 = vpop.f32.mrf.mxu0
        %v4063 = vadd.f32 0.0, %v4062
        %v4064 = vpop.f32.mrf.mxu0
        %v4065 = vadd.f32 0.0, %v4064
        %4066 = vmatmul.bf16.gmra.mxu0 %v4045
        %v4067 = vpop.f32.mrf.mxu0
        %v4068 = vadd.f32 0.0, %v4067
        %v4069 = vpop.f32.mrf.mxu0
        %v4070 = vadd.f32 0.0, %v4069
        %4071 = vmatmul.bf16.gmra.mxu0 %v4048
        %v4072 = vpop.f32.mrf.mxu0
        %v4073 = vadd.f32 0.0, %v4072
        %v4074 = vpop.f32.mrf.mxu0
        %v4075 = vadd.f32 0.0, %v4074
        %4076 = vmatmul.bf16.gmra.mxu0 %v4051
        %v4077 = vpop.f32.mrf.mxu0
        %v4078 = vadd.f32 0.0, %v4077
        %v4079 = vpop.f32.mrf.mxu0
        %v4080 = vadd.f32 0.0, %v4079
        %4081 = vdwg.mxu0
        %4082 = vmatpush.bf16.msra.mxu0 0
        %4083 = vmatpush.bf16.msra.mxu0 0
        %4084 = vmatpush.bf16.msra.mxu0 0
        %4085 = vmatpush.bf16.msra.mxu0 0
        %4086 = vmatpush.bf16.msra.mxu0 0
        %4087 = vmatpush.bf16.msra.mxu0 0
        %4088 = vmatpush.bf16.msra.mxu0 0
        %4089 = vmatpush.bf16.msra.mxu0 %v4025
        %4090 = vmatmul.bf16.gmra.mxu0 %v4042
        %v4091 = vpop.f32.mrf.mxu0
        %v4092 = vadd.f32 0.0, %v4091
        %v4093 = vpop.f32.mrf.mxu0
        %v4094 = vadd.f32 0.0, %v4093
        %4095 = vmatmul.bf16.gmra.mxu0 %v4045
        %v4096 = vpop.f32.mrf.mxu0
        %v4097 = vadd.f32 0.0, %v4096
        %v4098 = vpop.f32.mrf.mxu0
        %v4099 = vadd.f32 0.0, %v4098
        %4100 = vmatmul.bf16.gmra.mxu0 %v4048
        %v4101 = vpop.f32.mrf.mxu0
        %v4102 = vadd.f32 0.0, %v4101
        %v4103 = vpop.f32.mrf.mxu0
        %v4104 = vadd.f32 0.0, %v4103
        %4105 = vmatmul.bf16.gmra.mxu0 %v4051
        %v4106 = vpop.f32.mrf.mxu0
        %v4107 = vadd.f32 0.0, %v4106
        %v4108 = vpop.f32.mrf.mxu0
        %v4109 = vadd.f32 0.0, %v4108
        %4110 = vdwg.mxu0
        %4111 = vmatpush.bf16.msra.mxu0 0
        %4112 = vmatpush.bf16.msra.mxu0 0
        %4113 = vmatpush.bf16.msra.mxu0 0
        %4114 = vmatpush.bf16.msra.mxu0 0
        %4115 = vmatpush.bf16.msra.mxu0 0
        %4116 = vmatpush.bf16.msra.mxu0 0
        %4117 = vmatpush.bf16.msra.mxu0 0
        %4118 = vmatpush.bf16.msra.mxu0 %v4026
        %4119 = vmatmul.bf16.gmra.mxu0 %v4042
        %v4120 = vpop.f32.mrf.mxu0
        %v4121 = vadd.f32 0.0, %v4120
        %v4122 = vpop.f32.mrf.mxu0
        %v4123 = vadd.f32 0.0, %v4122
        %4124 = vmatmul.bf16.gmra.mxu0 %v4045
        %v4125 = vpop.f32.mrf.mxu0
        %v4126 = vadd.f32 0.0, %v4125
        %v4127 = vpop.f32.mrf.mxu0
        %v4128 = vadd.f32 0.0, %v4127
        %4129 = vmatmul.bf16.gmra.mxu0 %v4048
        %v4130 = vpop.f32.mrf.mxu0
        %v4131 = vadd.f32 0.0, %v4130
        %v4132 = vpop.f32.mrf.mxu0
        %v4133 = vadd.f32 0.0, %v4132
        %4134 = vmatmul.bf16.gmra.mxu0 %v4051
        %v4135 = vpop.f32.mrf.mxu0
        %v4136 = vadd.f32 0.0, %v4135
        %v4137 = vpop.f32.mrf.mxu0
        %v4138 = vadd.f32 0.0, %v4137
        %4139 = vdwg.mxu0
        %4140 = vmatpush.bf16.msra.mxu0 0
        %4141 = vmatpush.bf16.msra.mxu0 0
        %4142 = vmatpush.bf16.msra.mxu0 0
        %4143 = vmatpush.bf16.msra.mxu0 0
        %4144 = vmatpush.bf16.msra.mxu0 0
        %4145 = vmatpush.bf16.msra.mxu0 0
        %4146 = vmatpush.bf16.msra.mxu0 0
        %4147 = vmatpush.bf16.msra.mxu0 %v4027
        %4148 = vmatmul.bf16.gmra.mxu0 %v4042
        %v4149 = vpop.f32.mrf.mxu0
        %v4150 = vadd.f32 0.0, %v4149
        %v4151 = vpop.f32.mrf.mxu0
        %v4152 = vadd.f32 0.0, %v4151
        %4153 = vmatmul.bf16.gmra.mxu0 %v4045
        %v4154 = vpop.f32.mrf.mxu0
        %v4155 = vadd.f32 0.0, %v4154
        %v4156 = vpop.f32.mrf.mxu0
        %v4157 = vadd.f32 0.0, %v4156
        %4158 = vmatmul.bf16.gmra.mxu0 %v4048
        %v4159 = vpop.f32.mrf.mxu0
        %v4160 = vadd.f32 0.0, %v4159
        %v4161 = vpop.f32.mrf.mxu0
        %v4162 = vadd.f32 0.0, %v4161
        %4163 = vmatmul.bf16.gmra.mxu0 %v4051
        %v4164 = vpop.f32.mrf.mxu0
        %v4165 = vadd.f32 0.0, %v4164
        %v4166 = vpop.f32.mrf.mxu0
        %v4167 = vadd.f32 0.0, %v4166
        %4168 = vdwg.mxu0
        %4169 = vmatpush.bf16.msra.mxu0 0
        %4170 = vmatpush.bf16.msra.mxu0 0
        %4171 = vmatpush.bf16.msra.mxu0 0
        %4172 = vmatpush.bf16.msra.mxu0 0
        %4173 = vmatpush.bf16.msra.mxu0 0
        %4174 = vmatpush.bf16.msra.mxu0 0
        %4175 = vmatpush.bf16.msra.mxu0 0
        %4176 = vmatpush.bf16.msra.mxu0 %v4028
        %4177 = vmatmul.bf16.gmra.mxu0 %v4042
        %v4178 = vpop.f32.mrf.mxu0
        %v4179 = vadd.f32 0.0, %v4178
        %v4180 = vpop.f32.mrf.mxu0
        %v4181 = vadd.f32 0.0, %v4180
        %4182 = vmatmul.bf16.gmra.mxu0 %v4045
        %v4183 = vpop.f32.mrf.mxu0
        %v4184 = vadd.f32 0.0, %v4183
        %v4185 = vpop.f32.mrf.mxu0
        %v4186 = vadd.f32 0.0, %v4185
        %4187 = vmatmul.bf16.gmra.mxu0 %v4048
        %v4188 = vpop.f32.mrf.mxu0
        %v4189 = vadd.f32 0.0, %v4188
        %v4190 = vpop.f32.mrf.mxu0
        %v4191 = vadd.f32 0.0, %v4190
        %4192 = vmatmul.bf16.gmra.mxu0 %v4051
        %v4193 = vpop.f32.mrf.mxu0
        %v4194 = vadd.f32 0.0, %v4193
        %v4195 = vpop.f32.mrf.mxu0
        %v4196 = vadd.f32 0.0, %v4195
        %4197 = vdwg.mxu0
        %4198 = vmatpush.bf16.msra.mxu0 0
        %4199 = vmatpush.bf16.msra.mxu0 0
        %4200 = vmatpush.bf16.msra.mxu0 0
        %4201 = vmatpush.bf16.msra.mxu0 0
        %4202 = vmatpush.bf16.msra.mxu0 0
        %4203 = vmatpush.bf16.msra.mxu0 0
        %4204 = vmatpush.bf16.msra.mxu0 0
        %4205 = vmatpush.bf16.msra.mxu0 %v4029
        %4206 = vmatmul.bf16.gmra.mxu0 %v4042
        %v4207 = vpop.f32.mrf.mxu0
        %v4208 = vadd.f32 0.0, %v4207
        %v4209 = vpop.f32.mrf.mxu0
        %v4210 = vadd.f32 0.0, %v4209
        %4211 = vmatmul.bf16.gmra.mxu0 %v4045
        %v4212 = vpop.f32.mrf.mxu0
        %v4213 = vadd.f32 0.0, %v4212
        %v4214 = vpop.f32.mrf.mxu0
        %v4215 = vadd.f32 0.0, %v4214
        %4216 = vmatmul.bf16.gmra.mxu0 %v4048
        %v4217 = vpop.f32.mrf.mxu0
        %v4218 = vadd.f32 0.0, %v4217
        %v4219 = vpop.f32.mrf.mxu0
        %v4220 = vadd.f32 0.0, %v4219
        %4221 = vmatmul.bf16.gmra.mxu0 %v4051
        %v4222 = vpop.f32.mrf.mxu0
        %v4223 = vadd.f32 0.0, %v4222
        %v4224 = vpop.f32.mrf.mxu0
        %v4225 = vadd.f32 0.0, %v4224
        %4226 = vdwg.mxu0
        %4227 = vmatpush.bf16.msra.mxu0 0
        %4228 = vmatpush.bf16.msra.mxu0 0
        %4229 = vmatpush.bf16.msra.mxu0 0
        %4230 = vmatpush.bf16.msra.mxu0 0
        %4231 = vmatpush.bf16.msra.mxu0 0
        %4232 = vmatpush.bf16.msra.mxu0 0
        %4233 = vmatpush.bf16.msra.mxu0 0
        %4234 = vmatpush.bf16.msra.mxu0 %v4030
        %4235 = vmatmul.bf16.gmra.mxu0 %v4042
        %v4236 = vpop.f32.mrf.mxu0
        %v4237 = vadd.f32 0.0, %v4236
        %v4238 = vpop.f32.mrf.mxu0
        %v4239 = vadd.f32 0.0, %v4238
        %4240 = vmatmul.bf16.gmra.mxu0 %v4045
        %v4241 = vpop.f32.mrf.mxu0
        %v4242 = vadd.f32 0.0, %v4241
        %v4243 = vpop.f32.mrf.mxu0
        %v4244 = vadd.f32 0.0, %v4243
        %4245 = vmatmul.bf16.gmra.mxu0 %v4048
        %v4246 = vpop.f32.mrf.mxu0
        %v4247 = vadd.f32 0.0, %v4246
        %v4248 = vpop.f32.mrf.mxu0
        %v4249 = vadd.f32 0.0, %v4248
        %4250 = vmatmul.bf16.gmra.mxu0 %v4051
        %v4251 = vpop.f32.mrf.mxu0
        %v4252 = vadd.f32 0.0, %v4251
        %v4253 = vpop.f32.mrf.mxu0
        %v4254 = vadd.f32 0.0, %v4253
        %4255 = vdwg.mxu0
        %4256 = vmatpush.bf16.msra.mxu0 0
        %4257 = vmatpush.bf16.msra.mxu0 0
        %4258 = vmatpush.bf16.msra.mxu0 0
        %4259 = vmatpush.bf16.msra.mxu0 0
        %4260 = vmatpush.bf16.msra.mxu0 0
        %4261 = vmatpush.bf16.msra.mxu0 0
        %4262 = vmatpush.bf16.msra.mxu0 0
        %4263 = vmatpush.bf16.msra.mxu0 %v4031
        %4264 = vmatmul.bf16.gmra.mxu0 %v4042
        %v4265 = vpop.f32.mrf.mxu0
        %v4266 = vadd.f32 0.0, %v4265
        %v4267 = vpop.f32.mrf.mxu0
        %v4268 = vadd.f32 0.0, %v4267
        %4269 = vmatmul.bf16.gmra.mxu0 %v4045
        %v4270 = vpop.f32.mrf.mxu0
        %v4271 = vadd.f32 0.0, %v4270
        %v4272 = vpop.f32.mrf.mxu0
        %v4273 = vadd.f32 0.0, %v4272
        %4274 = vmatmul.bf16.gmra.mxu0 %v4048
        %v4275 = vpop.f32.mrf.mxu0
        %v4276 = vadd.f32 0.0, %v4275
        %v4277 = vpop.f32.mrf.mxu0
        %v4278 = vadd.f32 0.0, %v4277
        %4279 = vmatmul.bf16.gmra.mxu0 %v4051
        %v4280 = vpop.f32.mrf.mxu0
        %v4281 = vadd.f32 0.0, %v4280
        %v4282 = vpop.f32.mrf.mxu0
        %v4283 = vadd.f32 0.0, %v4282
        %4284 = vdwg.mxu0
        %v4285 = vadd.f32 %v4063, %v4065
        %v4286 = vadd.f32 %v4285, %v4068
        %v4287 = vadd.f32 %v4286, %v4070
        %v4288 = vadd.f32 %v4287, %v4073
        %v4289 = vadd.f32 %v4288, %v4075
        %v4290 = vadd.f32 %v4289, %v4078
        %v4291 = vadd.f32 %v4290, %v4080
        %v4292 = vrot.slane %v4291, 4
        %v4293 = vadd.f32 %v4291, %v4292
        %v4294 = vrot.slane %v4293, 2
        %v4295 = vadd.f32 %v4293, %v4294
        %v4296 = vrot.slane %v4295, 1
        %v4297 = vadd.f32 %v4295, %v4296
        %v4298 = vadd.f32 %v4092, %v4094
        %v4299 = vadd.f32 %v4298, %v4097
        %v4300 = vadd.f32 %v4299, %v4099
        %v4301 = vadd.f32 %v4300, %v4102
        %v4302 = vadd.f32 %v4301, %v4104
        %v4303 = vadd.f32 %v4302, %v4107
        %v4304 = vadd.f32 %v4303, %v4109
        %v4305 = vrot.slane %v4304, 4
        %v4306 = vadd.f32 %v4304, %v4305
        %v4307 = vrot.slane %v4306, 2
        %v4308 = vadd.f32 %v4306, %v4307
        %v4309 = vrot.slane %v4308, 1
        %v4310 = vadd.f32 %v4308, %v4309
        %v4311 = vadd.f32 %v4121, %v4123
        %v4312 = vadd.f32 %v4311, %v4126
        %v4313 = vadd.f32 %v4312, %v4128
        %v4314 = vadd.f32 %v4313, %v4131
        %v4315 = vadd.f32 %v4314, %v4133
        %v4316 = vadd.f32 %v4315, %v4136
        %v4317 = vadd.f32 %v4316, %v4138
        %v4318 = vrot.slane %v4317, 4
        %v4319 = vadd.f32 %v4317, %v4318
        %v4320 = vrot.slane %v4319, 2
        %v4321 = vadd.f32 %v4319, %v4320
        %v4322 = vrot.slane %v4321, 1
        %v4323 = vadd.f32 %v4321, %v4322
        %v4324 = vadd.f32 %v4150, %v4152
        %v4325 = vadd.f32 %v4324, %v4155
        %v4326 = vadd.f32 %v4325, %v4157
        %v4327 = vadd.f32 %v4326, %v4160
        %v4328 = vadd.f32 %v4327, %v4162
        %v4329 = vadd.f32 %v4328, %v4165
        %v4330 = vadd.f32 %v4329, %v4167
        %v4331 = vrot.slane %v4330, 4
        %v4332 = vadd.f32 %v4330, %v4331
        %v4333 = vrot.slane %v4332, 2
        %v4334 = vadd.f32 %v4332, %v4333
        %v4335 = vrot.slane %v4334, 1
        %v4336 = vadd.f32 %v4334, %v4335
        %v4337 = vadd.f32 %v4179, %v4181
        %v4338 = vadd.f32 %v4337, %v4184
        %v4339 = vadd.f32 %v4338, %v4186
        %v4340 = vadd.f32 %v4339, %v4189
        %v4341 = vadd.f32 %v4340, %v4191
        %v4342 = vadd.f32 %v4341, %v4194
        %v4343 = vadd.f32 %v4342, %v4196
        %v4344 = vrot.slane %v4343, 4
        %v4345 = vadd.f32 %v4343, %v4344
        %v4346 = vrot.slane %v4345, 2
        %v4347 = vadd.f32 %v4345, %v4346
        %v4348 = vrot.slane %v4347, 1
        %v4349 = vadd.f32 %v4347, %v4348
        %v4350 = vadd.f32 %v4208, %v4210
        %v4351 = vadd.f32 %v4350, %v4213
        %v4352 = vadd.f32 %v4351, %v4215
        %v4353 = vadd.f32 %v4352, %v4218
        %v4354 = vadd.f32 %v4353, %v4220
        %v4355 = vadd.f32 %v4354, %v4223
        %v4356 = vadd.f32 %v4355, %v4225
        %v4357 = vrot.slane %v4356, 4
        %v4358 = vadd.f32 %v4356, %v4357
        %v4359 = vrot.slane %v4358, 2
        %v4360 = vadd.f32 %v4358, %v4359
        %v4361 = vrot.slane %v4360, 1
        %v4362 = vadd.f32 %v4360, %v4361
        %v4363 = vadd.f32 %v4237, %v4239
        %v4364 = vadd.f32 %v4363, %v4242
        %v4365 = vadd.f32 %v4364, %v4244
        %v4366 = vadd.f32 %v4365, %v4247
        %v4367 = vadd.f32 %v4366, %v4249
        %v4368 = vadd.f32 %v4367, %v4252
        %v4369 = vadd.f32 %v4368, %v4254
        %v4370 = vrot.slane %v4369, 4
        %v4371 = vadd.f32 %v4369, %v4370
        %v4372 = vrot.slane %v4371, 2
        %v4373 = vadd.f32 %v4371, %v4372
        %v4374 = vrot.slane %v4373, 1
        %v4375 = vadd.f32 %v4373, %v4374
        %v4376 = vadd.f32 %v4266, %v4268
        %v4377 = vadd.f32 %v4376, %v4271
        %v4378 = vadd.f32 %v4377, %v4273
        %v4379 = vadd.f32 %v4378, %v4276
        %v4380 = vadd.f32 %v4379, %v4278
        %v4381 = vadd.f32 %v4380, %v4281
        %v4382 = vadd.f32 %v4381, %v4283
        %v4383 = vrot.slane %v4382, 4
        %v4384 = vadd.f32 %v4382, %v4383
        %v4385 = vrot.slane %v4384, 2
        %v4386 = vadd.f32 %v4384, %v4385
        %v4387 = vrot.slane %v4386, 1
        %v4388 = vadd.f32 %v4386, %v4387
        %v4389 = vrcp.pop 64.0
        %v4390 = vmul.f32 64.0, %v4389
        %v4391 = vsub.f32 1.0, %v4390
        %v4392 = vmul.f32 %v4389, %v4391
        %v4393 = vadd.f32 %v4389, %v4392
        %vm4394 = vweird.f32 %v4389
        %v4395 = vsel %vm4394, %v4389, %v4393
        %v4396 = vmul.f32 %v4297, %v4395
        %v4397 = vmul.f32 %v4310, %v4395
        %v4398 = vmul.f32 %v4323, %v4395
        %v4399 = vmul.f32 %v4336, %v4395
        %v4400 = vmul.f32 %v4349, %v4395
        %v4401 = vmul.f32 %v4362, %v4395
        %v4402 = vmul.f32 %v4375, %v4395
        %v4403 = vmul.f32 %v4388, %v4395
        %v4404 = vmul.f32 %v4063, %v4063
        %v4405 = vmul.f32 %v4092, %v4092
        %v4406 = vmul.f32 %v4121, %v4121
        %v4407 = vmul.f32 %v4150, %v4150
        %v4408 = vmul.f32 %v4179, %v4179
        %v4409 = vmul.f32 %v4208, %v4208
        %v4410 = vmul.f32 %v4237, %v4237
        %v4411 = vmul.f32 %v4266, %v4266
        %v4412 = vmul.f32 %v4065, %v4065
        %v4413 = vmul.f32 %v4094, %v4094
        %v4414 = vmul.f32 %v4123, %v4123
        %v4415 = vmul.f32 %v4152, %v4152
        %v4416 = vmul.f32 %v4181, %v4181
        %v4417 = vmul.f32 %v4210, %v4210
        %v4418 = vmul.f32 %v4239, %v4239
        %v4419 = vmul.f32 %v4268, %v4268
        %v4420 = vmul.f32 %v4068, %v4068
        %v4421 = vmul.f32 %v4097, %v4097
        %v4422 = vmul.f32 %v4126, %v4126
        %v4423 = vmul.f32 %v4155, %v4155
        %v4424 = vmul.f32 %v4184, %v4184
        %v4425 = vmul.f32 %v4213, %v4213
        %v4426 = vmul.f32 %v4242, %v4242
        %v4427 = vmul.f32 %v4271, %v4271
        %v4428 = vmul.f32 %v4070, %v4070
        %v4429 = vmul.f32 %v4099, %v4099
        %v4430 = vmul.f32 %v4128, %v4128
        %v4431 = vmul.f32 %v4157, %v4157
        %v4432 = vmul.f32 %v4186, %v4186
        %v4433 = vmul.f32 %v4215, %v4215
        %v4434 = vmul.f32 %v4244, %v4244
        %v4435 = vmul.f32 %v4273, %v4273
        %v4436 = vmul.f32 %v4073, %v4073
        %v4437 = vmul.f32 %v4102, %v4102
        %v4438 = vmul.f32 %v4131, %v4131
        %v4439 = vmul.f32 %v4160, %v4160
        %v4440 = vmul.f32 %v4189, %v4189
        %v4441 = vmul.f32 %v4218, %v4218
        %v4442 = vmul.f32 %v4247, %v4247
        %v4443 = vmul.f32 %v4276, %v4276
        %v4444 = vmul.f32 %v4075, %v4075
        %v4445 = vmul.f32 %v4104, %v4104
        %v4446 = vmul.f32 %v4133, %v4133
        %v4447 = vmul.f32 %v4162, %v4162
        %v4448 = vmul.f32 %v4191, %v4191
        %v4449 = vmul.f32 %v4220, %v4220
        %v4450 = vmul.f32 %v4249, %v4249
        %v4451 = vmul.f32 %v4278, %v4278
        %v4452 = vmul.f32 %v4078, %v4078
        %v4453 = vmul.f32 %v4107, %v4107
        %v4454 = vmul.f32 %v4136, %v4136
        %v4455 = vmul.f32 %v4165, %v4165
        %v4456 = vmul.f32 %v4194, %v4194
        %v4457 = vmul.f32 %v4223, %v4223
        %v4458 = vmul.f32 %v4252, %v4252
        %v4459 = vmul.f32 %v4281, %v4281
        %v4460 = vmul.f32 %v4080, %v4080
        %v4461 = vmul.f32 %v4109, %v4109
        %v4462 = vmul.f32 %v4138, %v4138
        %v4463 = vmul.f32 %v4167, %v4167
        %v4464 = vmul.f32 %v4196, %v4196
        %v4465 = vmul.f32 %v4225, %v4225
        %v4466 = vmul.f32 %v4254, %v4254
        %v4467 = vmul.f32 %v4283, %v4283
        %v4468 = vadd.f32 %v4404, %v4412
        %v4469 = vadd.f32 %v4468, %v4420
        %v4470 = vadd.f32 %v4469, %v4428
        %v4471 = vadd.f32 %v4470, %v4436
        %v4472 = vadd.f32 %v4471, %v4444
        %v4473 = vadd.f32 %v4472, %v4452
        %v4474 = vadd.f32 %v4473, %v4460
        %v4475 = vrot.slane %v4474, 4
        %v4476 = vadd.f32 %v4474, %v4475
        %v4477 = vrot.slane %v4476, 2
        %v4478 = vadd.f32 %v4476, %v4477
        %v4479 = vrot.slane %v4478, 1
        %v4480 = vadd.f32 %v4478, %v4479
        %v4481 = vadd.f32 %v4405, %v4413
        %v4482 = vadd.f32 %v4481, %v4421
        %v4483 = vadd.f32 %v4482, %v4429
        %v4484 = vadd.f32 %v4483, %v4437
        %v4485 = vadd.f32 %v4484, %v4445
        %v4486 = vadd.f32 %v4485, %v4453
        %v4487 = vadd.f32 %v4486, %v4461
        %v4488 = vrot.slane %v4487, 4
        %v4489 = vadd.f32 %v4487, %v4488
        %v4490 = vrot.slane %v4489, 2
        %v4491 = vadd.f32 %v4489, %v4490
        %v4492 = vrot.slane %v4491, 1
        %v4493 = vadd.f32 %v4491, %v4492
        %v4494 = vadd.f32 %v4406, %v4414
        %v4495 = vadd.f32 %v4494, %v4422
        %v4496 = vadd.f32 %v4495, %v4430
        %v4497 = vadd.f32 %v4496, %v4438
        %v4498 = vadd.f32 %v4497, %v4446
        %v4499 = vadd.f32 %v4498, %v4454
        %v4500 = vadd.f32 %v4499, %v4462
        %v4501 = vrot.slane %v4500, 4
        %v4502 = vadd.f32 %v4500, %v4501
        %v4503 = vrot.slane %v4502, 2
        %v4504 = vadd.f32 %v4502, %v4503
        %v4505 = vrot.slane %v4504, 1
        %v4506 = vadd.f32 %v4504, %v4505
        %v4507 = vadd.f32 %v4407, %v4415
        %v4508 = vadd.f32 %v4507, %v4423
        %v4509 = vadd.f32 %v4508, %v4431
        %v4510 = vadd.f32 %v4509, %v4439
        %v4511 = vadd.f32 %v4510, %v4447
        %v4512 = vadd.f32 %v4511, %v4455
        %v4513 = vadd.f32 %v4512, %v4463
        %v4514 = vrot.slane %v4513, 4
        %v4515 = vadd.f32 %v4513, %v4514
        %v4516 = vrot.slane %v4515, 2
        %v4517 = vadd.f32 %v4515, %v4516
        %v4518 = vrot.slane %v4517, 1
        %v4519 = vadd.f32 %v4517, %v4518
        %v4520 = vadd.f32 %v4408, %v4416
        %v4521 = vadd.f32 %v4520, %v4424
        %v4522 = vadd.f32 %v4521, %v4432
        %v4523 = vadd.f32 %v4522, %v4440
        %v4524 = vadd.f32 %v4523, %v4448
        %v4525 = vadd.f32 %v4524, %v4456
        %v4526 = vadd.f32 %v4525, %v4464
        %v4527 = vrot.slane %v4526, 4
        %v4528 = vadd.f32 %v4526, %v4527
        %v4529 = vrot.slane %v4528, 2
        %v4530 = vadd.f32 %v4528, %v4529
        %v4531 = vrot.slane %v4530, 1
        %v4532 = vadd.f32 %v4530, %v4531
        %v4533 = vadd.f32 %v4409, %v4417
        %v4534 = vadd.f32 %v4533, %v4425
        %v4535 = vadd.f32 %v4534, %v4433
        %v4536 = vadd.f32 %v4535, %v4441
        %v4537 = vadd.f32 %v4536, %v4449
        %v4538 = vadd.f32 %v4537, %v4457
        %v4539 = vadd.f32 %v4538, %v4465
        %v4540 = vrot.slane %v4539, 4
        %v4541 = vadd.f32 %v4539, %v4540
        %v4542 = vrot.slane %v4541, 2
        %v4543 = vadd.f32 %v4541, %v4542
        %v4544 = vrot.slane %v4543, 1
        %v4545 = vadd.f32 %v4543, %v4544
        %v4546 = vadd.f32 %v4410, %v4418
        %v4547 = vadd.f32 %v4546, %v4426
        %v4548 = vadd.f32 %v4547, %v4434
        %v4549 = vadd.f32 %v4548, %v4442
        %v4550 = vadd.f32 %v4549, %v4450
        %v4551 = vadd.f32 %v4550, %v4458
        %v4552 = vadd.f32 %v4551, %v4466
        %v4553 = vrot.slane %v4552, 4
        %v4554 = vadd.f32 %v4552, %v4553
        %v4555 = vrot.slane %v4554, 2
        %v4556 = vadd.f32 %v4554, %v4555
        %v4557 = vrot.slane %v4556, 1
        %v4558 = vadd.f32 %v4556, %v4557
        %v4559 = vadd.f32 %v4411, %v4419
        %v4560 = vadd.f32 %v4559, %v4427
        %v4561 = vadd.f32 %v4560, %v4435
        %v4562 = vadd.f32 %v4561, %v4443
        %v4563 = vadd.f32 %v4562, %v4451
        %v4564 = vadd.f32 %v4563, %v4459
        %v4565 = vadd.f32 %v4564, %v4467
        %v4566 = vrot.slane %v4565, 4
        %v4567 = vadd.f32 %v4565, %v4566
        %v4568 = vrot.slane %v4567, 2
        %v4569 = vadd.f32 %v4567, %v4568
        %v4570 = vrot.slane %v4569, 1
        %v4571 = vadd.f32 %v4569, %v4570
        %v4572 = vmul.f32 %v4480, %v4395
        %v4573 = vmul.f32 %v4493, %v4395
        %v4574 = vmul.f32 %v4506, %v4395
        %v4575 = vmul.f32 %v4519, %v4395
        %v4576 = vmul.f32 %v4532, %v4395
        %v4577 = vmul.f32 %v4545, %v4395
        %v4578 = vmul.f32 %v4558, %v4395
        %v4579 = vmul.f32 %v4571, %v4395
        %v4580 = vmul.f32 %v4396, %v4396
        %v4581 = vmul.f32 %v4397, %v4397
        %v4582 = vmul.f32 %v4398, %v4398
        %v4583 = vmul.f32 %v4399, %v4399
        %v4584 = vmul.f32 %v4400, %v4400
        %v4585 = vmul.f32 %v4401, %v4401
        %v4586 = vmul.f32 %v4402, %v4402
        %v4587 = vmul.f32 %v4403, %v4403
        %v4588 = vsub.f32 %v4572, %v4580
        %v4589 = vsub.f32 %v4573, %v4581
        %v4590 = vsub.f32 %v4574, %v4582
        %v4591 = vsub.f32 %v4575, %v4583
        %v4592 = vsub.f32 %v4576, %v4584
        %v4593 = vsub.f32 %v4577, %v4585
        %v4594 = vsub.f32 %v4578, %v4586
        %v4595 = vsub.f32 %v4579, %v4587
        %v4596 = vsub.f32 %v4063, %v4396
        %v4597 = vsub.f32 %v4092, %v4397
        %v4598 = vsub.f32 %v4121, %v4398
        %v4599 = vsub.f32 %v4150, %v4399
        %v4600 = vsub.f32 %v4179, %v4400
        %v4601 = vsub.f32 %v4208, %v4401
        %v4602 = vsub.f32 %v4237, %v4402
        %v4603 = vsub.f32 %v4266, %v4403
        %v4604 = vsub.f32 %v4065, %v4396
        %v4605 = vsub.f32 %v4094, %v4397
        %v4606 = vsub.f32 %v4123, %v4398
        %v4607 = vsub.f32 %v4152, %v4399
        %v4608 = vsub.f32 %v4181, %v4400
        %v4609 = vsub.f32 %v4210, %v4401
        %v4610 = vsub.f32 %v4239, %v4402
        %v4611 = vsub.f32 %v4268, %v4403
        %v4612 = vsub.f32 %v4068, %v4396
        %v4613 = vsub.f32 %v4097, %v4397
        %v4614 = vsub.f32 %v4126, %v4398
        %v4615 = vsub.f32 %v4155, %v4399
        %v4616 = vsub.f32 %v4184, %v4400
        %v4617 = vsub.f32 %v4213, %v4401
        %v4618 = vsub.f32 %v4242, %v4402
        %v4619 = vsub.f32 %v4271, %v4403
        %v4620 = vsub.f32 %v4070, %v4396
        %v4621 = vsub.f32 %v4099, %v4397
        %v4622 = vsub.f32 %v4128, %v4398
        %v4623 = vsub.f32 %v4157, %v4399
        %v4624 = vsub.f32 %v4186, %v4400
        %v4625 = vsub.f32 %v4215, %v4401
        %v4626 = vsub.f32 %v4244, %v4402
        %v4627 = vsub.f32 %v4273, %v4403
        %v4628 = vsub.f32 %v4073, %v4396
        %v4629 = vsub.f32 %v4102, %v4397
        %v4630 = vsub.f32 %v4131, %v4398
        %v4631 = vsub.f32 %v4160, %v4399
        %v4632 = vsub.f32 %v4189, %v4400
        %v4633 = vsub.f32 %v4218, %v4401
        %v4634 = vsub.f32 %v4247, %v4402
        %v4635 = vsub.f32 %v4276, %v4403
        %v4636 = vsub.f32 %v4075, %v4396
        %v4637 = vsub.f32 %v4104, %v4397
        %v4638 = vsub.f32 %v4133, %v4398
        %v4639 = vsub.f32 %v4162, %v4399
        %v4640 = vsub.f32 %v4191, %v4400
        %v4641 = vsub.f32 %v4220, %v4401
        %v4642 = vsub.f32 %v4249, %v4402
        %v4643 = vsub.f32 %v4278, %v4403
        %v4644 = vsub.f32 %v4078, %v4396
        %v4645 = vsub.f32 %v4107, %v4397
        %v4646 = vsub.f32 %v4136, %v4398
        %v4647 = vsub.f32 %v4165, %v4399
        %v4648 = vsub.f32 %v4194, %v4400
        %v4649 = vsub.f32 %v4223, %v4401
        %v4650 = vsub.f32 %v4252, %v4402
        %v4651 = vsub.f32 %v4281, %v4403
        %v4652 = vsub.f32 %v4080, %v4396
        %v4653 = vsub.f32 %v4109, %v4397
        %v4654 = vsub.f32 %v4138, %v4398
        %v4655 = vsub.f32 %v4167, %v4399
        %v4656 = vsub.f32 %v4196, %v4400
        %v4657 = vsub.f32 %v4225, %v4401
        %v4658 = vsub.f32 %v4254, %v4402
        %v4659 = vsub.f32 %v4283, %v4403
        %v4660 = vadd.f32 %v4588, 1e-05
        %v4661 = vadd.f32 %v4589, 1e-05
        %v4662 = vadd.f32 %v4590, 1e-05
        %v4663 = vadd.f32 %v4591, 1e-05
        %v4664 = vadd.f32 %v4592, 1e-05
        %v4665 = vadd.f32 %v4593, 1e-05
        %v4666 = vadd.f32 %v4594, 1e-05
        %v4667 = vadd.f32 %v4595, 1e-05
        %v4668 = vrsqrt.pop %v4660
        %v4669 = vmul.f32 %v4668, %v4660
        %v4670 = vmul.f32 %v4669, %v4668
        %v4671 = vmul.f32 0.5, %v4670
        %v4672 = vsub.f32 1.5, %v4671
        %v4673 = vmul.f32 %v4668, %v4672
        %vm4674 = vweird.f32 %v4660
        %vm4675 = vweird.f32 %v4668
        %vm4676 = vmor %vm4674, %vm4675
        %v4677 = vsel %vm4676, %v4668, %v4673
        %v4678 = vrsqrt.pop %v4661
        %v4679 = vmul.f32 %v4678, %v4661
        %v4680 = vmul.f32 %v4679, %v4678
        %v4681 = vmul.f32 0.5, %v4680
        %v4682 = vsub.f32 1.5, %v4681
        %v4683 = vmul.f32 %v4678, %v4682
        %vm4684 = vweird.f32 %v4661
        %vm4685 = vweird.f32 %v4678
        %vm4686 = vmor %vm4684, %vm4685
        %v4687 = vsel %vm4686, %v4678, %v4683
        %v4688 = vrsqrt.pop %v4662
        %v4689 = vmul.f32 %v4688, %v4662
        %v4690 = vmul.f32 %v4689, %v4688
        %v4691 = vmul.f32 0.5, %v4690
        %v4692 = vsub.f32 1.5, %v4691
        %v4693 = vmul.f32 %v4688, %v4692
        %vm4694 = vweird.f32 %v4662
        %vm4695 = vweird.f32 %v4688
        %vm4696 = vmor %vm4694, %vm4695
        %v4697 = vsel %vm4696, %v4688, %v4693
        %v4698 = vrsqrt.pop %v4663
        %v4699 = vmul.f32 %v4698, %v4663
        %v4700 = vmul.f32 %v4699, %v4698
        %v4701 = vmul.f32 0.5, %v4700
        %v4702 = vsub.f32 1.5, %v4701
        %v4703 = vmul.f32 %v4698, %v4702
        %vm4704 = vweird.f32 %v4663
        %vm4705 = vweird.f32 %v4698
        %vm4706 = vmor %vm4704, %vm4705
        %v4707 = vsel %vm4706, %v4698, %v4703
        %v4708 = vrsqrt.pop %v4664
        %v4709 = vmul.f32 %v4708, %v4664
        %v4710 = vmul.f32 %v4709, %v4708
        %v4711 = vmul.f32 0.5, %v4710
        %v4712 = vsub.f32 1.5, %v4711
        %v4713 = vmul.f32 %v4708, %v4712
        %vm4714 = vweird.f32 %v4664
        %vm4715 = vweird.f32 %v4708
        %vm4716 = vmor %vm4714, %vm4715
        %v4717 = vsel %vm4716, %v4708, %v4713
        %v4718 = vrsqrt.pop %v4665
        %v4719 = vmul.f32 %v4718, %v4665
        %v4720 = vmul.f32 %v4719, %v4718
        %v4721 = vmul.f32 0.5, %v4720
        %v4722 = vsub.f32 1.5, %v4721
        %v4723 = vmul.f32 %v4718, %v4722
        %vm4724 = vweird.f32 %v4665
        %vm4725 = vweird.f32 %v4718
        %vm4726 = vmor %vm4724, %vm4725
        %v4727 = vsel %vm4726, %v4718, %v4723
        %v4728 = vrsqrt.pop %v4666
        %v4729 = vmul.f32 %v4728, %v4666
        %v4730 = vmul.f32 %v4729, %v4728
        %v4731 = vmul.f32 0.5, %v4730
        %v4732 = vsub.f32 1.5, %v4731
        %v4733 = vmul.f32 %v4728, %v4732
        %vm4734 = vweird.f32 %v4666
        %vm4735 = vweird.f32 %v4728
        %vm4736 = vmor %vm4734, %vm4735
        %v4737 = vsel %vm4736, %v4728, %v4733
        %v4738 = vrsqrt.pop %v4667
        %v4739 = vmul.f32 %v4738, %v4667
        %v4740 = vmul.f32 %v4739, %v4738
        %v4741 = vmul.f32 0.5, %v4740
        %v4742 = vsub.f32 1.5, %v4741
        %v4743 = vmul.f32 %v4738, %v4742
        %vm4744 = vweird.f32 %v4667
        %vm4745 = vweird.f32 %v4738
        %vm4746 = vmor %vm4744, %vm4745
        %v4747 = vsel %vm4746, %v4738, %v4743
        %v4748 = vmul.f32 %v4596, %v4677
        %v4749 = vmul.f32 %v4597, %v4687
        %v4750 = vmul.f32 %v4598, %v4697
        %v4751 = vmul.f32 %v4599, %v4707
        %v4752 = vmul.f32 %v4600, %v4717
        %v4753 = vmul.f32 %v4601, %v4727
        %v4754 = vmul.f32 %v4602, %v4737
        %v4755 = vmul.f32 %v4603, %v4747
        %v4756 = vmul.f32 %v4604, %v4677
        %v4757 = vmul.f32 %v4605, %v4687
        %v4758 = vmul.f32 %v4606, %v4697
        %v4759 = vmul.f32 %v4607, %v4707
        %v4760 = vmul.f32 %v4608, %v4717
        %v4761 = vmul.f32 %v4609, %v4727
        %v4762 = vmul.f32 %v4610, %v4737
        %v4763 = vmul.f32 %v4611, %v4747
        %v4764 = vmul.f32 %v4612, %v4677
        %v4765 = vmul.f32 %v4613, %v4687
        %v4766 = vmul.f32 %v4614, %v4697
        %v4767 = vmul.f32 %v4615, %v4707
        %v4768 = vmul.f32 %v4616, %v4717
        %v4769 = vmul.f32 %v4617, %v4727
        %v4770 = vmul.f32 %v4618, %v4737
        %v4771 = vmul.f32 %v4619, %v4747
        %v4772 = vmul.f32 %v4620, %v4677
        %v4773 = vmul.f32 %v4621, %v4687
        %v4774 = vmul.f32 %v4622, %v4697
        %v4775 = vmul.f32 %v4623, %v4707
        %v4776 = vmul.f32 %v4624, %v4717
        %v4777 = vmul.f32 %v4625, %v4727
        %v4778 = vmul.f32 %v4626, %v4737
        %v4779 = vmul.f32 %v4627, %v4747
        %v4780 = vmul.f32 %v4628, %v4677
        %v4781 = vmul.f32 %v4629, %v4687
        %v4782 = vmul.f32 %v4630, %v4697
        %v4783 = vmul.f32 %v4631, %v4707
        %v4784 = vmul.f32 %v4632, %v4717
        %v4785 = vmul.f32 %v4633, %v4727
        %v4786 = vmul.f32 %v4634, %v4737
        %v4787 = vmul.f32 %v4635, %v4747
        %v4788 = vmul.f32 %v4636, %v4677
        %v4789 = vmul.f32 %v4637, %v4687
        %v4790 = vmul.f32 %v4638, %v4697
        %v4791 = vmul.f32 %v4639, %v4707
        %v4792 = vmul.f32 %v4640, %v4717
        %v4793 = vmul.f32 %v4641, %v4727
        %v4794 = vmul.f32 %v4642, %v4737
        %v4795 = vmul.f32 %v4643, %v4747
        %v4796 = vmul.f32 %v4644, %v4677
        %v4797 = vmul.f32 %v4645, %v4687
        %v4798 = vmul.f32 %v4646, %v4697
        %v4799 = vmul.f32 %v4647, %v4707
        %v4800 = vmul.f32 %v4648, %v4717
        %v4801 = vmul.f32 %v4649, %v4727
        %v4802 = vmul.f32 %v4650, %v4737
        %v4803 = vmul.f32 %v4651, %v4747
        %v4804 = vmul.f32 %v4652, %v4677
        %v4805 = vmul.f32 %v4653, %v4687
        %v4806 = vmul.f32 %v4654, %v4697
        %v4807 = vmul.f32 %v4655, %v4707
        %v4808 = vmul.f32 %v4656, %v4717
        %v4809 = vmul.f32 %v4657, %v4727
        %v4810 = vmul.f32 %v4658, %v4737
        %v4811 = vmul.f32 %v4659, %v4747
        %4812 = vset.pattern.permute.xlu0 3
        %4813 = vperm.xlu0 %4812, %v1157
        %v4814 = vpop.permute.xlu0 %4813
        %4816 = vset.pattern.permute.xlu0 3
        %4817 = vperm.xlu0 %4816, %v1158
        %v4818 = vpop.permute.xlu0 %4817
        %4820 = vset.pattern.permute.xlu0 3
        %4821 = vperm.xlu0 %4820, %v1159
        %v4822 = vpop.permute.xlu0 %4821
        %4824 = vset.pattern.permute.xlu0 3
        %4825 = vperm.xlu0 %4824, %v1160
        %v4826 = vpop.permute.xlu0 %4825
        %4828 = vset.pattern.permute.xlu0 3
        %4829 = vperm.xlu0 %4828, %v1161
        %v4830 = vpop.permute.xlu0 %4829
        %4832 = vset.pattern.permute.xlu0 3
        %4833 = vperm.xlu0 %4832, %v1162
        %v4834 = vpop.permute.xlu0 %4833
        %4836 = vset.pattern.permute.xlu0 3
        %4837 = vperm.xlu0 %4836, %v1163
        %v4838 = vpop.permute.xlu0 %4837
        %4840 = vset.pattern.permute.xlu0 3
        %4841 = vperm.xlu0 %4840, %v1164
        %v4842 = vpop.permute.xlu0 %4841
        %v4844 = vmul.f32 %v4748, %v4814
        %v4845 = vmul.f32 %v4749, %v4814
        %v4846 = vmul.f32 %v4750, %v4814
        %v4847 = vmul.f32 %v4751, %v4814
        %v4848 = vmul.f32 %v4752, %v4814
        %v4849 = vmul.f32 %v4753, %v4814
        %v4850 = vmul.f32 %v4754, %v4814
        %v4851 = vmul.f32 %v4755, %v4814
        %v4852 = vmul.f32 %v4756, %v4818
        %v4853 = vmul.f32 %v4757, %v4818
        %v4854 = vmul.f32 %v4758, %v4818
        %v4855 = vmul.f32 %v4759, %v4818
        %v4856 = vmul.f32 %v4760, %v4818
        %v4857 = vmul.f32 %v4761, %v4818
        %v4858 = vmul.f32 %v4762, %v4818
        %v4859 = vmul.f32 %v4763, %v4818
        %v4860 = vmul.f32 %v4764, %v4822
        %v4861 = vmul.f32 %v4765, %v4822
        %v4862 = vmul.f32 %v4766, %v4822
        %v4863 = vmul.f32 %v4767, %v4822
        %v4864 = vmul.f32 %v4768, %v4822
        %v4865 = vmul.f32 %v4769, %v4822
        %v4866 = vmul.f32 %v4770, %v4822
        %v4867 = vmul.f32 %v4771, %v4822
        %v4868 = vmul.f32 %v4772, %v4826
        %v4869 = vmul.f32 %v4773, %v4826
        %v4870 = vmul.f32 %v4774, %v4826
        %v4871 = vmul.f32 %v4775, %v4826
        %v4872 = vmul.f32 %v4776, %v4826
        %v4873 = vmul.f32 %v4777, %v4826
        %v4874 = vmul.f32 %v4778, %v4826
        %v4875 = vmul.f32 %v4779, %v4826
        %v4876 = vmul.f32 %v4780, %v4830
        %v4877 = vmul.f32 %v4781, %v4830
        %v4878 = vmul.f32 %v4782, %v4830
        %v4879 = vmul.f32 %v4783, %v4830
        %v4880 = vmul.f32 %v4784, %v4830
        %v4881 = vmul.f32 %v4785, %v4830
        %v4882 = vmul.f32 %v4786, %v4830
        %v4883 = vmul.f32 %v4787, %v4830
        %v4884 = vmul.f32 %v4788, %v4834
        %v4885 = vmul.f32 %v4789, %v4834
        %v4886 = vmul.f32 %v4790, %v4834
        %v4887 = vmul.f32 %v4791, %v4834
        %v4888 = vmul.f32 %v4792, %v4834
        %v4889 = vmul.f32 %v4793, %v4834
        %v4890 = vmul.f32 %v4794, %v4834
        %v4891 = vmul.f32 %v4795, %v4834
        %v4892 = vmul.f32 %v4796, %v4838
        %v4893 = vmul.f32 %v4797, %v4838
        %v4894 = vmul.f32 %v4798, %v4838
        %v4895 = vmul.f32 %v4799, %v4838
        %v4896 = vmul.f32 %v4800, %v4838
        %v4897 = vmul.f32 %v4801, %v4838
        %v4898 = vmul.f32 %v4802, %v4838
        %v4899 = vmul.f32 %v4803, %v4838
        %v4900 = vmul.f32 %v4804, %v4842
        %v4901 = vmul.f32 %v4805, %v4842
        %v4902 = vmul.f32 %v4806, %v4842
        %v4903 = vmul.f32 %v4807, %v4842
        %v4904 = vmul.f32 %v4808, %v4842
        %v4905 = vmul.f32 %v4809, %v4842
        %v4906 = vmul.f32 %v4810, %v4842
        %v4907 = vmul.f32 %v4811, %v4842
        %4908 = vset.pattern.permute.xlu0 4
        %4909 = vperm.xlu0 %4908, %v1157
        %v4910 = vpop.permute.xlu0 %4909
        %4912 = vset.pattern.permute.xlu0 4
        %4913 = vperm.xlu0 %4912, %v1158
        %v4914 = vpop.permute.xlu0 %4913
        %4916 = vset.pattern.permute.xlu0 4
        %4917 = vperm.xlu0 %4916, %v1159
        %v4918 = vpop.permute.xlu0 %4917
        %4920 = vset.pattern.permute.xlu0 4
        %4921 = vperm.xlu0 %4920, %v1160
        %v4922 = vpop.permute.xlu0 %4921
        %4924 = vset.pattern.permute.xlu0 4
        %4925 = vperm.xlu0 %4924, %v1161
        %v4926 = vpop.permute.xlu0 %4925
        %4928 = vset.pattern.permute.xlu0 4
        %4929 = vperm.xlu0 %4928, %v1162
        %v4930 = vpop.permute.xlu0 %4929
        %4932 = vset.pattern.permute.xlu0 4
        %4933 = vperm.xlu0 %4932, %v1163
        %v4934 = vpop.permute.xlu0 %4933
        %4936 = vset.pattern.permute.xlu0 4
        %4937 = vperm.xlu0 %4936, %v1164
        %v4938 = vpop.permute.xlu0 %4937
        %v4940 = vadd.f32 %v4844, %v4910
        %v4941 = vadd.f32 %v4845, %v4910
        %v4942 = vadd.f32 %v4846, %v4910
        %v4943 = vadd.f32 %v4847, %v4910
        %v4944 = vadd.f32 %v4848, %v4910
        %v4945 = vadd.f32 %v4849, %v4910
        %v4946 = vadd.f32 %v4850, %v4910
        %v4947 = vadd.f32 %v4851, %v4910
        %v4948 = vadd.f32 %v4852, %v4914
        %v4949 = vadd.f32 %v4853, %v4914
        %v4950 = vadd.f32 %v4854, %v4914
        %v4951 = vadd.f32 %v4855, %v4914
        %v4952 = vadd.f32 %v4856, %v4914
        %v4953 = vadd.f32 %v4857, %v4914
        %v4954 = vadd.f32 %v4858, %v4914
        %v4955 = vadd.f32 %v4859, %v4914
        %v4956 = vadd.f32 %v4860, %v4918
        %v4957 = vadd.f32 %v4861, %v4918
        %v4958 = vadd.f32 %v4862, %v4918
        %v4959 = vadd.f32 %v4863, %v4918
        %v4960 = vadd.f32 %v4864, %v4918
        %v4961 = vadd.f32 %v4865, %v4918
        %v4962 = vadd.f32 %v4866, %v4918
        %v4963 = vadd.f32 %v4867, %v4918
        %v4964 = vadd.f32 %v4868, %v4922
        %v4965 = vadd.f32 %v4869, %v4922
        %v4966 = vadd.f32 %v4870, %v4922
        %v4967 = vadd.f32 %v4871, %v4922
        %v4968 = vadd.f32 %v4872, %v4922
        %v4969 = vadd.f32 %v4873, %v4922
        %v4970 = vadd.f32 %v4874, %v4922
        %v4971 = vadd.f32 %v4875, %v4922
        %v4972 = vadd.f32 %v4876, %v4926
        %v4973 = vadd.f32 %v4877, %v4926
        %v4974 = vadd.f32 %v4878, %v4926
        %v4975 = vadd.f32 %v4879, %v4926
        %v4976 = vadd.f32 %v4880, %v4926
        %v4977 = vadd.f32 %v4881, %v4926
        %v4978 = vadd.f32 %v4882, %v4926
        %v4979 = vadd.f32 %v4883, %v4926
        %v4980 = vadd.f32 %v4884, %v4930
        %v4981 = vadd.f32 %v4885, %v4930
        %v4982 = vadd.f32 %v4886, %v4930
        %v4983 = vadd.f32 %v4887, %v4930
        %v4984 = vadd.f32 %v4888, %v4930
        %v4985 = vadd.f32 %v4889, %v4930
        %v4986 = vadd.f32 %v4890, %v4930
        %v4987 = vadd.f32 %v4891, %v4930
        %v4988 = vadd.f32 %v4892, %v4934
        %v4989 = vadd.f32 %v4893, %v4934
        %v4990 = vadd.f32 %v4894, %v4934
        %v4991 = vadd.f32 %v4895, %v4934
        %v4992 = vadd.f32 %v4896, %v4934
        %v4993 = vadd.f32 %v4897, %v4934
        %v4994 = vadd.f32 %v4898, %v4934
        %v4995 = vadd.f32 %v4899, %v4934
        %v4996 = vadd.f32 %v4900, %v4938
        %v4997 = vadd.f32 %v4901, %v4938
        %v4998 = vadd.f32 %v4902, %v4938
        %v4999 = vadd.f32 %v4903, %v4938
        %v5000 = vadd.f32 %v4904, %v4938
        %v5001 = vadd.f32 %v4905, %v4938
        %v5002 = vadd.f32 %v4906, %v4938
        %v5003 = vadd.f32 %v4907, %v4938
        %v5004 = vmax.f32 %v4940, 0.0
        %v5005 = vmax.f32 %v4941, 0.0
        %v5006 = vmax.f32 %v4942, 0.0
        %v5007 = vmax.f32 %v4943, 0.0
        %v5008 = vmax.f32 %v4944, 0.0
        %v5009 = vmax.f32 %v4945, 0.0
        %v5010 = vmax.f32 %v4946, 0.0
        %v5011 = vmax.f32 %v4947, 0.0
        %v5012 = vmax.f32 %v4948, 0.0
        %v5013 = vmax.f32 %v4949, 0.0
        %v5014 = vmax.f32 %v4950, 0.0
        %v5015 = vmax.f32 %v4951, 0.0
        %v5016 = vmax.f32 %v4952, 0.0
        %v5017 = vmax.f32 %v4953, 0.0
        %v5018 = vmax.f32 %v4954, 0.0
        %v5019 = vmax.f32 %v4955, 0.0
        %v5020 = vmax.f32 %v4956, 0.0
        %v5021 = vmax.f32 %v4957, 0.0
        %v5022 = vmax.f32 %v4958, 0.0
        %v5023 = vmax.f32 %v4959, 0.0
        %v5024 = vmax.f32 %v4960, 0.0
        %v5025 = vmax.f32 %v4961, 0.0
        %v5026 = vmax.f32 %v4962, 0.0
        %v5027 = vmax.f32 %v4963, 0.0
        %v5028 = vmax.f32 %v4964, 0.0
        %v5029 = vmax.f32 %v4965, 0.0
        %v5030 = vmax.f32 %v4966, 0.0
        %v5031 = vmax.f32 %v4967, 0.0
        %v5032 = vmax.f32 %v4968, 0.0
        %v5033 = vmax.f32 %v4969, 0.0
        %v5034 = vmax.f32 %v4970, 0.0
        %v5035 = vmax.f32 %v4971, 0.0
        %v5036 = vmax.f32 %v4972, 0.0
        %v5037 = vmax.f32 %v4973, 0.0
        %v5038 = vmax.f32 %v4974, 0.0
        %v5039 = vmax.f32 %v4975, 0.0
        %v5040 = vmax.f32 %v4976, 0.0
        %v5041 = vmax.f32 %v4977, 0.0
        %v5042 = vmax.f32 %v4978, 0.0
        %v5043 = vmax.f32 %v4979, 0.0
        %v5044 = vmax.f32 %v4980, 0.0
        %v5045 = vmax.f32 %v4981, 0.0
        %v5046 = vmax.f32 %v4982, 0.0
        %v5047 = vmax.f32 %v4983, 0.0
        %v5048 = vmax.f32 %v4984, 0.0
        %v5049 = vmax.f32 %v4985, 0.0
        %v5050 = vmax.f32 %v4986, 0.0
        %v5051 = vmax.f32 %v4987, 0.0
        %v5052 = vmax.f32 %v4988, 0.0
        %v5053 = vmax.f32 %v4989, 0.0
        %v5054 = vmax.f32 %v4990, 0.0
        %v5055 = vmax.f32 %v4991, 0.0
        %v5056 = vmax.f32 %v4992, 0.0
        %v5057 = vmax.f32 %v4993, 0.0
        %v5058 = vmax.f32 %v4994, 0.0
        %v5059 = vmax.f32 %v4995, 0.0
        %v5060 = vmax.f32 %v4996, 0.0
        %v5061 = vmax.f32 %v4997, 0.0
        %v5062 = vmax.f32 %v4998, 0.0
        %v5063 = vmax.f32 %v4999, 0.0
        %v5064 = vmax.f32 %v5000, 0.0
        %v5065 = vmax.f32 %v5001, 0.0
        %v5066 = vmax.f32 %v5002, 0.0
        %v5067 = vmax.f32 %v5003, 0.0
        %v5068 = vpack.c.bf16 %v5012, %v5004
        %v5069 = vpack.c.bf16 %v5013, %v5005
        %v5070 = vpack.c.bf16 %v5014, %v5006
        %v5071 = vpack.c.bf16 %v5015, %v5007
        %v5072 = vpack.c.bf16 %v5016, %v5008
        %v5073 = vpack.c.bf16 %v5017, %v5009
        %v5074 = vpack.c.bf16 %v5018, %v5010
        %v5075 = vpack.c.bf16 %v5019, %v5011
        %v5076 = vpack.c.bf16 %v5028, %v5020
        %v5077 = vpack.c.bf16 %v5029, %v5021
        %v5078 = vpack.c.bf16 %v5030, %v5022
        %v5079 = vpack.c.bf16 %v5031, %v5023
        %v5080 = vpack.c.bf16 %v5032, %v5024
        %v5081 = vpack.c.bf16 %v5033, %v5025
        %v5082 = vpack.c.bf16 %v5034, %v5026
        %v5083 = vpack.c.bf16 %v5035, %v5027
        %v5084 = vpack.c.bf16 %v5044, %v5036
        %v5085 = vpack.c.bf16 %v5045, %v5037
        %v5086 = vpack.c.bf16 %v5046, %v5038
        %v5087 = vpack.c.bf16 %v5047, %v5039
        %v5088 = vpack.c.bf16 %v5048, %v5040
        %v5089 = vpack.c.bf16 %v5049, %v5041
        %v5090 = vpack.c.bf16 %v5050, %v5042
        %v5091 = vpack.c.bf16 %v5051, %v5043
        %v5092 = vpack.c.bf16 %v5060, %v5052
        %v5093 = vpack.c.bf16 %v5061, %v5053
        %v5094 = vpack.c.bf16 %v5062, %v5054
        %v5095 = vpack.c.bf16 %v5063, %v5055
        %v5096 = vpack.c.bf16 %v5064, %v5056
        %v5097 = vpack.c.bf16 %v5065, %v5057
        %v5098 = vpack.c.bf16 %v5066, %v5058
        %v5099 = vpack.c.bf16 %v5067, %v5059
        %v5100 = vld [vmem:[%s5] sm:$0xf]
        %v5101 = vld [vmem:[%s5 + $0x4] sm:$0xf]
        %v5102 = vld [vmem:[%s5 + $0x8] sm:$0xf]
        %v5103 = vld [vmem:[%s5 + $0xc] sm:$0xf]
        %v5104 = vld [vmem:[%s5 + $0x10] sm:$0xf]
        %v5105 = vld [vmem:[%s5 + $0x14] sm:$0xf]
        %v5106 = vld [vmem:[%s5 + $0x18] sm:$0xf]
        %v5107 = vld [vmem:[%s5 + $0x1c] sm:$0xf]
        %v5108 = vld [vmem:[%s5 + $0x20] sm:$0xf]
        %v5109 = vld [vmem:[%s5 + $0x24] sm:$0xf]
        %v5110 = vld [vmem:[%s5 + $0x28] sm:$0xf]
        %v5111 = vld [vmem:[%s5 + $0x2c] sm:$0xf]
        %v5112 = vld [vmem:[%s5 + $0x30] sm:$0xf]
        %v5113 = vld [vmem:[%s5 + $0x34] sm:$0xf]
        %v5114 = vld [vmem:[%s5 + $0x38] sm:$0xf]
        %v5115 = vld [vmem:[%s5 + $0x3c] sm:$0xf]
        %v5132 = vunpack.c.l.b16 %v5100
        %v5133 = vunpack.c.l.b16 %v5101
        %v5134 = vunpack.c.l.b16 %v5102
        %v5135 = vunpack.c.l.b16 %v5103
        %v5136 = vunpack.c.l.b16 %v5104
        %v5137 = vunpack.c.l.b16 %v5105
        %v5138 = vunpack.c.l.b16 %v5106
        %v5139 = vunpack.c.l.b16 %v5107
        %v5140 = vunpack.c.l.b16 %v5108
        %v5141 = vunpack.c.l.b16 %v5109
        %v5142 = vunpack.c.l.b16 %v5110
        %v5143 = vunpack.c.l.b16 %v5111
        %v5144 = vunpack.c.l.b16 %v5112
        %v5145 = vunpack.c.l.b16 %v5113
        %v5146 = vunpack.c.l.b16 %v5114
        %v5147 = vunpack.c.l.b16 %v5115
        %v5148 = vpack.c.b16 %v5133, %v5132
        %v5149 = vpack.c.b16 %v5135, %v5134
        %v5150 = vpack.c.b16 %v5137, %v5136
        %v5151 = vpack.c.b16 %v5139, %v5138
        %v5152 = vpack.c.b16 %v5141, %v5140
        %v5153 = vpack.c.b16 %v5143, %v5142
        %v5154 = vpack.c.b16 %v5145, %v5144
        %v5155 = vpack.c.b16 %v5147, %v5146
        %vm5156 = vcmask 523264
        %v5158 = vsel %vm5156, %v5148, 0
        %v5161 = vsel %vm5156, %v5149, 0
        %v5164 = vsel %vm5156, %v5150, 0
        %v5167 = vsel %vm5156, %v5151, 0
        %v5170 = vsel %vm5156, %v5152, 0
        %v5173 = vsel %vm5156, %v5153, 0
        %v5176 = vsel %vm5156, %v5154, 0
        %v5179 = vsel %vm5156, %v5155, 0
        %5181 = vmatpush.bf16.msra.mxu0 0
        %5182 = vmatpush.bf16.msra.mxu0 0
        %5183 = vmatpush.bf16.msra.mxu0 0
        %5184 = vmatpush.bf16.msra.mxu0 0
        %5185 = vmatpush.bf16.msra.mxu0 %v5092
        %5186 = vmatpush.bf16.msra.mxu0 %v5084
        %5187 = vmatpush.bf16.msra.mxu0 %v5076
        %5188 = vmatpush.bf16.msra.mxu0 %v5068
        %5189 = vmatmul.bf16.gmra.mxu0 %v5158
        %v5190 = vpop.f32.mrf.mxu0
        %v5191 = vadd.f32 0.0, %v5190
        %v5192 = vpop.f32.mrf.mxu0
        %v5193 = vadd.f32 0.0, %v5192
        %5194 = vmatmul.bf16.gmra.mxu0 %v5161
        %v5195 = vpop.f32.mrf.mxu0
        %v5196 = vadd.f32 0.0, %v5195
        %v5197 = vpop.f32.mrf.mxu0
        %v5198 = vadd.f32 0.0, %v5197
        %5199 = vmatmul.bf16.gmra.mxu0 %v5164
        %v5200 = vpop.f32.mrf.mxu0
        %v5201 = vadd.f32 0.0, %v5200
        %v5202 = vpop.f32.mrf.mxu0
        %v5203 = vadd.f32 0.0, %v5202
        %5204 = vmatmul.bf16.gmra.mxu0 %v5167
        %v5205 = vpop.f32.mrf.mxu0
        %v5206 = vadd.f32 0.0, %v5205
        %v5207 = vpop.f32.mrf.mxu0
        %v5208 = vadd.f32 0.0, %v5207
        %5209 = vmatmul.bf16.gmra.mxu0 %v5170
        %v5210 = vpop.f32.mrf.mxu0
        %v5211 = vadd.f32 0.0, %v5210
        %v5212 = vpop.f32.mrf.mxu0
        %v5213 = vadd.f32 0.0, %v5212
        %5214 = vmatmul.bf16.gmra.mxu0 %v5173
        %v5215 = vpop.f32.mrf.mxu0
        %v5216 = vadd.f32 0.0, %v5215
        %v5217 = vpop.f32.mrf.mxu0
        %v5218 = vadd.f32 0.0, %v5217
        %5219 = vmatmul.bf16.gmra.mxu0 %v5176
        %v5220 = vpop.f32.mrf.mxu0
        %v5221 = vadd.f32 0.0, %v5220
        %v5222 = vpop.f32.mrf.mxu0
        %v5223 = vadd.f32 0.0, %v5222
        %5224 = vmatmul.bf16.gmra.mxu0 %v5179
        %v5225 = vpop.f32.mrf.mxu0
        %v5226 = vadd.f32 0.0, %v5225
        %v5227 = vpop.f32.mrf.mxu0
        %v5228 = vadd.f32 0.0, %v5227
        %5229 = vdwg.mxu0
        %5230 = vmatpush.bf16.msra.mxu0 0
        %5231 = vmatpush.bf16.msra.mxu0 0
        %5232 = vmatpush.bf16.msra.mxu0 0
        %5233 = vmatpush.bf16.msra.mxu0 0
        %5234 = vmatpush.bf16.msra.mxu0 %v5093
        %5235 = vmatpush.bf16.msra.mxu0 %v5085
        %5236 = vmatpush.bf16.msra.mxu0 %v5077
        %5237 = vmatpush.bf16.msra.mxu0 %v5069
        %5238 = vmatmul.bf16.gmra.mxu0 %v5158
        %v5239 = vpop.f32.mrf.mxu0
        %v5240 = vadd.f32 0.0, %v5239
        %v5241 = vpop.f32.mrf.mxu0
        %v5242 = vadd.f32 0.0, %v5241
        %5243 = vmatmul.bf16.gmra.mxu0 %v5161
        %v5244 = vpop.f32.mrf.mxu0
        %v5245 = vadd.f32 0.0, %v5244
        %v5246 = vpop.f32.mrf.mxu0
        %v5247 = vadd.f32 0.0, %v5246
        %5248 = vmatmul.bf16.gmra.mxu0 %v5164
        %v5249 = vpop.f32.mrf.mxu0
        %v5250 = vadd.f32 0.0, %v5249
        %v5251 = vpop.f32.mrf.mxu0
        %v5252 = vadd.f32 0.0, %v5251
        %5253 = vmatmul.bf16.gmra.mxu0 %v5167
        %v5254 = vpop.f32.mrf.mxu0
        %v5255 = vadd.f32 0.0, %v5254
        %v5256 = vpop.f32.mrf.mxu0
        %v5257 = vadd.f32 0.0, %v5256
        %5258 = vmatmul.bf16.gmra.mxu0 %v5170
        %v5259 = vpop.f32.mrf.mxu0
        %v5260 = vadd.f32 0.0, %v5259
        %v5261 = vpop.f32.mrf.mxu0
        %v5262 = vadd.f32 0.0, %v5261
        %5263 = vmatmul.bf16.gmra.mxu0 %v5173
        %v5264 = vpop.f32.mrf.mxu0
        %v5265 = vadd.f32 0.0, %v5264
        %v5266 = vpop.f32.mrf.mxu0
        %v5267 = vadd.f32 0.0, %v5266
        %5268 = vmatmul.bf16.gmra.mxu0 %v5176
        %v5269 = vpop.f32.mrf.mxu0
        %v5270 = vadd.f32 0.0, %v5269
        %v5271 = vpop.f32.mrf.mxu0
        %v5272 = vadd.f32 0.0, %v5271
        %5273 = vmatmul.bf16.gmra.mxu0 %v5179
        %v5274 = vpop.f32.mrf.mxu0
        %v5275 = vadd.f32 0.0, %v5274
        %v5276 = vpop.f32.mrf.mxu0
        %v5277 = vadd.f32 0.0, %v5276
        %5278 = vdwg.mxu0
        %5279 = vmatpush.bf16.msra.mxu0 0
        %5280 = vmatpush.bf16.msra.mxu0 0
        %5281 = vmatpush.bf16.msra.mxu0 0
        %5282 = vmatpush.bf16.msra.mxu0 0
        %5283 = vmatpush.bf16.msra.mxu0 %v5094
        %5284 = vmatpush.bf16.msra.mxu0 %v5086
        %5285 = vmatpush.bf16.msra.mxu0 %v5078
        %5286 = vmatpush.bf16.msra.mxu0 %v5070
        %5287 = vmatmul.bf16.gmra.mxu0 %v5158
        %v5288 = vpop.f32.mrf.mxu0
        %v5289 = vadd.f32 0.0, %v5288
        %v5290 = vpop.f32.mrf.mxu0
        %v5291 = vadd.f32 0.0, %v5290
        %5292 = vmatmul.bf16.gmra.mxu0 %v5161
        %v5293 = vpop.f32.mrf.mxu0
        %v5294 = vadd.f32 0.0, %v5293
        %v5295 = vpop.f32.mrf.mxu0
        %v5296 = vadd.f32 0.0, %v5295
        %5297 = vmatmul.bf16.gmra.mxu0 %v5164
        %v5298 = vpop.f32.mrf.mxu0
        %v5299 = vadd.f32 0.0, %v5298
        %v5300 = vpop.f32.mrf.mxu0
        %v5301 = vadd.f32 0.0, %v5300
        %5302 = vmatmul.bf16.gmra.mxu0 %v5167
        %v5303 = vpop.f32.mrf.mxu0
        %v5304 = vadd.f32 0.0, %v5303
        %v5305 = vpop.f32.mrf.mxu0
        %v5306 = vadd.f32 0.0, %v5305
        %5307 = vmatmul.bf16.gmra.mxu0 %v5170
        %v5308 = vpop.f32.mrf.mxu0
        %v5309 = vadd.f32 0.0, %v5308
        %v5310 = vpop.f32.mrf.mxu0
        %v5311 = vadd.f32 0.0, %v5310
        %5312 = vmatmul.bf16.gmra.mxu0 %v5173
        %v5313 = vpop.f32.mrf.mxu0
        %v5314 = vadd.f32 0.0, %v5313
        %v5315 = vpop.f32.mrf.mxu0
        %v5316 = vadd.f32 0.0, %v5315
        %5317 = vmatmul.bf16.gmra.mxu0 %v5176
        %v5318 = vpop.f32.mrf.mxu0
        %v5319 = vadd.f32 0.0, %v5318
        %v5320 = vpop.f32.mrf.mxu0
        %v5321 = vadd.f32 0.0, %v5320
        %5322 = vmatmul.bf16.gmra.mxu0 %v5179
        %v5323 = vpop.f32.mrf.mxu0
        %v5324 = vadd.f32 0.0, %v5323
        %v5325 = vpop.f32.mrf.mxu0
        %v5326 = vadd.f32 0.0, %v5325
        %5327 = vdwg.mxu0
        %5328 = vmatpush.bf16.msra.mxu0 0
        %5329 = vmatpush.bf16.msra.mxu0 0
        %5330 = vmatpush.bf16.msra.mxu0 0
        %5331 = vmatpush.bf16.msra.mxu0 0
        %5332 = vmatpush.bf16.msra.mxu0 %v5095
        %5333 = vmatpush.bf16.msra.mxu0 %v5087
        %5334 = vmatpush.bf16.msra.mxu0 %v5079
        %5335 = vmatpush.bf16.msra.mxu0 %v5071
        %5336 = vmatmul.bf16.gmra.mxu0 %v5158
        %v5337 = vpop.f32.mrf.mxu0
        %v5338 = vadd.f32 0.0, %v5337
        %v5339 = vpop.f32.mrf.mxu0
        %v5340 = vadd.f32 0.0, %v5339
        %5341 = vmatmul.bf16.gmra.mxu0 %v5161
        %v5342 = vpop.f32.mrf.mxu0
        %v5343 = vadd.f32 0.0, %v5342
        %v5344 = vpop.f32.mrf.mxu0
        %v5345 = vadd.f32 0.0, %v5344
        %5346 = vmatmul.bf16.gmra.mxu0 %v5164
        %v5347 = vpop.f32.mrf.mxu0
        %v5348 = vadd.f32 0.0, %v5347
        %v5349 = vpop.f32.mrf.mxu0
        %v5350 = vadd.f32 0.0, %v5349
        %5351 = vmatmul.bf16.gmra.mxu0 %v5167
        %v5352 = vpop.f32.mrf.mxu0
        %v5353 = vadd.f32 0.0, %v5352
        %v5354 = vpop.f32.mrf.mxu0
        %v5355 = vadd.f32 0.0, %v5354
        %5356 = vmatmul.bf16.gmra.mxu0 %v5170
        %v5357 = vpop.f32.mrf.mxu0
        %v5358 = vadd.f32 0.0, %v5357
        %v5359 = vpop.f32.mrf.mxu0
        %v5360 = vadd.f32 0.0, %v5359
        %5361 = vmatmul.bf16.gmra.mxu0 %v5173
        %v5362 = vpop.f32.mrf.mxu0
        %v5363 = vadd.f32 0.0, %v5362
        %v5364 = vpop.f32.mrf.mxu0
        %v5365 = vadd.f32 0.0, %v5364
        %5366 = vmatmul.bf16.gmra.mxu0 %v5176
        %v5367 = vpop.f32.mrf.mxu0
        %v5368 = vadd.f32 0.0, %v5367
        %v5369 = vpop.f32.mrf.mxu0
        %v5370 = vadd.f32 0.0, %v5369
        %5371 = vmatmul.bf16.gmra.mxu0 %v5179
        %v5372 = vpop.f32.mrf.mxu0
        %v5373 = vadd.f32 0.0, %v5372
        %v5374 = vpop.f32.mrf.mxu0
        %v5375 = vadd.f32 0.0, %v5374
        %5376 = vdwg.mxu0
        %5377 = vmatpush.bf16.msra.mxu0 0
        %5378 = vmatpush.bf16.msra.mxu0 0
        %5379 = vmatpush.bf16.msra.mxu0 0
        %5380 = vmatpush.bf16.msra.mxu0 0
        %5381 = vmatpush.bf16.msra.mxu0 %v5096
        %5382 = vmatpush.bf16.msra.mxu0 %v5088
        %5383 = vmatpush.bf16.msra.mxu0 %v5080
        %5384 = vmatpush.bf16.msra.mxu0 %v5072
        %5385 = vmatmul.bf16.gmra.mxu0 %v5158
        %v5386 = vpop.f32.mrf.mxu0
        %v5387 = vadd.f32 0.0, %v5386
        %v5388 = vpop.f32.mrf.mxu0
        %v5389 = vadd.f32 0.0, %v5388
        %5390 = vmatmul.bf16.gmra.mxu0 %v5161
        %v5391 = vpop.f32.mrf.mxu0
        %v5392 = vadd.f32 0.0, %v5391
        %v5393 = vpop.f32.mrf.mxu0
        %v5394 = vadd.f32 0.0, %v5393
        %5395 = vmatmul.bf16.gmra.mxu0 %v5164
        %v5396 = vpop.f32.mrf.mxu0
        %v5397 = vadd.f32 0.0, %v5396
        %v5398 = vpop.f32.mrf.mxu0
        %v5399 = vadd.f32 0.0, %v5398
        %5400 = vmatmul.bf16.gmra.mxu0 %v5167
        %v5401 = vpop.f32.mrf.mxu0
        %v5402 = vadd.f32 0.0, %v5401
        %v5403 = vpop.f32.mrf.mxu0
        %v5404 = vadd.f32 0.0, %v5403
        %5405 = vmatmul.bf16.gmra.mxu0 %v5170
        %v5406 = vpop.f32.mrf.mxu0
        %v5407 = vadd.f32 0.0, %v5406
        %v5408 = vpop.f32.mrf.mxu0
        %v5409 = vadd.f32 0.0, %v5408
        %5410 = vmatmul.bf16.gmra.mxu0 %v5173
        %v5411 = vpop.f32.mrf.mxu0
        %v5412 = vadd.f32 0.0, %v5411
        %v5413 = vpop.f32.mrf.mxu0
        %v5414 = vadd.f32 0.0, %v5413
        %5415 = vmatmul.bf16.gmra.mxu0 %v5176
        %v5416 = vpop.f32.mrf.mxu0
        %v5417 = vadd.f32 0.0, %v5416
        %v5418 = vpop.f32.mrf.mxu0
        %v5419 = vadd.f32 0.0, %v5418
        %5420 = vmatmul.bf16.gmra.mxu0 %v5179
        %v5421 = vpop.f32.mrf.mxu0
        %v5422 = vadd.f32 0.0, %v5421
        %v5423 = vpop.f32.mrf.mxu0
        %v5424 = vadd.f32 0.0, %v5423
        %5425 = vdwg.mxu0
        %5426 = vmatpush.bf16.msra.mxu0 0
        %5427 = vmatpush.bf16.msra.mxu0 0
        %5428 = vmatpush.bf16.msra.mxu0 0
        %5429 = vmatpush.bf16.msra.mxu0 0
        %5430 = vmatpush.bf16.msra.mxu0 %v5097
        %5431 = vmatpush.bf16.msra.mxu0 %v5089
        %5432 = vmatpush.bf16.msra.mxu0 %v5081
        %5433 = vmatpush.bf16.msra.mxu0 %v5073
        %5434 = vmatmul.bf16.gmra.mxu0 %v5158
        %v5435 = vpop.f32.mrf.mxu0
        %v5436 = vadd.f32 0.0, %v5435
        %v5437 = vpop.f32.mrf.mxu0
        %v5438 = vadd.f32 0.0, %v5437
        %5439 = vmatmul.bf16.gmra.mxu0 %v5161
        %v5440 = vpop.f32.mrf.mxu0
        %v5441 = vadd.f32 0.0, %v5440
        %v5442 = vpop.f32.mrf.mxu0
        %v5443 = vadd.f32 0.0, %v5442
        %5444 = vmatmul.bf16.gmra.mxu0 %v5164
        %v5445 = vpop.f32.mrf.mxu0
        %v5446 = vadd.f32 0.0, %v5445
        %v5447 = vpop.f32.mrf.mxu0
        %v5448 = vadd.f32 0.0, %v5447
        %5449 = vmatmul.bf16.gmra.mxu0 %v5167
        %v5450 = vpop.f32.mrf.mxu0
        %v5451 = vadd.f32 0.0, %v5450
        %v5452 = vpop.f32.mrf.mxu0
        %v5453 = vadd.f32 0.0, %v5452
        %5454 = vmatmul.bf16.gmra.mxu0 %v5170
        %v5455 = vpop.f32.mrf.mxu0
        %v5456 = vadd.f32 0.0, %v5455
        %v5457 = vpop.f32.mrf.mxu0
        %v5458 = vadd.f32 0.0, %v5457
        %5459 = vmatmul.bf16.gmra.mxu0 %v5173
        %v5460 = vpop.f32.mrf.mxu0
        %v5461 = vadd.f32 0.0, %v5460
        %v5462 = vpop.f32.mrf.mxu0
        %v5463 = vadd.f32 0.0, %v5462
        %5464 = vmatmul.bf16.gmra.mxu0 %v5176
        %v5465 = vpop.f32.mrf.mxu0
        %v5466 = vadd.f32 0.0, %v5465
        %v5467 = vpop.f32.mrf.mxu0
        %v5468 = vadd.f32 0.0, %v5467
        %5469 = vmatmul.bf16.gmra.mxu0 %v5179
        %v5470 = vpop.f32.mrf.mxu0
        %v5471 = vadd.f32 0.0, %v5470
        %v5472 = vpop.f32.mrf.mxu0
        %v5473 = vadd.f32 0.0, %v5472
        %5474 = vdwg.mxu0
        %5475 = vmatpush.bf16.msra.mxu0 0
        %5476 = vmatpush.bf16.msra.mxu0 0
        %5477 = vmatpush.bf16.msra.mxu0 0
        %5478 = vmatpush.bf16.msra.mxu0 0
        %5479 = vmatpush.bf16.msra.mxu0 %v5098
        %5480 = vmatpush.bf16.msra.mxu0 %v5090
        %5481 = vmatpush.bf16.msra.mxu0 %v5082
        %5482 = vmatpush.bf16.msra.mxu0 %v5074
        %5483 = vmatmul.bf16.gmra.mxu0 %v5158
        %v5484 = vpop.f32.mrf.mxu0
        %v5485 = vadd.f32 0.0, %v5484
        %v5486 = vpop.f32.mrf.mxu0
        %v5487 = vadd.f32 0.0, %v5486
        %5488 = vmatmul.bf16.gmra.mxu0 %v5161
        %v5489 = vpop.f32.mrf.mxu0
        %v5490 = vadd.f32 0.0, %v5489
        %v5491 = vpop.f32.mrf.mxu0
        %v5492 = vadd.f32 0.0, %v5491
        %5493 = vmatmul.bf16.gmra.mxu0 %v5164
        %v5494 = vpop.f32.mrf.mxu0
        %v5495 = vadd.f32 0.0, %v5494
        %v5496 = vpop.f32.mrf.mxu0
        %v5497 = vadd.f32 0.0, %v5496
        %5498 = vmatmul.bf16.gmra.mxu0 %v5167
        %v5499 = vpop.f32.mrf.mxu0
        %v5500 = vadd.f32 0.0, %v5499
        %v5501 = vpop.f32.mrf.mxu0
        %v5502 = vadd.f32 0.0, %v5501
        %5503 = vmatmul.bf16.gmra.mxu0 %v5170
        %v5504 = vpop.f32.mrf.mxu0
        %v5505 = vadd.f32 0.0, %v5504
        %v5506 = vpop.f32.mrf.mxu0
        %v5507 = vadd.f32 0.0, %v5506
        %5508 = vmatmul.bf16.gmra.mxu0 %v5173
        %v5509 = vpop.f32.mrf.mxu0
        %v5510 = vadd.f32 0.0, %v5509
        %v5511 = vpop.f32.mrf.mxu0
        %v5512 = vadd.f32 0.0, %v5511
        %5513 = vmatmul.bf16.gmra.mxu0 %v5176
        %v5514 = vpop.f32.mrf.mxu0
        %v5515 = vadd.f32 0.0, %v5514
        %v5516 = vpop.f32.mrf.mxu0
        %v5517 = vadd.f32 0.0, %v5516
        %5518 = vmatmul.bf16.gmra.mxu0 %v5179
        %v5519 = vpop.f32.mrf.mxu0
        %v5520 = vadd.f32 0.0, %v5519
        %v5521 = vpop.f32.mrf.mxu0
        %v5522 = vadd.f32 0.0, %v5521
        %5523 = vdwg.mxu0
        %5524 = vmatpush.bf16.msra.mxu0 0
        %5525 = vmatpush.bf16.msra.mxu0 0
        %5526 = vmatpush.bf16.msra.mxu0 0
        %5527 = vmatpush.bf16.msra.mxu0 0
        %5528 = vmatpush.bf16.msra.mxu0 %v5099
        %5529 = vmatpush.bf16.msra.mxu0 %v5091
        %5530 = vmatpush.bf16.msra.mxu0 %v5083
        %5531 = vmatpush.bf16.msra.mxu0 %v5075
        %5532 = vmatmul.bf16.gmra.mxu0 %v5158
        %v5533 = vpop.f32.mrf.mxu0
        %v5534 = vadd.f32 0.0, %v5533
        %v5535 = vpop.f32.mrf.mxu0
        %v5536 = vadd.f32 0.0, %v5535
        %5537 = vmatmul.bf16.gmra.mxu0 %v5161
        %v5538 = vpop.f32.mrf.mxu0
        %v5539 = vadd.f32 0.0, %v5538
        %v5540 = vpop.f32.mrf.mxu0
        %v5541 = vadd.f32 0.0, %v5540
        %5542 = vmatmul.bf16.gmra.mxu0 %v5164
        %v5543 = vpop.f32.mrf.mxu0
        %v5544 = vadd.f32 0.0, %v5543
        %v5545 = vpop.f32.mrf.mxu0
        %v5546 = vadd.f32 0.0, %v5545
        %5547 = vmatmul.bf16.gmra.mxu0 %v5167
        %v5548 = vpop.f32.mrf.mxu0
        %v5549 = vadd.f32 0.0, %v5548
        %v5550 = vpop.f32.mrf.mxu0
        %v5551 = vadd.f32 0.0, %v5550
        %5552 = vmatmul.bf16.gmra.mxu0 %v5170
        %v5553 = vpop.f32.mrf.mxu0
        %v5554 = vadd.f32 0.0, %v5553
        %v5555 = vpop.f32.mrf.mxu0
        %v5556 = vadd.f32 0.0, %v5555
        %5557 = vmatmul.bf16.gmra.mxu0 %v5173
        %v5558 = vpop.f32.mrf.mxu0
        %v5559 = vadd.f32 0.0, %v5558
        %v5560 = vpop.f32.mrf.mxu0
        %v5561 = vadd.f32 0.0, %v5560
        %5562 = vmatmul.bf16.gmra.mxu0 %v5176
        %v5563 = vpop.f32.mrf.mxu0
        %v5564 = vadd.f32 0.0, %v5563
        %v5565 = vpop.f32.mrf.mxu0
        %v5566 = vadd.f32 0.0, %v5565
        %5567 = vmatmul.bf16.gmra.mxu0 %v5179
        %v5568 = vpop.f32.mrf.mxu0
        %v5569 = vadd.f32 0.0, %v5568
        %v5570 = vpop.f32.mrf.mxu0
        %v5571 = vadd.f32 0.0, %v5570
        %5572 = vdwg.mxu0
        %v5573 = vadd.f32 %v5191, %v5193
        %v5574 = vadd.f32 %v5573, %v5196
        %v5575 = vadd.f32 %v5574, %v5198
        %v5576 = vadd.f32 %v5575, %v5201
        %v5577 = vadd.f32 %v5576, %v5203
        %v5578 = vadd.f32 %v5577, %v5206
        %v5579 = vadd.f32 %v5578, %v5208
        %v5580 = vadd.f32 %v5579, %v5211
        %v5581 = vadd.f32 %v5580, %v5213
        %v5582 = vadd.f32 %v5581, %v5216
        %v5583 = vadd.f32 %v5582, %v5218
        %v5584 = vadd.f32 %v5583, %v5221
        %v5585 = vadd.f32 %v5584, %v5223
        %v5586 = vadd.f32 %v5585, %v5226
        %v5587 = vadd.f32 %v5586, %v5228
        %v5588 = vrot.slane %v5587, 4
        %v5589 = vadd.f32 %v5587, %v5588
        %v5590 = vrot.slane %v5589, 2
        %v5591 = vadd.f32 %v5589, %v5590
        %v5592 = vrot.slane %v5591, 1
        %v5593 = vadd.f32 %v5591, %v5592
        %v5594 = vadd.f32 %v5240, %v5242
        %v5595 = vadd.f32 %v5594, %v5245
        %v5596 = vadd.f32 %v5595, %v5247
        %v5597 = vadd.f32 %v5596, %v5250
        %v5598 = vadd.f32 %v5597, %v5252
        %v5599 = vadd.f32 %v5598, %v5255
        %v5600 = vadd.f32 %v5599, %v5257
        %v5601 = vadd.f32 %v5600, %v5260
        %v5602 = vadd.f32 %v5601, %v5262
        %v5603 = vadd.f32 %v5602, %v5265
        %v5604 = vadd.f32 %v5603, %v5267
        %v5605 = vadd.f32 %v5604, %v5270
        %v5606 = vadd.f32 %v5605, %v5272
        %v5607 = vadd.f32 %v5606, %v5275
        %v5608 = vadd.f32 %v5607, %v5277
        %v5609 = vrot.slane %v5608, 4
        %v5610 = vadd.f32 %v5608, %v5609
        %v5611 = vrot.slane %v5610, 2
        %v5612 = vadd.f32 %v5610, %v5611
        %v5613 = vrot.slane %v5612, 1
        %v5614 = vadd.f32 %v5612, %v5613
        %v5615 = vadd.f32 %v5289, %v5291
        %v5616 = vadd.f32 %v5615, %v5294
        %v5617 = vadd.f32 %v5616, %v5296
        %v5618 = vadd.f32 %v5617, %v5299
        %v5619 = vadd.f32 %v5618, %v5301
        %v5620 = vadd.f32 %v5619, %v5304
        %v5621 = vadd.f32 %v5620, %v5306
        %v5622 = vadd.f32 %v5621, %v5309
        %v5623 = vadd.f32 %v5622, %v5311
        %v5624 = vadd.f32 %v5623, %v5314
        %v5625 = vadd.f32 %v5624, %v5316
        %v5626 = vadd.f32 %v5625, %v5319
        %v5627 = vadd.f32 %v5626, %v5321
        %v5628 = vadd.f32 %v5627, %v5324
        %v5629 = vadd.f32 %v5628, %v5326
        %v5630 = vrot.slane %v5629, 4
        %v5631 = vadd.f32 %v5629, %v5630
        %v5632 = vrot.slane %v5631, 2
        %v5633 = vadd.f32 %v5631, %v5632
        %v5634 = vrot.slane %v5633, 1
        %v5635 = vadd.f32 %v5633, %v5634
        %v5636 = vadd.f32 %v5338, %v5340
        %v5637 = vadd.f32 %v5636, %v5343
        %v5638 = vadd.f32 %v5637, %v5345
        %v5639 = vadd.f32 %v5638, %v5348
        %v5640 = vadd.f32 %v5639, %v5350
        %v5641 = vadd.f32 %v5640, %v5353
        %v5642 = vadd.f32 %v5641, %v5355
        %v5643 = vadd.f32 %v5642, %v5358
        %v5644 = vadd.f32 %v5643, %v5360
        %v5645 = vadd.f32 %v5644, %v5363
        %v5646 = vadd.f32 %v5645, %v5365
        %v5647 = vadd.f32 %v5646, %v5368
        %v5648 = vadd.f32 %v5647, %v5370
        %v5649 = vadd.f32 %v5648, %v5373
        %v5650 = vadd.f32 %v5649, %v5375
        %v5651 = vrot.slane %v5650, 4
        %v5652 = vadd.f32 %v5650, %v5651
        %v5653 = vrot.slane %v5652, 2
        %v5654 = vadd.f32 %v5652, %v5653
        %v5655 = vrot.slane %v5654, 1
        %v5656 = vadd.f32 %v5654, %v5655
        %v5657 = vadd.f32 %v5387, %v5389
        %v5658 = vadd.f32 %v5657, %v5392
        %v5659 = vadd.f32 %v5658, %v5394
        %v5660 = vadd.f32 %v5659, %v5397
        %v5661 = vadd.f32 %v5660, %v5399
        %v5662 = vadd.f32 %v5661, %v5402
        %v5663 = vadd.f32 %v5662, %v5404
        %v5664 = vadd.f32 %v5663, %v5407
        %v5665 = vadd.f32 %v5664, %v5409
        %v5666 = vadd.f32 %v5665, %v5412
        %v5667 = vadd.f32 %v5666, %v5414
        %v5668 = vadd.f32 %v5667, %v5417
        %v5669 = vadd.f32 %v5668, %v5419
        %v5670 = vadd.f32 %v5669, %v5422
        %v5671 = vadd.f32 %v5670, %v5424
        %v5672 = vrot.slane %v5671, 4
        %v5673 = vadd.f32 %v5671, %v5672
        %v5674 = vrot.slane %v5673, 2
        %v5675 = vadd.f32 %v5673, %v5674
        %v5676 = vrot.slane %v5675, 1
        %v5677 = vadd.f32 %v5675, %v5676
        %v5678 = vadd.f32 %v5436, %v5438
        %v5679 = vadd.f32 %v5678, %v5441
        %v5680 = vadd.f32 %v5679, %v5443
        %v5681 = vadd.f32 %v5680, %v5446
        %v5682 = vadd.f32 %v5681, %v5448
        %v5683 = vadd.f32 %v5682, %v5451
        %v5684 = vadd.f32 %v5683, %v5453
        %v5685 = vadd.f32 %v5684, %v5456
        %v5686 = vadd.f32 %v5685, %v5458
        %v5687 = vadd.f32 %v5686, %v5461
        %v5688 = vadd.f32 %v5687, %v5463
        %v5689 = vadd.f32 %v5688, %v5466
        %v5690 = vadd.f32 %v5689, %v5468
        %v5691 = vadd.f32 %v5690, %v5471
        %v5692 = vadd.f32 %v5691, %v5473
        %v5693 = vrot.slane %v5692, 4
        %v5694 = vadd.f32 %v5692, %v5693
        %v5695 = vrot.slane %v5694, 2
        %v5696 = vadd.f32 %v5694, %v5695
        %v5697 = vrot.slane %v5696, 1
        %v5698 = vadd.f32 %v5696, %v5697
        %v5699 = vadd.f32 %v5485, %v5487
        %v5700 = vadd.f32 %v5699, %v5490
        %v5701 = vadd.f32 %v5700, %v5492
        %v5702 = vadd.f32 %v5701, %v5495
        %v5703 = vadd.f32 %v5702, %v5497
        %v5704 = vadd.f32 %v5703, %v5500
        %v5705 = vadd.f32 %v5704, %v5502
        %v5706 = vadd.f32 %v5705, %v5505
        %v5707 = vadd.f32 %v5706, %v5507
        %v5708 = vadd.f32 %v5707, %v5510
        %v5709 = vadd.f32 %v5708, %v5512
        %v5710 = vadd.f32 %v5709, %v5515
        %v5711 = vadd.f32 %v5710, %v5517
        %v5712 = vadd.f32 %v5711, %v5520
        %v5713 = vadd.f32 %v5712, %v5522
        %v5714 = vrot.slane %v5713, 4
        %v5715 = vadd.f32 %v5713, %v5714
        %v5716 = vrot.slane %v5715, 2
        %v5717 = vadd.f32 %v5715, %v5716
        %v5718 = vrot.slane %v5717, 1
        %v5719 = vadd.f32 %v5717, %v5718
        %v5720 = vadd.f32 %v5534, %v5536
        %v5721 = vadd.f32 %v5720, %v5539
        %v5722 = vadd.f32 %v5721, %v5541
        %v5723 = vadd.f32 %v5722, %v5544
        %v5724 = vadd.f32 %v5723, %v5546
        %v5725 = vadd.f32 %v5724, %v5549
        %v5726 = vadd.f32 %v5725, %v5551
        %v5727 = vadd.f32 %v5726, %v5554
        %v5728 = vadd.f32 %v5727, %v5556
        %v5729 = vadd.f32 %v5728, %v5559
        %v5730 = vadd.f32 %v5729, %v5561
        %v5731 = vadd.f32 %v5730, %v5564
        %v5732 = vadd.f32 %v5731, %v5566
        %v5733 = vadd.f32 %v5732, %v5569
        %v5734 = vadd.f32 %v5733, %v5571
        %v5735 = vrot.slane %v5734, 4
        %v5736 = vadd.f32 %v5734, %v5735
        %v5737 = vrot.slane %v5736, 2
        %v5738 = vadd.f32 %v5736, %v5737
        %v5739 = vrot.slane %v5738, 1
        %v5740 = vadd.f32 %v5738, %v5739
        %v5741 = vmul.f32 %v5593, %v2123
        %v5742 = vmul.f32 %v5614, %v2123
        %v5743 = vmul.f32 %v5635, %v2123
        %v5744 = vmul.f32 %v5656, %v2123
        %v5745 = vmul.f32 %v5677, %v2123
        %v5746 = vmul.f32 %v5698, %v2123
        %v5747 = vmul.f32 %v5719, %v2123
        %v5748 = vmul.f32 %v5740, %v2123
        %v5749 = vmul.f32 %v5191, %v5191
        %v5750 = vmul.f32 %v5240, %v5240
        %v5751 = vmul.f32 %v5289, %v5289
        %v5752 = vmul.f32 %v5338, %v5338
        %v5753 = vmul.f32 %v5387, %v5387
        %v5754 = vmul.f32 %v5436, %v5436
        %v5755 = vmul.f32 %v5485, %v5485
        %v5756 = vmul.f32 %v5534, %v5534
        %v5757 = vmul.f32 %v5193, %v5193
        %v5758 = vmul.f32 %v5242, %v5242
        %v5759 = vmul.f32 %v5291, %v5291
        %v5760 = vmul.f32 %v5340, %v5340
        %v5761 = vmul.f32 %v5389, %v5389
        %v5762 = vmul.f32 %v5438, %v5438
        %v5763 = vmul.f32 %v5487, %v5487
        %v5764 = vmul.f32 %v5536, %v5536
        %v5765 = vmul.f32 %v5196, %v5196
        %v5766 = vmul.f32 %v5245, %v5245
        %v5767 = vmul.f32 %v5294, %v5294
        %v5768 = vmul.f32 %v5343, %v5343
        %v5769 = vmul.f32 %v5392, %v5392
        %v5770 = vmul.f32 %v5441, %v5441
        %v5771 = vmul.f32 %v5490, %v5490
        %v5772 = vmul.f32 %v5539, %v5539
        %v5773 = vmul.f32 %v5198, %v5198
        %v5774 = vmul.f32 %v5247, %v5247
        %v5775 = vmul.f32 %v5296, %v5296
        %v5776 = vmul.f32 %v5345, %v5345
        %v5777 = vmul.f32 %v5394, %v5394
        %v5778 = vmul.f32 %v5443, %v5443
        %v5779 = vmul.f32 %v5492, %v5492
        %v5780 = vmul.f32 %v5541, %v5541
        %v5781 = vmul.f32 %v5201, %v5201
        %v5782 = vmul.f32 %v5250, %v5250
        %v5783 = vmul.f32 %v5299, %v5299
        %v5784 = vmul.f32 %v5348, %v5348
        %v5785 = vmul.f32 %v5397, %v5397
        %v5786 = vmul.f32 %v5446, %v5446
        %v5787 = vmul.f32 %v5495, %v5495
        %v5788 = vmul.f32 %v5544, %v5544
        %v5789 = vmul.f32 %v5203, %v5203
        %v5790 = vmul.f32 %v5252, %v5252
        %v5791 = vmul.f32 %v5301, %v5301
        %v5792 = vmul.f32 %v5350, %v5350
        %v5793 = vmul.f32 %v5399, %v5399
        %v5794 = vmul.f32 %v5448, %v5448
        %v5795 = vmul.f32 %v5497, %v5497
        %v5796 = vmul.f32 %v5546, %v5546
        %v5797 = vmul.f32 %v5206, %v5206
        %v5798 = vmul.f32 %v5255, %v5255
        %v5799 = vmul.f32 %v5304, %v5304
        %v5800 = vmul.f32 %v5353, %v5353
        %v5801 = vmul.f32 %v5402, %v5402
        %v5802 = vmul.f32 %v5451, %v5451
        %v5803 = vmul.f32 %v5500, %v5500
        %v5804 = vmul.f32 %v5549, %v5549
        %v5805 = vmul.f32 %v5208, %v5208
        %v5806 = vmul.f32 %v5257, %v5257
        %v5807 = vmul.f32 %v5306, %v5306
        %v5808 = vmul.f32 %v5355, %v5355
        %v5809 = vmul.f32 %v5404, %v5404
        %v5810 = vmul.f32 %v5453, %v5453
        %v5811 = vmul.f32 %v5502, %v5502
        %v5812 = vmul.f32 %v5551, %v5551
        %v5813 = vmul.f32 %v5211, %v5211
        %v5814 = vmul.f32 %v5260, %v5260
        %v5815 = vmul.f32 %v5309, %v5309
        %v5816 = vmul.f32 %v5358, %v5358
        %v5817 = vmul.f32 %v5407, %v5407
        %v5818 = vmul.f32 %v5456, %v5456
        %v5819 = vmul.f32 %v5505, %v5505
        %v5820 = vmul.f32 %v5554, %v5554
        %v5821 = vmul.f32 %v5213, %v5213
        %v5822 = vmul.f32 %v5262, %v5262
        %v5823 = vmul.f32 %v5311, %v5311
        %v5824 = vmul.f32 %v5360, %v5360
        %v5825 = vmul.f32 %v5409, %v5409
        %v5826 = vmul.f32 %v5458, %v5458
        %v5827 = vmul.f32 %v5507, %v5507
        %v5828 = vmul.f32 %v5556, %v5556
        %v5829 = vmul.f32 %v5216, %v5216
        %v5830 = vmul.f32 %v5265, %v5265
        %v5831 = vmul.f32 %v5314, %v5314
        %v5832 = vmul.f32 %v5363, %v5363
        %v5833 = vmul.f32 %v5412, %v5412
        %v5834 = vmul.f32 %v5461, %v5461
        %v5835 = vmul.f32 %v5510, %v5510
        %v5836 = vmul.f32 %v5559, %v5559
        %v5837 = vmul.f32 %v5218, %v5218
        %v5838 = vmul.f32 %v5267, %v5267
        %v5839 = vmul.f32 %v5316, %v5316
        %v5840 = vmul.f32 %v5365, %v5365
        %v5841 = vmul.f32 %v5414, %v5414
        %v5842 = vmul.f32 %v5463, %v5463
        %v5843 = vmul.f32 %v5512, %v5512
        %v5844 = vmul.f32 %v5561, %v5561
        %v5845 = vmul.f32 %v5221, %v5221
        %v5846 = vmul.f32 %v5270, %v5270
        %v5847 = vmul.f32 %v5319, %v5319
        %v5848 = vmul.f32 %v5368, %v5368
        %v5849 = vmul.f32 %v5417, %v5417
        %v5850 = vmul.f32 %v5466, %v5466
        %v5851 = vmul.f32 %v5515, %v5515
        %v5852 = vmul.f32 %v5564, %v5564
        %v5853 = vmul.f32 %v5223, %v5223
        %v5854 = vmul.f32 %v5272, %v5272
        %v5855 = vmul.f32 %v5321, %v5321
        %v5856 = vmul.f32 %v5370, %v5370
        %v5857 = vmul.f32 %v5419, %v5419
        %v5858 = vmul.f32 %v5468, %v5468
        %v5859 = vmul.f32 %v5517, %v5517
        %v5860 = vmul.f32 %v5566, %v5566
        %v5861 = vmul.f32 %v5226, %v5226
        %v5862 = vmul.f32 %v5275, %v5275
        %v5863 = vmul.f32 %v5324, %v5324
        %v5864 = vmul.f32 %v5373, %v5373
        %v5865 = vmul.f32 %v5422, %v5422
        %v5866 = vmul.f32 %v5471, %v5471
        %v5867 = vmul.f32 %v5520, %v5520
        %v5868 = vmul.f32 %v5569, %v5569
        %v5869 = vmul.f32 %v5228, %v5228
        %v5870 = vmul.f32 %v5277, %v5277
        %v5871 = vmul.f32 %v5326, %v5326
        %v5872 = vmul.f32 %v5375, %v5375
        %v5873 = vmul.f32 %v5424, %v5424
        %v5874 = vmul.f32 %v5473, %v5473
        %v5875 = vmul.f32 %v5522, %v5522
        %v5876 = vmul.f32 %v5571, %v5571
        %v5877 = vadd.f32 %v5749, %v5757
        %v5878 = vadd.f32 %v5877, %v5765
        %v5879 = vadd.f32 %v5878, %v5773
        %v5880 = vadd.f32 %v5879, %v5781
        %v5881 = vadd.f32 %v5880, %v5789
        %v5882 = vadd.f32 %v5881, %v5797
        %v5883 = vadd.f32 %v5882, %v5805
        %v5884 = vadd.f32 %v5883, %v5813
        %v5885 = vadd.f32 %v5884, %v5821
        %v5886 = vadd.f32 %v5885, %v5829
        %v5887 = vadd.f32 %v5886, %v5837
        %v5888 = vadd.f32 %v5887, %v5845
        %v5889 = vadd.f32 %v5888, %v5853
        %v5890 = vadd.f32 %v5889, %v5861
        %v5891 = vadd.f32 %v5890, %v5869
        %v5892 = vrot.slane %v5891, 4
        %v5893 = vadd.f32 %v5891, %v5892
        %v5894 = vrot.slane %v5893, 2
        %v5895 = vadd.f32 %v5893, %v5894
        %v5896 = vrot.slane %v5895, 1
        %v5897 = vadd.f32 %v5895, %v5896
        %v5898 = vadd.f32 %v5750, %v5758
        %v5899 = vadd.f32 %v5898, %v5766
        %v5900 = vadd.f32 %v5899, %v5774
        %v5901 = vadd.f32 %v5900, %v5782
        %v5902 = vadd.f32 %v5901, %v5790
        %v5903 = vadd.f32 %v5902, %v5798
        %v5904 = vadd.f32 %v5903, %v5806
        %v5905 = vadd.f32 %v5904, %v5814
        %v5906 = vadd.f32 %v5905, %v5822
        %v5907 = vadd.f32 %v5906, %v5830
        %v5908 = vadd.f32 %v5907, %v5838
        %v5909 = vadd.f32 %v5908, %v5846
        %v5910 = vadd.f32 %v5909, %v5854
        %v5911 = vadd.f32 %v5910, %v5862
        %v5912 = vadd.f32 %v5911, %v5870
        %v5913 = vrot.slane %v5912, 4
        %v5914 = vadd.f32 %v5912, %v5913
        %v5915 = vrot.slane %v5914, 2
        %v5916 = vadd.f32 %v5914, %v5915
        %v5917 = vrot.slane %v5916, 1
        %v5918 = vadd.f32 %v5916, %v5917
        %v5919 = vadd.f32 %v5751, %v5759
        %v5920 = vadd.f32 %v5919, %v5767
        %v5921 = vadd.f32 %v5920, %v5775
        %v5922 = vadd.f32 %v5921, %v5783
        %v5923 = vadd.f32 %v5922, %v5791
        %v5924 = vadd.f32 %v5923, %v5799
        %v5925 = vadd.f32 %v5924, %v5807
        %v5926 = vadd.f32 %v5925, %v5815
        %v5927 = vadd.f32 %v5926, %v5823
        %v5928 = vadd.f32 %v5927, %v5831
        %v5929 = vadd.f32 %v5928, %v5839
        %v5930 = vadd.f32 %v5929, %v5847
        %v5931 = vadd.f32 %v5930, %v5855
        %v5932 = vadd.f32 %v5931, %v5863
        %v5933 = vadd.f32 %v5932, %v5871
        %v5934 = vrot.slane %v5933, 4
        %v5935 = vadd.f32 %v5933, %v5934
        %v5936 = vrot.slane %v5935, 2
        %v5937 = vadd.f32 %v5935, %v5936
        %v5938 = vrot.slane %v5937, 1
        %v5939 = vadd.f32 %v5937, %v5938
        %v5940 = vadd.f32 %v5752, %v5760
        %v5941 = vadd.f32 %v5940, %v5768
        %v5942 = vadd.f32 %v5941, %v5776
        %v5943 = vadd.f32 %v5942, %v5784
        %v5944 = vadd.f32 %v5943, %v5792
        %v5945 = vadd.f32 %v5944, %v5800
        %v5946 = vadd.f32 %v5945, %v5808
        %v5947 = vadd.f32 %v5946, %v5816
        %v5948 = vadd.f32 %v5947, %v5824
        %v5949 = vadd.f32 %v5948, %v5832
        %v5950 = vadd.f32 %v5949, %v5840
        %v5951 = vadd.f32 %v5950, %v5848
        %v5952 = vadd.f32 %v5951, %v5856
        %v5953 = vadd.f32 %v5952, %v5864
        %v5954 = vadd.f32 %v5953, %v5872
        %v5955 = vrot.slane %v5954, 4
        %v5956 = vadd.f32 %v5954, %v5955
        %v5957 = vrot.slane %v5956, 2
        %v5958 = vadd.f32 %v5956, %v5957
        %v5959 = vrot.slane %v5958, 1
        %v5960 = vadd.f32 %v5958, %v5959
        %v5961 = vadd.f32 %v5753, %v5761
        %v5962 = vadd.f32 %v5961, %v5769
        %v5963 = vadd.f32 %v5962, %v5777
        %v5964 = vadd.f32 %v5963, %v5785
        %v5965 = vadd.f32 %v5964, %v5793
        %v5966 = vadd.f32 %v5965, %v5801
        %v5967 = vadd.f32 %v5966, %v5809
        %v5968 = vadd.f32 %v5967, %v5817
        %v5969 = vadd.f32 %v5968, %v5825
        %v5970 = vadd.f32 %v5969, %v5833
        %v5971 = vadd.f32 %v5970, %v5841
        %v5972 = vadd.f32 %v5971, %v5849
        %v5973 = vadd.f32 %v5972, %v5857
        %v5974 = vadd.f32 %v5973, %v5865
        %v5975 = vadd.f32 %v5974, %v5873
        %v5976 = vrot.slane %v5975, 4
        %v5977 = vadd.f32 %v5975, %v5976
        %v5978 = vrot.slane %v5977, 2
        %v5979 = vadd.f32 %v5977, %v5978
        %v5980 = vrot.slane %v5979, 1
        %v5981 = vadd.f32 %v5979, %v5980
        %v5982 = vadd.f32 %v5754, %v5762
        %v5983 = vadd.f32 %v5982, %v5770
        %v5984 = vadd.f32 %v5983, %v5778
        %v5985 = vadd.f32 %v5984, %v5786
        %v5986 = vadd.f32 %v5985, %v5794
        %v5987 = vadd.f32 %v5986, %v5802
        %v5988 = vadd.f32 %v5987, %v5810
        %v5989 = vadd.f32 %v5988, %v5818
        %v5990 = vadd.f32 %v5989, %v5826
        %v5991 = vadd.f32 %v5990, %v5834
        %v5992 = vadd.f32 %v5991, %v5842
        %v5993 = vadd.f32 %v5992, %v5850
        %v5994 = vadd.f32 %v5993, %v5858
        %v5995 = vadd.f32 %v5994, %v5866
        %v5996 = vadd.f32 %v5995, %v5874
        %v5997 = vrot.slane %v5996, 4
        %v5998 = vadd.f32 %v5996, %v5997
        %v5999 = vrot.slane %v5998, 2
        %v6000 = vadd.f32 %v5998, %v5999
        %v6001 = vrot.slane %v6000, 1
        %v6002 = vadd.f32 %v6000, %v6001
        %v6003 = vadd.f32 %v5755, %v5763
        %v6004 = vadd.f32 %v6003, %v5771
        %v6005 = vadd.f32 %v6004, %v5779
        %v6006 = vadd.f32 %v6005, %v5787
        %v6007 = vadd.f32 %v6006, %v5795
        %v6008 = vadd.f32 %v6007, %v5803
        %v6009 = vadd.f32 %v6008, %v5811
        %v6010 = vadd.f32 %v6009, %v5819
        %v6011 = vadd.f32 %v6010, %v5827
        %v6012 = vadd.f32 %v6011, %v5835
        %v6013 = vadd.f32 %v6012, %v5843
        %v6014 = vadd.f32 %v6013, %v5851
        %v6015 = vadd.f32 %v6014, %v5859
        %v6016 = vadd.f32 %v6015, %v5867
        %v6017 = vadd.f32 %v6016, %v5875
        %v6018 = vrot.slane %v6017, 4
        %v6019 = vadd.f32 %v6017, %v6018
        %v6020 = vrot.slane %v6019, 2
        %v6021 = vadd.f32 %v6019, %v6020
        %v6022 = vrot.slane %v6021, 1
        %v6023 = vadd.f32 %v6021, %v6022
        %v6024 = vadd.f32 %v5756, %v5764
        %v6025 = vadd.f32 %v6024, %v5772
        %v6026 = vadd.f32 %v6025, %v5780
        %v6027 = vadd.f32 %v6026, %v5788
        %v6028 = vadd.f32 %v6027, %v5796
        %v6029 = vadd.f32 %v6028, %v5804
        %v6030 = vadd.f32 %v6029, %v5812
        %v6031 = vadd.f32 %v6030, %v5820
        %v6032 = vadd.f32 %v6031, %v5828
        %v6033 = vadd.f32 %v6032, %v5836
        %v6034 = vadd.f32 %v6033, %v5844
        %v6035 = vadd.f32 %v6034, %v5852
        %v6036 = vadd.f32 %v6035, %v5860
        %v6037 = vadd.f32 %v6036, %v5868
        %v6038 = vadd.f32 %v6037, %v5876
        %v6039 = vrot.slane %v6038, 4
        %v6040 = vadd.f32 %v6038, %v6039
        %v6041 = vrot.slane %v6040, 2
        %v6042 = vadd.f32 %v6040, %v6041
        %v6043 = vrot.slane %v6042, 1
        %v6044 = vadd.f32 %v6042, %v6043
        %v6045 = vmul.f32 %v5897, %v2123
        %v6046 = vmul.f32 %v5918, %v2123
        %v6047 = vmul.f32 %v5939, %v2123
        %v6048 = vmul.f32 %v5960, %v2123
        %v6049 = vmul.f32 %v5981, %v2123
        %v6050 = vmul.f32 %v6002, %v2123
        %v6051 = vmul.f32 %v6023, %v2123
        %v6052 = vmul.f32 %v6044, %v2123
        %v6053 = vmul.f32 %v5741, %v5741
        %v6054 = vmul.f32 %v5742, %v5742
        %v6055 = vmul.f32 %v5743, %v5743
        %v6056 = vmul.f32 %v5744, %v5744
        %v6057 = vmul.f32 %v5745, %v5745
        %v6058 = vmul.f32 %v5746, %v5746
        %v6059 = vmul.f32 %v5747, %v5747
        %v6060 = vmul.f32 %v5748, %v5748
        %v6061 = vsub.f32 %v6045, %v6053
        %v6062 = vsub.f32 %v6046, %v6054
        %v6063 = vsub.f32 %v6047, %v6055
        %v6064 = vsub.f32 %v6048, %v6056
        %v6065 = vsub.f32 %v6049, %v6057
        %v6066 = vsub.f32 %v6050, %v6058
        %v6067 = vsub.f32 %v6051, %v6059
        %v6068 = vsub.f32 %v6052, %v6060
        %v6069 = vsub.f32 %v5191, %v5741
        %v6070 = vsub.f32 %v5240, %v5742
        %v6071 = vsub.f32 %v5289, %v5743
        %v6072 = vsub.f32 %v5338, %v5744
        %v6073 = vsub.f32 %v5387, %v5745
        %v6074 = vsub.f32 %v5436, %v5746
        %v6075 = vsub.f32 %v5485, %v5747
        %v6076 = vsub.f32 %v5534, %v5748
        %v6077 = vsub.f32 %v5193, %v5741
        %v6078 = vsub.f32 %v5242, %v5742
        %v6079 = vsub.f32 %v5291, %v5743
        %v6080 = vsub.f32 %v5340, %v5744
        %v6081 = vsub.f32 %v5389, %v5745
        %v6082 = vsub.f32 %v5438, %v5746
        %v6083 = vsub.f32 %v5487, %v5747
        %v6084 = vsub.f32 %v5536, %v5748
        %v6085 = vsub.f32 %v5196, %v5741
        %v6086 = vsub.f32 %v5245, %v5742
        %v6087 = vsub.f32 %v5294, %v5743
        %v6088 = vsub.f32 %v5343, %v5744
        %v6089 = vsub.f32 %v5392, %v5745
        %v6090 = vsub.f32 %v5441, %v5746
        %v6091 = vsub.f32 %v5490, %v5747
        %v6092 = vsub.f32 %v5539, %v5748
        %v6093 = vsub.f32 %v5198, %v5741
        %v6094 = vsub.f32 %v5247, %v5742
        %v6095 = vsub.f32 %v5296, %v5743
        %v6096 = vsub.f32 %v5345, %v5744
        %v6097 = vsub.f32 %v5394, %v5745
        %v6098 = vsub.f32 %v5443, %v5746
        %v6099 = vsub.f32 %v5492, %v5747
        %v6100 = vsub.f32 %v5541, %v5748
        %v6101 = vsub.f32 %v5201, %v5741
        %v6102 = vsub.f32 %v5250, %v5742
        %v6103 = vsub.f32 %v5299, %v5743
        %v6104 = vsub.f32 %v5348, %v5744
        %v6105 = vsub.f32 %v5397, %v5745
        %v6106 = vsub.f32 %v5446, %v5746
        %v6107 = vsub.f32 %v5495, %v5747
        %v6108 = vsub.f32 %v5544, %v5748
        %v6109 = vsub.f32 %v5203, %v5741
        %v6110 = vsub.f32 %v5252, %v5742
        %v6111 = vsub.f32 %v5301, %v5743
        %v6112 = vsub.f32 %v5350, %v5744
        %v6113 = vsub.f32 %v5399, %v5745
        %v6114 = vsub.f32 %v5448, %v5746
        %v6115 = vsub.f32 %v5497, %v5747
        %v6116 = vsub.f32 %v5546, %v5748
        %v6117 = vsub.f32 %v5206, %v5741
        %v6118 = vsub.f32 %v5255, %v5742
        %v6119 = vsub.f32 %v5304, %v5743
        %v6120 = vsub.f32 %v5353, %v5744
        %v6121 = vsub.f32 %v5402, %v5745
        %v6122 = vsub.f32 %v5451, %v5746
        %v6123 = vsub.f32 %v5500, %v5747
        %v6124 = vsub.f32 %v5549, %v5748
        %v6125 = vsub.f32 %v5208, %v5741
        %v6126 = vsub.f32 %v5257, %v5742
        %v6127 = vsub.f32 %v5306, %v5743
        %v6128 = vsub.f32 %v5355, %v5744
        %v6129 = vsub.f32 %v5404, %v5745
        %v6130 = vsub.f32 %v5453, %v5746
        %v6131 = vsub.f32 %v5502, %v5747
        %v6132 = vsub.f32 %v5551, %v5748
        %v6133 = vsub.f32 %v5211, %v5741
        %v6134 = vsub.f32 %v5260, %v5742
        %v6135 = vsub.f32 %v5309, %v5743
        %v6136 = vsub.f32 %v5358, %v5744
        %v6137 = vsub.f32 %v5407, %v5745
        %v6138 = vsub.f32 %v5456, %v5746
        %v6139 = vsub.f32 %v5505, %v5747
        %v6140 = vsub.f32 %v5554, %v5748
        %v6141 = vsub.f32 %v5213, %v5741
        %v6142 = vsub.f32 %v5262, %v5742
        %v6143 = vsub.f32 %v5311, %v5743
        %v6144 = vsub.f32 %v5360, %v5744
        %v6145 = vsub.f32 %v5409, %v5745
        %v6146 = vsub.f32 %v5458, %v5746
        %v6147 = vsub.f32 %v5507, %v5747
        %v6148 = vsub.f32 %v5556, %v5748
        %v6149 = vsub.f32 %v5216, %v5741
        %v6150 = vsub.f32 %v5265, %v5742
        %v6151 = vsub.f32 %v5314, %v5743
        %v6152 = vsub.f32 %v5363, %v5744
        %v6153 = vsub.f32 %v5412, %v5745
        %v6154 = vsub.f32 %v5461, %v5746
        %v6155 = vsub.f32 %v5510, %v5747
        %v6156 = vsub.f32 %v5559, %v5748
        %v6157 = vsub.f32 %v5218, %v5741
        %v6158 = vsub.f32 %v5267, %v5742
        %v6159 = vsub.f32 %v5316, %v5743
        %v6160 = vsub.f32 %v5365, %v5744
        %v6161 = vsub.f32 %v5414, %v5745
        %v6162 = vsub.f32 %v5463, %v5746
        %v6163 = vsub.f32 %v5512, %v5747
        %v6164 = vsub.f32 %v5561, %v5748
        %v6165 = vsub.f32 %v5221, %v5741
        %v6166 = vsub.f32 %v5270, %v5742
        %v6167 = vsub.f32 %v5319, %v5743
        %v6168 = vsub.f32 %v5368, %v5744
        %v6169 = vsub.f32 %v5417, %v5745
        %v6170 = vsub.f32 %v5466, %v5746
        %v6171 = vsub.f32 %v5515, %v5747
        %v6172 = vsub.f32 %v5564, %v5748
        %v6173 = vsub.f32 %v5223, %v5741
        %v6174 = vsub.f32 %v5272, %v5742
        %v6175 = vsub.f32 %v5321, %v5743
        %v6176 = vsub.f32 %v5370, %v5744
        %v6177 = vsub.f32 %v5419, %v5745
        %v6178 = vsub.f32 %v5468, %v5746
        %v6179 = vsub.f32 %v5517, %v5747
        %v6180 = vsub.f32 %v5566, %v5748
        %v6181 = vsub.f32 %v5226, %v5741
        %v6182 = vsub.f32 %v5275, %v5742
        %v6183 = vsub.f32 %v5324, %v5743
        %v6184 = vsub.f32 %v5373, %v5744
        %v6185 = vsub.f32 %v5422, %v5745
        %v6186 = vsub.f32 %v5471, %v5746
        %v6187 = vsub.f32 %v5520, %v5747
        %v6188 = vsub.f32 %v5569, %v5748
        %v6189 = vsub.f32 %v5228, %v5741
        %v6190 = vsub.f32 %v5277, %v5742
        %v6191 = vsub.f32 %v5326, %v5743
        %v6192 = vsub.f32 %v5375, %v5744
        %v6193 = vsub.f32 %v5424, %v5745
        %v6194 = vsub.f32 %v5473, %v5746
        %v6195 = vsub.f32 %v5522, %v5747
        %v6196 = vsub.f32 %v5571, %v5748
        %v6197 = vadd.f32 %v6061, 1e-05
        %v6198 = vadd.f32 %v6062, 1e-05
        %v6199 = vadd.f32 %v6063, 1e-05
        %v6200 = vadd.f32 %v6064, 1e-05
        %v6201 = vadd.f32 %v6065, 1e-05
        %v6202 = vadd.f32 %v6066, 1e-05
        %v6203 = vadd.f32 %v6067, 1e-05
        %v6204 = vadd.f32 %v6068, 1e-05
        %v6205 = vrsqrt.pop %v6197
        %v6206 = vmul.f32 %v6205, %v6197
        %v6207 = vmul.f32 %v6206, %v6205
        %v6208 = vmul.f32 0.5, %v6207
        %v6209 = vsub.f32 1.5, %v6208
        %v6210 = vmul.f32 %v6205, %v6209
        %vm6211 = vweird.f32 %v6197
        %vm6212 = vweird.f32 %v6205
        %vm6213 = vmor %vm6211, %vm6212
        %v6214 = vsel %vm6213, %v6205, %v6210
        %v6215 = vrsqrt.pop %v6198
        %v6216 = vmul.f32 %v6215, %v6198
        %v6217 = vmul.f32 %v6216, %v6215
        %v6218 = vmul.f32 0.5, %v6217
        %v6219 = vsub.f32 1.5, %v6218
        %v6220 = vmul.f32 %v6215, %v6219
        %vm6221 = vweird.f32 %v6198
        %vm6222 = vweird.f32 %v6215
        %vm6223 = vmor %vm6221, %vm6222
        %v6224 = vsel %vm6223, %v6215, %v6220
        %v6225 = vrsqrt.pop %v6199
        %v6226 = vmul.f32 %v6225, %v6199
        %v6227 = vmul.f32 %v6226, %v6225
        %v6228 = vmul.f32 0.5, %v6227
        %v6229 = vsub.f32 1.5, %v6228
        %v6230 = vmul.f32 %v6225, %v6229
        %vm6231 = vweird.f32 %v6199
        %vm6232 = vweird.f32 %v6225
        %vm6233 = vmor %vm6231, %vm6232
        %v6234 = vsel %vm6233, %v6225, %v6230
        %v6235 = vrsqrt.pop %v6200
        %v6236 = vmul.f32 %v6235, %v6200
        %v6237 = vmul.f32 %v6236, %v6235
        %v6238 = vmul.f32 0.5, %v6237
        %v6239 = vsub.f32 1.5, %v6238
        %v6240 = vmul.f32 %v6235, %v6239
        %vm6241 = vweird.f32 %v6200
        %vm6242 = vweird.f32 %v6235
        %vm6243 = vmor %vm6241, %vm6242
        %v6244 = vsel %vm6243, %v6235, %v6240
        %v6245 = vrsqrt.pop %v6201
        %v6246 = vmul.f32 %v6245, %v6201
        %v6247 = vmul.f32 %v6246, %v6245
        %v6248 = vmul.f32 0.5, %v6247
        %v6249 = vsub.f32 1.5, %v6248
        %v6250 = vmul.f32 %v6245, %v6249
        %vm6251 = vweird.f32 %v6201
        %vm6252 = vweird.f32 %v6245
        %vm6253 = vmor %vm6251, %vm6252
        %v6254 = vsel %vm6253, %v6245, %v6250
        %v6255 = vrsqrt.pop %v6202
        %v6256 = vmul.f32 %v6255, %v6202
        %v6257 = vmul.f32 %v6256, %v6255
        %v6258 = vmul.f32 0.5, %v6257
        %v6259 = vsub.f32 1.5, %v6258
        %v6260 = vmul.f32 %v6255, %v6259
        %vm6261 = vweird.f32 %v6202
        %vm6262 = vweird.f32 %v6255
        %vm6263 = vmor %vm6261, %vm6262
        %v6264 = vsel %vm6263, %v6255, %v6260
        %v6265 = vrsqrt.pop %v6203
        %v6266 = vmul.f32 %v6265, %v6203
        %v6267 = vmul.f32 %v6266, %v6265
        %v6268 = vmul.f32 0.5, %v6267
        %v6269 = vsub.f32 1.5, %v6268
        %v6270 = vmul.f32 %v6265, %v6269
        %vm6271 = vweird.f32 %v6203
        %vm6272 = vweird.f32 %v6265
        %vm6273 = vmor %vm6271, %vm6272
        %v6274 = vsel %vm6273, %v6265, %v6270
        %v6275 = vrsqrt.pop %v6204
        %v6276 = vmul.f32 %v6275, %v6204
        %v6277 = vmul.f32 %v6276, %v6275
        %v6278 = vmul.f32 0.5, %v6277
        %v6279 = vsub.f32 1.5, %v6278
        %v6280 = vmul.f32 %v6275, %v6279
        %vm6281 = vweird.f32 %v6204
        %vm6282 = vweird.f32 %v6275
        %vm6283 = vmor %vm6281, %vm6282
        %v6284 = vsel %vm6283, %v6275, %v6280
        %v6285 = vmul.f32 %v6069, %v6214
        %v6286 = vmul.f32 %v6070, %v6224
        %v6287 = vmul.f32 %v6071, %v6234
        %v6288 = vmul.f32 %v6072, %v6244
        %v6289 = vmul.f32 %v6073, %v6254
        %v6290 = vmul.f32 %v6074, %v6264
        %v6291 = vmul.f32 %v6075, %v6274
        %v6292 = vmul.f32 %v6076, %v6284
        %v6293 = vmul.f32 %v6077, %v6214
        %v6294 = vmul.f32 %v6078, %v6224
        %v6295 = vmul.f32 %v6079, %v6234
        %v6296 = vmul.f32 %v6080, %v6244
        %v6297 = vmul.f32 %v6081, %v6254
        %v6298 = vmul.f32 %v6082, %v6264
        %v6299 = vmul.f32 %v6083, %v6274
        %v6300 = vmul.f32 %v6084, %v6284
        %v6301 = vmul.f32 %v6085, %v6214
        %v6302 = vmul.f32 %v6086, %v6224
        %v6303 = vmul.f32 %v6087, %v6234
        %v6304 = vmul.f32 %v6088, %v6244
        %v6305 = vmul.f32 %v6089, %v6254
        %v6306 = vmul.f32 %v6090, %v6264
        %v6307 = vmul.f32 %v6091, %v6274
        %v6308 = vmul.f32 %v6092, %v6284
        %v6309 = vmul.f32 %v6093, %v6214
        %v6310 = vmul.f32 %v6094, %v6224
        %v6311 = vmul.f32 %v6095, %v6234
        %v6312 = vmul.f32 %v6096, %v6244
        %v6313 = vmul.f32 %v6097, %v6254
        %v6314 = vmul.f32 %v6098, %v6264
        %v6315 = vmul.f32 %v6099, %v6274
        %v6316 = vmul.f32 %v6100, %v6284
        %v6317 = vmul.f32 %v6101, %v6214
        %v6318 = vmul.f32 %v6102, %v6224
        %v6319 = vmul.f32 %v6103, %v6234
        %v6320 = vmul.f32 %v6104, %v6244
        %v6321 = vmul.f32 %v6105, %v6254
        %v6322 = vmul.f32 %v6106, %v6264
        %v6323 = vmul.f32 %v6107, %v6274
        %v6324 = vmul.f32 %v6108, %v6284
        %v6325 = vmul.f32 %v6109, %v6214
        %v6326 = vmul.f32 %v6110, %v6224
        %v6327 = vmul.f32 %v6111, %v6234
        %v6328 = vmul.f32 %v6112, %v6244
        %v6329 = vmul.f32 %v6113, %v6254
        %v6330 = vmul.f32 %v6114, %v6264
        %v6331 = vmul.f32 %v6115, %v6274
        %v6332 = vmul.f32 %v6116, %v6284
        %v6333 = vmul.f32 %v6117, %v6214
        %v6334 = vmul.f32 %v6118, %v6224
        %v6335 = vmul.f32 %v6119, %v6234
        %v6336 = vmul.f32 %v6120, %v6244
        %v6337 = vmul.f32 %v6121, %v6254
        %v6338 = vmul.f32 %v6122, %v6264
        %v6339 = vmul.f32 %v6123, %v6274
        %v6340 = vmul.f32 %v6124, %v6284
        %v6341 = vmul.f32 %v6125, %v6214
        %v6342 = vmul.f32 %v6126, %v6224
        %v6343 = vmul.f32 %v6127, %v6234
        %v6344 = vmul.f32 %v6128, %v6244
        %v6345 = vmul.f32 %v6129, %v6254
        %v6346 = vmul.f32 %v6130, %v6264
        %v6347 = vmul.f32 %v6131, %v6274
        %v6348 = vmul.f32 %v6132, %v6284
        %v6349 = vmul.f32 %v6133, %v6214
        %v6350 = vmul.f32 %v6134, %v6224
        %v6351 = vmul.f32 %v6135, %v6234
        %v6352 = vmul.f32 %v6136, %v6244
        %v6353 = vmul.f32 %v6137, %v6254
        %v6354 = vmul.f32 %v6138, %v6264
        %v6355 = vmul.f32 %v6139, %v6274
        %v6356 = vmul.f32 %v6140, %v6284
        %v6357 = vmul.f32 %v6141, %v6214
        %v6358 = vmul.f32 %v6142, %v6224
        %v6359 = vmul.f32 %v6143, %v6234
        %v6360 = vmul.f32 %v6144, %v6244
        %v6361 = vmul.f32 %v6145, %v6254
        %v6362 = vmul.f32 %v6146, %v6264
        %v6363 = vmul.f32 %v6147, %v6274
        %v6364 = vmul.f32 %v6148, %v6284
        %v6365 = vmul.f32 %v6149, %v6214
        %v6366 = vmul.f32 %v6150, %v6224
        %v6367 = vmul.f32 %v6151, %v6234
        %v6368 = vmul.f32 %v6152, %v6244
        %v6369 = vmul.f32 %v6153, %v6254
        %v6370 = vmul.f32 %v6154, %v6264
        %v6371 = vmul.f32 %v6155, %v6274
        %v6372 = vmul.f32 %v6156, %v6284
        %v6373 = vmul.f32 %v6157, %v6214
        %v6374 = vmul.f32 %v6158, %v6224
        %v6375 = vmul.f32 %v6159, %v6234
        %v6376 = vmul.f32 %v6160, %v6244
        %v6377 = vmul.f32 %v6161, %v6254
        %v6378 = vmul.f32 %v6162, %v6264
        %v6379 = vmul.f32 %v6163, %v6274
        %v6380 = vmul.f32 %v6164, %v6284
        %v6381 = vmul.f32 %v6165, %v6214
        %v6382 = vmul.f32 %v6166, %v6224
        %v6383 = vmul.f32 %v6167, %v6234
        %v6384 = vmul.f32 %v6168, %v6244
        %v6385 = vmul.f32 %v6169, %v6254
        %v6386 = vmul.f32 %v6170, %v6264
        %v6387 = vmul.f32 %v6171, %v6274
        %v6388 = vmul.f32 %v6172, %v6284
        %v6389 = vmul.f32 %v6173, %v6214
        %v6390 = vmul.f32 %v6174, %v6224
        %v6391 = vmul.f32 %v6175, %v6234
        %v6392 = vmul.f32 %v6176, %v6244
        %v6393 = vmul.f32 %v6177, %v6254
        %v6394 = vmul.f32 %v6178, %v6264
        %v6395 = vmul.f32 %v6179, %v6274
        %v6396 = vmul.f32 %v6180, %v6284
        %v6397 = vmul.f32 %v6181, %v6214
        %v6398 = vmul.f32 %v6182, %v6224
        %v6399 = vmul.f32 %v6183, %v6234
        %v6400 = vmul.f32 %v6184, %v6244
        %v6401 = vmul.f32 %v6185, %v6254
        %v6402 = vmul.f32 %v6186, %v6264
        %v6403 = vmul.f32 %v6187, %v6274
        %v6404 = vmul.f32 %v6188, %v6284
        %v6405 = vmul.f32 %v6189, %v6214
        %v6406 = vmul.f32 %v6190, %v6224
        %v6407 = vmul.f32 %v6191, %v6234
        %v6408 = vmul.f32 %v6192, %v6244
        %v6409 = vmul.f32 %v6193, %v6254
        %v6410 = vmul.f32 %v6194, %v6264
        %v6411 = vmul.f32 %v6195, %v6274
        %v6412 = vmul.f32 %v6196, %v6284
        %6413 = vset.pattern.permute.xlu0 5
        %6414 = vperm.xlu0 %6413, %v1157
        %v6415 = vpop.permute.xlu0 %6414
        %6417 = vset.pattern.permute.xlu0 5
        %6418 = vperm.xlu0 %6417, %v1158
        %v6419 = vpop.permute.xlu0 %6418
        %6421 = vset.pattern.permute.xlu0 5
        %6422 = vperm.xlu0 %6421, %v1159
        %v6423 = vpop.permute.xlu0 %6422
        %6425 = vset.pattern.permute.xlu0 5
        %6426 = vperm.xlu0 %6425, %v1160
        %v6427 = vpop.permute.xlu0 %6426
        %6429 = vset.pattern.permute.xlu0 5
        %6430 = vperm.xlu0 %6429, %v1161
        %v6431 = vpop.permute.xlu0 %6430
        %6433 = vset.pattern.permute.xlu0 5
        %6434 = vperm.xlu0 %6433, %v1162
        %v6435 = vpop.permute.xlu0 %6434
        %6437 = vset.pattern.permute.xlu0 5
        %6438 = vperm.xlu0 %6437, %v1163
        %v6439 = vpop.permute.xlu0 %6438
        %6441 = vset.pattern.permute.xlu0 5
        %6442 = vperm.xlu0 %6441, %v1164
        %v6443 = vpop.permute.xlu0 %6442
        %6445 = vset.pattern.permute.xlu0 5
        %6446 = vperm.xlu0 %6445, %v1165
        %v6447 = vpop.permute.xlu0 %6446
        %6449 = vset.pattern.permute.xlu0 5
        %6450 = vperm.xlu0 %6449, %v1166
        %v6451 = vpop.permute.xlu0 %6450
        %6453 = vset.pattern.permute.xlu0 5
        %6454 = vperm.xlu0 %6453, %v1167
        %v6455 = vpop.permute.xlu0 %6454
        %6457 = vset.pattern.permute.xlu0 5
        %6458 = vperm.xlu0 %6457, %v1168
        %v6459 = vpop.permute.xlu0 %6458
        %6461 = vset.pattern.permute.xlu0 5
        %6462 = vperm.xlu0 %6461, %v1169
        %v6463 = vpop.permute.xlu0 %6462
        %6465 = vset.pattern.permute.xlu0 5
        %6466 = vperm.xlu0 %6465, %v1170
        %v6467 = vpop.permute.xlu0 %6466
        %6469 = vset.pattern.permute.xlu0 5
        %6470 = vperm.xlu0 %6469, %v1171
        %v6471 = vpop.permute.xlu0 %6470
        %6473 = vset.pattern.permute.xlu0 5
        %6474 = vperm.xlu0 %6473, %v1172
        %v6475 = vpop.permute.xlu0 %6474
        %v6477 = vmul.f32 %v6285, %v6415
        %v6478 = vmul.f32 %v6286, %v6415
        %v6479 = vmul.f32 %v6287, %v6415
        %v6480 = vmul.f32 %v6288, %v6415
        %v6481 = vmul.f32 %v6289, %v6415
        %v6482 = vmul.f32 %v6290, %v6415
        %v6483 = vmul.f32 %v6291, %v6415
        %v6484 = vmul.f32 %v6292, %v6415
        %v6485 = vmul.f32 %v6293, %v6419
        %v6486 = vmul.f32 %v6294, %v6419
        %v6487 = vmul.f32 %v6295, %v6419
        %v6488 = vmul.f32 %v6296, %v6419
        %v6489 = vmul.f32 %v6297, %v6419
        %v6490 = vmul.f32 %v6298, %v6419
        %v6491 = vmul.f32 %v6299, %v6419
        %v6492 = vmul.f32 %v6300, %v6419
        %v6493 = vmul.f32 %v6301, %v6423
        %v6494 = vmul.f32 %v6302, %v6423
        %v6495 = vmul.f32 %v6303, %v6423
        %v6496 = vmul.f32 %v6304, %v6423
        %v6497 = vmul.f32 %v6305, %v6423
        %v6498 = vmul.f32 %v6306, %v6423
        %v6499 = vmul.f32 %v6307, %v6423
        %v6500 = vmul.f32 %v6308, %v6423
        %v6501 = vmul.f32 %v6309, %v6427
        %v6502 = vmul.f32 %v6310, %v6427
        %v6503 = vmul.f32 %v6311, %v6427
        %v6504 = vmul.f32 %v6312, %v6427
        %v6505 = vmul.f32 %v6313, %v6427
        %v6506 = vmul.f32 %v6314, %v6427
        %v6507 = vmul.f32 %v6315, %v6427
        %v6508 = vmul.f32 %v6316, %v6427
        %v6509 = vmul.f32 %v6317, %v6431
        %v6510 = vmul.f32 %v6318, %v6431
        %v6511 = vmul.f32 %v6319, %v6431
        %v6512 = vmul.f32 %v6320, %v6431
        %v6513 = vmul.f32 %v6321, %v6431
        %v6514 = vmul.f32 %v6322, %v6431
        %v6515 = vmul.f32 %v6323, %v6431
        %v6516 = vmul.f32 %v6324, %v6431
        %v6517 = vmul.f32 %v6325, %v6435
        %v6518 = vmul.f32 %v6326, %v6435
        %v6519 = vmul.f32 %v6327, %v6435
        %v6520 = vmul.f32 %v6328, %v6435
        %v6521 = vmul.f32 %v6329, %v6435
        %v6522 = vmul.f32 %v6330, %v6435
        %v6523 = vmul.f32 %v6331, %v6435
        %v6524 = vmul.f32 %v6332, %v6435
        %v6525 = vmul.f32 %v6333, %v6439
        %v6526 = vmul.f32 %v6334, %v6439
        %v6527 = vmul.f32 %v6335, %v6439
        %v6528 = vmul.f32 %v6336, %v6439
        %v6529 = vmul.f32 %v6337, %v6439
        %v6530 = vmul.f32 %v6338, %v6439
        %v6531 = vmul.f32 %v6339, %v6439
        %v6532 = vmul.f32 %v6340, %v6439
        %v6533 = vmul.f32 %v6341, %v6443
        %v6534 = vmul.f32 %v6342, %v6443
        %v6535 = vmul.f32 %v6343, %v6443
        %v6536 = vmul.f32 %v6344, %v6443
        %v6537 = vmul.f32 %v6345, %v6443
        %v6538 = vmul.f32 %v6346, %v6443
        %v6539 = vmul.f32 %v6347, %v6443
        %v6540 = vmul.f32 %v6348, %v6443
        %v6541 = vmul.f32 %v6349, %v6447
        %v6542 = vmul.f32 %v6350, %v6447
        %v6543 = vmul.f32 %v6351, %v6447
        %v6544 = vmul.f32 %v6352, %v6447
        %v6545 = vmul.f32 %v6353, %v6447
        %v6546 = vmul.f32 %v6354, %v6447
        %v6547 = vmul.f32 %v6355, %v6447
        %v6548 = vmul.f32 %v6356, %v6447
        %v6549 = vmul.f32 %v6357, %v6451
        %v6550 = vmul.f32 %v6358, %v6451
        %v6551 = vmul.f32 %v6359, %v6451
        %v6552 = vmul.f32 %v6360, %v6451
        %v6553 = vmul.f32 %v6361, %v6451
        %v6554 = vmul.f32 %v6362, %v6451
        %v6555 = vmul.f32 %v6363, %v6451
        %v6556 = vmul.f32 %v6364, %v6451
        %v6557 = vmul.f32 %v6365, %v6455
        %v6558 = vmul.f32 %v6366, %v6455
        %v6559 = vmul.f32 %v6367, %v6455
        %v6560 = vmul.f32 %v6368, %v6455
        %v6561 = vmul.f32 %v6369, %v6455
        %v6562 = vmul.f32 %v6370, %v6455
        %v6563 = vmul.f32 %v6371, %v6455
        %v6564 = vmul.f32 %v6372, %v6455
        %v6565 = vmul.f32 %v6373, %v6459
        %v6566 = vmul.f32 %v6374, %v6459
        %v6567 = vmul.f32 %v6375, %v6459
        %v6568 = vmul.f32 %v6376, %v6459
        %v6569 = vmul.f32 %v6377, %v6459
        %v6570 = vmul.f32 %v6378, %v6459
        %v6571 = vmul.f32 %v6379, %v6459
        %v6572 = vmul.f32 %v6380, %v6459
        %v6573 = vmul.f32 %v6381, %v6463
        %v6574 = vmul.f32 %v6382, %v6463
        %v6575 = vmul.f32 %v6383, %v6463
        %v6576 = vmul.f32 %v6384, %v6463
        %v6577 = vmul.f32 %v6385, %v6463
        %v6578 = vmul.f32 %v6386, %v6463
        %v6579 = vmul.f32 %v6387, %v6463
        %v6580 = vmul.f32 %v6388, %v6463
        %v6581 = vmul.f32 %v6389, %v6467
        %v6582 = vmul.f32 %v6390, %v6467
        %v6583 = vmul.f32 %v6391, %v6467
        %v6584 = vmul.f32 %v6392, %v6467
        %v6585 = vmul.f32 %v6393, %v6467
        %v6586 = vmul.f32 %v6394, %v6467
        %v6587 = vmul.f32 %v6395, %v6467
        %v6588 = vmul.f32 %v6396, %v6467
        %v6589 = vmul.f32 %v6397, %v6471
        %v6590 = vmul.f32 %v6398, %v6471
        %v6591 = vmul.f32 %v6399, %v6471
        %v6592 = vmul.f32 %v6400, %v6471
        %v6593 = vmul.f32 %v6401, %v6471
        %v6594 = vmul.f32 %v6402, %v6471
        %v6595 = vmul.f32 %v6403, %v6471
        %v6596 = vmul.f32 %v6404, %v6471
        %v6597 = vmul.f32 %v6405, %v6475
        %v6598 = vmul.f32 %v6406, %v6475
        %v6599 = vmul.f32 %v6407, %v6475
        %v6600 = vmul.f32 %v6408, %v6475
        %v6601 = vmul.f32 %v6409, %v6475
        %v6602 = vmul.f32 %v6410, %v6475
        %v6603 = vmul.f32 %v6411, %v6475
        %v6604 = vmul.f32 %v6412, %v6475
        %6605 = vset.pattern.permute.xlu0 6
        %6606 = vperm.xlu0 %6605, %v1157
        %v6607 = vpop.permute.xlu0 %6606
        %6609 = vset.pattern.permute.xlu0 6
        %6610 = vperm.xlu0 %6609, %v1158
        %v6611 = vpop.permute.xlu0 %6610
        %6613 = vset.pattern.permute.xlu0 6
        %6614 = vperm.xlu0 %6613, %v1159
        %v6615 = vpop.permute.xlu0 %6614
        %6617 = vset.pattern.permute.xlu0 6
        %6618 = vperm.xlu0 %6617, %v1160
        %v6619 = vpop.permute.xlu0 %6618
        %6621 = vset.pattern.permute.xlu0 6
        %6622 = vperm.xlu0 %6621, %v1161
        %v6623 = vpop.permute.xlu0 %6622
        %6625 = vset.pattern.permute.xlu0 6
        %6626 = vperm.xlu0 %6625, %v1162
        %v6627 = vpop.permute.xlu0 %6626
        %6629 = vset.pattern.permute.xlu0 6
        %6630 = vperm.xlu0 %6629, %v1163
        %v6631 = vpop.permute.xlu0 %6630
        %6633 = vset.pattern.permute.xlu0 6
        %6634 = vperm.xlu0 %6633, %v1164
        %v6635 = vpop.permute.xlu0 %6634
        %6637 = vset.pattern.permute.xlu0 6
        %6638 = vperm.xlu0 %6637, %v1165
        %v6639 = vpop.permute.xlu0 %6638
        %6641 = vset.pattern.permute.xlu0 6
        %6642 = vperm.xlu0 %6641, %v1166
        %v6643 = vpop.permute.xlu0 %6642
        %6645 = vset.pattern.permute.xlu0 6
        %6646 = vperm.xlu0 %6645, %v1167
        %v6647 = vpop.permute.xlu0 %6646
        %6649 = vset.pattern.permute.xlu0 6
        %6650 = vperm.xlu0 %6649, %v1168
        %v6651 = vpop.permute.xlu0 %6650
        %6653 = vset.pattern.permute.xlu0 6
        %6654 = vperm.xlu0 %6653, %v1169
        %v6655 = vpop.permute.xlu0 %6654
        %6657 = vset.pattern.permute.xlu0 6
        %6658 = vperm.xlu0 %6657, %v1170
        %v6659 = vpop.permute.xlu0 %6658
        %6661 = vset.pattern.permute.xlu0 6
        %6662 = vperm.xlu0 %6661, %v1171
        %v6663 = vpop.permute.xlu0 %6662
        %6665 = vset.pattern.permute.xlu0 6
        %6666 = vperm.xlu0 %6665, %v1172
        %v6667 = vpop.permute.xlu0 %6666
        %v6669 = vadd.f32 %v6477, %v6607
        %v6670 = vadd.f32 %v6478, %v6607
        %v6671 = vadd.f32 %v6479, %v6607
        %v6672 = vadd.f32 %v6480, %v6607
        %v6673 = vadd.f32 %v6481, %v6607
        %v6674 = vadd.f32 %v6482, %v6607
        %v6675 = vadd.f32 %v6483, %v6607
        %v6676 = vadd.f32 %v6484, %v6607
        %v6677 = vadd.f32 %v6485, %v6611
        %v6678 = vadd.f32 %v6486, %v6611
        %v6679 = vadd.f32 %v6487, %v6611
        %v6680 = vadd.f32 %v6488, %v6611
        %v6681 = vadd.f32 %v6489, %v6611
        %v6682 = vadd.f32 %v6490, %v6611
        %v6683 = vadd.f32 %v6491, %v6611
        %v6684 = vadd.f32 %v6492, %v6611
        %v6685 = vadd.f32 %v6493, %v6615
        %v6686 = vadd.f32 %v6494, %v6615
        %v6687 = vadd.f32 %v6495, %v6615
        %v6688 = vadd.f32 %v6496, %v6615
        %v6689 = vadd.f32 %v6497, %v6615
        %v6690 = vadd.f32 %v6498, %v6615
        %v6691 = vadd.f32 %v6499, %v6615
        %v6692 = vadd.f32 %v6500, %v6615
        %v6693 = vadd.f32 %v6501, %v6619
        %v6694 = vadd.f32 %v6502, %v6619
        %v6695 = vadd.f32 %v6503, %v6619
        %v6696 = vadd.f32 %v6504, %v6619
        %v6697 = vadd.f32 %v6505, %v6619
        %v6698 = vadd.f32 %v6506, %v6619
        %v6699 = vadd.f32 %v6507, %v6619
        %v6700 = vadd.f32 %v6508, %v6619
        %v6701 = vadd.f32 %v6509, %v6623
        %v6702 = vadd.f32 %v6510, %v6623
        %v6703 = vadd.f32 %v6511, %v6623
        %v6704 = vadd.f32 %v6512, %v6623
        %v6705 = vadd.f32 %v6513, %v6623
        %v6706 = vadd.f32 %v6514, %v6623
        %v6707 = vadd.f32 %v6515, %v6623
        %v6708 = vadd.f32 %v6516, %v6623
        %v6709 = vadd.f32 %v6517, %v6627
        %v6710 = vadd.f32 %v6518, %v6627
        %v6711 = vadd.f32 %v6519, %v6627
        %v6712 = vadd.f32 %v6520, %v6627
        %v6713 = vadd.f32 %v6521, %v6627
        %v6714 = vadd.f32 %v6522, %v6627
        %v6715 = vadd.f32 %v6523, %v6627
        %v6716 = vadd.f32 %v6524, %v6627
        %v6717 = vadd.f32 %v6525, %v6631
        %v6718 = vadd.f32 %v6526, %v6631
        %v6719 = vadd.f32 %v6527, %v6631
        %v6720 = vadd.f32 %v6528, %v6631
        %v6721 = vadd.f32 %v6529, %v6631
        %v6722 = vadd.f32 %v6530, %v6631
        %v6723 = vadd.f32 %v6531, %v6631
        %v6724 = vadd.f32 %v6532, %v6631
        %v6725 = vadd.f32 %v6533, %v6635
        %v6726 = vadd.f32 %v6534, %v6635
        %v6727 = vadd.f32 %v6535, %v6635
        %v6728 = vadd.f32 %v6536, %v6635
        %v6729 = vadd.f32 %v6537, %v6635
        %v6730 = vadd.f32 %v6538, %v6635
        %v6731 = vadd.f32 %v6539, %v6635
        %v6732 = vadd.f32 %v6540, %v6635
        %v6733 = vadd.f32 %v6541, %v6639
        %v6734 = vadd.f32 %v6542, %v6639
        %v6735 = vadd.f32 %v6543, %v6639
        %v6736 = vadd.f32 %v6544, %v6639
        %v6737 = vadd.f32 %v6545, %v6639
        %v6738 = vadd.f32 %v6546, %v6639
        %v6739 = vadd.f32 %v6547, %v6639
        %v6740 = vadd.f32 %v6548, %v6639
        %v6741 = vadd.f32 %v6549, %v6643
        %v6742 = vadd.f32 %v6550, %v6643
        %v6743 = vadd.f32 %v6551, %v6643
        %v6744 = vadd.f32 %v6552, %v6643
        %v6745 = vadd.f32 %v6553, %v6643
        %v6746 = vadd.f32 %v6554, %v6643
        %v6747 = vadd.f32 %v6555, %v6643
        %v6748 = vadd.f32 %v6556, %v6643
        %v6749 = vadd.f32 %v6557, %v6647
        %v6750 = vadd.f32 %v6558, %v6647
        %v6751 = vadd.f32 %v6559, %v6647
        %v6752 = vadd.f32 %v6560, %v6647
        %v6753 = vadd.f32 %v6561, %v6647
        %v6754 = vadd.f32 %v6562, %v6647
        %v6755 = vadd.f32 %v6563, %v6647
        %v6756 = vadd.f32 %v6564, %v6647
        %v6757 = vadd.f32 %v6565, %v6651
        %v6758 = vadd.f32 %v6566, %v6651
        %v6759 = vadd.f32 %v6567, %v6651
        %v6760 = vadd.f32 %v6568, %v6651
        %v6761 = vadd.f32 %v6569, %v6651
        %v6762 = vadd.f32 %v6570, %v6651
        %v6763 = vadd.f32 %v6571, %v6651
        %v6764 = vadd.f32 %v6572, %v6651
        %v6765 = vadd.f32 %v6573, %v6655
        %v6766 = vadd.f32 %v6574, %v6655
        %v6767 = vadd.f32 %v6575, %v6655
        %v6768 = vadd.f32 %v6576, %v6655
        %v6769 = vadd.f32 %v6577, %v6655
        %v6770 = vadd.f32 %v6578, %v6655
        %v6771 = vadd.f32 %v6579, %v6655
        %v6772 = vadd.f32 %v6580, %v6655
        %v6773 = vadd.f32 %v6581, %v6659
        %v6774 = vadd.f32 %v6582, %v6659
        %v6775 = vadd.f32 %v6583, %v6659
        %v6776 = vadd.f32 %v6584, %v6659
        %v6777 = vadd.f32 %v6585, %v6659
        %v6778 = vadd.f32 %v6586, %v6659
        %v6779 = vadd.f32 %v6587, %v6659
        %v6780 = vadd.f32 %v6588, %v6659
        %v6781 = vadd.f32 %v6589, %v6663
        %v6782 = vadd.f32 %v6590, %v6663
        %v6783 = vadd.f32 %v6591, %v6663
        %v6784 = vadd.f32 %v6592, %v6663
        %v6785 = vadd.f32 %v6593, %v6663
        %v6786 = vadd.f32 %v6594, %v6663
        %v6787 = vadd.f32 %v6595, %v6663
        %v6788 = vadd.f32 %v6596, %v6663
        %v6789 = vadd.f32 %v6597, %v6667
        %v6790 = vadd.f32 %v6598, %v6667
        %v6791 = vadd.f32 %v6599, %v6667
        %v6792 = vadd.f32 %v6600, %v6667
        %v6793 = vadd.f32 %v6601, %v6667
        %v6794 = vadd.f32 %v6602, %v6667
        %v6795 = vadd.f32 %v6603, %v6667
        %v6796 = vadd.f32 %v6604, %v6667
        %v6797 = vmax.f32 %v6669, 0.0
        %v6798 = vmax.f32 %v6670, 0.0
        %v6799 = vmax.f32 %v6671, 0.0
        %v6800 = vmax.f32 %v6672, 0.0
        %v6801 = vmax.f32 %v6673, 0.0
        %v6802 = vmax.f32 %v6674, 0.0
        %v6803 = vmax.f32 %v6675, 0.0
        %v6804 = vmax.f32 %v6676, 0.0
        %v6805 = vmax.f32 %v6677, 0.0
        %v6806 = vmax.f32 %v6678, 0.0
        %v6807 = vmax.f32 %v6679, 0.0
        %v6808 = vmax.f32 %v6680, 0.0
        %v6809 = vmax.f32 %v6681, 0.0
        %v6810 = vmax.f32 %v6682, 0.0
        %v6811 = vmax.f32 %v6683, 0.0
        %v6812 = vmax.f32 %v6684, 0.0
        %v6813 = vmax.f32 %v6685, 0.0
        %v6814 = vmax.f32 %v6686, 0.0
        %v6815 = vmax.f32 %v6687, 0.0
        %v6816 = vmax.f32 %v6688, 0.0
        %v6817 = vmax.f32 %v6689, 0.0
        %v6818 = vmax.f32 %v6690, 0.0
        %v6819 = vmax.f32 %v6691, 0.0
        %v6820 = vmax.f32 %v6692, 0.0
        %v6821 = vmax.f32 %v6693, 0.0
        %v6822 = vmax.f32 %v6694, 0.0
        %v6823 = vmax.f32 %v6695, 0.0
        %v6824 = vmax.f32 %v6696, 0.0
        %v6825 = vmax.f32 %v6697, 0.0
        %v6826 = vmax.f32 %v6698, 0.0
        %v6827 = vmax.f32 %v6699, 0.0
        %v6828 = vmax.f32 %v6700, 0.0
        %v6829 = vmax.f32 %v6701, 0.0
        %v6830 = vmax.f32 %v6702, 0.0
        %v6831 = vmax.f32 %v6703, 0.0
        %v6832 = vmax.f32 %v6704, 0.0
        %v6833 = vmax.f32 %v6705, 0.0
        %v6834 = vmax.f32 %v6706, 0.0
        %v6835 = vmax.f32 %v6707, 0.0
        %v6836 = vmax.f32 %v6708, 0.0
        %v6837 = vmax.f32 %v6709, 0.0
        %v6838 = vmax.f32 %v6710, 0.0
        %v6839 = vmax.f32 %v6711, 0.0
        %v6840 = vmax.f32 %v6712, 0.0
        %v6841 = vmax.f32 %v6713, 0.0
        %v6842 = vmax.f32 %v6714, 0.0
        %v6843 = vmax.f32 %v6715, 0.0
        %v6844 = vmax.f32 %v6716, 0.0
        %v6845 = vmax.f32 %v6717, 0.0
        %v6846 = vmax.f32 %v6718, 0.0
        %v6847 = vmax.f32 %v6719, 0.0
        %v6848 = vmax.f32 %v6720, 0.0
        %v6849 = vmax.f32 %v6721, 0.0
        %v6850 = vmax.f32 %v6722, 0.0
        %v6851 = vmax.f32 %v6723, 0.0
        %v6852 = vmax.f32 %v6724, 0.0
        %v6853 = vmax.f32 %v6725, 0.0
        %v6854 = vmax.f32 %v6726, 0.0
        %v6855 = vmax.f32 %v6727, 0.0
        %v6856 = vmax.f32 %v6728, 0.0
        %v6857 = vmax.f32 %v6729, 0.0
        %v6858 = vmax.f32 %v6730, 0.0
        %v6859 = vmax.f32 %v6731, 0.0
        %v6860 = vmax.f32 %v6732, 0.0
        %v6861 = vmax.f32 %v6733, 0.0
        %v6862 = vmax.f32 %v6734, 0.0
        %v6863 = vmax.f32 %v6735, 0.0
        %v6864 = vmax.f32 %v6736, 0.0
        %v6865 = vmax.f32 %v6737, 0.0
        %v6866 = vmax.f32 %v6738, 0.0
        %v6867 = vmax.f32 %v6739, 0.0
        %v6868 = vmax.f32 %v6740, 0.0
        %v6869 = vmax.f32 %v6741, 0.0
        %v6870 = vmax.f32 %v6742, 0.0
        %v6871 = vmax.f32 %v6743, 0.0
        %v6872 = vmax.f32 %v6744, 0.0
        %v6873 = vmax.f32 %v6745, 0.0
        %v6874 = vmax.f32 %v6746, 0.0
        %v6875 = vmax.f32 %v6747, 0.0
        %v6876 = vmax.f32 %v6748, 0.0
        %v6877 = vmax.f32 %v6749, 0.0
        %v6878 = vmax.f32 %v6750, 0.0
        %v6879 = vmax.f32 %v6751, 0.0
        %v6880 = vmax.f32 %v6752, 0.0
        %v6881 = vmax.f32 %v6753, 0.0
        %v6882 = vmax.f32 %v6754, 0.0
        %v6883 = vmax.f32 %v6755, 0.0
        %v6884 = vmax.f32 %v6756, 0.0
        %v6885 = vmax.f32 %v6757, 0.0
        %v6886 = vmax.f32 %v6758, 0.0
        %v6887 = vmax.f32 %v6759, 0.0
        %v6888 = vmax.f32 %v6760, 0.0
        %v6889 = vmax.f32 %v6761, 0.0
        %v6890 = vmax.f32 %v6762, 0.0
        %v6891 = vmax.f32 %v6763, 0.0
        %v6892 = vmax.f32 %v6764, 0.0
        %v6893 = vmax.f32 %v6765, 0.0
        %v6894 = vmax.f32 %v6766, 0.0
        %v6895 = vmax.f32 %v6767, 0.0
        %v6896 = vmax.f32 %v6768, 0.0
        %v6897 = vmax.f32 %v6769, 0.0
        %v6898 = vmax.f32 %v6770, 0.0
        %v6899 = vmax.f32 %v6771, 0.0
        %v6900 = vmax.f32 %v6772, 0.0
        %v6901 = vmax.f32 %v6773, 0.0
        %v6902 = vmax.f32 %v6774, 0.0
        %v6903 = vmax.f32 %v6775, 0.0
        %v6904 = vmax.f32 %v6776, 0.0
        %v6905 = vmax.f32 %v6777, 0.0
        %v6906 = vmax.f32 %v6778, 0.0
        %v6907 = vmax.f32 %v6779, 0.0
        %v6908 = vmax.f32 %v6780, 0.0
        %v6909 = vmax.f32 %v6781, 0.0
        %v6910 = vmax.f32 %v6782, 0.0
        %v6911 = vmax.f32 %v6783, 0.0
        %v6912 = vmax.f32 %v6784, 0.0
        %v6913 = vmax.f32 %v6785, 0.0
        %v6914 = vmax.f32 %v6786, 0.0
        %v6915 = vmax.f32 %v6787, 0.0
        %v6916 = vmax.f32 %v6788, 0.0
        %v6917 = vmax.f32 %v6789, 0.0
        %v6918 = vmax.f32 %v6790, 0.0
        %v6919 = vmax.f32 %v6791, 0.0
        %v6920 = vmax.f32 %v6792, 0.0
        %v6921 = vmax.f32 %v6793, 0.0
        %v6922 = vmax.f32 %v6794, 0.0
        %v6923 = vmax.f32 %v6795, 0.0
        %v6924 = vmax.f32 %v6796, 0.0
        %v6925 = vpack.c.bf16 %v6805, %v6797
        %v6926 = vpack.c.bf16 %v6806, %v6798
        %v6927 = vpack.c.bf16 %v6807, %v6799
        %v6928 = vpack.c.bf16 %v6808, %v6800
        %v6929 = vpack.c.bf16 %v6809, %v6801
        %v6930 = vpack.c.bf16 %v6810, %v6802
        %v6931 = vpack.c.bf16 %v6811, %v6803
        %v6932 = vpack.c.bf16 %v6812, %v6804
        %v6933 = vpack.c.bf16 %v6821, %v6813
        %v6934 = vpack.c.bf16 %v6822, %v6814
        %v6935 = vpack.c.bf16 %v6823, %v6815
        %v6936 = vpack.c.bf16 %v6824, %v6816
        %v6937 = vpack.c.bf16 %v6825, %v6817
        %v6938 = vpack.c.bf16 %v6826, %v6818
        %v6939 = vpack.c.bf16 %v6827, %v6819
        %v6940 = vpack.c.bf16 %v6828, %v6820
        %v6941 = vpack.c.bf16 %v6837, %v6829
        %v6942 = vpack.c.bf16 %v6838, %v6830
        %v6943 = vpack.c.bf16 %v6839, %v6831
        %v6944 = vpack.c.bf16 %v6840, %v6832
        %v6945 = vpack.c.bf16 %v6841, %v6833
        %v6946 = vpack.c.bf16 %v6842, %v6834
        %v6947 = vpack.c.bf16 %v6843, %v6835
        %v6948 = vpack.c.bf16 %v6844, %v6836
        %v6949 = vpack.c.bf16 %v6853, %v6845
        %v6950 = vpack.c.bf16 %v6854, %v6846
        %v6951 = vpack.c.bf16 %v6855, %v6847
        %v6952 = vpack.c.bf16 %v6856, %v6848
        %v6953 = vpack.c.bf16 %v6857, %v6849
        %v6954 = vpack.c.bf16 %v6858, %v6850
        %v6955 = vpack.c.bf16 %v6859, %v6851
        %v6956 = vpack.c.bf16 %v6860, %v6852
        %v6957 = vpack.c.bf16 %v6869, %v6861
        %v6958 = vpack.c.bf16 %v6870, %v6862
        %v6959 = vpack.c.bf16 %v6871, %v6863
        %v6960 = vpack.c.bf16 %v6872, %v6864
        %v6961 = vpack.c.bf16 %v6873, %v6865
        %v6962 = vpack.c.bf16 %v6874, %v6866
        %v6963 = vpack.c.bf16 %v6875, %v6867
        %v6964 = vpack.c.bf16 %v6876, %v6868
        %v6965 = vpack.c.bf16 %v6885, %v6877
        %v6966 = vpack.c.bf16 %v6886, %v6878
        %v6967 = vpack.c.bf16 %v6887, %v6879
        %v6968 = vpack.c.bf16 %v6888, %v6880
        %v6969 = vpack.c.bf16 %v6889, %v6881
        %v6970 = vpack.c.bf16 %v6890, %v6882
        %v6971 = vpack.c.bf16 %v6891, %v6883
        %v6972 = vpack.c.bf16 %v6892, %v6884
        %v6973 = vpack.c.bf16 %v6901, %v6893
        %v6974 = vpack.c.bf16 %v6902, %v6894
        %v6975 = vpack.c.bf16 %v6903, %v6895
        %v6976 = vpack.c.bf16 %v6904, %v6896
        %v6977 = vpack.c.bf16 %v6905, %v6897
        %v6978 = vpack.c.bf16 %v6906, %v6898
        %v6979 = vpack.c.bf16 %v6907, %v6899
        %v6980 = vpack.c.bf16 %v6908, %v6900
        %v6981 = vpack.c.bf16 %v6917, %v6909
        %v6982 = vpack.c.bf16 %v6918, %v6910
        %v6983 = vpack.c.bf16 %v6919, %v6911
        %v6984 = vpack.c.bf16 %v6920, %v6912
        %v6985 = vpack.c.bf16 %v6921, %v6913
        %v6986 = vpack.c.bf16 %v6922, %v6914
        %v6987 = vpack.c.bf16 %v6923, %v6915
        %v6988 = vpack.c.bf16 %v6924, %v6916
        %v6989 = vld [vmem:[%s6] sm:$0xf]
        %v6990 = vld [vmem:[%s6 + $0x4] sm:$0xf]
        %v6991 = vld [vmem:[%s6 + $0x8] sm:$0xf]
        %v6992 = vld [vmem:[%s6 + $0xc] sm:$0xf]
        %v6993 = vld [vmem:[%s6 + $0x10] sm:$0xf]
        %v6994 = vld [vmem:[%s6 + $0x14] sm:$0xf]
        %v6995 = vld [vmem:[%s6 + $0x18] sm:$0xf]
        %v6996 = vld [vmem:[%s6 + $0x1c] sm:$0xf]
        %v6997 = vld [vmem:[%s6 + $0x20] sm:$0xf]
        %v6998 = vld [vmem:[%s6 + $0x24] sm:$0xf]
        %v6999 = vld [vmem:[%s6 + $0x28] sm:$0xf]
        %v7000 = vld [vmem:[%s6 + $0x2c] sm:$0xf]
        %v7001 = vld [vmem:[%s6 + $0x30] sm:$0xf]
        %v7002 = vld [vmem:[%s6 + $0x34] sm:$0xf]
        %v7003 = vld [vmem:[%s6 + $0x38] sm:$0xf]
        %v7004 = vld [vmem:[%s6 + $0x3c] sm:$0xf]
        %7005 = vset.pattern.permute.xlu0 7
        %7006 = vperm.xlu0 %7005, %v1157
        %v7007 = vpop.permute.xlu0 %7006
        %7009 = vset.pattern.permute.xlu0 7
        %7010 = vperm.xlu0 %7009, %v1158
        %v7011 = vpop.permute.xlu0 %7010
        %7013 = vset.pattern.permute.xlu0 7
        %7014 = vperm.xlu0 %7013, %v1159
        %v7015 = vpop.permute.xlu0 %7014
        %7017 = vset.pattern.permute.xlu0 7
        %7018 = vperm.xlu0 %7017, %v1160
        %v7019 = vpop.permute.xlu0 %7018
        %7021 = vset.pattern.permute.xlu0 7
        %7022 = vperm.xlu0 %7021, %v1161
        %v7023 = vpop.permute.xlu0 %7022
        %7025 = vset.pattern.permute.xlu0 7
        %7026 = vperm.xlu0 %7025, %v1162
        %v7027 = vpop.permute.xlu0 %7026
        %7029 = vset.pattern.permute.xlu0 7
        %7030 = vperm.xlu0 %7029, %v1163
        %v7031 = vpop.permute.xlu0 %7030
        %7033 = vset.pattern.permute.xlu0 7
        %7034 = vperm.xlu0 %7033, %v1164
        %v7035 = vpop.permute.xlu0 %7034
        %7037 = vset.pattern.permute.xlu0 7
        %7038 = vperm.xlu0 %7037, %v1165
        %v7039 = vpop.permute.xlu0 %7038
        %7041 = vset.pattern.permute.xlu0 7
        %7042 = vperm.xlu0 %7041, %v1166
        %v7043 = vpop.permute.xlu0 %7042
        %7045 = vset.pattern.permute.xlu0 7
        %7046 = vperm.xlu0 %7045, %v1167
        %v7047 = vpop.permute.xlu0 %7046
        %7049 = vset.pattern.permute.xlu0 7
        %7050 = vperm.xlu0 %7049, %v1168
        %v7051 = vpop.permute.xlu0 %7050
        %7053 = vset.pattern.permute.xlu0 7
        %7054 = vperm.xlu0 %7053, %v1169
        %v7055 = vpop.permute.xlu0 %7054
        %7057 = vset.pattern.permute.xlu0 7
        %7058 = vperm.xlu0 %7057, %v1170
        %v7059 = vpop.permute.xlu0 %7058
        %7061 = vset.pattern.permute.xlu0 7
        %7062 = vperm.xlu0 %7061, %v1171
        %v7063 = vpop.permute.xlu0 %7062
        %7065 = vset.pattern.permute.xlu0 7
        %7066 = vperm.xlu0 %7065, %v1172
        %v7067 = vpop.permute.xlu0 %7066
        %v7085 = vunpack.c.l.b16 %v6989
        %v7086 = vunpack.c.l.b16 %v6990
        %v7087 = vunpack.c.l.b16 %v6991
        %v7088 = vunpack.c.l.b16 %v6992
        %v7089 = vunpack.c.l.b16 %v6993
        %v7090 = vunpack.c.l.b16 %v6994
        %v7091 = vunpack.c.l.b16 %v6995
        %v7092 = vunpack.c.l.b16 %v6996
        %v7093 = vunpack.c.l.b16 %v6997
        %v7094 = vunpack.c.l.b16 %v6998
        %v7095 = vunpack.c.l.b16 %v6999
        %v7096 = vunpack.c.l.b16 %v7000
        %v7097 = vunpack.c.l.b16 %v7001
        %v7098 = vunpack.c.l.b16 %v7002
        %v7099 = vunpack.c.l.b16 %v7003
        %v7100 = vunpack.c.l.b16 %v7004
        %v7101 = vpack.c.b16 %v7086, %v7085
        %v7102 = vpack.c.b16 %v7088, %v7087
        %v7103 = vpack.c.b16 %v7090, %v7089
        %v7104 = vpack.c.b16 %v7092, %v7091
        %v7105 = vpack.c.b16 %v7094, %v7093
        %v7106 = vpack.c.b16 %v7096, %v7095
        %v7107 = vpack.c.b16 %v7098, %v7097
        %v7108 = vpack.c.b16 %v7100, %v7099
        %7117 = vmatpush.bf16.msra.mxu0 %v6981
        %7118 = vmatpush.bf16.msra.mxu0 %v6973
        %7119 = vmatpush.bf16.msra.mxu0 %v6965
        %7120 = vmatpush.bf16.msra.mxu0 %v6957
        %7121 = vmatpush.bf16.msra.mxu0 %v6949
        %7122 = vmatpush.bf16.msra.mxu0 %v6941
        %7123 = vmatpush.bf16.msra.mxu0 %v6933
        %7124 = vmatpush.bf16.msra.mxu0 %v6925
        %7125 = vmatmul.bf16.gmra.mxu0 %v7101
        %v7126 = vpop.f32.mrf.mxu0
        %v7127 = vadd.f32 %v7007, %v7126
        %v7128 = vpop.f32.mrf.mxu0
        %v7129 = vadd.f32 %v7011, %v7128
        %7130 = vmatmul.bf16.gmra.mxu0 %v7102
        %v7131 = vpop.f32.mrf.mxu0
        %v7132 = vadd.f32 %v7015, %v7131
        %v7133 = vpop.f32.mrf.mxu0
        %v7134 = vadd.f32 %v7019, %v7133
        %7135 = vmatmul.bf16.gmra.mxu0 %v7103
        %v7136 = vpop.f32.mrf.mxu0
        %v7137 = vadd.f32 %v7023, %v7136
        %v7138 = vpop.f32.mrf.mxu0
        %v7139 = vadd.f32 %v7027, %v7138
        %7140 = vmatmul.bf16.gmra.mxu0 %v7104
        %v7141 = vpop.f32.mrf.mxu0
        %v7142 = vadd.f32 %v7031, %v7141
        %v7143 = vpop.f32.mrf.mxu0
        %v7144 = vadd.f32 %v7035, %v7143
        %7145 = vmatmul.bf16.gmra.mxu0 %v7105
        %v7146 = vpop.f32.mrf.mxu0
        %v7147 = vadd.f32 %v7039, %v7146
        %v7148 = vpop.f32.mrf.mxu0
        %v7149 = vadd.f32 %v7043, %v7148
        %7150 = vmatmul.bf16.gmra.mxu0 %v7106
        %v7151 = vpop.f32.mrf.mxu0
        %v7152 = vadd.f32 %v7047, %v7151
        %v7153 = vpop.f32.mrf.mxu0
        %v7154 = vadd.f32 %v7051, %v7153
        %7155 = vmatmul.bf16.gmra.mxu0 %v7107
        %v7156 = vpop.f32.mrf.mxu0
        %v7157 = vadd.f32 %v7055, %v7156
        %v7158 = vpop.f32.mrf.mxu0
        %v7159 = vadd.f32 %v7059, %v7158
        %7160 = vmatmul.bf16.gmra.mxu0 %v7108
        %v7161 = vpop.f32.mrf.mxu0
        %v7162 = vadd.f32 %v7063, %v7161
        %v7163 = vpop.f32.mrf.mxu0
        %v7164 = vadd.f32 %v7067, %v7163
        %7165 = vdwg.mxu0
        %7166 = vmatpush.bf16.msra.mxu0 %v6982
        %7167 = vmatpush.bf16.msra.mxu0 %v6974
        %7168 = vmatpush.bf16.msra.mxu0 %v6966
        %7169 = vmatpush.bf16.msra.mxu0 %v6958
        %7170 = vmatpush.bf16.msra.mxu0 %v6950
        %7171 = vmatpush.bf16.msra.mxu0 %v6942
        %7172 = vmatpush.bf16.msra.mxu0 %v6934
        %7173 = vmatpush.bf16.msra.mxu0 %v6926
        %7174 = vmatmul.bf16.gmra.mxu0 %v7101
        %v7175 = vpop.f32.mrf.mxu0
        %v7176 = vadd.f32 %v7007, %v7175
        %v7177 = vpop.f32.mrf.mxu0
        %v7178 = vadd.f32 %v7011, %v7177
        %7179 = vmatmul.bf16.gmra.mxu0 %v7102
        %v7180 = vpop.f32.mrf.mxu0
        %v7181 = vadd.f32 %v7015, %v7180
        %v7182 = vpop.f32.mrf.mxu0
        %v7183 = vadd.f32 %v7019, %v7182
        %7184 = vmatmul.bf16.gmra.mxu0 %v7103
        %v7185 = vpop.f32.mrf.mxu0
        %v7186 = vadd.f32 %v7023, %v7185
        %v7187 = vpop.f32.mrf.mxu0
        %v7188 = vadd.f32 %v7027, %v7187
        %7189 = vmatmul.bf16.gmra.mxu0 %v7104
        %v7190 = vpop.f32.mrf.mxu0
        %v7191 = vadd.f32 %v7031, %v7190
        %v7192 = vpop.f32.mrf.mxu0
        %v7193 = vadd.f32 %v7035, %v7192
        %7194 = vmatmul.bf16.gmra.mxu0 %v7105
        %v7195 = vpop.f32.mrf.mxu0
        %v7196 = vadd.f32 %v7039, %v7195
        %v7197 = vpop.f32.mrf.mxu0
        %v7198 = vadd.f32 %v7043, %v7197
        %7199 = vmatmul.bf16.gmra.mxu0 %v7106
        %v7200 = vpop.f32.mrf.mxu0
        %v7201 = vadd.f32 %v7047, %v7200
        %v7202 = vpop.f32.mrf.mxu0
        %v7203 = vadd.f32 %v7051, %v7202
        %7204 = vmatmul.bf16.gmra.mxu0 %v7107
        %v7205 = vpop.f32.mrf.mxu0
        %v7206 = vadd.f32 %v7055, %v7205
        %v7207 = vpop.f32.mrf.mxu0
        %v7208 = vadd.f32 %v7059, %v7207
        %7209 = vmatmul.bf16.gmra.mxu0 %v7108
        %v7210 = vpop.f32.mrf.mxu0
        %v7211 = vadd.f32 %v7063, %v7210
        %v7212 = vpop.f32.mrf.mxu0
        %v7213 = vadd.f32 %v7067, %v7212
        %7214 = vdwg.mxu0
        %7215 = vmatpush.bf16.msra.mxu0 %v6983
        %7216 = vmatpush.bf16.msra.mxu0 %v6975
        %7217 = vmatpush.bf16.msra.mxu0 %v6967
        %7218 = vmatpush.bf16.msra.mxu0 %v6959
        %7219 = vmatpush.bf16.msra.mxu0 %v6951
        %7220 = vmatpush.bf16.msra.mxu0 %v6943
        %7221 = vmatpush.bf16.msra.mxu0 %v6935
        %7222 = vmatpush.bf16.msra.mxu0 %v6927
        %7223 = vmatmul.bf16.gmra.mxu0 %v7101
        %v7224 = vpop.f32.mrf.mxu0
        %v7225 = vadd.f32 %v7007, %v7224
        %v7226 = vpop.f32.mrf.mxu0
        %v7227 = vadd.f32 %v7011, %v7226
        %7228 = vmatmul.bf16.gmra.mxu0 %v7102
        %v7229 = vpop.f32.mrf.mxu0
        %v7230 = vadd.f32 %v7015, %v7229
        %v7231 = vpop.f32.mrf.mxu0
        %v7232 = vadd.f32 %v7019, %v7231
        %7233 = vmatmul.bf16.gmra.mxu0 %v7103
        %v7234 = vpop.f32.mrf.mxu0
        %v7235 = vadd.f32 %v7023, %v7234
        %v7236 = vpop.f32.mrf.mxu0
        %v7237 = vadd.f32 %v7027, %v7236
        %7238 = vmatmul.bf16.gmra.mxu0 %v7104
        %v7239 = vpop.f32.mrf.mxu0
        %v7240 = vadd.f32 %v7031, %v7239
        %v7241 = vpop.f32.mrf.mxu0
        %v7242 = vadd.f32 %v7035, %v7241
        %7243 = vmatmul.bf16.gmra.mxu0 %v7105
        %v7244 = vpop.f32.mrf.mxu0
        %v7245 = vadd.f32 %v7039, %v7244
        %v7246 = vpop.f32.mrf.mxu0
        %v7247 = vadd.f32 %v7043, %v7246
        %7248 = vmatmul.bf16.gmra.mxu0 %v7106
        %v7249 = vpop.f32.mrf.mxu0
        %v7250 = vadd.f32 %v7047, %v7249
        %v7251 = vpop.f32.mrf.mxu0
        %v7252 = vadd.f32 %v7051, %v7251
        %7253 = vmatmul.bf16.gmra.mxu0 %v7107
        %v7254 = vpop.f32.mrf.mxu0
        %v7255 = vadd.f32 %v7055, %v7254
        %v7256 = vpop.f32.mrf.mxu0
        %v7257 = vadd.f32 %v7059, %v7256
        %7258 = vmatmul.bf16.gmra.mxu0 %v7108
        %v7259 = vpop.f32.mrf.mxu0
        %v7260 = vadd.f32 %v7063, %v7259
        %v7261 = vpop.f32.mrf.mxu0
        %v7262 = vadd.f32 %v7067, %v7261
        %7263 = vdwg.mxu0
        %7264 = vmatpush.bf16.msra.mxu0 %v6984
        %7265 = vmatpush.bf16.msra.mxu0 %v6976
        %7266 = vmatpush.bf16.msra.mxu0 %v6968
        %7267 = vmatpush.bf16.msra.mxu0 %v6960
        %7268 = vmatpush.bf16.msra.mxu0 %v6952
        %7269 = vmatpush.bf16.msra.mxu0 %v6944
        %7270 = vmatpush.bf16.msra.mxu0 %v6936
        %7271 = vmatpush.bf16.msra.mxu0 %v6928
        %7272 = vmatmul.bf16.gmra.mxu0 %v7101
        %v7273 = vpop.f32.mrf.mxu0
        %v7274 = vadd.f32 %v7007, %v7273
        %v7275 = vpop.f32.mrf.mxu0
        %v7276 = vadd.f32 %v7011, %v7275
        %7277 = vmatmul.bf16.gmra.mxu0 %v7102
        %v7278 = vpop.f32.mrf.mxu0
        %v7279 = vadd.f32 %v7015, %v7278
        %v7280 = vpop.f32.mrf.mxu0
        %v7281 = vadd.f32 %v7019, %v7280
        %7282 = vmatmul.bf16.gmra.mxu0 %v7103
        %v7283 = vpop.f32.mrf.mxu0
        %v7284 = vadd.f32 %v7023, %v7283
        %v7285 = vpop.f32.mrf.mxu0
        %v7286 = vadd.f32 %v7027, %v7285
        %7287 = vmatmul.bf16.gmra.mxu0 %v7104
        %v7288 = vpop.f32.mrf.mxu0
        %v7289 = vadd.f32 %v7031, %v7288
        %v7290 = vpop.f32.mrf.mxu0
        %v7291 = vadd.f32 %v7035, %v7290
        %7292 = vmatmul.bf16.gmra.mxu0 %v7105
        %v7293 = vpop.f32.mrf.mxu0
        %v7294 = vadd.f32 %v7039, %v7293
        %v7295 = vpop.f32.mrf.mxu0
        %v7296 = vadd.f32 %v7043, %v7295
        %7297 = vmatmul.bf16.gmra.mxu0 %v7106
        %v7298 = vpop.f32.mrf.mxu0
        %v7299 = vadd.f32 %v7047, %v7298
        %v7300 = vpop.f32.mrf.mxu0
        %v7301 = vadd.f32 %v7051, %v7300
        %7302 = vmatmul.bf16.gmra.mxu0 %v7107
        %v7303 = vpop.f32.mrf.mxu0
        %v7304 = vadd.f32 %v7055, %v7303
        %v7305 = vpop.f32.mrf.mxu0
        %v7306 = vadd.f32 %v7059, %v7305
        %7307 = vmatmul.bf16.gmra.mxu0 %v7108
        %v7308 = vpop.f32.mrf.mxu0
        %v7309 = vadd.f32 %v7063, %v7308
        %v7310 = vpop.f32.mrf.mxu0
        %v7311 = vadd.f32 %v7067, %v7310
        %7312 = vdwg.mxu0
        %7313 = vmatpush.bf16.msra.mxu0 %v6985
        %7314 = vmatpush.bf16.msra.mxu0 %v6977
        %7315 = vmatpush.bf16.msra.mxu0 %v6969
        %7316 = vmatpush.bf16.msra.mxu0 %v6961
        %7317 = vmatpush.bf16.msra.mxu0 %v6953
        %7318 = vmatpush.bf16.msra.mxu0 %v6945
        %7319 = vmatpush.bf16.msra.mxu0 %v6937
        %7320 = vmatpush.bf16.msra.mxu0 %v6929
        %7321 = vmatmul.bf16.gmra.mxu0 %v7101
        %v7322 = vpop.f32.mrf.mxu0
        %v7323 = vadd.f32 %v7007, %v7322
        %v7324 = vpop.f32.mrf.mxu0
        %v7325 = vadd.f32 %v7011, %v7324
        %7326 = vmatmul.bf16.gmra.mxu0 %v7102
        %v7327 = vpop.f32.mrf.mxu0
        %v7328 = vadd.f32 %v7015, %v7327
        %v7329 = vpop.f32.mrf.mxu0
        %v7330 = vadd.f32 %v7019, %v7329
        %7331 = vmatmul.bf16.gmra.mxu0 %v7103
        %v7332 = vpop.f32.mrf.mxu0
        %v7333 = vadd.f32 %v7023, %v7332
        %v7334 = vpop.f32.mrf.mxu0
        %v7335 = vadd.f32 %v7027, %v7334
        %7336 = vmatmul.bf16.gmra.mxu0 %v7104
        %v7337 = vpop.f32.mrf.mxu0
        %v7338 = vadd.f32 %v7031, %v7337
        %v7339 = vpop.f32.mrf.mxu0
        %v7340 = vadd.f32 %v7035, %v7339
        %7341 = vmatmul.bf16.gmra.mxu0 %v7105
        %v7342 = vpop.f32.mrf.mxu0
        %v7343 = vadd.f32 %v7039, %v7342
        %v7344 = vpop.f32.mrf.mxu0
        %v7345 = vadd.f32 %v7043, %v7344
        %7346 = vmatmul.bf16.gmra.mxu0 %v7106
        %v7347 = vpop.f32.mrf.mxu0
        %v7348 = vadd.f32 %v7047, %v7347
        %v7349 = vpop.f32.mrf.mxu0
        %v7350 = vadd.f32 %v7051, %v7349
        %7351 = vmatmul.bf16.gmra.mxu0 %v7107
        %v7352 = vpop.f32.mrf.mxu0
        %v7353 = vadd.f32 %v7055, %v7352
        %v7354 = vpop.f32.mrf.mxu0
        %v7355 = vadd.f32 %v7059, %v7354
        %7356 = vmatmul.bf16.gmra.mxu0 %v7108
        %v7357 = vpop.f32.mrf.mxu0
        %v7358 = vadd.f32 %v7063, %v7357
        %v7359 = vpop.f32.mrf.mxu0
        %v7360 = vadd.f32 %v7067, %v7359
        %7361 = vdwg.mxu0
        %7362 = vmatpush.bf16.msra.mxu0 %v6986
        %7363 = vmatpush.bf16.msra.mxu0 %v6978
        %7364 = vmatpush.bf16.msra.mxu0 %v6970
        %7365 = vmatpush.bf16.msra.mxu0 %v6962
        %7366 = vmatpush.bf16.msra.mxu0 %v6954
        %7367 = vmatpush.bf16.msra.mxu0 %v6946
        %7368 = vmatpush.bf16.msra.mxu0 %v6938
        %7369 = vmatpush.bf16.msra.mxu0 %v6930
        %7370 = vmatmul.bf16.gmra.mxu0 %v7101
        %v7371 = vpop.f32.mrf.mxu0
        %v7372 = vadd.f32 %v7007, %v7371
        %v7373 = vpop.f32.mrf.mxu0
        %v7374 = vadd.f32 %v7011, %v7373
        %7375 = vmatmul.bf16.gmra.mxu0 %v7102
        %v7376 = vpop.f32.mrf.mxu0
        %v7377 = vadd.f32 %v7015, %v7376
        %v7378 = vpop.f32.mrf.mxu0
        %v7379 = vadd.f32 %v7019, %v7378
        %7380 = vmatmul.bf16.gmra.mxu0 %v7103
        %v7381 = vpop.f32.mrf.mxu0
        %v7382 = vadd.f32 %v7023, %v7381
        %v7383 = vpop.f32.mrf.mxu0
        %v7384 = vadd.f32 %v7027, %v7383
        %7385 = vmatmul.bf16.gmra.mxu0 %v7104
        %v7386 = vpop.f32.mrf.mxu0
        %v7387 = vadd.f32 %v7031, %v7386
        %v7388 = vpop.f32.mrf.mxu0
        %v7389 = vadd.f32 %v7035, %v7388
        %7390 = vmatmul.bf16.gmra.mxu0 %v7105
        %v7391 = vpop.f32.mrf.mxu0
        %v7392 = vadd.f32 %v7039, %v7391
        %v7393 = vpop.f32.mrf.mxu0
        %v7394 = vadd.f32 %v7043, %v7393
        %7395 = vmatmul.bf16.gmra.mxu0 %v7106
        %v7396 = vpop.f32.mrf.mxu0
        %v7397 = vadd.f32 %v7047, %v7396
        %v7398 = vpop.f32.mrf.mxu0
        %v7399 = vadd.f32 %v7051, %v7398
        %7400 = vmatmul.bf16.gmra.mxu0 %v7107
        %v7401 = vpop.f32.mrf.mxu0
        %v7402 = vadd.f32 %v7055, %v7401
        %v7403 = vpop.f32.mrf.mxu0
        %v7404 = vadd.f32 %v7059, %v7403
        %7405 = vmatmul.bf16.gmra.mxu0 %v7108
        %v7406 = vpop.f32.mrf.mxu0
        %v7407 = vadd.f32 %v7063, %v7406
        %v7408 = vpop.f32.mrf.mxu0
        %v7409 = vadd.f32 %v7067, %v7408
        %7410 = vdwg.mxu0
        %7411 = vmatpush.bf16.msra.mxu0 %v6987
        %7412 = vmatpush.bf16.msra.mxu0 %v6979
        %7413 = vmatpush.bf16.msra.mxu0 %v6971
        %7414 = vmatpush.bf16.msra.mxu0 %v6963
        %7415 = vmatpush.bf16.msra.mxu0 %v6955
        %7416 = vmatpush.bf16.msra.mxu0 %v6947
        %7417 = vmatpush.bf16.msra.mxu0 %v6939
        %7418 = vmatpush.bf16.msra.mxu0 %v6931
        %7419 = vmatmul.bf16.gmra.mxu0 %v7101
        %v7420 = vpop.f32.mrf.mxu0
        %v7421 = vadd.f32 %v7007, %v7420
        %v7422 = vpop.f32.mrf.mxu0
        %v7423 = vadd.f32 %v7011, %v7422
        %7424 = vmatmul.bf16.gmra.mxu0 %v7102
        %v7425 = vpop.f32.mrf.mxu0
        %v7426 = vadd.f32 %v7015, %v7425
        %v7427 = vpop.f32.mrf.mxu0
        %v7428 = vadd.f32 %v7019, %v7427
        %7429 = vmatmul.bf16.gmra.mxu0 %v7103
        %v7430 = vpop.f32.mrf.mxu0
        %v7431 = vadd.f32 %v7023, %v7430
        %v7432 = vpop.f32.mrf.mxu0
        %v7433 = vadd.f32 %v7027, %v7432
        %7434 = vmatmul.bf16.gmra.mxu0 %v7104
        %v7435 = vpop.f32.mrf.mxu0
        %v7436 = vadd.f32 %v7031, %v7435
        %v7437 = vpop.f32.mrf.mxu0
        %v7438 = vadd.f32 %v7035, %v7437
        %7439 = vmatmul.bf16.gmra.mxu0 %v7105
        %v7440 = vpop.f32.mrf.mxu0
        %v7441 = vadd.f32 %v7039, %v7440
        %v7442 = vpop.f32.mrf.mxu0
        %v7443 = vadd.f32 %v7043, %v7442
        %7444 = vmatmul.bf16.gmra.mxu0 %v7106
        %v7445 = vpop.f32.mrf.mxu0
        %v7446 = vadd.f32 %v7047, %v7445
        %v7447 = vpop.f32.mrf.mxu0
        %v7448 = vadd.f32 %v7051, %v7447
        %7449 = vmatmul.bf16.gmra.mxu0 %v7107
        %v7450 = vpop.f32.mrf.mxu0
        %v7451 = vadd.f32 %v7055, %v7450
        %v7452 = vpop.f32.mrf.mxu0
        %v7453 = vadd.f32 %v7059, %v7452
        %7454 = vmatmul.bf16.gmra.mxu0 %v7108
        %v7455 = vpop.f32.mrf.mxu0
        %v7456 = vadd.f32 %v7063, %v7455
        %v7457 = vpop.f32.mrf.mxu0
        %v7458 = vadd.f32 %v7067, %v7457
        %7459 = vdwg.mxu0
        %7460 = vmatpush.bf16.msra.mxu0 %v6988
        %7461 = vmatpush.bf16.msra.mxu0 %v6980
        %7462 = vmatpush.bf16.msra.mxu0 %v6972
        %7463 = vmatpush.bf16.msra.mxu0 %v6964
        %7464 = vmatpush.bf16.msra.mxu0 %v6956
        %7465 = vmatpush.bf16.msra.mxu0 %v6948
        %7466 = vmatpush.bf16.msra.mxu0 %v6940
        %7467 = vmatpush.bf16.msra.mxu0 %v6932
        %7468 = vmatmul.bf16.gmra.mxu0 %v7101
        %v7469 = vpop.f32.mrf.mxu0
        %v7470 = vadd.f32 %v7007, %v7469
        %v7471 = vpop.f32.mrf.mxu0
        %v7472 = vadd.f32 %v7011, %v7471
        %7473 = vmatmul.bf16.gmra.mxu0 %v7102
        %v7474 = vpop.f32.mrf.mxu0
        %v7475 = vadd.f32 %v7015, %v7474
        %v7476 = vpop.f32.mrf.mxu0
        %v7477 = vadd.f32 %v7019, %v7476
        %7478 = vmatmul.bf16.gmra.mxu0 %v7103
        %v7479 = vpop.f32.mrf.mxu0
        %v7480 = vadd.f32 %v7023, %v7479
        %v7481 = vpop.f32.mrf.mxu0
        %v7482 = vadd.f32 %v7027, %v7481
        %7483 = vmatmul.bf16.gmra.mxu0 %v7104
        %v7484 = vpop.f32.mrf.mxu0
        %v7485 = vadd.f32 %v7031, %v7484
        %v7486 = vpop.f32.mrf.mxu0
        %v7487 = vadd.f32 %v7035, %v7486
        %7488 = vmatmul.bf16.gmra.mxu0 %v7105
        %v7489 = vpop.f32.mrf.mxu0
        %v7490 = vadd.f32 %v7039, %v7489
        %v7491 = vpop.f32.mrf.mxu0
        %v7492 = vadd.f32 %v7043, %v7491
        %7493 = vmatmul.bf16.gmra.mxu0 %v7106
        %v7494 = vpop.f32.mrf.mxu0
        %v7495 = vadd.f32 %v7047, %v7494
        %v7496 = vpop.f32.mrf.mxu0
        %v7497 = vadd.f32 %v7051, %v7496
        %7498 = vmatmul.bf16.gmra.mxu0 %v7107
        %v7499 = vpop.f32.mrf.mxu0
        %v7500 = vadd.f32 %v7055, %v7499
        %v7501 = vpop.f32.mrf.mxu0
        %v7502 = vadd.f32 %v7059, %v7501
        %7503 = vmatmul.bf16.gmra.mxu0 %v7108
        %v7504 = vpop.f32.mrf.mxu0
        %v7505 = vadd.f32 %v7063, %v7504
        %v7506 = vpop.f32.mrf.mxu0
        %v7507 = vadd.f32 %v7067, %v7506
        %7508 = vdwg.mxu0
        %v7509 = vmax.f32 %v7127, %v7129
        %v7510 = vmax.f32 %v7509, %v7132
        %v7511 = vmax.f32 %v7510, %v7134
        %v7512 = vmax.f32 %v7511, %v7137
        %v7513 = vmax.f32 %v7512, %v7139
        %v7514 = vmax.f32 %v7513, %v7142
        %v7515 = vmax.f32 %v7514, %v7144
        %v7516 = vmax.f32 %v7515, %v7147
        %v7517 = vmax.f32 %v7516, %v7149
        %v7518 = vmax.f32 %v7517, %v7152
        %v7519 = vmax.f32 %v7518, %v7154
        %v7520 = vmax.f32 %v7519, %v7157
        %v7521 = vmax.f32 %v7520, %v7159
        %v7522 = vmax.f32 %v7521, %v7162
        %v7523 = vmax.f32 %v7522, %v7164
        %v7524 = vrot.slane %v7523, 4
        %v7525 = vmax.f32 %v7523, %v7524
        %v7526 = vrot.slane %v7525, 2
        %v7527 = vmax.f32 %v7525, %v7526
        %v7528 = vrot.slane %v7527, 1
        %v7529 = vmax.f32 %v7527, %v7528
        %v7530 = vmax.f32 %v7176, %v7178
        %v7531 = vmax.f32 %v7530, %v7181
        %v7532 = vmax.f32 %v7531, %v7183
        %v7533 = vmax.f32 %v7532, %v7186
        %v7534 = vmax.f32 %v7533, %v7188
        %v7535 = vmax.f32 %v7534, %v7191
        %v7536 = vmax.f32 %v7535, %v7193
        %v7537 = vmax.f32 %v7536, %v7196
        %v7538 = vmax.f32 %v7537, %v7198
        %v7539 = vmax.f32 %v7538, %v7201
        %v7540 = vmax.f32 %v7539, %v7203
        %v7541 = vmax.f32 %v7540, %v7206
        %v7542 = vmax.f32 %v7541, %v7208
        %v7543 = vmax.f32 %v7542, %v7211
        %v7544 = vmax.f32 %v7543, %v7213
        %v7545 = vrot.slane %v7544, 4
        %v7546 = vmax.f32 %v7544, %v7545
        %v7547 = vrot.slane %v7546, 2
        %v7548 = vmax.f32 %v7546, %v7547
        %v7549 = vrot.slane %v7548, 1
        %v7550 = vmax.f32 %v7548, %v7549
        %v7551 = vmax.f32 %v7225, %v7227
        %v7552 = vmax.f32 %v7551, %v7230
        %v7553 = vmax.f32 %v7552, %v7232
        %v7554 = vmax.f32 %v7553, %v7235
        %v7555 = vmax.f32 %v7554, %v7237
        %v7556 = vmax.f32 %v7555, %v7240
        %v7557 = vmax.f32 %v7556, %v7242
        %v7558 = vmax.f32 %v7557, %v7245
        %v7559 = vmax.f32 %v7558, %v7247
        %v7560 = vmax.f32 %v7559, %v7250
        %v7561 = vmax.f32 %v7560, %v7252
        %v7562 = vmax.f32 %v7561, %v7255
        %v7563 = vmax.f32 %v7562, %v7257
        %v7564 = vmax.f32 %v7563, %v7260
        %v7565 = vmax.f32 %v7564, %v7262
        %v7566 = vrot.slane %v7565, 4
        %v7567 = vmax.f32 %v7565, %v7566
        %v7568 = vrot.slane %v7567, 2
        %v7569 = vmax.f32 %v7567, %v7568
        %v7570 = vrot.slane %v7569, 1
        %v7571 = vmax.f32 %v7569, %v7570
        %v7572 = vmax.f32 %v7274, %v7276
        %v7573 = vmax.f32 %v7572, %v7279
        %v7574 = vmax.f32 %v7573, %v7281
        %v7575 = vmax.f32 %v7574, %v7284
        %v7576 = vmax.f32 %v7575, %v7286
        %v7577 = vmax.f32 %v7576, %v7289
        %v7578 = vmax.f32 %v7577, %v7291
        %v7579 = vmax.f32 %v7578, %v7294
        %v7580 = vmax.f32 %v7579, %v7296
        %v7581 = vmax.f32 %v7580, %v7299
        %v7582 = vmax.f32 %v7581, %v7301
        %v7583 = vmax.f32 %v7582, %v7304
        %v7584 = vmax.f32 %v7583, %v7306
        %v7585 = vmax.f32 %v7584, %v7309
        %v7586 = vmax.f32 %v7585, %v7311
        %v7587 = vrot.slane %v7586, 4
        %v7588 = vmax.f32 %v7586, %v7587
        %v7589 = vrot.slane %v7588, 2
        %v7590 = vmax.f32 %v7588, %v7589
        %v7591 = vrot.slane %v7590, 1
        %v7592 = vmax.f32 %v7590, %v7591
        %v7593 = vmax.f32 %v7323, %v7325
        %v7594 = vmax.f32 %v7593, %v7328
        %v7595 = vmax.f32 %v7594, %v7330
        %v7596 = vmax.f32 %v7595, %v7333
        %v7597 = vmax.f32 %v7596, %v7335
        %v7598 = vmax.f32 %v7597, %v7338
        %v7599 = vmax.f32 %v7598, %v7340
        %v7600 = vmax.f32 %v7599, %v7343
        %v7601 = vmax.f32 %v7600, %v7345
        %v7602 = vmax.f32 %v7601, %v7348
        %v7603 = vmax.f32 %v7602, %v7350
        %v7604 = vmax.f32 %v7603, %v7353
        %v7605 = vmax.f32 %v7604, %v7355
        %v7606 = vmax.f32 %v7605, %v7358
        %v7607 = vmax.f32 %v7606, %v7360
        %v7608 = vrot.slane %v7607, 4
        %v7609 = vmax.f32 %v7607, %v7608
        %v7610 = vrot.slane %v7609, 2
        %v7611 = vmax.f32 %v7609, %v7610
        %v7612 = vrot.slane %v7611, 1
        %v7613 = vmax.f32 %v7611, %v7612
        %v7614 = vmax.f32 %v7372, %v7374
        %v7615 = vmax.f32 %v7614, %v7377
        %v7616 = vmax.f32 %v7615, %v7379
        %v7617 = vmax.f32 %v7616, %v7382
        %v7618 = vmax.f32 %v7617, %v7384
        %v7619 = vmax.f32 %v7618, %v7387
        %v7620 = vmax.f32 %v7619, %v7389
        %v7621 = vmax.f32 %v7620, %v7392
        %v7622 = vmax.f32 %v7621, %v7394
        %v7623 = vmax.f32 %v7622, %v7397
        %v7624 = vmax.f32 %v7623, %v7399
        %v7625 = vmax.f32 %v7624, %v7402
        %v7626 = vmax.f32 %v7625, %v7404
        %v7627 = vmax.f32 %v7626, %v7407
        %v7628 = vmax.f32 %v7627, %v7409
        %v7629 = vrot.slane %v7628, 4
        %v7630 = vmax.f32 %v7628, %v7629
        %v7631 = vrot.slane %v7630, 2
        %v7632 = vmax.f32 %v7630, %v7631
        %v7633 = vrot.slane %v7632, 1
        %v7634 = vmax.f32 %v7632, %v7633
        %v7635 = vmax.f32 %v7421, %v7423
        %v7636 = vmax.f32 %v7635, %v7426
        %v7637 = vmax.f32 %v7636, %v7428
        %v7638 = vmax.f32 %v7637, %v7431
        %v7639 = vmax.f32 %v7638, %v7433
        %v7640 = vmax.f32 %v7639, %v7436
        %v7641 = vmax.f32 %v7640, %v7438
        %v7642 = vmax.f32 %v7641, %v7441
        %v7643 = vmax.f32 %v7642, %v7443
        %v7644 = vmax.f32 %v7643, %v7446
        %v7645 = vmax.f32 %v7644, %v7448
        %v7646 = vmax.f32 %v7645, %v7451
        %v7647 = vmax.f32 %v7646, %v7453
        %v7648 = vmax.f32 %v7647, %v7456
        %v7649 = vmax.f32 %v7648, %v7458
        %v7650 = vrot.slane %v7649, 4
        %v7651 = vmax.f32 %v7649, %v7650
        %v7652 = vrot.slane %v7651, 2
        %v7653 = vmax.f32 %v7651, %v7652
        %v7654 = vrot.slane %v7653, 1
        %v7655 = vmax.f32 %v7653, %v7654
        %v7656 = vmax.f32 %v7470, %v7472
        %v7657 = vmax.f32 %v7656, %v7475
        %v7658 = vmax.f32 %v7657, %v7477
        %v7659 = vmax.f32 %v7658, %v7480
        %v7660 = vmax.f32 %v7659, %v7482
        %v7661 = vmax.f32 %v7660, %v7485
        %v7662 = vmax.f32 %v7661, %v7487
        %v7663 = vmax.f32 %v7662, %v7490
        %v7664 = vmax.f32 %v7663, %v7492
        %v7665 = vmax.f32 %v7664, %v7495
        %v7666 = vmax.f32 %v7665, %v7497
        %v7667 = vmax.f32 %v7666, %v7500
        %v7668 = vmax.f32 %v7667, %v7502
        %v7669 = vmax.f32 %v7668, %v7505
        %v7670 = vmax.f32 %v7669, %v7507
        %v7671 = vrot.slane %v7670, 4
        %v7672 = vmax.f32 %v7670, %v7671
        %v7673 = vrot.slane %v7672, 2
        %v7674 = vmax.f32 %v7672, %v7673
        %v7675 = vrot.slane %v7674, 1
        %v7676 = vmax.f32 %v7674, %v7675
        %v7677 = vsub.f32 %v7127, %v7529
        %v7678 = vsub.f32 %v7176, %v7550
        %v7679 = vsub.f32 %v7225, %v7571
        %v7680 = vsub.f32 %v7274, %v7592
        %v7681 = vsub.f32 %v7323, %v7613
        %v7682 = vsub.f32 %v7372, %v7634
        %v7683 = vsub.f32 %v7421, %v7655
        %v7684 = vsub.f32 %v7470, %v7676
        %v7685 = vsub.f32 %v7129, %v7529
        %v7686 = vsub.f32 %v7178, %v7550
        %v7687 = vsub.f32 %v7227, %v7571
        %v7688 = vsub.f32 %v7276, %v7592
        %v7689 = vsub.f32 %v7325, %v7613
        %v7690 = vsub.f32 %v7374, %v7634
        %v7691 = vsub.f32 %v7423, %v7655
        %v7692 = vsub.f32 %v7472, %v7676
        %v7693 = vsub.f32 %v7132, %v7529
        %v7694 = vsub.f32 %v7181, %v7550
        %v7695 = vsub.f32 %v7230, %v7571
        %v7696 = vsub.f32 %v7279, %v7592
        %v7697 = vsub.f32 %v7328, %v7613
        %v7698 = vsub.f32 %v7377, %v7634
        %v7699 = vsub.f32 %v7426, %v7655
        %v7700 = vsub.f32 %v7475, %v7676
        %v7701 = vsub.f32 %v7134, %v7529
        %v7702 = vsub.f32 %v7183, %v7550
        %v7703 = vsub.f32 %v7232, %v7571
        %v7704 = vsub.f32 %v7281, %v7592
        %v7705 = vsub.f32 %v7330, %v7613
        %v7706 = vsub.f32 %v7379, %v7634
        %v7707 = vsub.f32 %v7428, %v7655
        %v7708 = vsub.f32 %v7477, %v7676
        %v7709 = vsub.f32 %v7137, %v7529
        %v7710 = vsub.f32 %v7186, %v7550
        %v7711 = vsub.f32 %v7235, %v7571
        %v7712 = vsub.f32 %v7284, %v7592
        %v7713 = vsub.f32 %v7333, %v7613
        %v7714 = vsub.f32 %v7382, %v7634
        %v7715 = vsub.f32 %v7431, %v7655
        %v7716 = vsub.f32 %v7480, %v7676
        %v7717 = vsub.f32 %v7139, %v7529
        %v7718 = vsub.f32 %v7188, %v7550
        %v7719 = vsub.f32 %v7237, %v7571
        %v7720 = vsub.f32 %v7286, %v7592
        %v7721 = vsub.f32 %v7335, %v7613
        %v7722 = vsub.f32 %v7384, %v7634
        %v7723 = vsub.f32 %v7433, %v7655
        %v7724 = vsub.f32 %v7482, %v7676
        %v7725 = vsub.f32 %v7142, %v7529
        %v7726 = vsub.f32 %v7191, %v7550
        %v7727 = vsub.f32 %v7240, %v7571
        %v7728 = vsub.f32 %v7289, %v7592
        %v7729 = vsub.f32 %v7338, %v7613
        %v7730 = vsub.f32 %v7387, %v7634
        %v7731 = vsub.f32 %v7436, %v7655
        %v7732 = vsub.f32 %v7485, %v7676
        %v7733 = vsub.f32 %v7144, %v7529
        %v7734 = vsub.f32 %v7193, %v7550
        %v7735 = vsub.f32 %v7242, %v7571
        %v7736 = vsub.f32 %v7291, %v7592
        %v7737 = vsub.f32 %v7340, %v7613
        %v7738 = vsub.f32 %v7389, %v7634
        %v7739 = vsub.f32 %v7438, %v7655
        %v7740 = vsub.f32 %v7487, %v7676
        %v7741 = vsub.f32 %v7147, %v7529
        %v7742 = vsub.f32 %v7196, %v7550
        %v7743 = vsub.f32 %v7245, %v7571
        %v7744 = vsub.f32 %v7294, %v7592
        %v7745 = vsub.f32 %v7343, %v7613
        %v7746 = vsub.f32 %v7392, %v7634
        %v7747 = vsub.f32 %v7441, %v7655
        %v7748 = vsub.f32 %v7490, %v7676
        %v7749 = vsub.f32 %v7149, %v7529
        %v7750 = vsub.f32 %v7198, %v7550
        %v7751 = vsub.f32 %v7247, %v7571
        %v7752 = vsub.f32 %v7296, %v7592
        %v7753 = vsub.f32 %v7345, %v7613
        %v7754 = vsub.f32 %v7394, %v7634
        %v7755 = vsub.f32 %v7443, %v7655
        %v7756 = vsub.f32 %v7492, %v7676
        %v7757 = vsub.f32 %v7152, %v7529
        %v7758 = vsub.f32 %v7201, %v7550
        %v7759 = vsub.f32 %v7250, %v7571
        %v7760 = vsub.f32 %v7299, %v7592
        %v7761 = vsub.f32 %v7348, %v7613
        %v7762 = vsub.f32 %v7397, %v7634
        %v7763 = vsub.f32 %v7446, %v7655
        %v7764 = vsub.f32 %v7495, %v7676
        %v7765 = vsub.f32 %v7154, %v7529
        %v7766 = vsub.f32 %v7203, %v7550
        %v7767 = vsub.f32 %v7252, %v7571
        %v7768 = vsub.f32 %v7301, %v7592
        %v7769 = vsub.f32 %v7350, %v7613
        %v7770 = vsub.f32 %v7399, %v7634
        %v7771 = vsub.f32 %v7448, %v7655
        %v7772 = vsub.f32 %v7497, %v7676
        %v7773 = vsub.f32 %v7157, %v7529
        %v7774 = vsub.f32 %v7206, %v7550
        %v7775 = vsub.f32 %v7255, %v7571
        %v7776 = vsub.f32 %v7304, %v7592
        %v7777 = vsub.f32 %v7353, %v7613
        %v7778 = vsub.f32 %v7402, %v7634
        %v7779 = vsub.f32 %v7451, %v7655
        %v7780 = vsub.f32 %v7500, %v7676
        %v7781 = vsub.f32 %v7159, %v7529
        %v7782 = vsub.f32 %v7208, %v7550
        %v7783 = vsub.f32 %v7257, %v7571
        %v7784 = vsub.f32 %v7306, %v7592
        %v7785 = vsub.f32 %v7355, %v7613
        %v7786 = vsub.f32 %v7404, %v7634
        %v7787 = vsub.f32 %v7453, %v7655
        %v7788 = vsub.f32 %v7502, %v7676
        %v7789 = vsub.f32 %v7162, %v7529
        %v7790 = vsub.f32 %v7211, %v7550
        %v7791 = vsub.f32 %v7260, %v7571
        %v7792 = vsub.f32 %v7309, %v7592
        %v7793 = vsub.f32 %v7358, %v7613
        %v7794 = vsub.f32 %v7407, %v7634
        %v7795 = vsub.f32 %v7456, %v7655
        %v7796 = vsub.f32 %v7505, %v7676
        %v7797 = vsub.f32 %v7164, %v7529
        %v7798 = vsub.f32 %v7213, %v7550
        %v7799 = vsub.f32 %v7262, %v7571
        %v7800 = vsub.f32 %v7311, %v7592
        %v7801 = vsub.f32 %v7360, %v7613
        %v7802 = vsub.f32 %v7409, %v7634
        %v7803 = vsub.f32 %v7458, %v7655
        %v7804 = vsub.f32 %v7507, %v7676
        %v7805 = vmul.f32 %v7677, 1.442695
        %v7806 = vpow.pop %v7805
        %v7807 = vmul.f32 %v7678, 1.442695
        %v7808 = vpow.pop %v7807
        %v7809 = vmul.f32 %v7679, 1.442695
        %v7810 = vpow.pop %v7809
        %v7811 = vmul.f32 %v7680, 1.442695
        %v7812 = vpow.pop %v7811
        %v7813 = vmul.f32 %v7681, 1.442695
        %v7814 = vpow.pop %v7813
        %v7815 = vmul.f32 %v7682, 1.442695
        %v7816 = vpow.pop %v7815
        %v7817 = vmul.f32 %v7683, 1.442695
        %v7818 = vpow.pop %v7817
        %v7819 = vmul.f32 %v7684, 1.442695
        %v7820 = vpow.pop %v7819
        %v7821 = vmul.f32 %v7685, 1.442695
        %v7822 = vpow.pop %v7821
        %v7823 = vmul.f32 %v7686, 1.442695
        %v7824 = vpow.pop %v7823
        %v7825 = vmul.f32 %v7687, 1.442695
        %v7826 = vpow.pop %v7825
        %v7827 = vmul.f32 %v7688, 1.442695
        %v7828 = vpow.pop %v7827
        %v7829 = vmul.f32 %v7689, 1.442695
        %v7830 = vpow.pop %v7829
        %v7831 = vmul.f32 %v7690, 1.442695
        %v7832 = vpow.pop %v7831
        %v7833 = vmul.f32 %v7691, 1.442695
        %v7834 = vpow.pop %v7833
        %v7835 = vmul.f32 %v7692, 1.442695
        %v7836 = vpow.pop %v7835
        %v7837 = vmul.f32 %v7693, 1.442695
        %v7838 = vpow.pop %v7837
        %v7839 = vmul.f32 %v7694, 1.442695
        %v7840 = vpow.pop %v7839
        %v7841 = vmul.f32 %v7695, 1.442695
        %v7842 = vpow.pop %v7841
        %v7843 = vmul.f32 %v7696, 1.442695
        %v7844 = vpow.pop %v7843
        %v7845 = vmul.f32 %v7697, 1.442695
        %v7846 = vpow.pop %v7845
        %v7847 = vmul.f32 %v7698, 1.442695
        %v7848 = vpow.pop %v7847
        %v7849 = vmul.f32 %v7699, 1.442695
        %v7850 = vpow.pop %v7849
        %v7851 = vmul.f32 %v7700, 1.442695
        %v7852 = vpow.pop %v7851
        %v7853 = vmul.f32 %v7701, 1.442695
        %v7854 = vpow.pop %v7853
        %v7855 = vmul.f32 %v7702, 1.442695
        %v7856 = vpow.pop %v7855
        %v7857 = vmul.f32 %v7703, 1.442695
        %v7858 = vpow.pop %v7857
        %v7859 = vmul.f32 %v7704, 1.442695
        %v7860 = vpow.pop %v7859
        %v7861 = vmul.f32 %v7705, 1.442695
        %v7862 = vpow.pop %v7861
        %v7863 = vmul.f32 %v7706, 1.442695
        %v7864 = vpow.pop %v7863
        %v7865 = vmul.f32 %v7707, 1.442695
        %v7866 = vpow.pop %v7865
        %v7867 = vmul.f32 %v7708, 1.442695
        %v7868 = vpow.pop %v7867
        %v7869 = vmul.f32 %v7709, 1.442695
        %v7870 = vpow.pop %v7869
        %v7871 = vmul.f32 %v7710, 1.442695
        %v7872 = vpow.pop %v7871
        %v7873 = vmul.f32 %v7711, 1.442695
        %v7874 = vpow.pop %v7873
        %v7875 = vmul.f32 %v7712, 1.442695
        %v7876 = vpow.pop %v7875
        %v7877 = vmul.f32 %v7713, 1.442695
        %v7878 = vpow.pop %v7877
        %v7879 = vmul.f32 %v7714, 1.442695
        %v7880 = vpow.pop %v7879
        %v7881 = vmul.f32 %v7715, 1.442695
        %v7882 = vpow.pop %v7881
        %v7883 = vmul.f32 %v7716, 1.442695
        %v7884 = vpow.pop %v7883
        %v7885 = vmul.f32 %v7717, 1.442695
        %v7886 = vpow.pop %v7885
        %v7887 = vmul.f32 %v7718, 1.442695
        %v7888 = vpow.pop %v7887
        %v7889 = vmul.f32 %v7719, 1.442695
        %v7890 = vpow.pop %v7889
        %v7891 = vmul.f32 %v7720, 1.442695
        %v7892 = vpow.pop %v7891
        %v7893 = vmul.f32 %v7721, 1.442695
        %v7894 = vpow.pop %v7893
        %v7895 = vmul.f32 %v7722, 1.442695
        %v7896 = vpow.pop %v7895
        %v7897 = vmul.f32 %v7723, 1.442695
        %v7898 = vpow.pop %v7897
        %v7899 = vmul.f32 %v7724, 1.442695
        %v7900 = vpow.pop %v7899
        %v7901 = vmul.f32 %v7725, 1.442695
        %v7902 = vpow.pop %v7901
        %v7903 = vmul.f32 %v7726, 1.442695
        %v7904 = vpow.pop %v7903
        %v7905 = vmul.f32 %v7727, 1.442695
        %v7906 = vpow.pop %v7905
        %v7907 = vmul.f32 %v7728, 1.442695
        %v7908 = vpow.pop %v7907
        %v7909 = vmul.f32 %v7729, 1.442695
        %v7910 = vpow.pop %v7909
        %v7911 = vmul.f32 %v7730, 1.442695
        %v7912 = vpow.pop %v7911
        %v7913 = vmul.f32 %v7731, 1.442695
        %v7914 = vpow.pop %v7913
        %v7915 = vmul.f32 %v7732, 1.442695
        %v7916 = vpow.pop %v7915
        %v7917 = vmul.f32 %v7733, 1.442695
        %v7918 = vpow.pop %v7917
        %v7919 = vmul.f32 %v7734, 1.442695
        %v7920 = vpow.pop %v7919
        %v7921 = vmul.f32 %v7735, 1.442695
        %v7922 = vpow.pop %v7921
        %v7923 = vmul.f32 %v7736, 1.442695
        %v7924 = vpow.pop %v7923
        %v7925 = vmul.f32 %v7737, 1.442695
        %v7926 = vpow.pop %v7925
        %v7927 = vmul.f32 %v7738, 1.442695
        %v7928 = vpow.pop %v7927
        %v7929 = vmul.f32 %v7739, 1.442695
        %v7930 = vpow.pop %v7929
        %v7931 = vmul.f32 %v7740, 1.442695
        %v7932 = vpow.pop %v7931
        %v7933 = vmul.f32 %v7741, 1.442695
        %v7934 = vpow.pop %v7933
        %v7935 = vmul.f32 %v7742, 1.442695
        %v7936 = vpow.pop %v7935
        %v7937 = vmul.f32 %v7743, 1.442695
        %v7938 = vpow.pop %v7937
        %v7939 = vmul.f32 %v7744, 1.442695
        %v7940 = vpow.pop %v7939
        %v7941 = vmul.f32 %v7745, 1.442695
        %v7942 = vpow.pop %v7941
        %v7943 = vmul.f32 %v7746, 1.442695
        %v7944 = vpow.pop %v7943
        %v7945 = vmul.f32 %v7747, 1.442695
        %v7946 = vpow.pop %v7945
        %v7947 = vmul.f32 %v7748, 1.442695
        %v7948 = vpow.pop %v7947
        %v7949 = vmul.f32 %v7749, 1.442695
        %v7950 = vpow.pop %v7949
        %v7951 = vmul.f32 %v7750, 1.442695
        %v7952 = vpow.pop %v7951
        %v7953 = vmul.f32 %v7751, 1.442695
        %v7954 = vpow.pop %v7953
        %v7955 = vmul.f32 %v7752, 1.442695
        %v7956 = vpow.pop %v7955
        %v7957 = vmul.f32 %v7753, 1.442695
        %v7958 = vpow.pop %v7957
        %v7959 = vmul.f32 %v7754, 1.442695
        %v7960 = vpow.pop %v7959
        %v7961 = vmul.f32 %v7755, 1.442695
        %v7962 = vpow.pop %v7961
        %v7963 = vmul.f32 %v7756, 1.442695
        %v7964 = vpow.pop %v7963
        %v7965 = vmul.f32 %v7757, 1.442695
        %v7966 = vpow.pop %v7965
        %v7967 = vmul.f32 %v7758, 1.442695
        %v7968 = vpow.pop %v7967
        %v7969 = vmul.f32 %v7759, 1.442695
        %v7970 = vpow.pop %v7969
        %v7971 = vmul.f32 %v7760, 1.442695
        %v7972 = vpow.pop %v7971
        %v7973 = vmul.f32 %v7761, 1.442695
        %v7974 = vpow.pop %v7973
        %v7975 = vmul.f32 %v7762, 1.442695
        %v7976 = vpow.pop %v7975
        %v7977 = vmul.f32 %v7763, 1.442695
        %v7978 = vpow.pop %v7977
        %v7979 = vmul.f32 %v7764, 1.442695
        %v7980 = vpow.pop %v7979
        %v7981 = vmul.f32 %v7765, 1.442695
        %v7982 = vpow.pop %v7981
        %v7983 = vmul.f32 %v7766, 1.442695
        %v7984 = vpow.pop %v7983
        %v7985 = vmul.f32 %v7767, 1.442695
        %v7986 = vpow.pop %v7985
        %v7987 = vmul.f32 %v7768, 1.442695
        %v7988 = vpow.pop %v7987
        %v7989 = vmul.f32 %v7769, 1.442695
        %v7990 = vpow.pop %v7989
        %v7991 = vmul.f32 %v7770, 1.442695
        %v7992 = vpow.pop %v7991
        %v7993 = vmul.f32 %v7771, 1.442695
        %v7994 = vpow.pop %v7993
        %v7995 = vmul.f32 %v7772, 1.442695
        %v7996 = vpow.pop %v7995
        %v7997 = vmul.f32 %v7773, 1.442695
        %v7998 = vpow.pop %v7997
        %v7999 = vmul.f32 %v7774, 1.442695
        %v8000 = vpow.pop %v7999
        %v8001 = vmul.f32 %v7775, 1.442695
        %v8002 = vpow.pop %v8001
        %v8003 = vmul.f32 %v7776, 1.442695
        %v8004 = vpow.pop %v8003
        %v8005 = vmul.f32 %v7777, 1.442695
        %v8006 = vpow.pop %v8005
        %v8007 = vmul.f32 %v7778, 1.442695
        %v8008 = vpow.pop %v8007
        %v8009 = vmul.f32 %v7779, 1.442695
        %v8010 = vpow.pop %v8009
        %v8011 = vmul.f32 %v7780, 1.442695
        %v8012 = vpow.pop %v8011
        %v8013 = vmul.f32 %v7781, 1.442695
        %v8014 = vpow.pop %v8013
        %v8015 = vmul.f32 %v7782, 1.442695
        %v8016 = vpow.pop %v8015
        %v8017 = vmul.f32 %v7783, 1.442695
        %v8018 = vpow.pop %v8017
        %v8019 = vmul.f32 %v7784, 1.442695
        %v8020 = vpow.pop %v8019
        %v8021 = vmul.f32 %v7785, 1.442695
        %v8022 = vpow.pop %v8021
        %v8023 = vmul.f32 %v7786, 1.442695
        %v8024 = vpow.pop %v8023
        %v8025 = vmul.f32 %v7787, 1.442695
        %v8026 = vpow.pop %v8025
        %v8027 = vmul.f32 %v7788, 1.442695
        %v8028 = vpow.pop %v8027
        %v8029 = vmul.f32 %v7789, 1.442695
        %v8030 = vpow.pop %v8029
        %v8031 = vmul.f32 %v7790, 1.442695
        %v8032 = vpow.pop %v8031
        %v8033 = vmul.f32 %v7791, 1.442695
        %v8034 = vpow.pop %v8033
        %v8035 = vmul.f32 %v7792, 1.442695
        %v8036 = vpow.pop %v8035
        %v8037 = vmul.f32 %v7793, 1.442695
        %v8038 = vpow.pop %v8037
        %v8039 = vmul.f32 %v7794, 1.442695
        %v8040 = vpow.pop %v8039
        %v8041 = vmul.f32 %v7795, 1.442695
        %v8042 = vpow.pop %v8041
        %v8043 = vmul.f32 %v7796, 1.442695
        %v8044 = vpow.pop %v8043
        %v8045 = vmul.f32 %v7797, 1.442695
        %v8046 = vpow.pop %v8045
        %v8047 = vmul.f32 %v7798, 1.442695
        %v8048 = vpow.pop %v8047
        %v8049 = vmul.f32 %v7799, 1.442695
        %v8050 = vpow.pop %v8049
        %v8051 = vmul.f32 %v7800, 1.442695
        %v8052 = vpow.pop %v8051
        %v8053 = vmul.f32 %v7801, 1.442695
        %v8054 = vpow.pop %v8053
        %v8055 = vmul.f32 %v7802, 1.442695
        %v8056 = vpow.pop %v8055
        %v8057 = vmul.f32 %v7803, 1.442695
        %v8058 = vpow.pop %v8057
        %v8059 = vmul.f32 %v7804, 1.442695
        %v8060 = vpow.pop %v8059
        %v8061 = vadd.f32 %v7806, %v7822
        %v8062 = vadd.f32 %v8061, %v7838
        %v8063 = vadd.f32 %v8062, %v7854
        %v8064 = vadd.f32 %v8063, %v7870
        %v8065 = vadd.f32 %v8064, %v7886
        %v8066 = vadd.f32 %v8065, %v7902
        %v8067 = vadd.f32 %v8066, %v7918
        %v8068 = vadd.f32 %v8067, %v7934
        %v8069 = vadd.f32 %v8068, %v7950
        %v8070 = vadd.f32 %v8069, %v7966
        %v8071 = vadd.f32 %v8070, %v7982
        %v8072 = vadd.f32 %v8071, %v7998
        %v8073 = vadd.f32 %v8072, %v8014
        %v8074 = vadd.f32 %v8073, %v8030
        %v8075 = vadd.f32 %v8074, %v8046
        %v8076 = vrot.slane %v8075, 4
        %v8077 = vadd.f32 %v8075, %v8076
        %v8078 = vrot.slane %v8077, 2
        %v8079 = vadd.f32 %v8077, %v8078
        %v8080 = vrot.slane %v8079, 1
        %v8081 = vadd.f32 %v8079, %v8080
        %v8082 = vadd.f32 %v7808, %v7824
        %v8083 = vadd.f32 %v8082, %v7840
        %v8084 = vadd.f32 %v8083, %v7856
        %v8085 = vadd.f32 %v8084, %v7872
        %v8086 = vadd.f32 %v8085, %v7888
        %v8087 = vadd.f32 %v8086, %v7904
        %v8088 = vadd.f32 %v8087, %v7920
        %v8089 = vadd.f32 %v8088, %v7936
        %v8090 = vadd.f32 %v8089, %v7952
        %v8091 = vadd.f32 %v8090, %v7968
        %v8092 = vadd.f32 %v8091, %v7984
        %v8093 = vadd.f32 %v8092, %v8000
        %v8094 = vadd.f32 %v8093, %v8016
        %v8095 = vadd.f32 %v8094, %v8032
        %v8096 = vadd.f32 %v8095, %v8048
        %v8097 = vrot.slane %v8096, 4
        %v8098 = vadd.f32 %v8096, %v8097
        %v8099 = vrot.slane %v8098, 2
        %v8100 = vadd.f32 %v8098, %v8099
        %v8101 = vrot.slane %v8100, 1
        %v8102 = vadd.f32 %v8100, %v8101
        %v8103 = vadd.f32 %v7810, %v7826
        %v8104 = vadd.f32 %v8103, %v7842
        %v8105 = vadd.f32 %v8104, %v7858
        %v8106 = vadd.f32 %v8105, %v7874
        %v8107 = vadd.f32 %v8106, %v7890
        %v8108 = vadd.f32 %v8107, %v7906
        %v8109 = vadd.f32 %v8108, %v7922
        %v8110 = vadd.f32 %v8109, %v7938
        %v8111 = vadd.f32 %v8110, %v7954
        %v8112 = vadd.f32 %v8111, %v7970
        %v8113 = vadd.f32 %v8112, %v7986
        %v8114 = vadd.f32 %v8113, %v8002
        %v8115 = vadd.f32 %v8114, %v8018
        %v8116 = vadd.f32 %v8115, %v8034
        %v8117 = vadd.f32 %v8116, %v8050
        %v8118 = vrot.slane %v8117, 4
        %v8119 = vadd.f32 %v8117, %v8118
        %v8120 = vrot.slane %v8119, 2
        %v8121 = vadd.f32 %v8119, %v8120
        %v8122 = vrot.slane %v8121, 1
        %v8123 = vadd.f32 %v8121, %v8122
        %v8124 = vadd.f32 %v7812, %v7828
        %v8125 = vadd.f32 %v8124, %v7844
        %v8126 = vadd.f32 %v8125, %v7860
        %v8127 = vadd.f32 %v8126, %v7876
        %v8128 = vadd.f32 %v8127, %v7892
        %v8129 = vadd.f32 %v8128, %v7908
        %v8130 = vadd.f32 %v8129, %v7924
        %v8131 = vadd.f32 %v8130, %v7940
        %v8132 = vadd.f32 %v8131, %v7956
        %v8133 = vadd.f32 %v8132, %v7972
        %v8134 = vadd.f32 %v8133, %v7988
        %v8135 = vadd.f32 %v8134, %v8004
        %v8136 = vadd.f32 %v8135, %v8020
        %v8137 = vadd.f32 %v8136, %v8036
        %v8138 = vadd.f32 %v8137, %v8052
        %v8139 = vrot.slane %v8138, 4
        %v8140 = vadd.f32 %v8138, %v8139
        %v8141 = vrot.slane %v8140, 2
        %v8142 = vadd.f32 %v8140, %v8141
        %v8143 = vrot.slane %v8142, 1
        %v8144 = vadd.f32 %v8142, %v8143
        %v8145 = vadd.f32 %v7814, %v7830
        %v8146 = vadd.f32 %v8145, %v7846
        %v8147 = vadd.f32 %v8146, %v7862
        %v8148 = vadd.f32 %v8147, %v7878
        %v8149 = vadd.f32 %v8148, %v7894
        %v8150 = vadd.f32 %v8149, %v7910
        %v8151 = vadd.f32 %v8150, %v7926
        %v8152 = vadd.f32 %v8151, %v7942
        %v8153 = vadd.f32 %v8152, %v7958
        %v8154 = vadd.f32 %v8153, %v7974
        %v8155 = vadd.f32 %v8154, %v7990
        %v8156 = vadd.f32 %v8155, %v8006
        %v8157 = vadd.f32 %v8156, %v8022
        %v8158 = vadd.f32 %v8157, %v8038
        %v8159 = vadd.f32 %v8158, %v8054
        %v8160 = vrot.slane %v8159, 4
        %v8161 = vadd.f32 %v8159, %v8160
        %v8162 = vrot.slane %v8161, 2
        %v8163 = vadd.f32 %v8161, %v8162
        %v8164 = vrot.slane %v8163, 1
        %v8165 = vadd.f32 %v8163, %v8164
        %v8166 = vadd.f32 %v7816, %v7832
        %v8167 = vadd.f32 %v8166, %v7848
        %v8168 = vadd.f32 %v8167, %v7864
        %v8169 = vadd.f32 %v8168, %v7880
        %v8170 = vadd.f32 %v8169, %v7896
        %v8171 = vadd.f32 %v8170, %v7912
        %v8172 = vadd.f32 %v8171, %v7928
        %v8173 = vadd.f32 %v8172, %v7944
        %v8174 = vadd.f32 %v8173, %v7960
        %v8175 = vadd.f32 %v8174, %v7976
        %v8176 = vadd.f32 %v8175, %v7992
        %v8177 = vadd.f32 %v8176, %v8008
        %v8178 = vadd.f32 %v8177, %v8024
        %v8179 = vadd.f32 %v8178, %v8040
        %v8180 = vadd.f32 %v8179, %v8056
        %v8181 = vrot.slane %v8180, 4
        %v8182 = vadd.f32 %v8180, %v8181
        %v8183 = vrot.slane %v8182, 2
        %v8184 = vadd.f32 %v8182, %v8183
        %v8185 = vrot.slane %v8184, 1
        %v8186 = vadd.f32 %v8184, %v8185
        %v8187 = vadd.f32 %v7818, %v7834
        %v8188 = vadd.f32 %v8187, %v7850
        %v8189 = vadd.f32 %v8188, %v7866
        %v8190 = vadd.f32 %v8189, %v7882
        %v8191 = vadd.f32 %v8190, %v7898
        %v8192 = vadd.f32 %v8191, %v7914
        %v8193 = vadd.f32 %v8192, %v7930
        %v8194 = vadd.f32 %v8193, %v7946
        %v8195 = vadd.f32 %v8194, %v7962
        %v8196 = vadd.f32 %v8195, %v7978
        %v8197 = vadd.f32 %v8196, %v7994
        %v8198 = vadd.f32 %v8197, %v8010
        %v8199 = vadd.f32 %v8198, %v8026
        %v8200 = vadd.f32 %v8199, %v8042
        %v8201 = vadd.f32 %v8200, %v8058
        %v8202 = vrot.slane %v8201, 4
        %v8203 = vadd.f32 %v8201, %v8202
        %v8204 = vrot.slane %v8203, 2
        %v8205 = vadd.f32 %v8203, %v8204
        %v8206 = vrot.slane %v8205, 1
        %v8207 = vadd.f32 %v8205, %v8206
        %v8208 = vadd.f32 %v7820, %v7836
        %v8209 = vadd.f32 %v8208, %v7852
        %v8210 = vadd.f32 %v8209, %v7868
        %v8211 = vadd.f32 %v8210, %v7884
        %v8212 = vadd.f32 %v8211, %v7900
        %v8213 = vadd.f32 %v8212, %v7916
        %v8214 = vadd.f32 %v8213, %v7932
        %v8215 = vadd.f32 %v8214, %v7948
        %v8216 = vadd.f32 %v8215, %v7964
        %v8217 = vadd.f32 %v8216, %v7980
        %v8218 = vadd.f32 %v8217, %v7996
        %v8219 = vadd.f32 %v8218, %v8012
        %v8220 = vadd.f32 %v8219, %v8028
        %v8221 = vadd.f32 %v8220, %v8044
        %v8222 = vadd.f32 %v8221, %v8060
        %v8223 = vrot.slane %v8222, 4
        %v8224 = vadd.f32 %v8222, %v8223
        %v8225 = vrot.slane %v8224, 2
        %v8226 = vadd.f32 %v8224, %v8225
        %v8227 = vrot.slane %v8226, 1
        %v8228 = vadd.f32 %v8226, %v8227
        %v8229 = vrcp.pop %v8081
        %v8230 = vrcp.pop %v8102
        %v8231 = vrcp.pop %v8123
        %v8232 = vrcp.pop %v8144
        %v8233 = vrcp.pop %v8165
        %v8234 = vrcp.pop %v8186
        %v8235 = vrcp.pop %v8207
        %v8236 = vrcp.pop %v8228
        %v8237 = vmul.f32 %v7806, %v8229
        %v8238 = vmul.f32 %v7808, %v8230
        %v8239 = vmul.f32 %v7810, %v8231
        %v8240 = vmul.f32 %v7812, %v8232
        %v8241 = vmul.f32 %v7814, %v8233
        %v8242 = vmul.f32 %v7816, %v8234
        %v8243 = vmul.f32 %v7818, %v8235
        %v8244 = vmul.f32 %v7820, %v8236
        %v8245 = vmul.f32 %v7822, %v8229
        %v8246 = vmul.f32 %v7824, %v8230
        %v8247 = vmul.f32 %v7826, %v8231
        %v8248 = vmul.f32 %v7828, %v8232
        %v8249 = vmul.f32 %v7830, %v8233
        %v8250 = vmul.f32 %v7832, %v8234
        %v8251 = vmul.f32 %v7834, %v8235
        %v8252 = vmul.f32 %v7836, %v8236
        %v8253 = vmul.f32 %v7838, %v8229
        %v8254 = vmul.f32 %v7840, %v8230
        %v8255 = vmul.f32 %v7842, %v8231
        %v8256 = vmul.f32 %v7844, %v8232
        %v8257 = vmul.f32 %v7846, %v8233
        %v8258 = vmul.f32 %v7848, %v8234
        %v8259 = vmul.f32 %v7850, %v8235
        %v8260 = vmul.f32 %v7852, %v8236
        %v8261 = vmul.f32 %v7854, %v8229
        %v8262 = vmul.f32 %v7856, %v8230
        %v8263 = vmul.f32 %v7858, %v8231
        %v8264 = vmul.f32 %v7860, %v8232
        %v8265 = vmul.f32 %v7862, %v8233
        %v8266 = vmul.f32 %v7864, %v8234
        %v8267 = vmul.f32 %v7866, %v8235
        %v8268 = vmul.f32 %v7868, %v8236
        %v8269 = vmul.f32 %v7870, %v8229
        %v8270 = vmul.f32 %v7872, %v8230
        %v8271 = vmul.f32 %v7874, %v8231
        %v8272 = vmul.f32 %v7876, %v8232
        %v8273 = vmul.f32 %v7878, %v8233
        %v8274 = vmul.f32 %v7880, %v8234
        %v8275 = vmul.f32 %v7882, %v8235
        %v8276 = vmul.f32 %v7884, %v8236
        %v8277 = vmul.f32 %v7886, %v8229
        %v8278 = vmul.f32 %v7888, %v8230
        %v8279 = vmul.f32 %v7890, %v8231
        %v8280 = vmul.f32 %v7892, %v8232
        %v8281 = vmul.f32 %v7894, %v8233
        %v8282 = vmul.f32 %v7896, %v8234
        %v8283 = vmul.f32 %v7898, %v8235
        %v8284 = vmul.f32 %v7900, %v8236
        %v8285 = vmul.f32 %v7902, %v8229
        %v8286 = vmul.f32 %v7904, %v8230
        %v8287 = vmul.f32 %v7906, %v8231
        %v8288 = vmul.f32 %v7908, %v8232
        %v8289 = vmul.f32 %v7910, %v8233
        %v8290 = vmul.f32 %v7912, %v8234
        %v8291 = vmul.f32 %v7914, %v8235
        %v8292 = vmul.f32 %v7916, %v8236
        %v8293 = vmul.f32 %v7918, %v8229
        %v8294 = vmul.f32 %v7920, %v8230
        %v8295 = vmul.f32 %v7922, %v8231
        %v8296 = vmul.f32 %v7924, %v8232
        %v8297 = vmul.f32 %v7926, %v8233
        %v8298 = vmul.f32 %v7928, %v8234
        %v8299 = vmul.f32 %v7930, %v8235
        %v8300 = vmul.f32 %v7932, %v8236
        %v8301 = vmul.f32 %v7934, %v8229
        %v8302 = vmul.f32 %v7936, %v8230
        %v8303 = vmul.f32 %v7938, %v8231
        %v8304 = vmul.f32 %v7940, %v8232
        %v8305 = vmul.f32 %v7942, %v8233
        %v8306 = vmul.f32 %v7944, %v8234
        %v8307 = vmul.f32 %v7946, %v8235
        %v8308 = vmul.f32 %v7948, %v8236
        %v8309 = vmul.f32 %v7950, %v8229
        %v8310 = vmul.f32 %v7952, %v8230
        %v8311 = vmul.f32 %v7954, %v8231
        %v8312 = vmul.f32 %v7956, %v8232
        %v8313 = vmul.f32 %v7958, %v8233
        %v8314 = vmul.f32 %v7960, %v8234
        %v8315 = vmul.f32 %v7962, %v8235
        %v8316 = vmul.f32 %v7964, %v8236
        %v8317 = vmul.f32 %v7966, %v8229
        %v8318 = vmul.f32 %v7968, %v8230
        %v8319 = vmul.f32 %v7970, %v8231
        %v8320 = vmul.f32 %v7972, %v8232
        %v8321 = vmul.f32 %v7974, %v8233
        %v8322 = vmul.f32 %v7976, %v8234
        %v8323 = vmul.f32 %v7978, %v8235
        %v8324 = vmul.f32 %v7980, %v8236
        %v8325 = vmul.f32 %v7982, %v8229
        %v8326 = vmul.f32 %v7984, %v8230
        %v8327 = vmul.f32 %v7986, %v8231
        %v8328 = vmul.f32 %v7988, %v8232
        %v8329 = vmul.f32 %v7990, %v8233
        %v8330 = vmul.f32 %v7992, %v8234
        %v8331 = vmul.f32 %v7994, %v8235
        %v8332 = vmul.f32 %v7996, %v8236
        %v8333 = vmul.f32 %v7998, %v8229
        %v8334 = vmul.f32 %v8000, %v8230
        %v8335 = vmul.f32 %v8002, %v8231
        %v8336 = vmul.f32 %v8004, %v8232
        %v8337 = vmul.f32 %v8006, %v8233
        %v8338 = vmul.f32 %v8008, %v8234
        %v8339 = vmul.f32 %v8010, %v8235
        %v8340 = vmul.f32 %v8012, %v8236
        %v8341 = vmul.f32 %v8014, %v8229
        %v8342 = vmul.f32 %v8016, %v8230
        %v8343 = vmul.f32 %v8018, %v8231
        %v8344 = vmul.f32 %v8020, %v8232
        %v8345 = vmul.f32 %v8022, %v8233
        %v8346 = vmul.f32 %v8024, %v8234
        %v8347 = vmul.f32 %v8026, %v8235
        %v8348 = vmul.f32 %v8028, %v8236
        %v8349 = vmul.f32 %v8030, %v8229
        %v8350 = vmul.f32 %v8032, %v8230
        %v8351 = vmul.f32 %v8034, %v8231
        %v8352 = vmul.f32 %v8036, %v8232
        %v8353 = vmul.f32 %v8038, %v8233
        %v8354 = vmul.f32 %v8040, %v8234
        %v8355 = vmul.f32 %v8042, %v8235
        %v8356 = vmul.f32 %v8044, %v8236
        %v8357 = vmul.f32 %v8046, %v8229
        %v8358 = vmul.f32 %v8048, %v8230
        %v8359 = vmul.f32 %v8050, %v8231
        %v8360 = vmul.f32 %v8052, %v8232
        %v8361 = vmul.f32 %v8054, %v8233
        %v8362 = vmul.f32 %v8056, %v8234
        %v8363 = vmul.f32 %v8058, %v8235
        %v8364 = vmul.f32 %v8060, %v8236
        %v8365 = vpack.c.bf16 %v8238, %v8237
        %v8366 = vpack.c.bf16 %v8240, %v8239
        %v8367 = vpack.c.bf16 %v8242, %v8241
        %v8368 = vpack.c.bf16 %v8244, %v8243
        %v8369 = vpack.c.bf16 %v8246, %v8245
        %v8370 = vpack.c.bf16 %v8248, %v8247
        %v8371 = vpack.c.bf16 %v8250, %v8249
        %v8372 = vpack.c.bf16 %v8252, %v8251
        %v8373 = vpack.c.bf16 %v8254, %v8253
        %v8374 = vpack.c.bf16 %v8256, %v8255
        %v8375 = vpack.c.bf16 %v8258, %v8257
        %v8376 = vpack.c.bf16 %v8260, %v8259
        %v8377 = vpack.c.bf16 %v8262, %v8261
        %v8378 = vpack.c.bf16 %v8264, %v8263
        %v8379 = vpack.c.bf16 %v8266, %v8265
        %v8380 = vpack.c.bf16 %v8268, %v8267
        %v8381 = vpack.c.bf16 %v8270, %v8269
        %v8382 = vpack.c.bf16 %v8272, %v8271
        %v8383 = vpack.c.bf16 %v8274, %v8273
        %v8384 = vpack.c.bf16 %v8276, %v8275
        %v8385 = vpack.c.bf16 %v8278, %v8277
        %v8386 = vpack.c.bf16 %v8280, %v8279
        %v8387 = vpack.c.bf16 %v8282, %v8281
        %v8388 = vpack.c.bf16 %v8284, %v8283
        %v8389 = vpack.c.bf16 %v8286, %v8285
        %v8390 = vpack.c.bf16 %v8288, %v8287
        %v8391 = vpack.c.bf16 %v8290, %v8289
        %v8392 = vpack.c.bf16 %v8292, %v8291
        %v8393 = vpack.c.bf16 %v8294, %v8293
        %v8394 = vpack.c.bf16 %v8296, %v8295
        %v8395 = vpack.c.bf16 %v8298, %v8297
        %v8396 = vpack.c.bf16 %v8300, %v8299
        %v8397 = vpack.c.bf16 %v8302, %v8301
        %v8398 = vpack.c.bf16 %v8304, %v8303
        %v8399 = vpack.c.bf16 %v8306, %v8305
        %v8400 = vpack.c.bf16 %v8308, %v8307
        %v8401 = vpack.c.bf16 %v8310, %v8309
        %v8402 = vpack.c.bf16 %v8312, %v8311
        %v8403 = vpack.c.bf16 %v8314, %v8313
        %v8404 = vpack.c.bf16 %v8316, %v8315
        %v8405 = vpack.c.bf16 %v8318, %v8317
        %v8406 = vpack.c.bf16 %v8320, %v8319
        %v8407 = vpack.c.bf16 %v8322, %v8321
        %v8408 = vpack.c.bf16 %v8324, %v8323
        %v8409 = vpack.c.bf16 %v8326, %v8325
        %v8410 = vpack.c.bf16 %v8328, %v8327
        %v8411 = vpack.c.bf16 %v8330, %v8329
        %v8412 = vpack.c.bf16 %v8332, %v8331
        %v8413 = vpack.c.bf16 %v8334, %v8333
        %v8414 = vpack.c.bf16 %v8336, %v8335
        %v8415 = vpack.c.bf16 %v8338, %v8337
        %v8416 = vpack.c.bf16 %v8340, %v8339
        %v8417 = vpack.c.bf16 %v8342, %v8341
        %v8418 = vpack.c.bf16 %v8344, %v8343
        %v8419 = vpack.c.bf16 %v8346, %v8345
        %v8420 = vpack.c.bf16 %v8348, %v8347
        %v8421 = vpack.c.bf16 %v8350, %v8349
        %v8422 = vpack.c.bf16 %v8352, %v8351
        %v8423 = vpack.c.bf16 %v8354, %v8353
        %v8424 = vpack.c.bf16 %v8356, %v8355
        %v8425 = vpack.c.bf16 %v8358, %v8357
        %v8426 = vpack.c.bf16 %v8360, %v8359
        %v8427 = vpack.c.bf16 %v8362, %v8361
        %v8428 = vpack.c.bf16 %v8364, %v8363
        %v8429 = vunpack.c.l.bf16 %v3908
        %v8430 = vunpack.c.h.bf16 %v3908
        %v8431 = vunpack.c.l.bf16 %v3909
        %v8432 = vunpack.c.h.bf16 %v3909
        %v8433 = vunpack.c.l.bf16 %v3910
        %v8434 = vunpack.c.h.bf16 %v3910
        %v8435 = vunpack.c.l.bf16 %v3911
        %v8436 = vunpack.c.h.bf16 %v3911
        %v8437 = vunpack.c.l.bf16 %v3912
        %v8438 = vunpack.c.h.bf16 %v3912
        %v8439 = vunpack.c.l.bf16 %v3913
        %v8440 = vunpack.c.h.bf16 %v3913
        %v8441 = vunpack.c.l.bf16 %v3914
        %v8442 = vunpack.c.h.bf16 %v3914
        %v8443 = vunpack.c.l.bf16 %v3915
        %v8444 = vunpack.c.h.bf16 %v3915
        %v8445 = vunpack.c.l.bf16 %v3916
        %v8446 = vunpack.c.h.bf16 %v3916
        %v8447 = vunpack.c.l.bf16 %v3917
        %v8448 = vunpack.c.h.bf16 %v3917
        %v8449 = vunpack.c.l.bf16 %v3918
        %v8450 = vunpack.c.h.bf16 %v3918
        %v8451 = vunpack.c.l.bf16 %v3919
        %v8452 = vunpack.c.h.bf16 %v3919
        %v8453 = vunpack.c.l.bf16 %v3920
        %v8454 = vunpack.c.h.bf16 %v3920
        %v8455 = vunpack.c.l.bf16 %v3921
        %v8456 = vunpack.c.h.bf16 %v3921
        %v8457 = vunpack.c.l.bf16 %v3922
        %v8458 = vunpack.c.h.bf16 %v3922
        %v8459 = vunpack.c.l.bf16 %v3923
        %v8460 = vunpack.c.h.bf16 %v3923
        %v8461 = vunpack.c.l.bf16 %v3924
        %v8462 = vunpack.c.h.bf16 %v3924
        %v8463 = vunpack.c.l.bf16 %v3925
        %v8464 = vunpack.c.h.bf16 %v3925
        %v8465 = vunpack.c.l.bf16 %v3926
        %v8466 = vunpack.c.h.bf16 %v3926
        %v8467 = vunpack.c.l.bf16 %v3927
        %v8468 = vunpack.c.h.bf16 %v3927
        %v8469 = vunpack.c.l.bf16 %v3928
        %v8470 = vunpack.c.h.bf16 %v3928
        %v8471 = vunpack.c.l.bf16 %v3929
        %v8472 = vunpack.c.h.bf16 %v3929
        %v8473 = vunpack.c.l.bf16 %v3930
        %v8474 = vunpack.c.h.bf16 %v3930
        %v8475 = vunpack.c.l.bf16 %v3931
        %v8476 = vunpack.c.h.bf16 %v3931
        %v8477 = vunpack.c.l.bf16 %v3932
        %v8478 = vunpack.c.h.bf16 %v3932
        %v8479 = vunpack.c.l.bf16 %v3933
        %v8480 = vunpack.c.h.bf16 %v3933
        %v8481 = vunpack.c.l.bf16 %v3934
        %v8482 = vunpack.c.h.bf16 %v3934
        %v8483 = vunpack.c.l.bf16 %v3935
        %v8484 = vunpack.c.h.bf16 %v3935
        %v8485 = vunpack.c.l.bf16 %v3936
        %v8486 = vunpack.c.h.bf16 %v3936
        %v8487 = vunpack.c.l.bf16 %v3937
        %v8488 = vunpack.c.h.bf16 %v3937
        %v8489 = vunpack.c.l.bf16 %v3938
        %v8490 = vunpack.c.h.bf16 %v3938
        %v8491 = vunpack.c.l.bf16 %v3939
        %v8492 = vunpack.c.h.bf16 %v3939
        %v8493 = vunpack.c.l.bf16 %v3940
        %v8494 = vunpack.c.h.bf16 %v3940
        %v8495 = vunpack.c.l.bf16 %v3941
        %v8496 = vunpack.c.h.bf16 %v3941
        %v8497 = vunpack.c.l.bf16 %v3942
        %v8498 = vunpack.c.h.bf16 %v3942
        %v8499 = vunpack.c.l.bf16 %v3943
        %v8500 = vunpack.c.h.bf16 %v3943
        %v8501 = vunpack.c.l.bf16 %v3944
        %v8502 = vunpack.c.h.bf16 %v3944
        %v8503 = vunpack.c.l.bf16 %v3945
        %v8504 = vunpack.c.h.bf16 %v3945
        %v8505 = vunpack.c.l.bf16 %v3946
        %v8506 = vunpack.c.h.bf16 %v3946
        %v8507 = vunpack.c.l.bf16 %v3947
        %v8508 = vunpack.c.h.bf16 %v3947
        %v8509 = vunpack.c.l.bf16 %v3948
        %v8510 = vunpack.c.h.bf16 %v3948
        %v8511 = vunpack.c.l.bf16 %v3949
        %v8512 = vunpack.c.h.bf16 %v3949
        %v8513 = vunpack.c.l.bf16 %v3950
        %v8514 = vunpack.c.h.bf16 %v3950
        %v8515 = vunpack.c.l.bf16 %v3951
        %v8516 = vunpack.c.h.bf16 %v3951
        %v8517 = vunpack.c.l.bf16 %v3952
        %v8518 = vunpack.c.h.bf16 %v3952
        %v8519 = vunpack.c.l.bf16 %v3953
        %v8520 = vunpack.c.h.bf16 %v3953
        %v8521 = vunpack.c.l.bf16 %v3954
        %v8522 = vunpack.c.h.bf16 %v3954
        %v8523 = vunpack.c.l.bf16 %v3955
        %v8524 = vunpack.c.h.bf16 %v3955
        %v8525 = vunpack.c.l.bf16 %v3956
        %v8526 = vunpack.c.h.bf16 %v3956
        %v8527 = vunpack.c.l.bf16 %v3957
        %v8528 = vunpack.c.h.bf16 %v3957
        %v8529 = vunpack.c.l.bf16 %v3958
        %v8530 = vunpack.c.h.bf16 %v3958
        %v8531 = vunpack.c.l.bf16 %v3959
        %v8532 = vunpack.c.h.bf16 %v3959
        %v8533 = vunpack.c.l.bf16 %v3960
        %v8534 = vunpack.c.h.bf16 %v3960
        %v8535 = vunpack.c.l.bf16 %v3961
        %v8536 = vunpack.c.h.bf16 %v3961
        %v8537 = vunpack.c.l.bf16 %v3962
        %v8538 = vunpack.c.h.bf16 %v3962
        %v8539 = vunpack.c.l.bf16 %v3963
        %v8540 = vunpack.c.h.bf16 %v3963
        %v8541 = vunpack.c.l.bf16 %v3964
        %v8542 = vunpack.c.h.bf16 %v3964
        %v8543 = vunpack.c.l.bf16 %v3965
        %v8544 = vunpack.c.h.bf16 %v3965
        %v8545 = vunpack.c.l.bf16 %v3966
        %v8546 = vunpack.c.h.bf16 %v3966
        %v8547 = vunpack.c.l.bf16 %v3967
        %v8548 = vunpack.c.h.bf16 %v3967
        %v8549 = vunpack.c.l.bf16 %v3968
        %v8550 = vunpack.c.h.bf16 %v3968
        %v8551 = vunpack.c.l.bf16 %v3969
        %v8552 = vunpack.c.h.bf16 %v3969
        %v8553 = vunpack.c.l.bf16 %v3970
        %v8554 = vunpack.c.h.bf16 %v3970
        %v8555 = vunpack.c.l.bf16 %v3971
        %v8556 = vunpack.c.h.bf16 %v3971
        %v8557 = vunpack.c.l.bf16 %v8365
        %v8558 = vunpack.c.h.bf16 %v8365
        %v8559 = vunpack.c.l.bf16 %v8366
        %v8560 = vunpack.c.h.bf16 %v8366
        %v8561 = vunpack.c.l.bf16 %v8367
        %v8562 = vunpack.c.h.bf16 %v8367
        %v8563 = vunpack.c.l.bf16 %v8368
        %v8564 = vunpack.c.h.bf16 %v8368
        %v8565 = vunpack.c.l.bf16 %v8369
        %v8566 = vunpack.c.h.bf16 %v8369
        %v8567 = vunpack.c.l.bf16 %v8370
        %v8568 = vunpack.c.h.bf16 %v8370
        %v8569 = vunpack.c.l.bf16 %v8371
        %v8570 = vunpack.c.h.bf16 %v8371
        %v8571 = vunpack.c.l.bf16 %v8372
        %v8572 = vunpack.c.h.bf16 %v8372
        %v8573 = vunpack.c.l.bf16 %v8373
        %v8574 = vunpack.c.h.bf16 %v8373
        %v8575 = vunpack.c.l.bf16 %v8374
        %v8576 = vunpack.c.h.bf16 %v8374
        %v8577 = vunpack.c.l.bf16 %v8375
        %v8578 = vunpack.c.h.bf16 %v8375
        %v8579 = vunpack.c.l.bf16 %v8376
        %v8580 = vunpack.c.h.bf16 %v8376
        %v8581 = vunpack.c.l.bf16 %v8377
        %v8582 = vunpack.c.h.bf16 %v8377
        %v8583 = vunpack.c.l.bf16 %v8378
        %v8584 = vunpack.c.h.bf16 %v8378
        %v8585 = vunpack.c.l.bf16 %v8379
        %v8586 = vunpack.c.h.bf16 %v8379
        %v8587 = vunpack.c.l.bf16 %v8380
        %v8588 = vunpack.c.h.bf16 %v8380
        %v8589 = vunpack.c.l.bf16 %v8381
        %v8590 = vunpack.c.h.bf16 %v8381
        %v8591 = vunpack.c.l.bf16 %v8382
        %v8592 = vunpack.c.h.bf16 %v8382
        %v8593 = vunpack.c.l.bf16 %v8383
        %v8594 = vunpack.c.h.bf16 %v8383
        %v8595 = vunpack.c.l.bf16 %v8384
        %v8596 = vunpack.c.h.bf16 %v8384
        %v8597 = vunpack.c.l.bf16 %v8385
        %v8598 = vunpack.c.h.bf16 %v8385
        %v8599 = vunpack.c.l.bf16 %v8386
        %v8600 = vunpack.c.h.bf16 %v8386
        %v8601 = vunpack.c.l.bf16 %v8387
        %v8602 = vunpack.c.h.bf16 %v8387
        %v8603 = vunpack.c.l.bf16 %v8388
        %v8604 = vunpack.c.h.bf16 %v8388
        %v8605 = vunpack.c.l.bf16 %v8389
        %v8606 = vunpack.c.h.bf16 %v8389
        %v8607 = vunpack.c.l.bf16 %v8390
        %v8608 = vunpack.c.h.bf16 %v8390
        %v8609 = vunpack.c.l.bf16 %v8391
        %v8610 = vunpack.c.h.bf16 %v8391
        %v8611 = vunpack.c.l.bf16 %v8392
        %v8612 = vunpack.c.h.bf16 %v8392
        %v8613 = vunpack.c.l.bf16 %v8393
        %v8614 = vunpack.c.h.bf16 %v8393
        %v8615 = vunpack.c.l.bf16 %v8394
        %v8616 = vunpack.c.h.bf16 %v8394
        %v8617 = vunpack.c.l.bf16 %v8395
        %v8618 = vunpack.c.h.bf16 %v8395
        %v8619 = vunpack.c.l.bf16 %v8396
        %v8620 = vunpack.c.h.bf16 %v8396
        %v8621 = vunpack.c.l.bf16 %v8397
        %v8622 = vunpack.c.h.bf16 %v8397
        %v8623 = vunpack.c.l.bf16 %v8398
        %v8624 = vunpack.c.h.bf16 %v8398
        %v8625 = vunpack.c.l.bf16 %v8399
        %v8626 = vunpack.c.h.bf16 %v8399
        %v8627 = vunpack.c.l.bf16 %v8400
        %v8628 = vunpack.c.h.bf16 %v8400
        %v8629 = vunpack.c.l.bf16 %v8401
        %v8630 = vunpack.c.h.bf16 %v8401
        %v8631 = vunpack.c.l.bf16 %v8402
        %v8632 = vunpack.c.h.bf16 %v8402
        %v8633 = vunpack.c.l.bf16 %v8403
        %v8634 = vunpack.c.h.bf16 %v8403
        %v8635 = vunpack.c.l.bf16 %v8404
        %v8636 = vunpack.c.h.bf16 %v8404
        %v8637 = vunpack.c.l.bf16 %v8405
        %v8638 = vunpack.c.h.bf16 %v8405
        %v8639 = vunpack.c.l.bf16 %v8406
        %v8640 = vunpack.c.h.bf16 %v8406
        %v8641 = vunpack.c.l.bf16 %v8407
        %v8642 = vunpack.c.h.bf16 %v8407
        %v8643 = vunpack.c.l.bf16 %v8408
        %v8644 = vunpack.c.h.bf16 %v8408
        %v8645 = vunpack.c.l.bf16 %v8409
        %v8646 = vunpack.c.h.bf16 %v8409
        %v8647 = vunpack.c.l.bf16 %v8410
        %v8648 = vunpack.c.h.bf16 %v8410
        %v8649 = vunpack.c.l.bf16 %v8411
        %v8650 = vunpack.c.h.bf16 %v8411
        %v8651 = vunpack.c.l.bf16 %v8412
        %v8652 = vunpack.c.h.bf16 %v8412
        %v8653 = vunpack.c.l.bf16 %v8413
        %v8654 = vunpack.c.h.bf16 %v8413
        %v8655 = vunpack.c.l.bf16 %v8414
        %v8656 = vunpack.c.h.bf16 %v8414
        %v8657 = vunpack.c.l.bf16 %v8415
        %v8658 = vunpack.c.h.bf16 %v8415
        %v8659 = vunpack.c.l.bf16 %v8416
        %v8660 = vunpack.c.h.bf16 %v8416
        %v8661 = vunpack.c.l.bf16 %v8417
        %v8662 = vunpack.c.h.bf16 %v8417
        %v8663 = vunpack.c.l.bf16 %v8418
        %v8664 = vunpack.c.h.bf16 %v8418
        %v8665 = vunpack.c.l.bf16 %v8419
        %v8666 = vunpack.c.h.bf16 %v8419
        %v8667 = vunpack.c.l.bf16 %v8420
        %v8668 = vunpack.c.h.bf16 %v8420
        %v8669 = vunpack.c.l.bf16 %v8421
        %v8670 = vunpack.c.h.bf16 %v8421
        %v8671 = vunpack.c.l.bf16 %v8422
        %v8672 = vunpack.c.h.bf16 %v8422
        %v8673 = vunpack.c.l.bf16 %v8423
        %v8674 = vunpack.c.h.bf16 %v8423
        %v8675 = vunpack.c.l.bf16 %v8424
        %v8676 = vunpack.c.h.bf16 %v8424
        %v8677 = vunpack.c.l.bf16 %v8425
        %v8678 = vunpack.c.h.bf16 %v8425
        %v8679 = vunpack.c.l.bf16 %v8426
        %v8680 = vunpack.c.h.bf16 %v8426
        %v8681 = vunpack.c.l.bf16 %v8427
        %v8682 = vunpack.c.h.bf16 %v8427
        %v8683 = vunpack.c.l.bf16 %v8428
        %v8684 = vunpack.c.h.bf16 %v8428
        %v8685 = vmul.f32 %v8429, %v8557
        %v8686 = vmul.f32 %v8430, %v8558
        %v8687 = vmul.f32 %v8431, %v8559
        %v8688 = vmul.f32 %v8432, %v8560
        %v8689 = vmul.f32 %v8433, %v8561
        %v8690 = vmul.f32 %v8434, %v8562
        %v8691 = vmul.f32 %v8435, %v8563
        %v8692 = vmul.f32 %v8436, %v8564
        %v8693 = vmul.f32 %v8437, %v8565
        %v8694 = vmul.f32 %v8438, %v8566
        %v8695 = vmul.f32 %v8439, %v8567
        %v8696 = vmul.f32 %v8440, %v8568
        %v8697 = vmul.f32 %v8441, %v8569
        %v8698 = vmul.f32 %v8442, %v8570
        %v8699 = vmul.f32 %v8443, %v8571
        %v8700 = vmul.f32 %v8444, %v8572
        %v8701 = vmul.f32 %v8445, %v8573
        %v8702 = vmul.f32 %v8446, %v8574
        %v8703 = vmul.f32 %v8447, %v8575
        %v8704 = vmul.f32 %v8448, %v8576
        %v8705 = vmul.f32 %v8449, %v8577
        %v8706 = vmul.f32 %v8450, %v8578
        %v8707 = vmul.f32 %v8451, %v8579
        %v8708 = vmul.f32 %v8452, %v8580
        %v8709 = vmul.f32 %v8453, %v8581
        %v8710 = vmul.f32 %v8454, %v8582
        %v8711 = vmul.f32 %v8455, %v8583
        %v8712 = vmul.f32 %v8456, %v8584
        %v8713 = vmul.f32 %v8457, %v8585
        %v8714 = vmul.f32 %v8458, %v8586
        %v8715 = vmul.f32 %v8459, %v8587
        %v8716 = vmul.f32 %v8460, %v8588
        %v8717 = vmul.f32 %v8461, %v8589
        %v8718 = vmul.f32 %v8462, %v8590
        %v8719 = vmul.f32 %v8463, %v8591
        %v8720 = vmul.f32 %v8464, %v8592
        %v8721 = vmul.f32 %v8465, %v8593
        %v8722 = vmul.f32 %v8466, %v8594
        %v8723 = vmul.f32 %v8467, %v8595
        %v8724 = vmul.f32 %v8468, %v8596
        %v8725 = vmul.f32 %v8469, %v8597
        %v8726 = vmul.f32 %v8470, %v8598
        %v8727 = vmul.f32 %v8471, %v8599
        %v8728 = vmul.f32 %v8472, %v8600
        %v8729 = vmul.f32 %v8473, %v8601
        %v8730 = vmul.f32 %v8474, %v8602
        %v8731 = vmul.f32 %v8475, %v8603
        %v8732 = vmul.f32 %v8476, %v8604
        %v8733 = vmul.f32 %v8477, %v8605
        %v8734 = vmul.f32 %v8478, %v8606
        %v8735 = vmul.f32 %v8479, %v8607
        %v8736 = vmul.f32 %v8480, %v8608
        %v8737 = vmul.f32 %v8481, %v8609
        %v8738 = vmul.f32 %v8482, %v8610
        %v8739 = vmul.f32 %v8483, %v8611
        %v8740 = vmul.f32 %v8484, %v8612
        %v8741 = vmul.f32 %v8485, %v8613
        %v8742 = vmul.f32 %v8486, %v8614
        %v8743 = vmul.f32 %v8487, %v8615
        %v8744 = vmul.f32 %v8488, %v8616
        %v8745 = vmul.f32 %v8489, %v8617
        %v8746 = vmul.f32 %v8490, %v8618
        %v8747 = vmul.f32 %v8491, %v8619
        %v8748 = vmul.f32 %v8492, %v8620
        %v8749 = vmul.f32 %v8493, %v8621
        %v8750 = vmul.f32 %v8494, %v8622
        %v8751 = vmul.f32 %v8495, %v8623
        %v8752 = vmul.f32 %v8496, %v8624
        %v8753 = vmul.f32 %v8497, %v8625
        %v8754 = vmul.f32 %v8498, %v8626
        %v8755 = vmul.f32 %v8499, %v8627
        %v8756 = vmul.f32 %v8500, %v8628
        %v8757 = vmul.f32 %v8501, %v8629
        %v8758 = vmul.f32 %v8502, %v8630
        %v8759 = vmul.f32 %v8503, %v8631
        %v8760 = vmul.f32 %v8504, %v8632
        %v8761 = vmul.f32 %v8505, %v8633
        %v8762 = vmul.f32 %v8506, %v8634
        %v8763 = vmul.f32 %v8507, %v8635
        %v8764 = vmul.f32 %v8508, %v8636
        %v8765 = vmul.f32 %v8509, %v8637
        %v8766 = vmul.f32 %v8510, %v8638
        %v8767 = vmul.f32 %v8511, %v8639
        %v8768 = vmul.f32 %v8512, %v8640
        %v8769 = vmul.f32 %v8513, %v8641
        %v8770 = vmul.f32 %v8514, %v8642
        %v8771 = vmul.f32 %v8515, %v8643
        %v8772 = vmul.f32 %v8516, %v8644
        %v8773 = vmul.f32 %v8517, %v8645
        %v8774 = vmul.f32 %v8518, %v8646
        %v8775 = vmul.f32 %v8519, %v8647
        %v8776 = vmul.f32 %v8520, %v8648
        %v8777 = vmul.f32 %v8521, %v8649
        %v8778 = vmul.f32 %v8522, %v8650
        %v8779 = vmul.f32 %v8523, %v8651
        %v8780 = vmul.f32 %v8524, %v8652
        %v8781 = vmul.f32 %v8525, %v8653
        %v8782 = vmul.f32 %v8526, %v8654
        %v8783 = vmul.f32 %v8527, %v8655
        %v8784 = vmul.f32 %v8528, %v8656
        %v8785 = vmul.f32 %v8529, %v8657
        %v8786 = vmul.f32 %v8530, %v8658
        %v8787 = vmul.f32 %v8531, %v8659
        %v8788 = vmul.f32 %v8532, %v8660
        %v8789 = vmul.f32 %v8533, %v8661
        %v8790 = vmul.f32 %v8534, %v8662
        %v8791 = vmul.f32 %v8535, %v8663
        %v8792 = vmul.f32 %v8536, %v8664
        %v8793 = vmul.f32 %v8537, %v8665
        %v8794 = vmul.f32 %v8538, %v8666
        %v8795 = vmul.f32 %v8539, %v8667
        %v8796 = vmul.f32 %v8540, %v8668
        %v8797 = vmul.f32 %v8541, %v8669
        %v8798 = vmul.f32 %v8542, %v8670
        %v8799 = vmul.f32 %v8543, %v8671
        %v8800 = vmul.f32 %v8544, %v8672
        %v8801 = vmul.f32 %v8545, %v8673
        %v8802 = vmul.f32 %v8546, %v8674
        %v8803 = vmul.f32 %v8547, %v8675
        %v8804 = vmul.f32 %v8548, %v8676
        %v8805 = vmul.f32 %v8549, %v8677
        %v8806 = vmul.f32 %v8550, %v8678
        %v8807 = vmul.f32 %v8551, %v8679
        %v8808 = vmul.f32 %v8552, %v8680
        %v8809 = vmul.f32 %v8553, %v8681
        %v8810 = vmul.f32 %v8554, %v8682
        %v8811 = vmul.f32 %v8555, %v8683
        %v8812 = vmul.f32 %v8556, %v8684
        %v8813 = vpack.c.bf16 %v8693, %v8685
        %v8814 = vpack.c.bf16 %v8694, %v8686
        %v8815 = vpack.c.bf16 %v8695, %v8687
        %v8816 = vpack.c.bf16 %v8696, %v8688
        %v8817 = vpack.c.bf16 %v8697, %v8689
        %v8818 = vpack.c.bf16 %v8698, %v8690
        %v8819 = vpack.c.bf16 %v8699, %v8691
        %v8820 = vpack.c.bf16 %v8700, %v8692
        %v8821 = vpack.c.bf16 %v8709, %v8701
        %v8822 = vpack.c.bf16 %v8710, %v8702
        %v8823 = vpack.c.bf16 %v8711, %v8703
        %v8824 = vpack.c.bf16 %v8712, %v8704
        %v8825 = vpack.c.bf16 %v8713, %v8705
        %v8826 = vpack.c.bf16 %v8714, %v8706
        %v8827 = vpack.c.bf16 %v8715, %v8707
        %v8828 = vpack.c.bf16 %v8716, %v8708
        %v8829 = vpack.c.bf16 %v8725, %v8717
        %v8830 = vpack.c.bf16 %v8726, %v8718
        %v8831 = vpack.c.bf16 %v8727, %v8719
        %v8832 = vpack.c.bf16 %v8728, %v8720
        %v8833 = vpack.c.bf16 %v8729, %v8721
        %v8834 = vpack.c.bf16 %v8730, %v8722
        %v8835 = vpack.c.bf16 %v8731, %v8723
        %v8836 = vpack.c.bf16 %v8732, %v8724
        %v8837 = vpack.c.bf16 %v8741, %v8733
        %v8838 = vpack.c.bf16 %v8742, %v8734
        %v8839 = vpack.c.bf16 %v8743, %v8735
        %v8840 = vpack.c.bf16 %v8744, %v8736
        %v8841 = vpack.c.bf16 %v8745, %v8737
        %v8842 = vpack.c.bf16 %v8746, %v8738
        %v8843 = vpack.c.bf16 %v8747, %v8739
        %v8844 = vpack.c.bf16 %v8748, %v8740
        %v8845 = vpack.c.bf16 %v8757, %v8749
        %v8846 = vpack.c.bf16 %v8758, %v8750
        %v8847 = vpack.c.bf16 %v8759, %v8751
        %v8848 = vpack.c.bf16 %v8760, %v8752
        %v8849 = vpack.c.bf16 %v8761, %v8753
        %v8850 = vpack.c.bf16 %v8762, %v8754
        %v8851 = vpack.c.bf16 %v8763, %v8755
        %v8852 = vpack.c.bf16 %v8764, %v8756
        %v8853 = vpack.c.bf16 %v8773, %v8765
        %v8854 = vpack.c.bf16 %v8774, %v8766
        %v8855 = vpack.c.bf16 %v8775, %v8767
        %v8856 = vpack.c.bf16 %v8776, %v8768
        %v8857 = vpack.c.bf16 %v8777, %v8769
        %v8858 = vpack.c.bf16 %v8778, %v8770
        %v8859 = vpack.c.bf16 %v8779, %v8771
        %v8860 = vpack.c.bf16 %v8780, %v8772
        %v8861 = vpack.c.bf16 %v8789, %v8781
        %v8862 = vpack.c.bf16 %v8790, %v8782
        %v8863 = vpack.c.bf16 %v8791, %v8783
        %v8864 = vpack.c.bf16 %v8792, %v8784
        %v8865 = vpack.c.bf16 %v8793, %v8785
        %v8866 = vpack.c.bf16 %v8794, %v8786
        %v8867 = vpack.c.bf16 %v8795, %v8787
        %v8868 = vpack.c.bf16 %v8796, %v8788
        %v8869 = vpack.c.bf16 %v8805, %v8797
        %v8870 = vpack.c.bf16 %v8806, %v8798
        %v8871 = vpack.c.bf16 %v8807, %v8799
        %v8872 = vpack.c.bf16 %v8808, %v8800
        %v8873 = vpack.c.bf16 %v8809, %v8801
        %v8874 = vpack.c.bf16 %v8810, %v8802
        %v8875 = vpack.c.bf16 %v8811, %v8803
        %v8876 = vpack.c.bf16 %v8812, %v8804
        %v8877 = vld [vmem:[%s7] sm:$0xf]
        %v8878 = vld [vmem:[%s7 + $0x4] sm:$0xf]
        %v8879 = vld [vmem:[%s7 + $0x8] sm:$0xf]
        %v8880 = vld [vmem:[%s7 + $0xc] sm:$0xf]
        %v8881 = vld [vmem:[%s7 + $0x10] sm:$0xf]
        %v8882 = vld [vmem:[%s7 + $0x14] sm:$0xf]
        %v8883 = vld [vmem:[%s7 + $0x18] sm:$0xf]
        %v8884 = vld [vmem:[%s7 + $0x1c] sm:$0xf]
        %v8893 = vunpack.c.l.b16 %v8877
        %v8894 = vunpack.c.l.b16 %v8878
        %v8895 = vunpack.c.l.b16 %v8879
        %v8896 = vunpack.c.l.b16 %v8880
        %v8897 = vunpack.c.l.b16 %v8881
        %v8898 = vunpack.c.l.b16 %v8882
        %v8899 = vunpack.c.l.b16 %v8883
        %v8900 = vunpack.c.l.b16 %v8884
        %v8901 = vpack.c.b16 %v8894, %v8893
        %v8902 = vpack.c.b16 %v8896, %v8895
        %v8903 = vpack.c.b16 %v8898, %v8897
        %v8904 = vpack.c.b16 %v8900, %v8899
        %8909 = vmatpush.bf16.msra.mxu0 %v8869
        %8910 = vmatpush.bf16.msra.mxu0 %v8861
        %8911 = vmatpush.bf16.msra.mxu0 %v8853
        %8912 = vmatpush.bf16.msra.mxu0 %v8845
        %8913 = vmatpush.bf16.msra.mxu0 %v8837
        %8914 = vmatpush.bf16.msra.mxu0 %v8829
        %8915 = vmatpush.bf16.msra.mxu0 %v8821
        %8916 = vmatpush.bf16.msra.mxu0 %v8813
        %8917 = vmatmul.bf16.gmra.mxu0 %v8901
        %v8918 = vpop.f32.mrf.mxu0
        %v8919 = vadd.f32 0.0, %v8918
        %v8920 = vpop.f32.mrf.mxu0
        %v8921 = vadd.f32 0.0, %v8920
        %8922 = vmatmul.bf16.gmra.mxu0 %v8902
        %v8923 = vpop.f32.mrf.mxu0
        %v8924 = vadd.f32 0.0, %v8923
        %v8925 = vpop.f32.mrf.mxu0
        %v8926 = vadd.f32 0.0, %v8925
        %8927 = vmatmul.bf16.gmra.mxu0 %v8903
        %v8928 = vpop.f32.mrf.mxu0
        %v8929 = vadd.f32 0.0, %v8928
        %v8930 = vpop.f32.mrf.mxu0
        %v8931 = vadd.f32 0.0, %v8930
        %8932 = vmatmul.bf16.gmra.mxu0 %v8904
        %v8933 = vpop.f32.mrf.mxu0
        %v8934 = vadd.f32 0.0, %v8933
        %v8935 = vpop.f32.mrf.mxu0
        %v8936 = vadd.f32 0.0, %v8935
        %8937 = vdwg.mxu0
        %8938 = vmatpush.bf16.msra.mxu0 %v8870
        %8939 = vmatpush.bf16.msra.mxu0 %v8862
        %8940 = vmatpush.bf16.msra.mxu0 %v8854
        %8941 = vmatpush.bf16.msra.mxu0 %v8846
        %8942 = vmatpush.bf16.msra.mxu0 %v8838
        %8943 = vmatpush.bf16.msra.mxu0 %v8830
        %8944 = vmatpush.bf16.msra.mxu0 %v8822
        %8945 = vmatpush.bf16.msra.mxu0 %v8814
        %8946 = vmatmul.bf16.gmra.mxu0 %v8901
        %v8947 = vpop.f32.mrf.mxu0
        %v8948 = vadd.f32 0.0, %v8947
        %v8949 = vpop.f32.mrf.mxu0
        %v8950 = vadd.f32 0.0, %v8949
        %8951 = vmatmul.bf16.gmra.mxu0 %v8902
        %v8952 = vpop.f32.mrf.mxu0
        %v8953 = vadd.f32 0.0, %v8952
        %v8954 = vpop.f32.mrf.mxu0
        %v8955 = vadd.f32 0.0, %v8954
        %8956 = vmatmul.bf16.gmra.mxu0 %v8903
        %v8957 = vpop.f32.mrf.mxu0
        %v8958 = vadd.f32 0.0, %v8957
        %v8959 = vpop.f32.mrf.mxu0
        %v8960 = vadd.f32 0.0, %v8959
        %8961 = vmatmul.bf16.gmra.mxu0 %v8904
        %v8962 = vpop.f32.mrf.mxu0
        %v8963 = vadd.f32 0.0, %v8962
        %v8964 = vpop.f32.mrf.mxu0
        %v8965 = vadd.f32 0.0, %v8964
        %8966 = vdwg.mxu0
        %8967 = vmatpush.bf16.msra.mxu0 %v8871
        %8968 = vmatpush.bf16.msra.mxu0 %v8863
        %8969 = vmatpush.bf16.msra.mxu0 %v8855
        %8970 = vmatpush.bf16.msra.mxu0 %v8847
        %8971 = vmatpush.bf16.msra.mxu0 %v8839
        %8972 = vmatpush.bf16.msra.mxu0 %v8831
        %8973 = vmatpush.bf16.msra.mxu0 %v8823
        %8974 = vmatpush.bf16.msra.mxu0 %v8815
        %8975 = vmatmul.bf16.gmra.mxu0 %v8901
        %v8976 = vpop.f32.mrf.mxu0
        %v8977 = vadd.f32 0.0, %v8976
        %v8978 = vpop.f32.mrf.mxu0
        %v8979 = vadd.f32 0.0, %v8978
        %8980 = vmatmul.bf16.gmra.mxu0 %v8902
        %v8981 = vpop.f32.mrf.mxu0
        %v8982 = vadd.f32 0.0, %v8981
        %v8983 = vpop.f32.mrf.mxu0
        %v8984 = vadd.f32 0.0, %v8983
        %8985 = vmatmul.bf16.gmra.mxu0 %v8903
        %v8986 = vpop.f32.mrf.mxu0
        %v8987 = vadd.f32 0.0, %v8986
        %v8988 = vpop.f32.mrf.mxu0
        %v8989 = vadd.f32 0.0, %v8988
        %8990 = vmatmul.bf16.gmra.mxu0 %v8904
        %v8991 = vpop.f32.mrf.mxu0
        %v8992 = vadd.f32 0.0, %v8991
        %v8993 = vpop.f32.mrf.mxu0
        %v8994 = vadd.f32 0.0, %v8993
        %8995 = vdwg.mxu0
        %8996 = vmatpush.bf16.msra.mxu0 %v8872
        %8997 = vmatpush.bf16.msra.mxu0 %v8864
        %8998 = vmatpush.bf16.msra.mxu0 %v8856
        %8999 = vmatpush.bf16.msra.mxu0 %v8848
        %9000 = vmatpush.bf16.msra.mxu0 %v8840
        %9001 = vmatpush.bf16.msra.mxu0 %v8832
        %9002 = vmatpush.bf16.msra.mxu0 %v8824
        %9003 = vmatpush.bf16.msra.mxu0 %v8816
        %9004 = vmatmul.bf16.gmra.mxu0 %v8901
        %v9005 = vpop.f32.mrf.mxu0
        %v9006 = vadd.f32 0.0, %v9005
        %v9007 = vpop.f32.mrf.mxu0
        %v9008 = vadd.f32 0.0, %v9007
        %9009 = vmatmul.bf16.gmra.mxu0 %v8902
        %v9010 = vpop.f32.mrf.mxu0
        %v9011 = vadd.f32 0.0, %v9010
        %v9012 = vpop.f32.mrf.mxu0
        %v9013 = vadd.f32 0.0, %v9012
        %9014 = vmatmul.bf16.gmra.mxu0 %v8903
        %v9015 = vpop.f32.mrf.mxu0
        %v9016 = vadd.f32 0.0, %v9015
        %v9017 = vpop.f32.mrf.mxu0
        %v9018 = vadd.f32 0.0, %v9017
        %9019 = vmatmul.bf16.gmra.mxu0 %v8904
        %v9020 = vpop.f32.mrf.mxu0
        %v9021 = vadd.f32 0.0, %v9020
        %v9022 = vpop.f32.mrf.mxu0
        %v9023 = vadd.f32 0.0, %v9022
        %9024 = vdwg.mxu0
        %9025 = vmatpush.bf16.msra.mxu0 %v8873
        %9026 = vmatpush.bf16.msra.mxu0 %v8865
        %9027 = vmatpush.bf16.msra.mxu0 %v8857
        %9028 = vmatpush.bf16.msra.mxu0 %v8849
        %9029 = vmatpush.bf16.msra.mxu0 %v8841
        %9030 = vmatpush.bf16.msra.mxu0 %v8833
        %9031 = vmatpush.bf16.msra.mxu0 %v8825
        %9032 = vmatpush.bf16.msra.mxu0 %v8817
        %9033 = vmatmul.bf16.gmra.mxu0 %v8901
        %v9034 = vpop.f32.mrf.mxu0
        %v9035 = vadd.f32 0.0, %v9034
        %v9036 = vpop.f32.mrf.mxu0
        %v9037 = vadd.f32 0.0, %v9036
        %9038 = vmatmul.bf16.gmra.mxu0 %v8902
        %v9039 = vpop.f32.mrf.mxu0
        %v9040 = vadd.f32 0.0, %v9039
        %v9041 = vpop.f32.mrf.mxu0
        %v9042 = vadd.f32 0.0, %v9041
        %9043 = vmatmul.bf16.gmra.mxu0 %v8903
        %v9044 = vpop.f32.mrf.mxu0
        %v9045 = vadd.f32 0.0, %v9044
        %v9046 = vpop.f32.mrf.mxu0
        %v9047 = vadd.f32 0.0, %v9046
        %9048 = vmatmul.bf16.gmra.mxu0 %v8904
        %v9049 = vpop.f32.mrf.mxu0
        %v9050 = vadd.f32 0.0, %v9049
        %v9051 = vpop.f32.mrf.mxu0
        %v9052 = vadd.f32 0.0, %v9051
        %9053 = vdwg.mxu0
        %9054 = vmatpush.bf16.msra.mxu0 %v8874
        %9055 = vmatpush.bf16.msra.mxu0 %v8866
        %9056 = vmatpush.bf16.msra.mxu0 %v8858
        %9057 = vmatpush.bf16.msra.mxu0 %v8850
        %9058 = vmatpush.bf16.msra.mxu0 %v8842
        %9059 = vmatpush.bf16.msra.mxu0 %v8834
        %9060 = vmatpush.bf16.msra.mxu0 %v8826
        %9061 = vmatpush.bf16.msra.mxu0 %v8818
        %9062 = vmatmul.bf16.gmra.mxu0 %v8901
        %v9063 = vpop.f32.mrf.mxu0
        %v9064 = vadd.f32 0.0, %v9063
        %v9065 = vpop.f32.mrf.mxu0
        %v9066 = vadd.f32 0.0, %v9065
        %9067 = vmatmul.bf16.gmra.mxu0 %v8902
        %v9068 = vpop.f32.mrf.mxu0
        %v9069 = vadd.f32 0.0, %v9068
        %v9070 = vpop.f32.mrf.mxu0
        %v9071 = vadd.f32 0.0, %v9070
        %9072 = vmatmul.bf16.gmra.mxu0 %v8903
        %v9073 = vpop.f32.mrf.mxu0
        %v9074 = vadd.f32 0.0, %v9073
        %v9075 = vpop.f32.mrf.mxu0
        %v9076 = vadd.f32 0.0, %v9075
        %9077 = vmatmul.bf16.gmra.mxu0 %v8904
        %v9078 = vpop.f32.mrf.mxu0
        %v9079 = vadd.f32 0.0, %v9078
        %v9080 = vpop.f32.mrf.mxu0
        %v9081 = vadd.f32 0.0, %v9080
        %9082 = vdwg.mxu0
        %9083 = vmatpush.bf16.msra.mxu0 %v8875
        %9084 = vmatpush.bf16.msra.mxu0 %v8867
        %9085 = vmatpush.bf16.msra.mxu0 %v8859
        %9086 = vmatpush.bf16.msra.mxu0 %v8851
        %9087 = vmatpush.bf16.msra.mxu0 %v8843
        %9088 = vmatpush.bf16.msra.mxu0 %v8835
        %9089 = vmatpush.bf16.msra.mxu0 %v8827
        %9090 = vmatpush.bf16.msra.mxu0 %v8819
        %9091 = vmatmul.bf16.gmra.mxu0 %v8901
        %v9092 = vpop.f32.mrf.mxu0
        %v9093 = vadd.f32 0.0, %v9092
        %v9094 = vpop.f32.mrf.mxu0
        %v9095 = vadd.f32 0.0, %v9094
        %9096 = vmatmul.bf16.gmra.mxu0 %v8902
        %v9097 = vpop.f32.mrf.mxu0
        %v9098 = vadd.f32 0.0, %v9097
        %v9099 = vpop.f32.mrf.mxu0
        %v9100 = vadd.f32 0.0, %v9099
        %9101 = vmatmul.bf16.gmra.mxu0 %v8903
        %v9102 = vpop.f32.mrf.mxu0
        %v9103 = vadd.f32 0.0, %v9102
        %v9104 = vpop.f32.mrf.mxu0
        %v9105 = vadd.f32 0.0, %v9104
        %9106 = vmatmul.bf16.gmra.mxu0 %v8904
        %v9107 = vpop.f32.mrf.mxu0
        %v9108 = vadd.f32 0.0, %v9107
        %v9109 = vpop.f32.mrf.mxu0
        %v9110 = vadd.f32 0.0, %v9109
        %9111 = vdwg.mxu0
        %9112 = vmatpush.bf16.msra.mxu0 %v8876
        %9113 = vmatpush.bf16.msra.mxu0 %v8868
        %9114 = vmatpush.bf16.msra.mxu0 %v8860
        %9115 = vmatpush.bf16.msra.mxu0 %v8852
        %9116 = vmatpush.bf16.msra.mxu0 %v8844
        %9117 = vmatpush.bf16.msra.mxu0 %v8836
        %9118 = vmatpush.bf16.msra.mxu0 %v8828
        %9119 = vmatpush.bf16.msra.mxu0 %v8820
        %9120 = vmatmul.bf16.gmra.mxu0 %v8901
        %v9121 = vpop.f32.mrf.mxu0
        %v9122 = vadd.f32 0.0, %v9121
        %v9123 = vpop.f32.mrf.mxu0
        %v9124 = vadd.f32 0.0, %v9123
        %9125 = vmatmul.bf16.gmra.mxu0 %v8902
        %v9126 = vpop.f32.mrf.mxu0
        %v9127 = vadd.f32 0.0, %v9126
        %v9128 = vpop.f32.mrf.mxu0
        %v9129 = vadd.f32 0.0, %v9128
        %9130 = vmatmul.bf16.gmra.mxu0 %v8903
        %v9131 = vpop.f32.mrf.mxu0
        %v9132 = vadd.f32 0.0, %v9131
        %v9133 = vpop.f32.mrf.mxu0
        %v9134 = vadd.f32 0.0, %v9133
        %9135 = vmatmul.bf16.gmra.mxu0 %v8904
        %v9136 = vpop.f32.mrf.mxu0
        %v9137 = vadd.f32 0.0, %v9136
        %v9138 = vpop.f32.mrf.mxu0
        %v9139 = vadd.f32 0.0, %v9138
        %9140 = vdwg.mxu0
        %v9141 = vadd.f32 %v8919, %v8921
        %v9142 = vadd.f32 %v9141, %v8924
        %v9143 = vadd.f32 %v9142, %v8926
        %v9144 = vadd.f32 %v9143, %v8929
        %v9145 = vadd.f32 %v9144, %v8931
        %v9146 = vadd.f32 %v9145, %v8934
        %v9147 = vadd.f32 %v9146, %v8936
        %v9148 = vrot.slane %v9147, 4
        %v9149 = vadd.f32 %v9147, %v9148
        %v9150 = vrot.slane %v9149, 2
        %v9151 = vadd.f32 %v9149, %v9150
        %v9152 = vrot.slane %v9151, 1
        %v9153 = vadd.f32 %v9151, %v9152
        %v9154 = vadd.f32 %v8948, %v8950
        %v9155 = vadd.f32 %v9154, %v8953
        %v9156 = vadd.f32 %v9155, %v8955
        %v9157 = vadd.f32 %v9156, %v8958
        %v9158 = vadd.f32 %v9157, %v8960
        %v9159 = vadd.f32 %v9158, %v8963
        %v9160 = vadd.f32 %v9159, %v8965
        %v9161 = vrot.slane %v9160, 4
        %v9162 = vadd.f32 %v9160, %v9161
        %v9163 = vrot.slane %v9162, 2
        %v9164 = vadd.f32 %v9162, %v9163
        %v9165 = vrot.slane %v9164, 1
        %v9166 = vadd.f32 %v9164, %v9165
        %v9167 = vadd.f32 %v8977, %v8979
        %v9168 = vadd.f32 %v9167, %v8982
        %v9169 = vadd.f32 %v9168, %v8984
        %v9170 = vadd.f32 %v9169, %v8987
        %v9171 = vadd.f32 %v9170, %v8989
        %v9172 = vadd.f32 %v9171, %v8992
        %v9173 = vadd.f32 %v9172, %v8994
        %v9174 = vrot.slane %v9173, 4
        %v9175 = vadd.f32 %v9173, %v9174
        %v9176 = vrot.slane %v9175, 2
        %v9177 = vadd.f32 %v9175, %v9176
        %v9178 = vrot.slane %v9177, 1
        %v9179 = vadd.f32 %v9177, %v9178
        %v9180 = vadd.f32 %v9006, %v9008
        %v9181 = vadd.f32 %v9180, %v9011
        %v9182 = vadd.f32 %v9181, %v9013
        %v9183 = vadd.f32 %v9182, %v9016
        %v9184 = vadd.f32 %v9183, %v9018
        %v9185 = vadd.f32 %v9184, %v9021
        %v9186 = vadd.f32 %v9185, %v9023
        %v9187 = vrot.slane %v9186, 4
        %v9188 = vadd.f32 %v9186, %v9187
        %v9189 = vrot.slane %v9188, 2
        %v9190 = vadd.f32 %v9188, %v9189
        %v9191 = vrot.slane %v9190, 1
        %v9192 = vadd.f32 %v9190, %v9191
        %v9193 = vadd.f32 %v9035, %v9037
        %v9194 = vadd.f32 %v9193, %v9040
        %v9195 = vadd.f32 %v9194, %v9042
        %v9196 = vadd.f32 %v9195, %v9045
        %v9197 = vadd.f32 %v9196, %v9047
        %v9198 = vadd.f32 %v9197, %v9050
        %v9199 = vadd.f32 %v9198, %v9052
        %v9200 = vrot.slane %v9199, 4
        %v9201 = vadd.f32 %v9199, %v9200
        %v9202 = vrot.slane %v9201, 2
        %v9203 = vadd.f32 %v9201, %v9202
        %v9204 = vrot.slane %v9203, 1
        %v9205 = vadd.f32 %v9203, %v9204
        %v9206 = vadd.f32 %v9064, %v9066
        %v9207 = vadd.f32 %v9206, %v9069
        %v9208 = vadd.f32 %v9207, %v9071
        %v9209 = vadd.f32 %v9208, %v9074
        %v9210 = vadd.f32 %v9209, %v9076
        %v9211 = vadd.f32 %v9210, %v9079
        %v9212 = vadd.f32 %v9211, %v9081
        %v9213 = vrot.slane %v9212, 4
        %v9214 = vadd.f32 %v9212, %v9213
        %v9215 = vrot.slane %v9214, 2
        %v9216 = vadd.f32 %v9214, %v9215
        %v9217 = vrot.slane %v9216, 1
        %v9218 = vadd.f32 %v9216, %v9217
        %v9219 = vadd.f32 %v9093, %v9095
        %v9220 = vadd.f32 %v9219, %v9098
        %v9221 = vadd.f32 %v9220, %v9100
        %v9222 = vadd.f32 %v9221, %v9103
        %v9223 = vadd.f32 %v9222, %v9105
        %v9224 = vadd.f32 %v9223, %v9108
        %v9225 = vadd.f32 %v9224, %v9110
        %v9226 = vrot.slane %v9225, 4
        %v9227 = vadd.f32 %v9225, %v9226
        %v9228 = vrot.slane %v9227, 2
        %v9229 = vadd.f32 %v9227, %v9228
        %v9230 = vrot.slane %v9229, 1
        %v9231 = vadd.f32 %v9229, %v9230
        %v9232 = vadd.f32 %v9122, %v9124
        %v9233 = vadd.f32 %v9232, %v9127
        %v9234 = vadd.f32 %v9233, %v9129
        %v9235 = vadd.f32 %v9234, %v9132
        %v9236 = vadd.f32 %v9235, %v9134
        %v9237 = vadd.f32 %v9236, %v9137
        %v9238 = vadd.f32 %v9237, %v9139
        %v9239 = vrot.slane %v9238, 4
        %v9240 = vadd.f32 %v9238, %v9239
        %v9241 = vrot.slane %v9240, 2
        %v9242 = vadd.f32 %v9240, %v9241
        %v9243 = vrot.slane %v9242, 1
        %v9244 = vadd.f32 %v9242, %v9243
        %v9245 = vmul.f32 %v9153, %v4395
        %v9246 = vmul.f32 %v9166, %v4395
        %v9247 = vmul.f32 %v9179, %v4395
        %v9248 = vmul.f32 %v9192, %v4395
        %v9249 = vmul.f32 %v9205, %v4395
        %v9250 = vmul.f32 %v9218, %v4395
        %v9251 = vmul.f32 %v9231, %v4395
        %v9252 = vmul.f32 %v9244, %v4395
        %v9253 = vmul.f32 %v8919, %v8919
        %v9254 = vmul.f32 %v8948, %v8948
        %v9255 = vmul.f32 %v8977, %v8977
        %v9256 = vmul.f32 %v9006, %v9006
        %v9257 = vmul.f32 %v9035, %v9035
        %v9258 = vmul.f32 %v9064, %v9064
        %v9259 = vmul.f32 %v9093, %v9093
        %v9260 = vmul.f32 %v9122, %v9122
        %v9261 = vmul.f32 %v8921, %v8921
        %v9262 = vmul.f32 %v8950, %v8950
        %v9263 = vmul.f32 %v8979, %v8979
        %v9264 = vmul.f32 %v9008, %v9008
        %v9265 = vmul.f32 %v9037, %v9037
        %v9266 = vmul.f32 %v9066, %v9066
        %v9267 = vmul.f32 %v9095, %v9095
        %v9268 = vmul.f32 %v9124, %v9124
        %v9269 = vmul.f32 %v8924, %v8924
        %v9270 = vmul.f32 %v8953, %v8953
        %v9271 = vmul.f32 %v8982, %v8982
        %v9272 = vmul.f32 %v9011, %v9011
        %v9273 = vmul.f32 %v9040, %v9040
        %v9274 = vmul.f32 %v9069, %v9069
        %v9275 = vmul.f32 %v9098, %v9098
        %v9276 = vmul.f32 %v9127, %v9127
        %v9277 = vmul.f32 %v8926, %v8926
        %v9278 = vmul.f32 %v8955, %v8955
        %v9279 = vmul.f32 %v8984, %v8984
        %v9280 = vmul.f32 %v9013, %v9013
        %v9281 = vmul.f32 %v9042, %v9042
        %v9282 = vmul.f32 %v9071, %v9071
        %v9283 = vmul.f32 %v9100, %v9100
        %v9284 = vmul.f32 %v9129, %v9129
        %v9285 = vmul.f32 %v8929, %v8929
        %v9286 = vmul.f32 %v8958, %v8958
        %v9287 = vmul.f32 %v8987, %v8987
        %v9288 = vmul.f32 %v9016, %v9016
        %v9289 = vmul.f32 %v9045, %v9045
        %v9290 = vmul.f32 %v9074, %v9074
        %v9291 = vmul.f32 %v9103, %v9103
        %v9292 = vmul.f32 %v9132, %v9132
        %v9293 = vmul.f32 %v8931, %v8931
        %v9294 = vmul.f32 %v8960, %v8960
        %v9295 = vmul.f32 %v8989, %v8989
        %v9296 = vmul.f32 %v9018, %v9018
        %v9297 = vmul.f32 %v9047, %v9047
        %v9298 = vmul.f32 %v9076, %v9076
        %v9299 = vmul.f32 %v9105, %v9105
        %v9300 = vmul.f32 %v9134, %v9134
        %v9301 = vmul.f32 %v8934, %v8934
        %v9302 = vmul.f32 %v8963, %v8963
        %v9303 = vmul.f32 %v8992, %v8992
        %v9304 = vmul.f32 %v9021, %v9021
        %v9305 = vmul.f32 %v9050, %v9050
        %v9306 = vmul.f32 %v9079, %v9079
        %v9307 = vmul.f32 %v9108, %v9108
        %v9308 = vmul.f32 %v9137, %v9137
        %v9309 = vmul.f32 %v8936, %v8936
        %v9310 = vmul.f32 %v8965, %v8965
        %v9311 = vmul.f32 %v8994, %v8994
        %v9312 = vmul.f32 %v9023, %v9023
        %v9313 = vmul.f32 %v9052, %v9052
        %v9314 = vmul.f32 %v9081, %v9081
        %v9315 = vmul.f32 %v9110, %v9110
        %v9316 = vmul.f32 %v9139, %v9139
        %v9317 = vadd.f32 %v9253, %v9261
        %v9318 = vadd.f32 %v9317, %v9269
        %v9319 = vadd.f32 %v9318, %v9277
        %v9320 = vadd.f32 %v9319, %v9285
        %v9321 = vadd.f32 %v9320, %v9293
        %v9322 = vadd.f32 %v9321, %v9301
        %v9323 = vadd.f32 %v9322, %v9309
        %v9324 = vrot.slane %v9323, 4
        %v9325 = vadd.f32 %v9323, %v9324
        %v9326 = vrot.slane %v9325, 2
        %v9327 = vadd.f32 %v9325, %v9326
        %v9328 = vrot.slane %v9327, 1
        %v9329 = vadd.f32 %v9327, %v9328
        %v9330 = vadd.f32 %v9254, %v9262
        %v9331 = vadd.f32 %v9330, %v9270
        %v9332 = vadd.f32 %v9331, %v9278
        %v9333 = vadd.f32 %v9332, %v9286
        %v9334 = vadd.f32 %v9333, %v9294
        %v9335 = vadd.f32 %v9334, %v9302
        %v9336 = vadd.f32 %v9335, %v9310
        %v9337 = vrot.slane %v9336, 4
        %v9338 = vadd.f32 %v9336, %v9337
        %v9339 = vrot.slane %v9338, 2
        %v9340 = vadd.f32 %v9338, %v9339
        %v9341 = vrot.slane %v9340, 1
        %v9342 = vadd.f32 %v9340, %v9341
        %v9343 = vadd.f32 %v9255, %v9263
        %v9344 = vadd.f32 %v9343, %v9271
        %v9345 = vadd.f32 %v9344, %v9279
        %v9346 = vadd.f32 %v9345, %v9287
        %v9347 = vadd.f32 %v9346, %v9295
        %v9348 = vadd.f32 %v9347, %v9303
        %v9349 = vadd.f32 %v9348, %v9311
        %v9350 = vrot.slane %v9349, 4
        %v9351 = vadd.f32 %v9349, %v9350
        %v9352 = vrot.slane %v9351, 2
        %v9353 = vadd.f32 %v9351, %v9352
        %v9354 = vrot.slane %v9353, 1
        %v9355 = vadd.f32 %v9353, %v9354
        %v9356 = vadd.f32 %v9256, %v9264
        %v9357 = vadd.f32 %v9356, %v9272
        %v9358 = vadd.f32 %v9357, %v9280
        %v9359 = vadd.f32 %v9358, %v9288
        %v9360 = vadd.f32 %v9359, %v9296
        %v9361 = vadd.f32 %v9360, %v9304
        %v9362 = vadd.f32 %v9361, %v9312
        %v9363 = vrot.slane %v9362, 4
        %v9364 = vadd.f32 %v9362, %v9363
        %v9365 = vrot.slane %v9364, 2
        %v9366 = vadd.f32 %v9364, %v9365
        %v9367 = vrot.slane %v9366, 1
        %v9368 = vadd.f32 %v9366, %v9367
        %v9369 = vadd.f32 %v9257, %v9265
        %v9370 = vadd.f32 %v9369, %v9273
        %v9371 = vadd.f32 %v9370, %v9281
        %v9372 = vadd.f32 %v9371, %v9289
        %v9373 = vadd.f32 %v9372, %v9297
        %v9374 = vadd.f32 %v9373, %v9305
        %v9375 = vadd.f32 %v9374, %v9313
        %v9376 = vrot.slane %v9375, 4
        %v9377 = vadd.f32 %v9375, %v9376
        %v9378 = vrot.slane %v9377, 2
        %v9379 = vadd.f32 %v9377, %v9378
        %v9380 = vrot.slane %v9379, 1
        %v9381 = vadd.f32 %v9379, %v9380
        %v9382 = vadd.f32 %v9258, %v9266
        %v9383 = vadd.f32 %v9382, %v9274
        %v9384 = vadd.f32 %v9383, %v9282
        %v9385 = vadd.f32 %v9384, %v9290
        %v9386 = vadd.f32 %v9385, %v9298
        %v9387 = vadd.f32 %v9386, %v9306
        %v9388 = vadd.f32 %v9387, %v9314
        %v9389 = vrot.slane %v9388, 4
        %v9390 = vadd.f32 %v9388, %v9389
        %v9391 = vrot.slane %v9390, 2
        %v9392 = vadd.f32 %v9390, %v9391
        %v9393 = vrot.slane %v9392, 1
        %v9394 = vadd.f32 %v9392, %v9393
        %v9395 = vadd.f32 %v9259, %v9267
        %v9396 = vadd.f32 %v9395, %v9275
        %v9397 = vadd.f32 %v9396, %v9283
        %v9398 = vadd.f32 %v9397, %v9291
        %v9399 = vadd.f32 %v9398, %v9299
        %v9400 = vadd.f32 %v9399, %v9307
        %v9401 = vadd.f32 %v9400, %v9315
        %v9402 = vrot.slane %v9401, 4
        %v9403 = vadd.f32 %v9401, %v9402
        %v9404 = vrot.slane %v9403, 2
        %v9405 = vadd.f32 %v9403, %v9404
        %v9406 = vrot.slane %v9405, 1
        %v9407 = vadd.f32 %v9405, %v9406
        %v9408 = vadd.f32 %v9260, %v9268
        %v9409 = vadd.f32 %v9408, %v9276
        %v9410 = vadd.f32 %v9409, %v9284
        %v9411 = vadd.f32 %v9410, %v9292
        %v9412 = vadd.f32 %v9411, %v9300
        %v9413 = vadd.f32 %v9412, %v9308
        %v9414 = vadd.f32 %v9413, %v9316
        %v9415 = vrot.slane %v9414, 4
        %v9416 = vadd.f32 %v9414, %v9415
        %v9417 = vrot.slane %v9416, 2
        %v9418 = vadd.f32 %v9416, %v9417
        %v9419 = vrot.slane %v9418, 1
        %v9420 = vadd.f32 %v9418, %v9419
        %v9421 = vmul.f32 %v9329, %v4395
        %v9422 = vmul.f32 %v9342, %v4395
        %v9423 = vmul.f32 %v9355, %v4395
        %v9424 = vmul.f32 %v9368, %v4395
        %v9425 = vmul.f32 %v9381, %v4395
        %v9426 = vmul.f32 %v9394, %v4395
        %v9427 = vmul.f32 %v9407, %v4395
        %v9428 = vmul.f32 %v9420, %v4395
        %v9429 = vmul.f32 %v9245, %v9245
        %v9430 = vmul.f32 %v9246, %v9246
        %v9431 = vmul.f32 %v9247, %v9247
        %v9432 = vmul.f32 %v9248, %v9248
        %v9433 = vmul.f32 %v9249, %v9249
        %v9434 = vmul.f32 %v9250, %v9250
        %v9435 = vmul.f32 %v9251, %v9251
        %v9436 = vmul.f32 %v9252, %v9252
        %v9437 = vsub.f32 %v9421, %v9429
        %v9438 = vsub.f32 %v9422, %v9430
        %v9439 = vsub.f32 %v9423, %v9431
        %v9440 = vsub.f32 %v9424, %v9432
        %v9441 = vsub.f32 %v9425, %v9433
        %v9442 = vsub.f32 %v9426, %v9434
        %v9443 = vsub.f32 %v9427, %v9435
        %v9444 = vsub.f32 %v9428, %v9436
        %v9445 = vsub.f32 %v8919, %v9245
        %v9446 = vsub.f32 %v8948, %v9246
        %v9447 = vsub.f32 %v8977, %v9247
        %v9448 = vsub.f32 %v9006, %v9248
        %v9449 = vsub.f32 %v9035, %v9249
        %v9450 = vsub.f32 %v9064, %v9250
        %v9451 = vsub.f32 %v9093, %v9251
        %v9452 = vsub.f32 %v9122, %v9252
        %v9453 = vsub.f32 %v8921, %v9245
        %v9454 = vsub.f32 %v8950, %v9246
        %v9455 = vsub.f32 %v8979, %v9247
        %v9456 = vsub.f32 %v9008, %v9248
        %v9457 = vsub.f32 %v9037, %v9249
        %v9458 = vsub.f32 %v9066, %v9250
        %v9459 = vsub.f32 %v9095, %v9251
        %v9460 = vsub.f32 %v9124, %v9252
        %v9461 = vsub.f32 %v8924, %v9245
        %v9462 = vsub.f32 %v8953, %v9246
        %v9463 = vsub.f32 %v8982, %v9247
        %v9464 = vsub.f32 %v9011, %v9248
        %v9465 = vsub.f32 %v9040, %v9249
        %v9466 = vsub.f32 %v9069, %v9250
        %v9467 = vsub.f32 %v9098, %v9251
        %v9468 = vsub.f32 %v9127, %v9252
        %v9469 = vsub.f32 %v8926, %v9245
        %v9470 = vsub.f32 %v8955, %v9246
        %v9471 = vsub.f32 %v8984, %v9247
        %v9472 = vsub.f32 %v9013, %v9248
        %v9473 = vsub.f32 %v9042, %v9249
        %v9474 = vsub.f32 %v9071, %v9250
        %v9475 = vsub.f32 %v9100, %v9251
        %v9476 = vsub.f32 %v9129, %v9252
        %v9477 = vsub.f32 %v8929, %v9245
        %v9478 = vsub.f32 %v8958, %v9246
        %v9479 = vsub.f32 %v8987, %v9247
        %v9480 = vsub.f32 %v9016, %v9248
        %v9481 = vsub.f32 %v9045, %v9249
        %v9482 = vsub.f32 %v9074, %v9250
        %v9483 = vsub.f32 %v9103, %v9251
        %v9484 = vsub.f32 %v9132, %v9252
        %v9485 = vsub.f32 %v8931, %v9245
        %v9486 = vsub.f32 %v8960, %v9246
        %v9487 = vsub.f32 %v8989, %v9247
        %v9488 = vsub.f32 %v9018, %v9248
        %v9489 = vsub.f32 %v9047, %v9249
        %v9490 = vsub.f32 %v9076, %v9250
        %v9491 = vsub.f32 %v9105, %v9251
        %v9492 = vsub.f32 %v9134, %v9252
        %v9493 = vsub.f32 %v8934, %v9245
        %v9494 = vsub.f32 %v8963, %v9246
        %v9495 = vsub.f32 %v8992, %v9247
        %v9496 = vsub.f32 %v9021, %v9248
        %v9497 = vsub.f32 %v9050, %v9249
        %v9498 = vsub.f32 %v9079, %v9250
        %v9499 = vsub.f32 %v9108, %v9251
        %v9500 = vsub.f32 %v9137, %v9252
        %v9501 = vsub.f32 %v8936, %v9245
        %v9502 = vsub.f32 %v8965, %v9246
        %v9503 = vsub.f32 %v8994, %v9247
        %v9504 = vsub.f32 %v9023, %v9248
        %v9505 = vsub.f32 %v9052, %v9249
        %v9506 = vsub.f32 %v9081, %v9250
        %v9507 = vsub.f32 %v9110, %v9251
        %v9508 = vsub.f32 %v9139, %v9252
        %v9509 = vadd.f32 %v9437, 1e-05
        %v9510 = vadd.f32 %v9438, 1e-05
        %v9511 = vadd.f32 %v9439, 1e-05
        %v9512 = vadd.f32 %v9440, 1e-05
        %v9513 = vadd.f32 %v9441, 1e-05
        %v9514 = vadd.f32 %v9442, 1e-05
        %v9515 = vadd.f32 %v9443, 1e-05
        %v9516 = vadd.f32 %v9444, 1e-05
        %v9517 = vrsqrt.pop %v9509
        %v9518 = vmul.f32 %v9517, %v9509
        %v9519 = vmul.f32 %v9518, %v9517
        %v9520 = vmul.f32 0.5, %v9519
        %v9521 = vsub.f32 1.5, %v9520
        %v9522 = vmul.f32 %v9517, %v9521
        %vm9523 = vweird.f32 %v9509
        %vm9524 = vweird.f32 %v9517
        %vm9525 = vmor %vm9523, %vm9524
        %v9526 = vsel %vm9525, %v9517, %v9522
        %v9527 = vrsqrt.pop %v9510
        %v9528 = vmul.f32 %v9527, %v9510
        %v9529 = vmul.f32 %v9528, %v9527
        %v9530 = vmul.f32 0.5, %v9529
        %v9531 = vsub.f32 1.5, %v9530
        %v9532 = vmul.f32 %v9527, %v9531
        %vm9533 = vweird.f32 %v9510
        %vm9534 = vweird.f32 %v9527
        %vm9535 = vmor %vm9533, %vm9534
        %v9536 = vsel %vm9535, %v9527, %v9532
        %v9537 = vrsqrt.pop %v9511
        %v9538 = vmul.f32 %v9537, %v9511
        %v9539 = vmul.f32 %v9538, %v9537
        %v9540 = vmul.f32 0.5, %v9539
        %v9541 = vsub.f32 1.5, %v9540
        %v9542 = vmul.f32 %v9537, %v9541
        %vm9543 = vweird.f32 %v9511
        %vm9544 = vweird.f32 %v9537
        %vm9545 = vmor %vm9543, %vm9544
        %v9546 = vsel %vm9545, %v9537, %v9542
        %v9547 = vrsqrt.pop %v9512
        %v9548 = vmul.f32 %v9547, %v9512
        %v9549 = vmul.f32 %v9548, %v9547
        %v9550 = vmul.f32 0.5, %v9549
        %v9551 = vsub.f32 1.5, %v9550
        %v9552 = vmul.f32 %v9547, %v9551
        %vm9553 = vweird.f32 %v9512
        %vm9554 = vweird.f32 %v9547
        %vm9555 = vmor %vm9553, %vm9554
        %v9556 = vsel %vm9555, %v9547, %v9552
        %v9557 = vrsqrt.pop %v9513
        %v9558 = vmul.f32 %v9557, %v9513
        %v9559 = vmul.f32 %v9558, %v9557
        %v9560 = vmul.f32 0.5, %v9559
        %v9561 = vsub.f32 1.5, %v9560
        %v9562 = vmul.f32 %v9557, %v9561
        %vm9563 = vweird.f32 %v9513
        %vm9564 = vweird.f32 %v9557
        %vm9565 = vmor %vm9563, %vm9564
        %v9566 = vsel %vm9565, %v9557, %v9562
        %v9567 = vrsqrt.pop %v9514
        %v9568 = vmul.f32 %v9567, %v9514
        %v9569 = vmul.f32 %v9568, %v9567
        %v9570 = vmul.f32 0.5, %v9569
        %v9571 = vsub.f32 1.5, %v9570
        %v9572 = vmul.f32 %v9567, %v9571
        %vm9573 = vweird.f32 %v9514
        %vm9574 = vweird.f32 %v9567
        %vm9575 = vmor %vm9573, %vm9574
        %v9576 = vsel %vm9575, %v9567, %v9572
        %v9577 = vrsqrt.pop %v9515
        %v9578 = vmul.f32 %v9577, %v9515
        %v9579 = vmul.f32 %v9578, %v9577
        %v9580 = vmul.f32 0.5, %v9579
        %v9581 = vsub.f32 1.5, %v9580
        %v9582 = vmul.f32 %v9577, %v9581
        %vm9583 = vweird.f32 %v9515
        %vm9584 = vweird.f32 %v9577
        %vm9585 = vmor %vm9583, %vm9584
        %v9586 = vsel %vm9585, %v9577, %v9582
        %v9587 = vrsqrt.pop %v9516
        %v9588 = vmul.f32 %v9587, %v9516
        %v9589 = vmul.f32 %v9588, %v9587
        %v9590 = vmul.f32 0.5, %v9589
        %v9591 = vsub.f32 1.5, %v9590
        %v9592 = vmul.f32 %v9587, %v9591
        %vm9593 = vweird.f32 %v9516
        %vm9594 = vweird.f32 %v9587
        %vm9595 = vmor %vm9593, %vm9594
        %v9596 = vsel %vm9595, %v9587, %v9592
        %v9597 = vmul.f32 %v9445, %v9526
        %v9598 = vmul.f32 %v9446, %v9536
        %v9599 = vmul.f32 %v9447, %v9546
        %v9600 = vmul.f32 %v9448, %v9556
        %v9601 = vmul.f32 %v9449, %v9566
        %v9602 = vmul.f32 %v9450, %v9576
        %v9603 = vmul.f32 %v9451, %v9586
        %v9604 = vmul.f32 %v9452, %v9596
        %v9605 = vmul.f32 %v9453, %v9526
        %v9606 = vmul.f32 %v9454, %v9536
        %v9607 = vmul.f32 %v9455, %v9546
        %v9608 = vmul.f32 %v9456, %v9556
        %v9609 = vmul.f32 %v9457, %v9566
        %v9610 = vmul.f32 %v9458, %v9576
        %v9611 = vmul.f32 %v9459, %v9586
        %v9612 = vmul.f32 %v9460, %v9596
        %v9613 = vmul.f32 %v9461, %v9526
        %v9614 = vmul.f32 %v9462, %v9536
        %v9615 = vmul.f32 %v9463, %v9546
        %v9616 = vmul.f32 %v9464, %v9556
        %v9617 = vmul.f32 %v9465, %v9566
        %v9618 = vmul.f32 %v9466, %v9576
        %v9619 = vmul.f32 %v9467, %v9586
        %v9620 = vmul.f32 %v9468, %v9596
        %v9621 = vmul.f32 %v9469, %v9526
        %v9622 = vmul.f32 %v9470, %v9536
        %v9623 = vmul.f32 %v9471, %v9546
        %v9624 = vmul.f32 %v9472, %v9556
        %v9625 = vmul.f32 %v9473, %v9566
        %v9626 = vmul.f32 %v9474, %v9576
        %v9627 = vmul.f32 %v9475, %v9586
        %v9628 = vmul.f32 %v9476, %v9596
        %v9629 = vmul.f32 %v9477, %v9526
        %v9630 = vmul.f32 %v9478, %v9536
        %v9631 = vmul.f32 %v9479, %v9546
        %v9632 = vmul.f32 %v9480, %v9556
        %v9633 = vmul.f32 %v9481, %v9566
        %v9634 = vmul.f32 %v9482, %v9576
        %v9635 = vmul.f32 %v9483, %v9586
        %v9636 = vmul.f32 %v9484, %v9596
        %v9637 = vmul.f32 %v9485, %v9526
        %v9638 = vmul.f32 %v9486, %v9536
        %v9639 = vmul.f32 %v9487, %v9546
        %v9640 = vmul.f32 %v9488, %v9556
        %v9641 = vmul.f32 %v9489, %v9566
        %v9642 = vmul.f32 %v9490, %v9576
        %v9643 = vmul.f32 %v9491, %v9586
        %v9644 = vmul.f32 %v9492, %v9596
        %v9645 = vmul.f32 %v9493, %v9526
        %v9646 = vmul.f32 %v9494, %v9536
        %v9647 = vmul.f32 %v9495, %v9546
        %v9648 = vmul.f32 %v9496, %v9556
        %v9649 = vmul.f32 %v9497, %v9566
        %v9650 = vmul.f32 %v9498, %v9576
        %v9651 = vmul.f32 %v9499, %v9586
        %v9652 = vmul.f32 %v9500, %v9596
        %v9653 = vmul.f32 %v9501, %v9526
        %v9654 = vmul.f32 %v9502, %v9536
        %v9655 = vmul.f32 %v9503, %v9546
        %v9656 = vmul.f32 %v9504, %v9556
        %v9657 = vmul.f32 %v9505, %v9566
        %v9658 = vmul.f32 %v9506, %v9576
        %v9659 = vmul.f32 %v9507, %v9586
        %v9660 = vmul.f32 %v9508, %v9596
        %9661 = vset.pattern.permute.xlu0 8
        %9662 = vperm.xlu0 %9661, %v1157
        %v9663 = vpop.permute.xlu0 %9662
        %9665 = vset.pattern.permute.xlu0 8
        %9666 = vperm.xlu0 %9665, %v1158
        %v9667 = vpop.permute.xlu0 %9666
        %9669 = vset.pattern.permute.xlu0 8
        %9670 = vperm.xlu0 %9669, %v1159
        %v9671 = vpop.permute.xlu0 %9670
        %9673 = vset.pattern.permute.xlu0 8
        %9674 = vperm.xlu0 %9673, %v1160
        %v9675 = vpop.permute.xlu0 %9674
        %9677 = vset.pattern.permute.xlu0 8
        %9678 = vperm.xlu0 %9677, %v1161
        %v9679 = vpop.permute.xlu0 %9678
        %9681 = vset.pattern.permute.xlu0 8
        %9682 = vperm.xlu0 %9681, %v1162
        %v9683 = vpop.permute.xlu0 %9682
        %9685 = vset.pattern.permute.xlu0 8
        %9686 = vperm.xlu0 %9685, %v1163
        %v9687 = vpop.permute.xlu0 %9686
        %9689 = vset.pattern.permute.xlu0 8
        %9690 = vperm.xlu0 %9689, %v1164
        %v9691 = vpop.permute.xlu0 %9690
        %v9693 = vmul.f32 %v9597, %v9663
        %v9694 = vmul.f32 %v9598, %v9663
        %v9695 = vmul.f32 %v9599, %v9663
        %v9696 = vmul.f32 %v9600, %v9663
        %v9697 = vmul.f32 %v9601, %v9663
        %v9698 = vmul.f32 %v9602, %v9663
        %v9699 = vmul.f32 %v9603, %v9663
        %v9700 = vmul.f32 %v9604, %v9663
        %v9701 = vmul.f32 %v9605, %v9667
        %v9702 = vmul.f32 %v9606, %v9667
        %v9703 = vmul.f32 %v9607, %v9667
        %v9704 = vmul.f32 %v9608, %v9667
        %v9705 = vmul.f32 %v9609, %v9667
        %v9706 = vmul.f32 %v9610, %v9667
        %v9707 = vmul.f32 %v9611, %v9667
        %v9708 = vmul.f32 %v9612, %v9667
        %v9709 = vmul.f32 %v9613, %v9671
        %v9710 = vmul.f32 %v9614, %v9671
        %v9711 = vmul.f32 %v9615, %v9671
        %v9712 = vmul.f32 %v9616, %v9671
        %v9713 = vmul.f32 %v9617, %v9671
        %v9714 = vmul.f32 %v9618, %v9671
        %v9715 = vmul.f32 %v9619, %v9671
        %v9716 = vmul.f32 %v9620, %v9671
        %v9717 = vmul.f32 %v9621, %v9675
        %v9718 = vmul.f32 %v9622, %v9675
        %v9719 = vmul.f32 %v9623, %v9675
        %v9720 = vmul.f32 %v9624, %v9675
        %v9721 = vmul.f32 %v9625, %v9675
        %v9722 = vmul.f32 %v9626, %v9675
        %v9723 = vmul.f32 %v9627, %v9675
        %v9724 = vmul.f32 %v9628, %v9675
        %v9725 = vmul.f32 %v9629, %v9679
        %v9726 = vmul.f32 %v9630, %v9679
        %v9727 = vmul.f32 %v9631, %v9679
        %v9728 = vmul.f32 %v9632, %v9679
        %v9729 = vmul.f32 %v9633, %v9679
        %v9730 = vmul.f32 %v9634, %v9679
        %v9731 = vmul.f32 %v9635, %v9679
        %v9732 = vmul.f32 %v9636, %v9679
        %v9733 = vmul.f32 %v9637, %v9683
        %v9734 = vmul.f32 %v9638, %v9683
        %v9735 = vmul.f32 %v9639, %v9683
        %v9736 = vmul.f32 %v9640, %v9683
        %v9737 = vmul.f32 %v9641, %v9683
        %v9738 = vmul.f32 %v9642, %v9683
        %v9739 = vmul.f32 %v9643, %v9683
        %v9740 = vmul.f32 %v9644, %v9683
        %v9741 = vmul.f32 %v9645, %v9687
        %v9742 = vmul.f32 %v9646, %v9687
        %v9743 = vmul.f32 %v9647, %v9687
        %v9744 = vmul.f32 %v9648, %v9687
        %v9745 = vmul.f32 %v9649, %v9687
        %v9746 = vmul.f32 %v9650, %v9687
        %v9747 = vmul.f32 %v9651, %v9687
        %v9748 = vmul.f32 %v9652, %v9687
        %v9749 = vmul.f32 %v9653, %v9691
        %v9750 = vmul.f32 %v9654, %v9691
        %v9751 = vmul.f32 %v9655, %v9691
        %v9752 = vmul.f32 %v9656, %v9691
        %v9753 = vmul.f32 %v9657, %v9691
        %v9754 = vmul.f32 %v9658, %v9691
        %v9755 = vmul.f32 %v9659, %v9691
        %v9756 = vmul.f32 %v9660, %v9691
        %9757 = vset.pattern.permute.xlu0 9
        %9758 = vperm.xlu0 %9757, %v1157
        %v9759 = vpop.permute.xlu0 %9758
        %9761 = vset.pattern.permute.xlu0 9
        %9762 = vperm.xlu0 %9761, %v1158
        %v9763 = vpop.permute.xlu0 %9762
        %9765 = vset.pattern.permute.xlu0 9
        %9766 = vperm.xlu0 %9765, %v1159
        %v9767 = vpop.permute.xlu0 %9766
        %9769 = vset.pattern.permute.xlu0 9
        %9770 = vperm.xlu0 %9769, %v1160
        %v9771 = vpop.permute.xlu0 %9770
        %9773 = vset.pattern.permute.xlu0 9
        %9774 = vperm.xlu0 %9773, %v1161
        %v9775 = vpop.permute.xlu0 %9774
        %9777 = vset.pattern.permute.xlu0 9
        %9778 = vperm.xlu0 %9777, %v1162
        %v9779 = vpop.permute.xlu0 %9778
        %9781 = vset.pattern.permute.xlu0 9
        %9782 = vperm.xlu0 %9781, %v1163
        %v9783 = vpop.permute.xlu0 %9782
        %9785 = vset.pattern.permute.xlu0 9
        %9786 = vperm.xlu0 %9785, %v1164
        %v9787 = vpop.permute.xlu0 %9786
        %v9789 = vadd.f32 %v9693, %v9759
        %v9790 = vadd.f32 %v9694, %v9759
        %v9791 = vadd.f32 %v9695, %v9759
        %v9792 = vadd.f32 %v9696, %v9759
        %v9793 = vadd.f32 %v9697, %v9759
        %v9794 = vadd.f32 %v9698, %v9759
        %v9795 = vadd.f32 %v9699, %v9759
        %v9796 = vadd.f32 %v9700, %v9759
        %v9797 = vadd.f32 %v9701, %v9763
        %v9798 = vadd.f32 %v9702, %v9763
        %v9799 = vadd.f32 %v9703, %v9763
        %v9800 = vadd.f32 %v9704, %v9763
        %v9801 = vadd.f32 %v9705, %v9763
        %v9802 = vadd.f32 %v9706, %v9763
        %v9803 = vadd.f32 %v9707, %v9763
        %v9804 = vadd.f32 %v9708, %v9763
        %v9805 = vadd.f32 %v9709, %v9767
        %v9806 = vadd.f32 %v9710, %v9767
        %v9807 = vadd.f32 %v9711, %v9767
        %v9808 = vadd.f32 %v9712, %v9767
        %v9809 = vadd.f32 %v9713, %v9767
        %v9810 = vadd.f32 %v9714, %v9767
        %v9811 = vadd.f32 %v9715, %v9767
        %v9812 = vadd.f32 %v9716, %v9767
        %v9813 = vadd.f32 %v9717, %v9771
        %v9814 = vadd.f32 %v9718, %v9771
        %v9815 = vadd.f32 %v9719, %v9771
        %v9816 = vadd.f32 %v9720, %v9771
        %v9817 = vadd.f32 %v9721, %v9771
        %v9818 = vadd.f32 %v9722, %v9771
        %v9819 = vadd.f32 %v9723, %v9771
        %v9820 = vadd.f32 %v9724, %v9771
        %v9821 = vadd.f32 %v9725, %v9775
        %v9822 = vadd.f32 %v9726, %v9775
        %v9823 = vadd.f32 %v9727, %v9775
        %v9824 = vadd.f32 %v9728, %v9775
        %v9825 = vadd.f32 %v9729, %v9775
        %v9826 = vadd.f32 %v9730, %v9775
        %v9827 = vadd.f32 %v9731, %v9775
        %v9828 = vadd.f32 %v9732, %v9775
        %v9829 = vadd.f32 %v9733, %v9779
        %v9830 = vadd.f32 %v9734, %v9779
        %v9831 = vadd.f32 %v9735, %v9779
        %v9832 = vadd.f32 %v9736, %v9779
        %v9833 = vadd.f32 %v9737, %v9779
        %v9834 = vadd.f32 %v9738, %v9779
        %v9835 = vadd.f32 %v9739, %v9779
        %v9836 = vadd.f32 %v9740, %v9779
        %v9837 = vadd.f32 %v9741, %v9783
        %v9838 = vadd.f32 %v9742, %v9783
        %v9839 = vadd.f32 %v9743, %v9783
        %v9840 = vadd.f32 %v9744, %v9783
        %v9841 = vadd.f32 %v9745, %v9783
        %v9842 = vadd.f32 %v9746, %v9783
        %v9843 = vadd.f32 %v9747, %v9783
        %v9844 = vadd.f32 %v9748, %v9783
        %v9845 = vadd.f32 %v9749, %v9787
        %v9846 = vadd.f32 %v9750, %v9787
        %v9847 = vadd.f32 %v9751, %v9787
        %v9848 = vadd.f32 %v9752, %v9787
        %v9849 = vadd.f32 %v9753, %v9787
        %v9850 = vadd.f32 %v9754, %v9787
        %v9851 = vadd.f32 %v9755, %v9787
        %v9852 = vadd.f32 %v9756, %v9787
        %v9853 = vmax.f32 %v9789, 0.0
        %v9854 = vmax.f32 %v9790, 0.0
        %v9855 = vmax.f32 %v9791, 0.0
        %v9856 = vmax.f32 %v9792, 0.0
        %v9857 = vmax.f32 %v9793, 0.0
        %v9858 = vmax.f32 %v9794, 0.0
        %v9859 = vmax.f32 %v9795, 0.0
        %v9860 = vmax.f32 %v9796, 0.0
        %v9861 = vmax.f32 %v9797, 0.0
        %v9862 = vmax.f32 %v9798, 0.0
        %v9863 = vmax.f32 %v9799, 0.0
        %v9864 = vmax.f32 %v9800, 0.0
        %v9865 = vmax.f32 %v9801, 0.0
        %v9866 = vmax.f32 %v9802, 0.0
        %v9867 = vmax.f32 %v9803, 0.0
        %v9868 = vmax.f32 %v9804, 0.0
        %v9869 = vmax.f32 %v9805, 0.0
        %v9870 = vmax.f32 %v9806, 0.0
        %v9871 = vmax.f32 %v9807, 0.0
        %v9872 = vmax.f32 %v9808, 0.0
        %v9873 = vmax.f32 %v9809, 0.0
        %v9874 = vmax.f32 %v9810, 0.0
        %v9875 = vmax.f32 %v9811, 0.0
        %v9876 = vmax.f32 %v9812, 0.0
        %v9877 = vmax.f32 %v9813, 0.0
        %v9878 = vmax.f32 %v9814, 0.0
        %v9879 = vmax.f32 %v9815, 0.0
        %v9880 = vmax.f32 %v9816, 0.0
        %v9881 = vmax.f32 %v9817, 0.0
        %v9882 = vmax.f32 %v9818, 0.0
        %v9883 = vmax.f32 %v9819, 0.0
        %v9884 = vmax.f32 %v9820, 0.0
        %v9885 = vmax.f32 %v9821, 0.0
        %v9886 = vmax.f32 %v9822, 0.0
        %v9887 = vmax.f32 %v9823, 0.0
        %v9888 = vmax.f32 %v9824, 0.0
        %v9889 = vmax.f32 %v9825, 0.0
        %v9890 = vmax.f32 %v9826, 0.0
        %v9891 = vmax.f32 %v9827, 0.0
        %v9892 = vmax.f32 %v9828, 0.0
        %v9893 = vmax.f32 %v9829, 0.0
        %v9894 = vmax.f32 %v9830, 0.0
        %v9895 = vmax.f32 %v9831, 0.0
        %v9896 = vmax.f32 %v9832, 0.0
        %v9897 = vmax.f32 %v9833, 0.0
        %v9898 = vmax.f32 %v9834, 0.0
        %v9899 = vmax.f32 %v9835, 0.0
        %v9900 = vmax.f32 %v9836, 0.0
        %v9901 = vmax.f32 %v9837, 0.0
        %v9902 = vmax.f32 %v9838, 0.0
        %v9903 = vmax.f32 %v9839, 0.0
        %v9904 = vmax.f32 %v9840, 0.0
        %v9905 = vmax.f32 %v9841, 0.0
        %v9906 = vmax.f32 %v9842, 0.0
        %v9907 = vmax.f32 %v9843, 0.0
        %v9908 = vmax.f32 %v9844, 0.0
        %v9909 = vmax.f32 %v9845, 0.0
        %v9910 = vmax.f32 %v9846, 0.0
        %v9911 = vmax.f32 %v9847, 0.0
        %v9912 = vmax.f32 %v9848, 0.0
        %v9913 = vmax.f32 %v9849, 0.0
        %v9914 = vmax.f32 %v9850, 0.0
        %v9915 = vmax.f32 %v9851, 0.0
        %v9916 = vmax.f32 %v9852, 0.0
        %v9917 = vpack.c.bf16 %v9861, %v9853
        %v9918 = vpack.c.bf16 %v9862, %v9854
        %v9919 = vpack.c.bf16 %v9863, %v9855
        %v9920 = vpack.c.bf16 %v9864, %v9856
        %v9921 = vpack.c.bf16 %v9865, %v9857
        %v9922 = vpack.c.bf16 %v9866, %v9858
        %v9923 = vpack.c.bf16 %v9867, %v9859
        %v9924 = vpack.c.bf16 %v9868, %v9860
        %v9925 = vpack.c.bf16 %v9877, %v9869
        %v9926 = vpack.c.bf16 %v9878, %v9870
        %v9927 = vpack.c.bf16 %v9879, %v9871
        %v9928 = vpack.c.bf16 %v9880, %v9872
        %v9929 = vpack.c.bf16 %v9881, %v9873
        %v9930 = vpack.c.bf16 %v9882, %v9874
        %v9931 = vpack.c.bf16 %v9883, %v9875
        %v9932 = vpack.c.bf16 %v9884, %v9876
        %v9933 = vpack.c.bf16 %v9893, %v9885
        %v9934 = vpack.c.bf16 %v9894, %v9886
        %v9935 = vpack.c.bf16 %v9895, %v9887
        %v9936 = vpack.c.bf16 %v9896, %v9888
        %v9937 = vpack.c.bf16 %v9897, %v9889
        %v9938 = vpack.c.bf16 %v9898, %v9890
        %v9939 = vpack.c.bf16 %v9899, %v9891
        %v9940 = vpack.c.bf16 %v9900, %v9892
        %v9941 = vpack.c.bf16 %v9909, %v9901
        %v9942 = vpack.c.bf16 %v9910, %v9902
        %v9943 = vpack.c.bf16 %v9911, %v9903
        %v9944 = vpack.c.bf16 %v9912, %v9904
        %v9945 = vpack.c.bf16 %v9913, %v9905
        %v9946 = vpack.c.bf16 %v9914, %v9906
        %v9947 = vpack.c.bf16 %v9915, %v9907
        %v9948 = vpack.c.bf16 %v9916, %v9908
        %v9949 = vld [vmem:[%s8] sm:$0xf]
        %v9950 = vld [vmem:[%s8 + $0x4] sm:$0xf]
        %v9951 = vld [vmem:[%s8 + $0x8] sm:$0xf]
        %v9952 = vld [vmem:[%s8 + $0xc] sm:$0xf]
        %v9957 = vunpack.c.l.b16 %v9949
        %v9958 = vunpack.c.l.b16 %v9950
        %v9959 = vunpack.c.l.b16 %v9951
        %v9960 = vunpack.c.l.b16 %v9952
        %v9961 = vpack.c.b16 %v9958, %v9957
        %v9962 = vpack.c.b16 %v9960, %v9959
        %v9964 = vsel %vm5156, %v9961, 0
        %v9967 = vsel %vm5156, %v9962, 0
        %9969 = vmatpush.bf16.msra.mxu0 0
        %9970 = vmatpush.bf16.msra.mxu0 0
        %9971 = vmatpush.bf16.msra.mxu0 0
        %9972 = vmatpush.bf16.msra.mxu0 0
        %9973 = vmatpush.bf16.msra.mxu0 %v9941
        %9974 = vmatpush.bf16.msra.mxu0 %v9933
        %9975 = vmatpush.bf16.msra.mxu0 %v9925
        %9976 = vmatpush.bf16.msra.mxu0 %v9917
        %9977 = vmatmul.bf16.gmra.mxu0 %v9964
        %v9978 = vpop.f32.mrf.mxu0
        %v9979 = vadd.f32 0.0, %v9978
        %v9980 = vpop.f32.mrf.mxu0
        %v9981 = vadd.f32 0.0, %v9980
        %9982 = vmatmul.bf16.gmra.mxu0 %v9967
        %v9983 = vpop.f32.mrf.mxu0
        %v9984 = vadd.f32 0.0, %v9983
        %v9985 = vpop.f32.mrf.mxu0
        %v9986 = vadd.f32 0.0, %v9985
        %9987 = vdwg.mxu0
        %9988 = vmatpush.bf16.msra.mxu0 0
        %9989 = vmatpush.bf16.msra.mxu0 0
        %9990 = vmatpush.bf16.msra.mxu0 0
        %9991 = vmatpush.bf16.msra.mxu0 0
        %9992 = vmatpush.bf16.msra.mxu0 %v9942
        %9993 = vmatpush.bf16.msra.mxu0 %v9934
        %9994 = vmatpush.bf16.msra.mxu0 %v9926
        %9995 = vmatpush.bf16.msra.mxu0 %v9918
        %9996 = vmatmul.bf16.gmra.mxu0 %v9964
        %v9997 = vpop.f32.mrf.mxu0
        %v9998 = vadd.f32 0.0, %v9997
        %v9999 = vpop.f32.mrf.mxu0
        %v10000 = vadd.f32 0.0, %v9999
        %10001 = vmatmul.bf16.gmra.mxu0 %v9967
        %v10002 = vpop.f32.mrf.mxu0
        %v10003 = vadd.f32 0.0, %v10002
        %v10004 = vpop.f32.mrf.mxu0
        %v10005 = vadd.f32 0.0, %v10004
        %10006 = vdwg.mxu0
        %10007 = vmatpush.bf16.msra.mxu0 0
        %10008 = vmatpush.bf16.msra.mxu0 0
        %10009 = vmatpush.bf16.msra.mxu0 0
        %10010 = vmatpush.bf16.msra.mxu0 0
        %10011 = vmatpush.bf16.msra.mxu0 %v9943
        %10012 = vmatpush.bf16.msra.mxu0 %v9935
        %10013 = vmatpush.bf16.msra.mxu0 %v9927
        %10014 = vmatpush.bf16.msra.mxu0 %v9919
        %10015 = vmatmul.bf16.gmra.mxu0 %v9964
        %v10016 = vpop.f32.mrf.mxu0
        %v10017 = vadd.f32 0.0, %v10016
        %v10018 = vpop.f32.mrf.mxu0
        %v10019 = vadd.f32 0.0, %v10018
        %10020 = vmatmul.bf16.gmra.mxu0 %v9967
        %v10021 = vpop.f32.mrf.mxu0
        %v10022 = vadd.f32 0.0, %v10021
        %v10023 = vpop.f32.mrf.mxu0
        %v10024 = vadd.f32 0.0, %v10023
        %10025 = vdwg.mxu0
        %10026 = vmatpush.bf16.msra.mxu0 0
        %10027 = vmatpush.bf16.msra.mxu0 0
        %10028 = vmatpush.bf16.msra.mxu0 0
        %10029 = vmatpush.bf16.msra.mxu0 0
        %10030 = vmatpush.bf16.msra.mxu0 %v9944
        %10031 = vmatpush.bf16.msra.mxu0 %v9936
        %10032 = vmatpush.bf16.msra.mxu0 %v9928
        %10033 = vmatpush.bf16.msra.mxu0 %v9920
        %10034 = vmatmul.bf16.gmra.mxu0 %v9964
        %v10035 = vpop.f32.mrf.mxu0
        %v10036 = vadd.f32 0.0, %v10035
        %v10037 = vpop.f32.mrf.mxu0
        %v10038 = vadd.f32 0.0, %v10037
        %10039 = vmatmul.bf16.gmra.mxu0 %v9967
        %v10040 = vpop.f32.mrf.mxu0
        %v10041 = vadd.f32 0.0, %v10040
        %v10042 = vpop.f32.mrf.mxu0
        %v10043 = vadd.f32 0.0, %v10042
        %10044 = vdwg.mxu0
        %10045 = vmatpush.bf16.msra.mxu0 0
        %10046 = vmatpush.bf16.msra.mxu0 0
        %10047 = vmatpush.bf16.msra.mxu0 0
        %10048 = vmatpush.bf16.msra.mxu0 0
        %10049 = vmatpush.bf16.msra.mxu0 %v9945
        %10050 = vmatpush.bf16.msra.mxu0 %v9937
        %10051 = vmatpush.bf16.msra.mxu0 %v9929
        %10052 = vmatpush.bf16.msra.mxu0 %v9921
        %10053 = vmatmul.bf16.gmra.mxu0 %v9964
        %v10054 = vpop.f32.mrf.mxu0
        %v10055 = vadd.f32 0.0, %v10054
        %v10056 = vpop.f32.mrf.mxu0
        %v10057 = vadd.f32 0.0, %v10056
        %10058 = vmatmul.bf16.gmra.mxu0 %v9967
        %v10059 = vpop.f32.mrf.mxu0
        %v10060 = vadd.f32 0.0, %v10059
        %v10061 = vpop.f32.mrf.mxu0
        %v10062 = vadd.f32 0.0, %v10061
        %10063 = vdwg.mxu0
        %10064 = vmatpush.bf16.msra.mxu0 0
        %10065 = vmatpush.bf16.msra.mxu0 0
        %10066 = vmatpush.bf16.msra.mxu0 0
        %10067 = vmatpush.bf16.msra.mxu0 0
        %10068 = vmatpush.bf16.msra.mxu0 %v9946
        %10069 = vmatpush.bf16.msra.mxu0 %v9938
        %10070 = vmatpush.bf16.msra.mxu0 %v9930
        %10071 = vmatpush.bf16.msra.mxu0 %v9922
        %10072 = vmatmul.bf16.gmra.mxu0 %v9964
        %v10073 = vpop.f32.mrf.mxu0
        %v10074 = vadd.f32 0.0, %v10073
        %v10075 = vpop.f32.mrf.mxu0
        %v10076 = vadd.f32 0.0, %v10075
        %10077 = vmatmul.bf16.gmra.mxu0 %v9967
        %v10078 = vpop.f32.mrf.mxu0
        %v10079 = vadd.f32 0.0, %v10078
        %v10080 = vpop.f32.mrf.mxu0
        %v10081 = vadd.f32 0.0, %v10080
        %10082 = vdwg.mxu0
        %10083 = vmatpush.bf16.msra.mxu0 0
        %10084 = vmatpush.bf16.msra.mxu0 0
        %10085 = vmatpush.bf16.msra.mxu0 0
        %10086 = vmatpush.bf16.msra.mxu0 0
        %10087 = vmatpush.bf16.msra.mxu0 %v9947
        %10088 = vmatpush.bf16.msra.mxu0 %v9939
        %10089 = vmatpush.bf16.msra.mxu0 %v9931
        %10090 = vmatpush.bf16.msra.mxu0 %v9923
        %10091 = vmatmul.bf16.gmra.mxu0 %v9964
        %v10092 = vpop.f32.mrf.mxu0
        %v10093 = vadd.f32 0.0, %v10092
        %v10094 = vpop.f32.mrf.mxu0
        %v10095 = vadd.f32 0.0, %v10094
        %10096 = vmatmul.bf16.gmra.mxu0 %v9967
        %v10097 = vpop.f32.mrf.mxu0
        %v10098 = vadd.f32 0.0, %v10097
        %v10099 = vpop.f32.mrf.mxu0
        %v10100 = vadd.f32 0.0, %v10099
        %10101 = vdwg.mxu0
        %10102 = vmatpush.bf16.msra.mxu0 0
        %10103 = vmatpush.bf16.msra.mxu0 0
        %10104 = vmatpush.bf16.msra.mxu0 0
        %10105 = vmatpush.bf16.msra.mxu0 0
        %10106 = vmatpush.bf16.msra.mxu0 %v9948
        %10107 = vmatpush.bf16.msra.mxu0 %v9940
        %10108 = vmatpush.bf16.msra.mxu0 %v9932
        %10109 = vmatpush.bf16.msra.mxu0 %v9924
        %10110 = vmatmul.bf16.gmra.mxu0 %v9964
        %v10111 = vpop.f32.mrf.mxu0
        %v10112 = vadd.f32 0.0, %v10111
        %v10113 = vpop.f32.mrf.mxu0
        %v10114 = vadd.f32 0.0, %v10113
        %10115 = vmatmul.bf16.gmra.mxu0 %v9967
        %v10116 = vpop.f32.mrf.mxu0
        %v10117 = vadd.f32 0.0, %v10116
        %v10118 = vpop.f32.mrf.mxu0
        %v10119 = vadd.f32 0.0, %v10118
        %10120 = vdwg.mxu0
        %v10121 = vadd.f32 %v9979, %v9981
        %v10122 = vadd.f32 %v10121, %v9984
        %v10123 = vadd.f32 %v10122, %v9986
        %v10124 = vrot.slane %v10123, 4
        %v10125 = vadd.f32 %v10123, %v10124
        %v10126 = vrot.slane %v10125, 2
        %v10127 = vadd.f32 %v10125, %v10126
        %v10128 = vrot.slane %v10127, 1
        %v10129 = vadd.f32 %v10127, %v10128
        %v10130 = vadd.f32 %v9998, %v10000
        %v10131 = vadd.f32 %v10130, %v10003
        %v10132 = vadd.f32 %v10131, %v10005
        %v10133 = vrot.slane %v10132, 4
        %v10134 = vadd.f32 %v10132, %v10133
        %v10135 = vrot.slane %v10134, 2
        %v10136 = vadd.f32 %v10134, %v10135
        %v10137 = vrot.slane %v10136, 1
        %v10138 = vadd.f32 %v10136, %v10137
        %v10139 = vadd.f32 %v10017, %v10019
        %v10140 = vadd.f32 %v10139, %v10022
        %v10141 = vadd.f32 %v10140, %v10024
        %v10142 = vrot.slane %v10141, 4
        %v10143 = vadd.f32 %v10141, %v10142
        %v10144 = vrot.slane %v10143, 2
        %v10145 = vadd.f32 %v10143, %v10144
        %v10146 = vrot.slane %v10145, 1
        %v10147 = vadd.f32 %v10145, %v10146
        %v10148 = vadd.f32 %v10036, %v10038
        %v10149 = vadd.f32 %v10148, %v10041
        %v10150 = vadd.f32 %v10149, %v10043
        %v10151 = vrot.slane %v10150, 4
        %v10152 = vadd.f32 %v10150, %v10151
        %v10153 = vrot.slane %v10152, 2
        %v10154 = vadd.f32 %v10152, %v10153
        %v10155 = vrot.slane %v10154, 1
        %v10156 = vadd.f32 %v10154, %v10155
        %v10157 = vadd.f32 %v10055, %v10057
        %v10158 = vadd.f32 %v10157, %v10060
        %v10159 = vadd.f32 %v10158, %v10062
        %v10160 = vrot.slane %v10159, 4
        %v10161 = vadd.f32 %v10159, %v10160
        %v10162 = vrot.slane %v10161, 2
        %v10163 = vadd.f32 %v10161, %v10162
        %v10164 = vrot.slane %v10163, 1
        %v10165 = vadd.f32 %v10163, %v10164
        %v10166 = vadd.f32 %v10074, %v10076
        %v10167 = vadd.f32 %v10166, %v10079
        %v10168 = vadd.f32 %v10167, %v10081
        %v10169 = vrot.slane %v10168, 4
        %v10170 = vadd.f32 %v10168, %v10169
        %v10171 = vrot.slane %v10170, 2
        %v10172 = vadd.f32 %v10170, %v10171
        %v10173 = vrot.slane %v10172, 1
        %v10174 = vadd.f32 %v10172, %v10173
        %v10175 = vadd.f32 %v10093, %v10095
        %v10176 = vadd.f32 %v10175, %v10098
        %v10177 = vadd.f32 %v10176, %v10100
        %v10178 = vrot.slane %v10177, 4
        %v10179 = vadd.f32 %v10177, %v10178
        %v10180 = vrot.slane %v10179, 2
        %v10181 = vadd.f32 %v10179, %v10180
        %v10182 = vrot.slane %v10181, 1
        %v10183 = vadd.f32 %v10181, %v10182
        %v10184 = vadd.f32 %v10112, %v10114
        %v10185 = vadd.f32 %v10184, %v10117
        %v10186 = vadd.f32 %v10185, %v10119
        %v10187 = vrot.slane %v10186, 4
        %v10188 = vadd.f32 %v10186, %v10187
        %v10189 = vrot.slane %v10188, 2
        %v10190 = vadd.f32 %v10188, %v10189
        %v10191 = vrot.slane %v10190, 1
        %v10192 = vadd.f32 %v10190, %v10191
        %v10193 = vrcp.pop 32.0
        %v10194 = vmul.f32 32.0, %v10193
        %v10195 = vsub.f32 1.0, %v10194
        %v10196 = vmul.f32 %v10193, %v10195
        %v10197 = vadd.f32 %v10193, %v10196
        %vm10198 = vweird.f32 %v10193
        %v10199 = vsel %vm10198, %v10193, %v10197
        %v10200 = vmul.f32 %v10129, %v10199
        %v10201 = vmul.f32 %v10138, %v10199
        %v10202 = vmul.f32 %v10147, %v10199
        %v10203 = vmul.f32 %v10156, %v10199
        %v10204 = vmul.f32 %v10165, %v10199
        %v10205 = vmul.f32 %v10174, %v10199
        %v10206 = vmul.f32 %v10183, %v10199
        %v10207 = vmul.f32 %v10192, %v10199
        %v10208 = vmul.f32 %v9979, %v9979
        %v10209 = vmul.f32 %v9998, %v9998
        %v10210 = vmul.f32 %v10017, %v10017
        %v10211 = vmul.f32 %v10036, %v10036
        %v10212 = vmul.f32 %v10055, %v10055
        %v10213 = vmul.f32 %v10074, %v10074
        %v10214 = vmul.f32 %v10093, %v10093
        %v10215 = vmul.f32 %v10112, %v10112
        %v10216 = vmul.f32 %v9981, %v9981
        %v10217 = vmul.f32 %v10000, %v10000
        %v10218 = vmul.f32 %v10019, %v10019
        %v10219 = vmul.f32 %v10038, %v10038
        %v10220 = vmul.f32 %v10057, %v10057
        %v10221 = vmul.f32 %v10076, %v10076
        %v10222 = vmul.f32 %v10095, %v10095
        %v10223 = vmul.f32 %v10114, %v10114
        %v10224 = vmul.f32 %v9984, %v9984
        %v10225 = vmul.f32 %v10003, %v10003
        %v10226 = vmul.f32 %v10022, %v10022
        %v10227 = vmul.f32 %v10041, %v10041
        %v10228 = vmul.f32 %v10060, %v10060
        %v10229 = vmul.f32 %v10079, %v10079
        %v10230 = vmul.f32 %v10098, %v10098
        %v10231 = vmul.f32 %v10117, %v10117
        %v10232 = vmul.f32 %v9986, %v9986
        %v10233 = vmul.f32 %v10005, %v10005
        %v10234 = vmul.f32 %v10024, %v10024
        %v10235 = vmul.f32 %v10043, %v10043
        %v10236 = vmul.f32 %v10062, %v10062
        %v10237 = vmul.f32 %v10081, %v10081
        %v10238 = vmul.f32 %v10100, %v10100
        %v10239 = vmul.f32 %v10119, %v10119
        %v10240 = vadd.f32 %v10208, %v10216
        %v10241 = vadd.f32 %v10240, %v10224
        %v10242 = vadd.f32 %v10241, %v10232
        %v10243 = vrot.slane %v10242, 4
        %v10244 = vadd.f32 %v10242, %v10243
        %v10245 = vrot.slane %v10244, 2
        %v10246 = vadd.f32 %v10244, %v10245
        %v10247 = vrot.slane %v10246, 1
        %v10248 = vadd.f32 %v10246, %v10247
        %v10249 = vadd.f32 %v10209, %v10217
        %v10250 = vadd.f32 %v10249, %v10225
        %v10251 = vadd.f32 %v10250, %v10233
        %v10252 = vrot.slane %v10251, 4
        %v10253 = vadd.f32 %v10251, %v10252
        %v10254 = vrot.slane %v10253, 2
        %v10255 = vadd.f32 %v10253, %v10254
        %v10256 = vrot.slane %v10255, 1
        %v10257 = vadd.f32 %v10255, %v10256
        %v10258 = vadd.f32 %v10210, %v10218
        %v10259 = vadd.f32 %v10258, %v10226
        %v10260 = vadd.f32 %v10259, %v10234
        %v10261 = vrot.slane %v10260, 4
        %v10262 = vadd.f32 %v10260, %v10261
        %v10263 = vrot.slane %v10262, 2
        %v10264 = vadd.f32 %v10262, %v10263
        %v10265 = vrot.slane %v10264, 1
        %v10266 = vadd.f32 %v10264, %v10265
        %v10267 = vadd.f32 %v10211, %v10219
        %v10268 = vadd.f32 %v10267, %v10227
        %v10269 = vadd.f32 %v10268, %v10235
        %v10270 = vrot.slane %v10269, 4
        %v10271 = vadd.f32 %v10269, %v10270
        %v10272 = vrot.slane %v10271, 2
        %v10273 = vadd.f32 %v10271, %v10272
        %v10274 = vrot.slane %v10273, 1
        %v10275 = vadd.f32 %v10273, %v10274
        %v10276 = vadd.f32 %v10212, %v10220
        %v10277 = vadd.f32 %v10276, %v10228
        %v10278 = vadd.f32 %v10277, %v10236
        %v10279 = vrot.slane %v10278, 4
        %v10280 = vadd.f32 %v10278, %v10279
        %v10281 = vrot.slane %v10280, 2
        %v10282 = vadd.f32 %v10280, %v10281
        %v10283 = vrot.slane %v10282, 1
        %v10284 = vadd.f32 %v10282, %v10283
        %v10285 = vadd.f32 %v10213, %v10221
        %v10286 = vadd.f32 %v10285, %v10229
        %v10287 = vadd.f32 %v10286, %v10237
        %v10288 = vrot.slane %v10287, 4
        %v10289 = vadd.f32 %v10287, %v10288
        %v10290 = vrot.slane %v10289, 2
        %v10291 = vadd.f32 %v10289, %v10290
        %v10292 = vrot.slane %v10291, 1
        %v10293 = vadd.f32 %v10291, %v10292
        %v10294 = vadd.f32 %v10214, %v10222
        %v10295 = vadd.f32 %v10294, %v10230
        %v10296 = vadd.f32 %v10295, %v10238
        %v10297 = vrot.slane %v10296, 4
        %v10298 = vadd.f32 %v10296, %v10297
        %v10299 = vrot.slane %v10298, 2
        %v10300 = vadd.f32 %v10298, %v10299
        %v10301 = vrot.slane %v10300, 1
        %v10302 = vadd.f32 %v10300, %v10301
        %v10303 = vadd.f32 %v10215, %v10223
        %v10304 = vadd.f32 %v10303, %v10231
        %v10305 = vadd.f32 %v10304, %v10239
        %v10306 = vrot.slane %v10305, 4
        %v10307 = vadd.f32 %v10305, %v10306
        %v10308 = vrot.slane %v10307, 2
        %v10309 = vadd.f32 %v10307, %v10308
        %v10310 = vrot.slane %v10309, 1
        %v10311 = vadd.f32 %v10309, %v10310
        %v10312 = vmul.f32 %v10248, %v10199
        %v10313 = vmul.f32 %v10257, %v10199
        %v10314 = vmul.f32 %v10266, %v10199
        %v10315 = vmul.f32 %v10275, %v10199
        %v10316 = vmul.f32 %v10284, %v10199
        %v10317 = vmul.f32 %v10293, %v10199
        %v10318 = vmul.f32 %v10302, %v10199
        %v10319 = vmul.f32 %v10311, %v10199
        %v10320 = vmul.f32 %v10200, %v10200
        %v10321 = vmul.f32 %v10201, %v10201
        %v10322 = vmul.f32 %v10202, %v10202
        %v10323 = vmul.f32 %v10203, %v10203
        %v10324 = vmul.f32 %v10204, %v10204
        %v10325 = vmul.f32 %v10205, %v10205
        %v10326 = vmul.f32 %v10206, %v10206
        %v10327 = vmul.f32 %v10207, %v10207
        %v10328 = vsub.f32 %v10312, %v10320
        %v10329 = vsub.f32 %v10313, %v10321
        %v10330 = vsub.f32 %v10314, %v10322
        %v10331 = vsub.f32 %v10315, %v10323
        %v10332 = vsub.f32 %v10316, %v10324
        %v10333 = vsub.f32 %v10317, %v10325
        %v10334 = vsub.f32 %v10318, %v10326
        %v10335 = vsub.f32 %v10319, %v10327
        %v10336 = vsub.f32 %v9979, %v10200
        %v10337 = vsub.f32 %v9998, %v10201
        %v10338 = vsub.f32 %v10017, %v10202
        %v10339 = vsub.f32 %v10036, %v10203
        %v10340 = vsub.f32 %v10055, %v10204
        %v10341 = vsub.f32 %v10074, %v10205
        %v10342 = vsub.f32 %v10093, %v10206
        %v10343 = vsub.f32 %v10112, %v10207
        %v10344 = vsub.f32 %v9981, %v10200
        %v10345 = vsub.f32 %v10000, %v10201
        %v10346 = vsub.f32 %v10019, %v10202
        %v10347 = vsub.f32 %v10038, %v10203
        %v10348 = vsub.f32 %v10057, %v10204
        %v10349 = vsub.f32 %v10076, %v10205
        %v10350 = vsub.f32 %v10095, %v10206
        %v10351 = vsub.f32 %v10114, %v10207
        %v10352 = vsub.f32 %v9984, %v10200
        %v10353 = vsub.f32 %v10003, %v10201
        %v10354 = vsub.f32 %v10022, %v10202
        %v10355 = vsub.f32 %v10041, %v10203
        %v10356 = vsub.f32 %v10060, %v10204
        %v10357 = vsub.f32 %v10079, %v10205
        %v10358 = vsub.f32 %v10098, %v10206
        %v10359 = vsub.f32 %v10117, %v10207
        %v10360 = vsub.f32 %v9986, %v10200
        %v10361 = vsub.f32 %v10005, %v10201
        %v10362 = vsub.f32 %v10024, %v10202
        %v10363 = vsub.f32 %v10043, %v10203
        %v10364 = vsub.f32 %v10062, %v10204
        %v10365 = vsub.f32 %v10081, %v10205
        %v10366 = vsub.f32 %v10100, %v10206
        %v10367 = vsub.f32 %v10119, %v10207
        %v10368 = vadd.f32 %v10328, 1e-05
        %v10369 = vadd.f32 %v10329, 1e-05
        %v10370 = vadd.f32 %v10330, 1e-05
        %v10371 = vadd.f32 %v10331, 1e-05
        %v10372 = vadd.f32 %v10332, 1e-05
        %v10373 = vadd.f32 %v10333, 1e-05
        %v10374 = vadd.f32 %v10334, 1e-05
        %v10375 = vadd.f32 %v10335, 1e-05
        %v10376 = vrsqrt.pop %v10368
        %v10377 = vmul.f32 %v10376, %v10368
        %v10378 = vmul.f32 %v10377, %v10376
        %v10379 = vmul.f32 0.5, %v10378
        %v10380 = vsub.f32 1.5, %v10379
        %v10381 = vmul.f32 %v10376, %v10380
        %vm10382 = vweird.f32 %v10368
        %vm10383 = vweird.f32 %v10376
        %vm10384 = vmor %vm10382, %vm10383
        %v10385 = vsel %vm10384, %v10376, %v10381
        %v10386 = vrsqrt.pop %v10369
        %v10387 = vmul.f32 %v10386, %v10369
        %v10388 = vmul.f32 %v10387, %v10386
        %v10389 = vmul.f32 0.5, %v10388
        %v10390 = vsub.f32 1.5, %v10389
        %v10391 = vmul.f32 %v10386, %v10390
        %vm10392 = vweird.f32 %v10369
        %vm10393 = vweird.f32 %v10386
        %vm10394 = vmor %vm10392, %vm10393
        %v10395 = vsel %vm10394, %v10386, %v10391
        %v10396 = vrsqrt.pop %v10370
        %v10397 = vmul.f32 %v10396, %v10370
        %v10398 = vmul.f32 %v10397, %v10396
        %v10399 = vmul.f32 0.5, %v10398
        %v10400 = vsub.f32 1.5, %v10399
        %v10401 = vmul.f32 %v10396, %v10400
        %vm10402 = vweird.f32 %v10370
        %vm10403 = vweird.f32 %v10396
        %vm10404 = vmor %vm10402, %vm10403
        %v10405 = vsel %vm10404, %v10396, %v10401
        %v10406 = vrsqrt.pop %v10371
        %v10407 = vmul.f32 %v10406, %v10371
        %v10408 = vmul.f32 %v10407, %v10406
        %v10409 = vmul.f32 0.5, %v10408
        %v10410 = vsub.f32 1.5, %v10409
        %v10411 = vmul.f32 %v10406, %v10410
        %vm10412 = vweird.f32 %v10371
        %vm10413 = vweird.f32 %v10406
        %vm10414 = vmor %vm10412, %vm10413
        %v10415 = vsel %vm10414, %v10406, %v10411
        %v10416 = vrsqrt.pop %v10372
        %v10417 = vmul.f32 %v10416, %v10372
        %v10418 = vmul.f32 %v10417, %v10416
        %v10419 = vmul.f32 0.5, %v10418
        %v10420 = vsub.f32 1.5, %v10419
        %v10421 = vmul.f32 %v10416, %v10420
        %vm10422 = vweird.f32 %v10372
        %vm10423 = vweird.f32 %v10416
        %vm10424 = vmor %vm10422, %vm10423
        %v10425 = vsel %vm10424, %v10416, %v10421
        %v10426 = vrsqrt.pop %v10373
        %v10427 = vmul.f32 %v10426, %v10373
        %v10428 = vmul.f32 %v10427, %v10426
        %v10429 = vmul.f32 0.5, %v10428
        %v10430 = vsub.f32 1.5, %v10429
        %v10431 = vmul.f32 %v10426, %v10430
        %vm10432 = vweird.f32 %v10373
        %vm10433 = vweird.f32 %v10426
        %vm10434 = vmor %vm10432, %vm10433
        %v10435 = vsel %vm10434, %v10426, %v10431
        %v10436 = vrsqrt.pop %v10374
        %v10437 = vmul.f32 %v10436, %v10374
        %v10438 = vmul.f32 %v10437, %v10436
        %v10439 = vmul.f32 0.5, %v10438
        %v10440 = vsub.f32 1.5, %v10439
        %v10441 = vmul.f32 %v10436, %v10440
        %vm10442 = vweird.f32 %v10374
        %vm10443 = vweird.f32 %v10436
        %vm10444 = vmor %vm10442, %vm10443
        %v10445 = vsel %vm10444, %v10436, %v10441
        %v10446 = vrsqrt.pop %v10375
        %v10447 = vmul.f32 %v10446, %v10375
        %v10448 = vmul.f32 %v10447, %v10446
        %v10449 = vmul.f32 0.5, %v10448
        %v10450 = vsub.f32 1.5, %v10449
        %v10451 = vmul.f32 %v10446, %v10450
        %vm10452 = vweird.f32 %v10375
        %vm10453 = vweird.f32 %v10446
        %vm10454 = vmor %vm10452, %vm10453
        %v10455 = vsel %vm10454, %v10446, %v10451
        %v10456 = vmul.f32 %v10336, %v10385
        %v10457 = vmul.f32 %v10337, %v10395
        %v10458 = vmul.f32 %v10338, %v10405
        %v10459 = vmul.f32 %v10339, %v10415
        %v10460 = vmul.f32 %v10340, %v10425
        %v10461 = vmul.f32 %v10341, %v10435
        %v10462 = vmul.f32 %v10342, %v10445
        %v10463 = vmul.f32 %v10343, %v10455
        %v10464 = vmul.f32 %v10344, %v10385
        %v10465 = vmul.f32 %v10345, %v10395
        %v10466 = vmul.f32 %v10346, %v10405
        %v10467 = vmul.f32 %v10347, %v10415
        %v10468 = vmul.f32 %v10348, %v10425
        %v10469 = vmul.f32 %v10349, %v10435
        %v10470 = vmul.f32 %v10350, %v10445
        %v10471 = vmul.f32 %v10351, %v10455
        %v10472 = vmul.f32 %v10352, %v10385
        %v10473 = vmul.f32 %v10353, %v10395
        %v10474 = vmul.f32 %v10354, %v10405
        %v10475 = vmul.f32 %v10355, %v10415
        %v10476 = vmul.f32 %v10356, %v10425
        %v10477 = vmul.f32 %v10357, %v10435
        %v10478 = vmul.f32 %v10358, %v10445
        %v10479 = vmul.f32 %v10359, %v10455
        %v10480 = vmul.f32 %v10360, %v10385
        %v10481 = vmul.f32 %v10361, %v10395
        %v10482 = vmul.f32 %v10362, %v10405
        %v10483 = vmul.f32 %v10363, %v10415
        %v10484 = vmul.f32 %v10364, %v10425
        %v10485 = vmul.f32 %v10365, %v10435
        %v10486 = vmul.f32 %v10366, %v10445
        %v10487 = vmul.f32 %v10367, %v10455
        %10488 = vset.pattern.permute.xlu0 10
        %10489 = vperm.xlu0 %10488, %v1157
        %v10490 = vpop.permute.xlu0 %10489
        %10492 = vset.pattern.permute.xlu0 10
        %10493 = vperm.xlu0 %10492, %v1158
        %v10494 = vpop.permute.xlu0 %10493
        %10496 = vset.pattern.permute.xlu0 10
        %10497 = vperm.xlu0 %10496, %v1159
        %v10498 = vpop.permute.xlu0 %10497
        %10500 = vset.pattern.permute.xlu0 10
        %10501 = vperm.xlu0 %10500, %v1160
        %v10502 = vpop.permute.xlu0 %10501
        %v10504 = vmul.f32 %v10456, %v10490
        %v10505 = vmul.f32 %v10457, %v10490
        %v10506 = vmul.f32 %v10458, %v10490
        %v10507 = vmul.f32 %v10459, %v10490
        %v10508 = vmul.f32 %v10460, %v10490
        %v10509 = vmul.f32 %v10461, %v10490
        %v10510 = vmul.f32 %v10462, %v10490
        %v10511 = vmul.f32 %v10463, %v10490
        %v10512 = vmul.f32 %v10464, %v10494
        %v10513 = vmul.f32 %v10465, %v10494
        %v10514 = vmul.f32 %v10466, %v10494
        %v10515 = vmul.f32 %v10467, %v10494
        %v10516 = vmul.f32 %v10468, %v10494
        %v10517 = vmul.f32 %v10469, %v10494
        %v10518 = vmul.f32 %v10470, %v10494
        %v10519 = vmul.f32 %v10471, %v10494
        %v10520 = vmul.f32 %v10472, %v10498
        %v10521 = vmul.f32 %v10473, %v10498
        %v10522 = vmul.f32 %v10474, %v10498
        %v10523 = vmul.f32 %v10475, %v10498
        %v10524 = vmul.f32 %v10476, %v10498
        %v10525 = vmul.f32 %v10477, %v10498
        %v10526 = vmul.f32 %v10478, %v10498
        %v10527 = vmul.f32 %v10479, %v10498
        %v10528 = vmul.f32 %v10480, %v10502
        %v10529 = vmul.f32 %v10481, %v10502
        %v10530 = vmul.f32 %v10482, %v10502
        %v10531 = vmul.f32 %v10483, %v10502
        %v10532 = vmul.f32 %v10484, %v10502
        %v10533 = vmul.f32 %v10485, %v10502
        %v10534 = vmul.f32 %v10486, %v10502
        %v10535 = vmul.f32 %v10487, %v10502
        %10536 = vset.pattern.permute.xlu0 11
        %10537 = vperm.xlu0 %10536, %v1157
        %v10538 = vpop.permute.xlu0 %10537
        %10540 = vset.pattern.permute.xlu0 11
        %10541 = vperm.xlu0 %10540, %v1158
        %v10542 = vpop.permute.xlu0 %10541
        %10544 = vset.pattern.permute.xlu0 11
        %10545 = vperm.xlu0 %10544, %v1159
        %v10546 = vpop.permute.xlu0 %10545
        %10548 = vset.pattern.permute.xlu0 11
        %10549 = vperm.xlu0 %10548, %v1160
        %v10550 = vpop.permute.xlu0 %10549
        %v10552 = vadd.f32 %v10504, %v10538
        %v10553 = vadd.f32 %v10505, %v10538
        %v10554 = vadd.f32 %v10506, %v10538
        %v10555 = vadd.f32 %v10507, %v10538
        %v10556 = vadd.f32 %v10508, %v10538
        %v10557 = vadd.f32 %v10509, %v10538
        %v10558 = vadd.f32 %v10510, %v10538
        %v10559 = vadd.f32 %v10511, %v10538
        %v10560 = vadd.f32 %v10512, %v10542
        %v10561 = vadd.f32 %v10513, %v10542
        %v10562 = vadd.f32 %v10514, %v10542
        %v10563 = vadd.f32 %v10515, %v10542
        %v10564 = vadd.f32 %v10516, %v10542
        %v10565 = vadd.f32 %v10517, %v10542
        %v10566 = vadd.f32 %v10518, %v10542
        %v10567 = vadd.f32 %v10519, %v10542
        %v10568 = vadd.f32 %v10520, %v10546
        %v10569 = vadd.f32 %v10521, %v10546
        %v10570 = vadd.f32 %v10522, %v10546
        %v10571 = vadd.f32 %v10523, %v10546
        %v10572 = vadd.f32 %v10524, %v10546
        %v10573 = vadd.f32 %v10525, %v10546
        %v10574 = vadd.f32 %v10526, %v10546
        %v10575 = vadd.f32 %v10527, %v10546
        %v10576 = vadd.f32 %v10528, %v10550
        %v10577 = vadd.f32 %v10529, %v10550
        %v10578 = vadd.f32 %v10530, %v10550
        %v10579 = vadd.f32 %v10531, %v10550
        %v10580 = vadd.f32 %v10532, %v10550
        %v10581 = vadd.f32 %v10533, %v10550
        %v10582 = vadd.f32 %v10534, %v10550
        %v10583 = vadd.f32 %v10535, %v10550
        %v10584 = vmax.f32 %v10552, 0.0
        %v10585 = vmax.f32 %v10553, 0.0
        %v10586 = vmax.f32 %v10554, 0.0
        %v10587 = vmax.f32 %v10555, 0.0
        %v10588 = vmax.f32 %v10556, 0.0
        %v10589 = vmax.f32 %v10557, 0.0
        %v10590 = vmax.f32 %v10558, 0.0
        %v10591 = vmax.f32 %v10559, 0.0
        %v10592 = vmax.f32 %v10560, 0.0
        %v10593 = vmax.f32 %v10561, 0.0
        %v10594 = vmax.f32 %v10562, 0.0
        %v10595 = vmax.f32 %v10563, 0.0
        %v10596 = vmax.f32 %v10564, 0.0
        %v10597 = vmax.f32 %v10565, 0.0
        %v10598 = vmax.f32 %v10566, 0.0
        %v10599 = vmax.f32 %v10567, 0.0
        %v10600 = vmax.f32 %v10568, 0.0
        %v10601 = vmax.f32 %v10569, 0.0
        %v10602 = vmax.f32 %v10570, 0.0
        %v10603 = vmax.f32 %v10571, 0.0
        %v10604 = vmax.f32 %v10572, 0.0
        %v10605 = vmax.f32 %v10573, 0.0
        %v10606 = vmax.f32 %v10574, 0.0
        %v10607 = vmax.f32 %v10575, 0.0
        %v10608 = vmax.f32 %v10576, 0.0
        %v10609 = vmax.f32 %v10577, 0.0
        %v10610 = vmax.f32 %v10578, 0.0
        %v10611 = vmax.f32 %v10579, 0.0
        %v10612 = vmax.f32 %v10580, 0.0
        %v10613 = vmax.f32 %v10581, 0.0
        %v10614 = vmax.f32 %v10582, 0.0
        %v10615 = vmax.f32 %v10583, 0.0
        %v10616 = vpack.c.bf16 %v10585, %v10584
        %v10617 = vpack.c.bf16 %v10587, %v10586
        %v10618 = vpack.c.bf16 %v10589, %v10588
        %v10619 = vpack.c.bf16 %v10591, %v10590
        %v10620 = vpack.c.bf16 %v10593, %v10592
        %v10621 = vpack.c.bf16 %v10595, %v10594
        %v10622 = vpack.c.bf16 %v10597, %v10596
        %v10623 = vpack.c.bf16 %v10599, %v10598
        %v10624 = vpack.c.bf16 %v10601, %v10600
        %v10625 = vpack.c.bf16 %v10603, %v10602
        %v10626 = vpack.c.bf16 %v10605, %v10604
        %v10627 = vpack.c.bf16 %v10607, %v10606
        %v10628 = vpack.c.bf16 %v10609, %v10608
        %v10629 = vpack.c.bf16 %v10611, %v10610
        %v10630 = vpack.c.bf16 %v10613, %v10612
        %v10631 = vpack.c.bf16 %v10615, %v10614
        %v10632 = vunpack.c.l.bf16 %v10616
        %v10633 = vunpack.c.h.bf16 %v10616
        %v10634 = vunpack.c.l.bf16 %v10617
        %v10635 = vunpack.c.h.bf16 %v10617
        %v10636 = vunpack.c.l.bf16 %v10618
        %v10637 = vunpack.c.h.bf16 %v10618
        %v10638 = vunpack.c.l.bf16 %v10619
        %v10639 = vunpack.c.h.bf16 %v10619
        %v10640 = vunpack.c.l.bf16 %v10620
        %v10641 = vunpack.c.h.bf16 %v10620
        %v10642 = vunpack.c.l.bf16 %v10621
        %v10643 = vunpack.c.h.bf16 %v10621
        %v10644 = vunpack.c.l.bf16 %v10622
        %v10645 = vunpack.c.h.bf16 %v10622
        %v10646 = vunpack.c.l.bf16 %v10623
        %v10647 = vunpack.c.h.bf16 %v10623
        %v10648 = vunpack.c.l.bf16 %v10624
        %v10649 = vunpack.c.h.bf16 %v10624
        %v10650 = vunpack.c.l.bf16 %v10625
        %v10651 = vunpack.c.h.bf16 %v10625
        %v10652 = vunpack.c.l.bf16 %v10626
        %v10653 = vunpack.c.h.bf16 %v10626
        %v10654 = vunpack.c.l.bf16 %v10627
        %v10655 = vunpack.c.h.bf16 %v10627
        %v10656 = vunpack.c.l.bf16 %v10628
        %v10657 = vunpack.c.h.bf16 %v10628
        %v10658 = vunpack.c.l.bf16 %v10629
        %v10659 = vunpack.c.h.bf16 %v10629
        %v10660 = vunpack.c.l.bf16 %v10630
        %v10661 = vunpack.c.h.bf16 %v10630
        %v10662 = vunpack.c.l.bf16 %v10631
        %v10663 = vunpack.c.h.bf16 %v10631
        %10664 = vset.pattern.permute.xlu0 12
        %10665 = vperm.xlu0 %10664, %v1157
        %v10666 = vpop.permute.xlu0 %10665
        %10668 = vset.pattern.permute.xlu0 12
        %10669 = vperm.xlu0 %10668, %v1158
        %v10670 = vpop.permute.xlu0 %10669
        %10672 = vset.pattern.permute.xlu0 12
        %10673 = vperm.xlu0 %10672, %v1159
        %v10674 = vpop.permute.xlu0 %10673
        %10676 = vset.pattern.permute.xlu0 12
        %10677 = vperm.xlu0 %10676, %v1160
        %v10678 = vpop.permute.xlu0 %10677
        %v10680 = vmul.f32 %v10632, %v10666
        %v10681 = vmul.f32 %v10633, %v10666
        %v10682 = vmul.f32 %v10634, %v10666
        %v10683 = vmul.f32 %v10635, %v10666
        %v10684 = vmul.f32 %v10636, %v10666
        %v10685 = vmul.f32 %v10637, %v10666
        %v10686 = vmul.f32 %v10638, %v10666
        %v10687 = vmul.f32 %v10639, %v10666
        %v10688 = vmul.f32 %v10640, %v10670
        %v10689 = vmul.f32 %v10641, %v10670
        %v10690 = vmul.f32 %v10642, %v10670
        %v10691 = vmul.f32 %v10643, %v10670
        %v10692 = vmul.f32 %v10644, %v10670
        %v10693 = vmul.f32 %v10645, %v10670
        %v10694 = vmul.f32 %v10646, %v10670
        %v10695 = vmul.f32 %v10647, %v10670
        %v10696 = vmul.f32 %v10648, %v10674
        %v10697 = vmul.f32 %v10649, %v10674
        %v10698 = vmul.f32 %v10650, %v10674
        %v10699 = vmul.f32 %v10651, %v10674
        %v10700 = vmul.f32 %v10652, %v10674
        %v10701 = vmul.f32 %v10653, %v10674
        %v10702 = vmul.f32 %v10654, %v10674
        %v10703 = vmul.f32 %v10655, %v10674
        %v10704 = vmul.f32 %v10656, %v10678
        %v10705 = vmul.f32 %v10657, %v10678
        %v10706 = vmul.f32 %v10658, %v10678
        %v10707 = vmul.f32 %v10659, %v10678
        %v10708 = vmul.f32 %v10660, %v10678
        %v10709 = vmul.f32 %v10661, %v10678
        %v10710 = vmul.f32 %v10662, %v10678
        %v10711 = vmul.f32 %v10663, %v10678
        %v10712 = vadd.f32 %v10680, %v10688
        %v10713 = vadd.f32 %v10712, %v10696
        %v10714 = vadd.f32 %v10713, %v10704
        %v10715 = vrot.slane %v10714, 4
        %v10716 = vadd.f32 %v10714, %v10715
        %v10717 = vrot.slane %v10716, 2
        %v10718 = vadd.f32 %v10716, %v10717
        %v10719 = vrot.slane %v10718, 1
        %v10720 = vadd.f32 %v10718, %v10719
        %v10721 = vadd.f32 %v10681, %v10689
        %v10722 = vadd.f32 %v10721, %v10697
        %v10723 = vadd.f32 %v10722, %v10705
        %v10724 = vrot.slane %v10723, 4
        %v10725 = vadd.f32 %v10723, %v10724
        %v10726 = vrot.slane %v10725, 2
        %v10727 = vadd.f32 %v10725, %v10726
        %v10728 = vrot.slane %v10727, 1
        %v10729 = vadd.f32 %v10727, %v10728
        %v10730 = vadd.f32 %v10682, %v10690
        %v10731 = vadd.f32 %v10730, %v10698
        %v10732 = vadd.f32 %v10731, %v10706
        %v10733 = vrot.slane %v10732, 4
        %v10734 = vadd.f32 %v10732, %v10733
        %v10735 = vrot.slane %v10734, 2
        %v10736 = vadd.f32 %v10734, %v10735
        %v10737 = vrot.slane %v10736, 1
        %v10738 = vadd.f32 %v10736, %v10737
        %v10739 = vadd.f32 %v10683, %v10691
        %v10740 = vadd.f32 %v10739, %v10699
        %v10741 = vadd.f32 %v10740, %v10707
        %v10742 = vrot.slane %v10741, 4
        %v10743 = vadd.f32 %v10741, %v10742
        %v10744 = vrot.slane %v10743, 2
        %v10745 = vadd.f32 %v10743, %v10744
        %v10746 = vrot.slane %v10745, 1
        %v10747 = vadd.f32 %v10745, %v10746
        %v10748 = vadd.f32 %v10684, %v10692
        %v10749 = vadd.f32 %v10748, %v10700
        %v10750 = vadd.f32 %v10749, %v10708
        %v10751 = vrot.slane %v10750, 4
        %v10752 = vadd.f32 %v10750, %v10751
        %v10753 = vrot.slane %v10752, 2
        %v10754 = vadd.f32 %v10752, %v10753
        %v10755 = vrot.slane %v10754, 1
        %v10756 = vadd.f32 %v10754, %v10755
        %v10757 = vadd.f32 %v10685, %v10693
        %v10758 = vadd.f32 %v10757, %v10701
        %v10759 = vadd.f32 %v10758, %v10709
        %v10760 = vrot.slane %v10759, 4
        %v10761 = vadd.f32 %v10759, %v10760
        %v10762 = vrot.slane %v10761, 2
        %v10763 = vadd.f32 %v10761, %v10762
        %v10764 = vrot.slane %v10763, 1
        %v10765 = vadd.f32 %v10763, %v10764
        %v10766 = vadd.f32 %v10686, %v10694
        %v10767 = vadd.f32 %v10766, %v10702
        %v10768 = vadd.f32 %v10767, %v10710
        %v10769 = vrot.slane %v10768, 4
        %v10770 = vadd.f32 %v10768, %v10769
        %v10771 = vrot.slane %v10770, 2
        %v10772 = vadd.f32 %v10770, %v10771
        %v10773 = vrot.slane %v10772, 1
        %v10774 = vadd.f32 %v10772, %v10773
        %v10775 = vadd.f32 %v10687, %v10695
        %v10776 = vadd.f32 %v10775, %v10703
        %v10777 = vadd.f32 %v10776, %v10711
        %v10778 = vrot.slane %v10777, 4
        %v10779 = vadd.f32 %v10777, %v10778
        %v10780 = vrot.slane %v10779, 2
        %v10781 = vadd.f32 %v10779, %v10780
        %v10782 = vrot.slane %v10781, 1
        %v10783 = vadd.f32 %v10781, %v10782
        %10784 = vset.pattern.permute.xlu0 13
        %10785 = vperm.xlu0 %10784, %v1157
        %v10786 = vpop.permute.xlu0 %10785
        %v10788 = vadd.f32 %v10720, %v10786
        %v10789 = vadd.f32 %v10729, %v10786
        %v10790 = vadd.f32 %v10738, %v10786
        %v10791 = vadd.f32 %v10747, %v10786
        %v10792 = vadd.f32 %v10756, %v10786
        %v10793 = vadd.f32 %v10765, %v10786
        %v10794 = vadd.f32 %v10774, %v10786
        %v10795 = vadd.f32 %v10783, %v10786
        %v10804 = vrot.slane %v10789, 7
        %v10805 = vrot.slane %v10790, 6
        %v10806 = vrot.slane %v10791, 5
        %v10807 = vrot.slane %v10792, 4
        %v10808 = vrot.slane %v10793, 3
        %v10809 = vrot.slane %v10794, 2
        %v10810 = vrot.slane %v10795, 1
        %vm10811 = vcmask 1040384
        %v10812 = vsel %vm10811, %v10788, %v10804
        %vm10813 = vcmask 1042434
        %v10814 = vsel %vm10813, %v10805, %v10806
        %vm10815 = vcmask 1041408
        %v10816 = vsel %vm10815, %v10812, %v10814
        %vm10817 = vcmask 1044484
        %v10818 = vsel %vm10817, %v10807, %v10808
        %vm10819 = vcmask 1046534
        %v10820 = vsel %vm10819, %v10809, %v10810
        %vm10821 = vcmask 1045508
        %v10822 = vsel %vm10821, %v10818, %v10820
        %vm10823 = vcmask 1043456
        %v10824 = vsel %vm10823, %v10816, %v10822
        %10826 = vst [vmem:[%s1069] sm:$0xff] %v10824
        %s10827 = sand.u32 %s270, 1
        %s10828 = scalar_lea.sflag [#allocation5], %s10827
        %s10829 = sand.u32 %s270, 1
        %s10830 = smul.addr %s10829, 8
        %s10831 = scalar_lea.vmem [#allocation4], %s10830
        // Predicated region
        $region193: #{discriminator_forward.1} parent=183 // pred_check
          %p10832 = pneg %p280
        $region194: #{discriminator_forward.1} parent=183 // pred_check_branch
          %10834 = sbr.rel (%p10832) target = $region196
        $region195: #{discriminator_forward.1} parent=183 // pred_region
          %s10835 = smul.u32 8, %s29
          %s10836 = ssub.s32 9, %s10835
          %p10837 = scmp.lt.s32.totalorder %s10836, 8
          %s10838 = scalar_select %p10837, %s10836, 8
          %s10839 = ssub.s32 8, %s10838
          %s10840 = sshll.u32 %s10839, 4
          %10841 = vsyncadd %s10828, %s10840
          %p10842 = scmp.ne.s32.totalorder 0, %s10838
          %s10843 = smul.addr %s28, 9
          %s10844 = sadd.s32 %s10835, %s10843
          %s10845 = scalar_lea.hbm %s10, %s10844
          %s10846 = sshll.u32 %s10838, 4
          %s10847 = sshll.u32 %s10831, 4
          %s10848 = int_to_ptr.vmem [resolvable:$true] %s10847
          %s10849 = sshll.u32 %s10845, 4
          %s10850 = int_to_ptr.hbm [resolvable:$true] %s10849
          %10852 = dma.vmem_to_hbm [thread:$0]  (%p10842), %s10848, %s10846, %s10850, %s10828
        $region196: #{discriminator_forward.1} parent=183 // pred_fallthru
          _
      $region184: #{discriminator_forward.1} parent=5 // pred_fallthru
        _
      %p10853 = scmp.le.s32.totalorder 2, %s19
      // Predicated region
      $region197: #{discriminator_forward.1} parent=5 // pred_check
        %p10854 = pneg %p10853
      $region198: #{discriminator_forward.1} parent=5 // pred_check_branch
        %10856 = sbr.rel (%p10854) target = $region200
      $region199: #{discriminator_forward.1} parent=5 // pred_region
        %s10857 = ssub.s32 %s19, 2
        // Predicated region
        $region201: #{discriminator_forward.1} parent=199 // pred_check
          %p10858 = pneg %p286
        $region202: #{discriminator_forward.1} parent=199 // pred_check_branch
          %10860 = sbr.rel (%p10858) target = $region204
        $region203: #{discriminator_forward.1} parent=199 // pred_region
          %s10861 = sand.u32 %s271, 1
          %s10862 = scalar_lea.sflag [#allocation5], %s10861
          %s10863 = sand.u32 %s271, 1
          %s10864 = smul.addr %s10863, 8
          %s10865 = scalar_lea.vmem [#allocation4], %s10864
          %10867 = dma.done %s10862, 128
        $region204: #{discriminator_forward.1} parent=199 // pred_fallthru
          _
      $region200: #{discriminator_forward.1} parent=5 // pred_fallthru
        _
    $region6: #{discriminator_forward.1} parent=1 // loop_footer
      %s23 = sadd.s32 1, %s19
    $region7: #{discriminator_forward.1} parent=1 // loop_footer_branch
      %18 = sbr.rel target = $region3
    $region8: #{discriminator_forward.1} parent=1 // loop_exit
      _
    %10868 = vsyncpa [#allocation5], 1
    %s10869 = scalar_lea.sflag [#allocation5], 1
    %10870 = vsyncpa %s10869, 1

</llo_original>
